<compile_context>
chip_gen: v7x
topology: tpu7x:2x2x1
jax: 0.10.0
libtpu: 0.0.40
codegen_flags: <defaults>
</compile_context>

<pallas_src>
from functools import partial

import jax
import jax.numpy as jnp
from jax.experimental import pallas as pl
from jax.experimental.pallas import tpu as pltpu


# ---------------------------------------------------------------------------
# Fused resblock kernel: NB batch elements per grid step, (C, H*W) layout.
# ---------------------------------------------------------------------------
def _resblock_kernel(x_ref, w1a_ref, w1b_ref, w2a_ref, w2b_ref,
                     b1a_ref, b1b_ref, b2a_ref, b2b_ref,
                     o_ref, s_ref,
                     *, H, W, C, NB, PAD, compute_dtype):
    HW = H * W

    # Zero the pad strips of the shifted-read slab.  The interior
    # [PAD, PAD+HW) is fully overwritten before every conv; the strips are
    # never written and provide the zero padding for rows that fall outside
    # the image.  (Tiny: 2*PAD lanes x C sublanes.)
    s_ref[:, :PAD] = jnp.zeros((C, PAD), dtype=compute_dtype)
    s_ref[:, PAD + HW:] = jnp.zeros((C, PAD), dtype=compute_dtype)

    # Column-validity masks for the +/-1 W-taps (the flattened H*W lane axis
    # wraps across image rows, so the first/last column must be zeroed).
    col = jax.lax.broadcasted_iota(jnp.int32, (1, HW), 1) % W
    not_first_col = col != 0          # valid lanes for a  w-1 (left)  tap
    not_last_col = col != (W - 1)     # valid lanes for a  w+1 (right) tap

    def conv3x3_mfm(src_f32, wa_ref, wb_ref, ba_ref, bb_ref):
        # src_f32: (C, H*W) f32, channels on sublanes, H*W lane-dense.
        # Aligned interior store (PAD and HW are multiples of 128 / full dim).
        s_ref[:, PAD:PAD + HW] = src_f32.astype(compute_dtype)

        # Bias folded into the accumulator init (hoisted broadcast).
        acc_a = jnp.broadcast_to(ba_ref[...], (C, HW))       # (C, HW) f32
        acc_b = jnp.broadcast_to(bb_ref[...], (C, HW))

        for kh in range(3):                                   # 9 taps, K = Cin
            for kw in range(3):
                t = kh * 3 + kw
                start = PAD + (kh - 1) * W + (kw - 1)
                patch = s_ref[:, start:start + HW]            # (Cin, HW) shifted view
                if kw == 0:
                    patch = jnp.where(not_first_col, patch, jnp.zeros_like(patch))
                elif kw == 2:
                    patch = jnp.where(not_last_col, patch, jnp.zeros_like(patch))
                acc_a = acc_a + jnp.dot(wa_ref[t], patch,
                                        preferred_element_type=jnp.float32)
                acc_b = acc_b + jnp.dot(wb_ref[t], patch,
                                        preferred_element_type=jnp.float32)

        # MFM: pure per-lane max of the two halves (weights split in wrapper).
        return jnp.maximum(acc_a, acc_b)                      # (C, HW) f32

    for n in range(NB):                                       # unrolled batch sub-loop
        x_cf = x_ref[n].astype(jnp.float32)                   # (C, H*W), lane-dense load
        h1 = conv3x3_mfm(x_cf, w1a_ref, w1b_ref, b1a_ref, b1b_ref)   # conv1 + mfm
        h2 = conv3x3_mfm(h1, w2a_ref, w2b_ref, b2a_ref, b2b_ref)     # conv2 + mfm
        o_ref[n] = (h2 + x_cf).astype(o_ref.dtype)            # residual, lane-dense store


# ---------------------------------------------------------------------------
# Wrapper.
# ---------------------------------------------------------------------------
def _prep_conv_params(w, b, compute_dtype):
    """w: (3, 3, Cin, 2*Cout) HWIO, b: (2*Cout,).  Split the MFM halves, put
    Cout first so each tap is a (Cout, Cin) matmul left-operand, flatten taps."""
    kh, kw, cin, c2 = w.shape
    assert (kh, kw) == (3, 3)
    cout = c2 // 2
    wa = jnp.transpose(w[..., :cout], (0, 1, 3, 2)).reshape(9, cout, cin)
    wb = jnp.transpose(w[..., cout:], (0, 1, 3, 2)).reshape(9, cout, cin)
    ba = b[:cout].reshape(cout, 1).astype(jnp.float32)
    bb = b[cout:].reshape(cout, 1).astype(jnp.float32)
    return wa.astype(compute_dtype), wb.astype(compute_dtype), ba, bb


def resblock_forward(x_nchw, params, *, compute_dtype=jnp.bfloat16, batch_block=None):
    """Pallas implementation of resblock.forward (in_channels == out_channels)."""
    N, C, H, W = x_nchw.shape
    HW = H * W
    cout = params["w1"].shape[-1] // 2
    assert cout == C, "resblock requires in_channels == out_channels"

    # Zero-strip width for the shifted-read slab: multiple of 128 and >= W+1.
    PAD = ((W + 1 + 127) // 128) * 128

    # Batch elements per grid step (amortize serial per-step overhead on
    # v5e/v6e); keep the per-step in+out block footprint modest.
    if batch_block is None:
        per_elem = C * HW * x_nchw.dtype.itemsize * 4     # in+out, double-buffered
        batch_block = 1
        for nb in (8, 4, 2):
            if N % nb == 0 and nb * per_elem <= 8 * 1024 * 1024:
                batch_block = nb
                break
    NB = batch_block
    assert N % NB == 0

    w1a, w1b, b1a, b1b = _prep_conv_params(params["w1"], params["b1"], compute_dtype)
    w2a, w2b, b2a, b2b = _prep_conv_params(params["w2"], params["b2"], compute_dtype)

    x_flat = x_nchw.reshape(N, C, HW)                     # free trailing-dim merge

    kern = partial(_resblock_kernel, H=H, W=W, C=C, NB=NB, PAD=PAD,
                   compute_dtype=compute_dtype)
    xspec = pl.BlockSpec((NB, C, HW), lambda g: (g, 0, 0))
    wspec = pl.BlockSpec((9, C, C), lambda g: (0, 0, 0))
    bspec = pl.BlockSpec((C, 1), lambda g: (0, 0))

    out = pl.pallas_call(
        kern,
        out_shape=jax.ShapeDtypeStruct((N, C, HW), x_nchw.dtype),
        grid=(N // NB,),
        in_specs=[xspec, wspec, wspec, wspec, wspec, bspec, bspec, bspec, bspec],
        out_specs=xspec,
        scratch_shapes=[
            pltpu.VMEM((C, PAD + HW + PAD), compute_dtype),   # shifted-read slab
        ],
        compiler_params=pltpu.CompilerParams(
            dimension_semantics=("parallel",),
            vmem_limit_bytes=48 * 1024 * 1024),
    )(x_flat, w1a, w1b, w2a, w2b, b1a, b1b, b2a, b2b)

    return out.reshape(N, C, H, W)                        # free trailing-dim split


# ---------------------------------------------------------------------------
# Pure-JAX reference (runtime sanity check).
# ---------------------------------------------------------------------------
def _ref_conv_mfm(x_nhwc, w, b):
    y = jax.lax.conv_general_dilated(
        x_nhwc, w, window_strides=(1, 1), padding=((1, 1), (1, 1)),
        dimension_numbers=("NHWC", "HWIO", "NHWC"),
        precision=jax.lax.Precision.HIGHEST)
    y = y + b
    cout = w.shape[-1] // 2
    return jnp.maximum(y[..., :cout], y[..., cout:])


def _ref_resblock(x_nchw, params):
    x = jnp.transpose(x_nchw, (0, 2, 3, 1))
    o = _ref_conv_mfm(x, params["w1"], params["b1"])
    o = _ref_conv_mfm(o, params["w2"], params["b2"]) + x
    return jnp.transpose(o, (0, 3, 1, 2))


if __name__ == "__main__":
    N, C, H, W = 2, 4, 16, 16          # resblock requires in_channels == out_channels
    key = jax.random.PRNGKey(0)
    kx, k1, k2, k3, k4 = jax.random.split(key, 5)

    x = jax.random.normal(kx, (N, C, H, W), jnp.float32)
    params = {
        "w1": jax.random.normal(k1, (3, 3, C, 2 * C), jnp.float32) * 0.1,
        "b1": jax.random.normal(k2, (2 * C,), jnp.float32) * 0.1,
        "w2": jax.random.normal(k3, (3, 3, C, 2 * C), jnp.float32) * 0.1,
        "b2": jax.random.normal(k4, (2 * C,), jnp.float32) * 0.1,
    }

    ref = jax.block_until_ready(_ref_resblock(x, params))

    # f32-operand path: tight check against the XLA conv reference.
    out_f32 = jax.block_until_ready(
        jax.jit(partial(resblock_forward, compute_dtype=jnp.float32))(x, params))
    assert out_f32.shape == (N, C, H, W)
    err_f32 = float(jnp.max(jnp.abs(out_f32 - ref)))
    assert jnp.allclose(out_f32, ref, atol=1e-2, rtol=1e-2), err_f32

    # Default bf16-operand (f32 accumulate) path: perf default, looser check.
    out_bf16 = jax.block_until_ready(jax.jit(resblock_forward)(x, params))
    assert out_bf16.shape == (N, C, H, W)
    err_bf16 = float(jnp.max(jnp.abs(out_bf16 - ref)))
    assert jnp.allclose(out_bf16, ref, atol=5e-2, rtol=5e-2), err_bf16

    print("KERNEL_OK")
</pallas_src>

<mosaic_0001>
module attributes {stable_mosaic.version = 11 : i64} {
  func.func @_resblock_kernel(%arg0: i32, %arg1: memref<2x4x256xf32, #tpu.memory_space<vmem>>, %arg2: memref<9x4x4xf32, #tpu.memory_space<vmem>>, %arg3: memref<9x4x4xf32, #tpu.memory_space<vmem>>, %arg4: memref<9x4x4xf32, #tpu.memory_space<vmem>>, %arg5: memref<9x4x4xf32, #tpu.memory_space<vmem>>, %arg6: memref<4x1xf32, #tpu.memory_space<vmem>>, %arg7: memref<4x1xf32, #tpu.memory_space<vmem>>, %arg8: memref<4x1xf32, #tpu.memory_space<vmem>>, %arg9: memref<4x1xf32, #tpu.memory_space<vmem>>, %arg10: memref<2x4x256xf32, #tpu.memory_space<vmem>>, %arg11: memref<4x512xf32, #tpu.memory_space<vmem>>) attributes {dimension_semantics = [#tpu.dimension_semantics<parallel>], iteration_bounds = array<i64: 1>, scalar_prefetch = 0 : i64, scratch_operands = 1 : i64, tpu.core_type = #tpu.core_type<tc>, window_params = [{transform_indices = @transform_0, window_bounds = array<i64: 2, 4, 256>}, {pipeline_mode = #tpu.pipeline_mode<synchronous>, transform_indices = @transform_1, window_bounds = array<i64: 9, 4, 4>}, {pipeline_mode = #tpu.pipeline_mode<synchronous>, transform_indices = @transform_2, window_bounds = array<i64: 9, 4, 4>}, {pipeline_mode = #tpu.pipeline_mode<synchronous>, transform_indices = @transform_3, window_bounds = array<i64: 9, 4, 4>}, {pipeline_mode = #tpu.pipeline_mode<synchronous>, transform_indices = @transform_4, window_bounds = array<i64: 9, 4, 4>}, {pipeline_mode = #tpu.pipeline_mode<synchronous>, transform_indices = @transform_5, window_bounds = array<i64: 4, 1>}, {pipeline_mode = #tpu.pipeline_mode<synchronous>, transform_indices = @transform_6, window_bounds = array<i64: 4, 1>}, {pipeline_mode = #tpu.pipeline_mode<synchronous>, transform_indices = @transform_7, window_bounds = array<i64: 4, 1>}, {pipeline_mode = #tpu.pipeline_mode<synchronous>, transform_indices = @transform_8, window_bounds = array<i64: 4, 1>}, {transform_indices = @transform_9, window_bounds = array<i64: 2, 4, 256>}]} {
    %cst = arith.constant 0.000000e+00 : f32
    %0 = vector.broadcast %cst : f32 to vector<4x128xf32>
    %c0 = arith.constant 0 : index
    %c0_0 = arith.constant 0 : index
    %1 = vector.load %arg11[%c0, %c0_0] : memref<4x512xf32, #tpu.memory_space<vmem>>, vector<4x128xf32>
    tpu.vector_store %arg11[%c0, %c0_0], %0 {strides = array<i32>} : memref<4x512xf32, #tpu.memory_space<vmem>>, vector<4x128xf32>,
    %cst_1 = arith.constant 0.000000e+00 : f32
    %2 = vector.broadcast %cst_1 : f32 to vector<4x128xf32>
    %c0_2 = arith.constant 0 : index
    %c384 = arith.constant 384 : index
    %3 = vector.load %arg11[%c0_2, %c384] : memref<4x512xf32, #tpu.memory_space<vmem>>, vector<4x128xf32>
    tpu.vector_store %arg11[%c0_2, %c384], %2 {strides = array<i32>} : memref<4x512xf32, #tpu.memory_space<vmem>>, vector<4x128xf32>,
    %4 = tpu.iota {dimensions = array<i32: 1>} : vector<1x256xi32>
    %c16_i32 = arith.constant 16 : i32
    %c0_i32 = arith.constant 0 : i32
    %5 = arith.cmpi eq, %c16_i32, %c0_i32 : i32
    %c1_i32 = arith.constant 1 : i32
    %6 = arith.select %5, %c1_i32, %c16_i32 : i32
    %7 = vector.broadcast %6 : i32 to vector<1x256xi32>
    %8 = arith.remsi %4, %7 : vector<1x256xi32>
    %c0_i32_3 = arith.constant 0 : i32
    %9 = vector.broadcast %c0_i32_3 : i32 to vector<1x256xi32>
    %10 = arith.cmpi ne, %8, %9 : vector<1x256xi32>
    %c0_i32_4 = arith.constant 0 : i32
    %11 = vector.broadcast %c0_i32_4 : i32 to vector<1x256xi32>
    %12 = arith.cmpi slt, %8, %11 : vector<1x256xi32>
    %c0_i32_5 = arith.constant 0 : i32
    %13 = arith.cmpi slt, %6, %c0_i32_5 : i32
    %14 = vector.broadcast %13 : i1 to vector<1x256xi1>
    %15 = vector.broadcast %14 : vector<1x256xi1> to vector<1x256xi1>
    %16 = arith.xori %12, %15 : vector<1x256xi1>
    %17 = arith.andi %16, %10 : vector<1x256xi1>
    %18 = vector.broadcast %6 : i32 to vector<1x256xi32>
    %19 = arith.addi %8, %18 : vector<1x256xi32>
    %20 = arith.select %17, %19, %8 : vector<1x256xi1>, vector<1x256xi32>
    %c0_i32_6 = arith.constant 0 : i32
    %21 = vector.broadcast %c0_i32_6 : i32 to vector<1x256xi32>
    %22 = arith.cmpi ne, %20, %21 : vector<1x256xi32>
    %c15_i32 = arith.constant 15 : i32
    %23 = vector.broadcast %c15_i32 : i32 to vector<1x256xi32>
    %24 = arith.cmpi ne, %20, %23 : vector<1x256xi32>
    %c0_7 = arith.constant 0 : index
    %c0_8 = arith.constant 0 : index
    %c0_9 = arith.constant 0 : index
    %25 = vector.load %arg1[%c0_7, %c0_8, %c0_9] : memref<2x4x256xf32, #tpu.memory_space<vmem>>, vector<1x4x256xf32>
    %26 = vector.shape_cast %25 : vector<1x4x256xf32> to vector<4x256xf32>
    %c0_10 = arith.constant 0 : index
    %c128 = arith.constant 128 : index
    %27 = vector.load %arg11[%c0_10, %c128] : memref<4x512xf32, #tpu.memory_space<vmem>>, vector<4x256xf32>
    tpu.vector_store %arg11[%c0_10, %c128], %26 {strides = array<i32>} : memref<4x512xf32, #tpu.memory_space<vmem>>, vector<4x256xf32>,
    %c0_11 = arith.constant 0 : index
    %c0_12 = arith.constant 0 : index
    %28 = vector.load %arg6[%c0_11, %c0_12] : memref<4x1xf32, #tpu.memory_space<vmem>>, vector<4x1xf32>
    %29 = vector.shape_cast %28 : vector<4x1xf32> to vector<4x1xf32>
    %30 = vector.broadcast %29 : vector<4x1xf32> to vector<4x256xf32>
    %c0_13 = arith.constant 0 : index
    %c0_14 = arith.constant 0 : index
    %31 = vector.load %arg7[%c0_13, %c0_14] : memref<4x1xf32, #tpu.memory_space<vmem>>, vector<4x1xf32>
    %32 = vector.shape_cast %31 : vector<4x1xf32> to vector<4x1xf32>
    %33 = vector.broadcast %32 : vector<4x1xf32> to vector<4x256xf32>
    %c0_15 = arith.constant 0 : index
    %c111 = arith.constant 111 : index
    %34 = vector.load %arg11[%c0_15, %c111] : memref<4x512xf32, #tpu.memory_space<vmem>>, vector<4x256xf32>
    %cst_16 = arith.constant 0.000000e+00 : f32
    %35 = vector.broadcast %cst_16 : f32 to vector<4x256xf32>
    %36 = vector.shape_cast %22 : vector<1x256xi1> to vector<1x256xi1>
    %37 = vector.broadcast %36 : vector<1x256xi1> to vector<4x256xi1>
    %38 = arith.select %37, %34, %35 : vector<4x256xi1>, vector<4x256xf32>
    %c0_17 = arith.constant 0 : index
    %c0_18 = arith.constant 0 : index
    %c0_19 = arith.constant 0 : index
    %39 = vector.load %arg2[%c0_17, %c0_18, %c0_19] : memref<9x4x4xf32, #tpu.memory_space<vmem>>, vector<1x4x4xf32>
    %40 = vector.shape_cast %39 : vector<1x4x4xf32> to vector<4x4xf32>
    %cst_20 = arith.constant dense<0.000000e+00> : vector<4x256xf32>
    %41 = tpu.matmul %40, %38, %cst_20 {dimension_numbers = #tpu.dot_dimension_numbers<[1], [0], [0], [1], [0, 0, 1, 1], [], []>} : vector<4x4xf32>, vector<4x256xf32>, vector<4x256xf32> -> vector<4x256xf32>
    %42 = arith.addf %30, %41 : vector<4x256xf32>
    %c0_21 = arith.constant 0 : index
    %c0_22 = arith.constant 0 : index
    %c0_23 = arith.constant 0 : index
    %43 = vector.load %arg3[%c0_21, %c0_22, %c0_23] : memref<9x4x4xf32, #tpu.memory_space<vmem>>, vector<1x4x4xf32>
    %44 = vector.shape_cast %43 : vector<1x4x4xf32> to vector<4x4xf32>
    %cst_24 = arith.constant dense<0.000000e+00> : vector<4x256xf32>
    %45 = tpu.matmul %44, %38, %cst_24 {dimension_numbers = #tpu.dot_dimension_numbers<[1], [0], [0], [1], [0, 0, 1, 1], [], []>} : vector<4x4xf32>, vector<4x256xf32>, vector<4x256xf32> -> vector<4x256xf32>
    %46 = arith.addf %33, %45 : vector<4x256xf32>
    %c0_25 = arith.constant 0 : index
    %c112 = arith.constant 112 : index
    %47 = vector.load %arg11[%c0_25, %c112] : memref<4x512xf32, #tpu.memory_space<vmem>>, vector<4x256xf32>
    %c1 = arith.constant 1 : index
    %c0_26 = arith.constant 0 : index
    %c0_27 = arith.constant 0 : index
    %48 = vector.load %arg2[%c1, %c0_26, %c0_27] : memref<9x4x4xf32, #tpu.memory_space<vmem>>, vector<1x4x4xf32>
    %49 = vector.shape_cast %48 : vector<1x4x4xf32> to vector<4x4xf32>
    %cst_28 = arith.constant dense<0.000000e+00> : vector<4x256xf32>
    %50 = tpu.matmul %49, %47, %cst_28 {dimension_numbers = #tpu.dot_dimension_numbers<[1], [0], [0], [1], [0, 0, 1, 1], [], []>} : vector<4x4xf32>, vector<4x256xf32>, vector<4x256xf32> -> vector<4x256xf32>
    %51 = arith.addf %42, %50 : vector<4x256xf32>
    %c1_29 = arith.constant 1 : index
    %c0_30 = arith.constant 0 : index
    %c0_31 = arith.constant 0 : index
    %52 = vector.load %arg3[%c1_29, %c0_30, %c0_31] : memref<9x4x4xf32, #tpu.memory_space<vmem>>, vector<1x4x4xf32>
    %53 = vector.shape_cast %52 : vector<1x4x4xf32> to vector<4x4xf32>
    %cst_32 = arith.constant dense<0.000000e+00> : vector<4x256xf32>
    %54 = tpu.matmul %53, %47, %cst_32 {dimension_numbers = #tpu.dot_dimension_numbers<[1], [0], [0], [1], [0, 0, 1, 1], [], []>} : vector<4x4xf32>, vector<4x256xf32>, vector<4x256xf32> -> vector<4x256xf32>
    %55 = arith.addf %46, %54 : vector<4x256xf32>
    %c0_33 = arith.constant 0 : index
    %c113 = arith.constant 113 : index
    %56 = vector.load %arg11[%c0_33, %c113] : memref<4x512xf32, #tpu.memory_space<vmem>>, vector<4x256xf32>
    %cst_34 = arith.constant 0.000000e+00 : f32
    %57 = vector.broadcast %cst_34 : f32 to vector<4x256xf32>
    %58 = vector.shape_cast %24 : vector<1x256xi1> to vector<1x256xi1>
    %59 = vector.broadcast %58 : vector<1x256xi1> to vector<4x256xi1>
    %60 = arith.select %59, %56, %57 : vector<4x256xi1>, vector<4x256xf32>
    %c2 = arith.constant 2 : index
    %c0_35 = arith.constant 0 : index
    %c0_36 = arith.constant 0 : index
    %61 = vector.load %arg2[%c2, %c0_35, %c0_36] : memref<9x4x4xf32, #tpu.memory_space<vmem>>, vector<1x4x4xf32>
    %62 = vector.shape_cast %61 : vector<1x4x4xf32> to vector<4x4xf32>
    %cst_37 = arith.constant dense<0.000000e+00> : vector<4x256xf32>
    %63 = tpu.matmul %62, %60, %cst_37 {dimension_numbers = #tpu.dot_dimension_numbers<[1], [0], [0], [1], [0, 0, 1, 1], [], []>} : vector<4x4xf32>, vector<4x256xf32>, vector<4x256xf32> -> vector<4x256xf32>
    %64 = arith.addf %51, %63 : vector<4x256xf32>
    %c2_38 = arith.constant 2 : index
    %c0_39 = arith.constant 0 : index
    %c0_40 = arith.constant 0 : index
    %65 = vector.load %arg3[%c2_38, %c0_39, %c0_40] : memref<9x4x4xf32, #tpu.memory_space<vmem>>, vector<1x4x4xf32>
    %66 = vector.shape_cast %65 : vector<1x4x4xf32> to vector<4x4xf32>
    %cst_41 = arith.constant dense<0.000000e+00> : vector<4x256xf32>
    %67 = tpu.matmul %66, %60, %cst_41 {dimension_numbers = #tpu.dot_dimension_numbers<[1], [0], [0], [1], [0, 0, 1, 1], [], []>} : vector<4x4xf32>, vector<4x256xf32>, vector<4x256xf32> -> vector<4x256xf32>
    %68 = arith.addf %55, %67 : vector<4x256xf32>
    %c0_42 = arith.constant 0 : index
    %c127 = arith.constant 127 : index
    %69 = vector.load %arg11[%c0_42, %c127] : memref<4x512xf32, #tpu.memory_space<vmem>>, vector<4x256xf32>
    %cst_43 = arith.constant 0.000000e+00 : f32
    %70 = vector.broadcast %cst_43 : f32 to vector<4x256xf32>
    %71 = vector.shape_cast %22 : vector<1x256xi1> to vector<1x256xi1>
    %72 = vector.broadcast %71 : vector<1x256xi1> to vector<4x256xi1>
    %73 = arith.select %72, %69, %70 : vector<4x256xi1>, vector<4x256xf32>
    %c3 = arith.constant 3 : index
    %c0_44 = arith.constant 0 : index
    %c0_45 = arith.constant 0 : index
    %74 = vector.load %arg2[%c3, %c0_44, %c0_45] : memref<9x4x4xf32, #tpu.memory_space<vmem>>, vector<1x4x4xf32>
    %75 = vector.shape_cast %74 : vector<1x4x4xf32> to vector<4x4xf32>
    %cst_46 = arith.constant dense<0.000000e+00> : vector<4x256xf32>
    %76 = tpu.matmul %75, %73, %cst_46 {dimension_numbers = #tpu.dot_dimension_numbers<[1], [0], [0], [1], [0, 0, 1, 1], [], []>} : vector<4x4xf32>, vector<4x256xf32>, vector<4x256xf32> -> vector<4x256xf32>
    %77 = arith.addf %64, %76 : vector<4x256xf32>
    %c3_47 = arith.constant 3 : index
    %c0_48 = arith.constant 0 : index
    %c0_49 = arith.constant 0 : index
    %78 = vector.load %arg3[%c3_47, %c0_48, %c0_49] : memref<9x4x4xf32, #tpu.memory_space<vmem>>, vector<1x4x4xf32>
    %79 = vector.shape_cast %78 : vector<1x4x4xf32> to vector<4x4xf32>
    %cst_50 = arith.constant dense<0.000000e+00> : vector<4x256xf32>
    %80 = tpu.matmul %79, %73, %cst_50 {dimension_numbers = #tpu.dot_dimension_numbers<[1], [0], [0], [1], [0, 0, 1, 1], [], []>} : vector<4x4xf32>, vector<4x256xf32>, vector<4x256xf32> -> vector<4x256xf32>
    %81 = arith.addf %68, %80 : vector<4x256xf32>
    %c0_51 = arith.constant 0 : index
    %c128_52 = arith.constant 128 : index
    %82 = vector.load %arg11[%c0_51, %c128_52] : memref<4x512xf32, #tpu.memory_space<vmem>>, vector<4x256xf32>
    %c4 = arith.constant 4 : index
    %c0_53 = arith.constant 0 : index
    %c0_54 = arith.constant 0 : index
    %83 = vector.load %arg2[%c4, %c0_53, %c0_54] : memref<9x4x4xf32, #tpu.memory_space<vmem>>, vector<1x4x4xf32>
    %84 = vector.shape_cast %83 : vector<1x4x4xf32> to vector<4x4xf32>
    %cst_55 = arith.constant dense<0.000000e+00> : vector<4x256xf32>
    %85 = tpu.matmul %84, %82, %cst_55 {dimension_numbers = #tpu.dot_dimension_numbers<[1], [0], [0], [1], [0, 0, 1, 1], [], []>} : vector<4x4xf32>, vector<4x256xf32>, vector<4x256xf32> -> vector<4x256xf32>
    %86 = arith.addf %77, %85 : vector<4x256xf32>
    %c4_56 = arith.constant 4 : index
    %c0_57 = arith.constant 0 : index
    %c0_58 = arith.constant 0 : index
    %87 = vector.load %arg3[%c4_56, %c0_57, %c0_58] : memref<9x4x4xf32, #tpu.memory_space<vmem>>, vector<1x4x4xf32>
    %88 = vector.shape_cast %87 : vector<1x4x4xf32> to vector<4x4xf32>
    %cst_59 = arith.constant dense<0.000000e+00> : vector<4x256xf32>
    %89 = tpu.matmul %88, %82, %cst_59 {dimension_numbers = #tpu.dot_dimension_numbers<[1], [0], [0], [1], [0, 0, 1, 1], [], []>} : vector<4x4xf32>, vector<4x256xf32>, vector<4x256xf32> -> vector<4x256xf32>
    %90 = arith.addf %81, %89 : vector<4x256xf32>
    %c0_60 = arith.constant 0 : index
    %c129 = arith.constant 129 : index
    %91 = vector.load %arg11[%c0_60, %c129] : memref<4x512xf32, #tpu.memory_space<vmem>>, vector<4x256xf32>
    %cst_61 = arith.constant 0.000000e+00 : f32
    %92 = vector.broadcast %cst_61 : f32 to vector<4x256xf32>
    %93 = vector.shape_cast %24 : vector<1x256xi1> to vector<1x256xi1>
    %94 = vector.broadcast %93 : vector<1x256xi1> to vector<4x256xi1>
    %95 = arith.select %94, %91, %92 : vector<4x256xi1>, vector<4x256xf32>
    %c5 = arith.constant 5 : index
    %c0_62 = arith.constant 0 : index
    %c0_63 = arith.constant 0 : index
    %96 = vector.load %arg2[%c5, %c0_62, %c0_63] : memref<9x4x4xf32, #tpu.memory_space<vmem>>, vector<1x4x4xf32>
    %97 = vector.shape_cast %96 : vector<1x4x4xf32> to vector<4x4xf32>
    %cst_64 = arith.constant dense<0.000000e+00> : vector<4x256xf32>
    %98 = tpu.matmul %97, %95, %cst_64 {dimension_numbers = #tpu.dot_dimension_numbers<[1], [0], [0], [1], [0, 0, 1, 1], [], []>} : vector<4x4xf32>, vector<4x256xf32>, vector<4x256xf32> -> vector<4x256xf32>
    %99 = arith.addf %86, %98 : vector<4x256xf32>
    %c5_65 = arith.constant 5 : index
    %c0_66 = arith.constant 0 : index
    %c0_67 = arith.constant 0 : index
    %100 = vector.load %arg3[%c5_65, %c0_66, %c0_67] : memref<9x4x4xf32, #tpu.memory_space<vmem>>, vector<1x4x4xf32>
    %101 = vector.shape_cast %100 : vector<1x4x4xf32> to vector<4x4xf32>
    %cst_68 = arith.constant dense<0.000000e+00> : vector<4x256xf32>
    %102 = tpu.matmul %101, %95, %cst_68 {dimension_numbers = #tpu.dot_dimension_numbers<[1], [0], [0], [1], [0, 0, 1, 1], [], []>} : vector<4x4xf32>, vector<4x256xf32>, vector<4x256xf32> -> vector<4x256xf32>
    %103 = arith.addf %90, %102 : vector<4x256xf32>
    %c0_69 = arith.constant 0 : index
    %c143 = arith.constant 143 : index
    %104 = vector.load %arg11[%c0_69, %c143] : memref<4x512xf32, #tpu.memory_space<vmem>>, vector<4x256xf32>
    %cst_70 = arith.constant 0.000000e+00 : f32
    %105 = vector.broadcast %cst_70 : f32 to vector<4x256xf32>
    %106 = vector.shape_cast %22 : vector<1x256xi1> to vector<1x256xi1>
    %107 = vector.broadcast %106 : vector<1x256xi1> to vector<4x256xi1>
    %108 = arith.select %107, %104, %105 : vector<4x256xi1>, vector<4x256xf32>
    %c6 = arith.constant 6 : index
    %c0_71 = arith.constant 0 : index
    %c0_72 = arith.constant 0 : index
    %109 = vector.load %arg2[%c6, %c0_71, %c0_72] : memref<9x4x4xf32, #tpu.memory_space<vmem>>, vector<1x4x4xf32>
    %110 = vector.shape_cast %109 : vector<1x4x4xf32> to vector<4x4xf32>
    %cst_73 = arith.constant dense<0.000000e+00> : vector<4x256xf32>
    %111 = tpu.matmul %110, %108, %cst_73 {dimension_numbers = #tpu.dot_dimension_numbers<[1], [0], [0], [1], [0, 0, 1, 1], [], []>} : vector<4x4xf32>, vector<4x256xf32>, vector<4x256xf32> -> vector<4x256xf32>
    %112 = arith.addf %99, %111 : vector<4x256xf32>
    %c6_74 = arith.constant 6 : index
    %c0_75 = arith.constant 0 : index
    %c0_76 = arith.constant 0 : index
    %113 = vector.load %arg3[%c6_74, %c0_75, %c0_76] : memref<9x4x4xf32, #tpu.memory_space<vmem>>, vector<1x4x4xf32>
    %114 = vector.shape_cast %113 : vector<1x4x4xf32> to vector<4x4xf32>
    %cst_77 = arith.constant dense<0.000000e+00> : vector<4x256xf32>
    %115 = tpu.matmul %114, %108, %cst_77 {dimension_numbers = #tpu.dot_dimension_numbers<[1], [0], [0], [1], [0, 0, 1, 1], [], []>} : vector<4x4xf32>, vector<4x256xf32>, vector<4x256xf32> -> vector<4x256xf32>
    %116 = arith.addf %103, %115 : vector<4x256xf32>
    %c0_78 = arith.constant 0 : index
    %c144 = arith.constant 144 : index
    %117 = vector.load %arg11[%c0_78, %c144] : memref<4x512xf32, #tpu.memory_space<vmem>>, vector<4x256xf32>
    %c7 = arith.constant 7 : index
    %c0_79 = arith.constant 0 : index
    %c0_80 = arith.constant 0 : index
    %118 = vector.load %arg2[%c7, %c0_79, %c0_80] : memref<9x4x4xf32, #tpu.memory_space<vmem>>, vector<1x4x4xf32>
    %119 = vector.shape_cast %118 : vector<1x4x4xf32> to vector<4x4xf32>
    %cst_81 = arith.constant dense<0.000000e+00> : vector<4x256xf32>
    %120 = tpu.matmul %119, %117, %cst_81 {dimension_numbers = #tpu.dot_dimension_numbers<[1], [0], [0], [1], [0, 0, 1, 1], [], []>} : vector<4x4xf32>, vector<4x256xf32>, vector<4x256xf32> -> vector<4x256xf32>
    %121 = arith.addf %112, %120 : vector<4x256xf32>
    %c7_82 = arith.constant 7 : index
    %c0_83 = arith.constant 0 : index
    %c0_84 = arith.constant 0 : index
    %122 = vector.load %arg3[%c7_82, %c0_83, %c0_84] : memref<9x4x4xf32, #tpu.memory_space<vmem>>, vector<1x4x4xf32>
    %123 = vector.shape_cast %122 : vector<1x4x4xf32> to vector<4x4xf32>
    %cst_85 = arith.constant dense<0.000000e+00> : vector<4x256xf32>
    %124 = tpu.matmul %123, %117, %cst_85 {dimension_numbers = #tpu.dot_dimension_numbers<[1], [0], [0], [1], [0, 0, 1, 1], [], []>} : vector<4x4xf32>, vector<4x256xf32>, vector<4x256xf32> -> vector<4x256xf32>
    %125 = arith.addf %116, %124 : vector<4x256xf32>
    %c0_86 = arith.constant 0 : index
    %c145 = arith.constant 145 : index
    %126 = vector.load %arg11[%c0_86, %c145] : memref<4x512xf32, #tpu.memory_space<vmem>>, vector<4x256xf32>
    %cst_87 = arith.constant 0.000000e+00 : f32
    %127 = vector.broadcast %cst_87 : f32 to vector<4x256xf32>
    %128 = vector.shape_cast %24 : vector<1x256xi1> to vector<1x256xi1>
    %129 = vector.broadcast %128 : vector<1x256xi1> to vector<4x256xi1>
    %130 = arith.select %129, %126, %127 : vector<4x256xi1>, vector<4x256xf32>
    %c8 = arith.constant 8 : index
    %c0_88 = arith.constant 0 : index
    %c0_89 = arith.constant 0 : index
    %131 = vector.load %arg2[%c8, %c0_88, %c0_89] : memref<9x4x4xf32, #tpu.memory_space<vmem>>, vector<1x4x4xf32>
    %132 = vector.shape_cast %131 : vector<1x4x4xf32> to vector<4x4xf32>
    %cst_90 = arith.constant dense<0.000000e+00> : vector<4x256xf32>
    %133 = tpu.matmul %132, %130, %cst_90 {dimension_numbers = #tpu.dot_dimension_numbers<[1], [0], [0], [1], [0, 0, 1, 1], [], []>} : vector<4x4xf32>, vector<4x256xf32>, vector<4x256xf32> -> vector<4x256xf32>
    %134 = arith.addf %121, %133 : vector<4x256xf32>
    %c8_91 = arith.constant 8 : index
    %c0_92 = arith.constant 0 : index
    %c0_93 = arith.constant 0 : index
    %135 = vector.load %arg3[%c8_91, %c0_92, %c0_93] : memref<9x4x4xf32, #tpu.memory_space<vmem>>, vector<1x4x4xf32>
    %136 = vector.shape_cast %135 : vector<1x4x4xf32> to vector<4x4xf32>
    %cst_94 = arith.constant dense<0.000000e+00> : vector<4x256xf32>
    %137 = tpu.matmul %136, %130, %cst_94 {dimension_numbers = #tpu.dot_dimension_numbers<[1], [0], [0], [1], [0, 0, 1, 1], [], []>} : vector<4x4xf32>, vector<4x256xf32>, vector<4x256xf32> -> vector<4x256xf32>
    %138 = arith.addf %125, %137 : vector<4x256xf32>
    %139 = arith.maximumf %134, %138 : vector<4x256xf32>
    %c0_95 = arith.constant 0 : index
    %c128_96 = arith.constant 128 : index
    %140 = vector.load %arg11[%c0_95, %c128_96] : memref<4x512xf32, #tpu.memory_space<vmem>>, vector<4x256xf32>
    tpu.vector_store %arg11[%c0_95, %c128_96], %139 {strides = array<i32>} : memref<4x512xf32, #tpu.memory_space<vmem>>, vector<4x256xf32>,
    %c0_97 = arith.constant 0 : index
    %c0_98 = arith.constant 0 : index
    %141 = vector.load %arg8[%c0_97, %c0_98] : memref<4x1xf32, #tpu.memory_space<vmem>>, vector<4x1xf32>
    %142 = vector.shape_cast %141 : vector<4x1xf32> to vector<4x1xf32>
    %143 = vector.broadcast %142 : vector<4x1xf32> to vector<4x256xf32>
    %c0_99 = arith.constant 0 : index
    %c0_100 = arith.constant 0 : index
    %144 = vector.load %arg9[%c0_99, %c0_100] : memref<4x1xf32, #tpu.memory_space<vmem>>, vector<4x1xf32>
    %145 = vector.shape_cast %144 : vector<4x1xf32> to vector<4x1xf32>
    %146 = vector.broadcast %145 : vector<4x1xf32> to vector<4x256xf32>
    %c0_101 = arith.constant 0 : index
    %c111_102 = arith.constant 111 : index
    %147 = vector.load %arg11[%c0_101, %c111_102] : memref<4x512xf32, #tpu.memory_space<vmem>>, vector<4x256xf32>
    %cst_103 = arith.constant 0.000000e+00 : f32
    %148 = vector.broadcast %cst_103 : f32 to vector<4x256xf32>
    %149 = vector.shape_cast %22 : vector<1x256xi1> to vector<1x256xi1>
    %150 = vector.broadcast %149 : vector<1x256xi1> to vector<4x256xi1>
    %151 = arith.select %150, %147, %148 : vector<4x256xi1>, vector<4x256xf32>
    %c0_104 = arith.constant 0 : index
    %c0_105 = arith.constant 0 : index
    %c0_106 = arith.constant 0 : index
    %152 = vector.load %arg4[%c0_104, %c0_105, %c0_106] : memref<9x4x4xf32, #tpu.memory_space<vmem>>, vector<1x4x4xf32>
    %153 = vector.shape_cast %152 : vector<1x4x4xf32> to vector<4x4xf32>
    %cst_107 = arith.constant dense<0.000000e+00> : vector<4x256xf32>
    %154 = tpu.matmul %153, %151, %cst_107 {dimension_numbers = #tpu.dot_dimension_numbers<[1], [0], [0], [1], [0, 0, 1, 1], [], []>} : vector<4x4xf32>, vector<4x256xf32>, vector<4x256xf32> -> vector<4x256xf32>
    %155 = arith.addf %143, %154 : vector<4x256xf32>
    %c0_108 = arith.constant 0 : index
    %c0_109 = arith.constant 0 : index
    %c0_110 = arith.constant 0 : index
    %156 = vector.load %arg5[%c0_108, %c0_109, %c0_110] : memref<9x4x4xf32, #tpu.memory_space<vmem>>, vector<1x4x4xf32>
    %157 = vector.shape_cast %156 : vector<1x4x4xf32> to vector<4x4xf32>
    %cst_111 = arith.constant dense<0.000000e+00> : vector<4x256xf32>
    %158 = tpu.matmul %157, %151, %cst_111 {dimension_numbers = #tpu.dot_dimension_numbers<[1], [0], [0], [1], [0, 0, 1, 1], [], []>} : vector<4x4xf32>, vector<4x256xf32>, vector<4x256xf32> -> vector<4x256xf32>
    %159 = arith.addf %146, %158 : vector<4x256xf32>
    %c0_112 = arith.constant 0 : index
    %c112_113 = arith.constant 112 : index
    %160 = vector.load %arg11[%c0_112, %c112_113] : memref<4x512xf32, #tpu.memory_space<vmem>>, vector<4x256xf32>
    %c1_114 = arith.constant 1 : index
    %c0_115 = arith.constant 0 : index
    %c0_116 = arith.constant 0 : index
    %161 = vector.load %arg4[%c1_114, %c0_115, %c0_116] : memref<9x4x4xf32, #tpu.memory_space<vmem>>, vector<1x4x4xf32>
    %162 = vector.shape_cast %161 : vector<1x4x4xf32> to vector<4x4xf32>
    %cst_117 = arith.constant dense<0.000000e+00> : vector<4x256xf32>
    %163 = tpu.matmul %162, %160, %cst_117 {dimension_numbers = #tpu.dot_dimension_numbers<[1], [0], [0], [1], [0, 0, 1, 1], [], []>} : vector<4x4xf32>, vector<4x256xf32>, vector<4x256xf32> -> vector<4x256xf32>
    %164 = arith.addf %155, %163 : vector<4x256xf32>
    %c1_118 = arith.constant 1 : index
    %c0_119 = arith.constant 0 : index
    %c0_120 = arith.constant 0 : index
    %165 = vector.load %arg5[%c1_118, %c0_119, %c0_120] : memref<9x4x4xf32, #tpu.memory_space<vmem>>, vector<1x4x4xf32>
    %166 = vector.shape_cast %165 : vector<1x4x4xf32> to vector<4x4xf32>
    %cst_121 = arith.constant dense<0.000000e+00> : vector<4x256xf32>
    %167 = tpu.matmul %166, %160, %cst_121 {dimension_numbers = #tpu.dot_dimension_numbers<[1], [0], [0], [1], [0, 0, 1, 1], [], []>} : vector<4x4xf32>, vector<4x256xf32>, vector<4x256xf32> -> vector<4x256xf32>
    %168 = arith.addf %159, %167 : vector<4x256xf32>
    %c0_122 = arith.constant 0 : index
    %c113_123 = arith.constant 113 : index
    %169 = vector.load %arg11[%c0_122, %c113_123] : memref<4x512xf32, #tpu.memory_space<vmem>>, vector<4x256xf32>
    %cst_124 = arith.constant 0.000000e+00 : f32
    %170 = vector.broadcast %cst_124 : f32 to vector<4x256xf32>
    %171 = vector.shape_cast %24 : vector<1x256xi1> to vector<1x256xi1>
    %172 = vector.broadcast %171 : vector<1x256xi1> to vector<4x256xi1>
    %173 = arith.select %172, %169, %170 : vector<4x256xi1>, vector<4x256xf32>
    %c2_125 = arith.constant 2 : index
    %c0_126 = arith.constant 0 : index
    %c0_127 = arith.constant 0 : index
    %174 = vector.load %arg4[%c2_125, %c0_126, %c0_127] : memref<9x4x4xf32, #tpu.memory_space<vmem>>, vector<1x4x4xf32>
    %175 = vector.shape_cast %174 : vector<1x4x4xf32> to vector<4x4xf32>
    %cst_128 = arith.constant dense<0.000000e+00> : vector<4x256xf32>
    %176 = tpu.matmul %175, %173, %cst_128 {dimension_numbers = #tpu.dot_dimension_numbers<[1], [0], [0], [1], [0, 0, 1, 1], [], []>} : vector<4x4xf32>, vector<4x256xf32>, vector<4x256xf32> -> vector<4x256xf32>
    %177 = arith.addf %164, %176 : vector<4x256xf32>
    %c2_129 = arith.constant 2 : index
    %c0_130 = arith.constant 0 : index
    %c0_131 = arith.constant 0 : index
    %178 = vector.load %arg5[%c2_129, %c0_130, %c0_131] : memref<9x4x4xf32, #tpu.memory_space<vmem>>, vector<1x4x4xf32>
    %179 = vector.shape_cast %178 : vector<1x4x4xf32> to vector<4x4xf32>
    %cst_132 = arith.constant dense<0.000000e+00> : vector<4x256xf32>
    %180 = tpu.matmul %179, %173, %cst_132 {dimension_numbers = #tpu.dot_dimension_numbers<[1], [0], [0], [1], [0, 0, 1, 1], [], []>} : vector<4x4xf32>, vector<4x256xf32>, vector<4x256xf32> -> vector<4x256xf32>
    %181 = arith.addf %168, %180 : vector<4x256xf32>
    %c0_133 = arith.constant 0 : index
    %c127_134 = arith.constant 127 : index
    %182 = vector.load %arg11[%c0_133, %c127_134] : memref<4x512xf32, #tpu.memory_space<vmem>>, vector<4x256xf32>
    %cst_135 = arith.constant 0.000000e+00 : f32
    %183 = vector.broadcast %cst_135 : f32 to vector<4x256xf32>
    %184 = vector.shape_cast %22 : vector<1x256xi1> to vector<1x256xi1>
    %185 = vector.broadcast %184 : vector<1x256xi1> to vector<4x256xi1>
    %186 = arith.select %185, %182, %183 : vector<4x256xi1>, vector<4x256xf32>
    %c3_136 = arith.constant 3 : index
    %c0_137 = arith.constant 0 : index
    %c0_138 = arith.constant 0 : index
    %187 = vector.load %arg4[%c3_136, %c0_137, %c0_138] : memref<9x4x4xf32, #tpu.memory_space<vmem>>, vector<1x4x4xf32>
    %188 = vector.shape_cast %187 : vector<1x4x4xf32> to vector<4x4xf32>
    %cst_139 = arith.constant dense<0.000000e+00> : vector<4x256xf32>
    %189 = tpu.matmul %188, %186, %cst_139 {dimension_numbers = #tpu.dot_dimension_numbers<[1], [0], [0], [1], [0, 0, 1, 1], [], []>} : vector<4x4xf32>, vector<4x256xf32>, vector<4x256xf32> -> vector<4x256xf32>
    %190 = arith.addf %177, %189 : vector<4x256xf32>
    %c3_140 = arith.constant 3 : index
    %c0_141 = arith.constant 0 : index
    %c0_142 = arith.constant 0 : index
    %191 = vector.load %arg5[%c3_140, %c0_141, %c0_142] : memref<9x4x4xf32, #tpu.memory_space<vmem>>, vector<1x4x4xf32>
    %192 = vector.shape_cast %191 : vector<1x4x4xf32> to vector<4x4xf32>
    %cst_143 = arith.constant dense<0.000000e+00> : vector<4x256xf32>
    %193 = tpu.matmul %192, %186, %cst_143 {dimension_numbers = #tpu.dot_dimension_numbers<[1], [0], [0], [1], [0, 0, 1, 1], [], []>} : vector<4x4xf32>, vector<4x256xf32>, vector<4x256xf32> -> vector<4x256xf32>
    %194 = arith.addf %181, %193 : vector<4x256xf32>
    %c0_144 = arith.constant 0 : index
    %c128_145 = arith.constant 128 : index
    %195 = vector.load %arg11[%c0_144, %c128_145] : memref<4x512xf32, #tpu.memory_space<vmem>>, vector<4x256xf32>
    %c4_146 = arith.constant 4 : index
    %c0_147 = arith.constant 0 : index
    %c0_148 = arith.constant 0 : index
    %196 = vector.load %arg4[%c4_146, %c0_147, %c0_148] : memref<9x4x4xf32, #tpu.memory_space<vmem>>, vector<1x4x4xf32>
    %197 = vector.shape_cast %196 : vector<1x4x4xf32> to vector<4x4xf32>
    %cst_149 = arith.constant dense<0.000000e+00> : vector<4x256xf32>
    %198 = tpu.matmul %197, %195, %cst_149 {dimension_numbers = #tpu.dot_dimension_numbers<[1], [0], [0], [1], [0, 0, 1, 1], [], []>} : vector<4x4xf32>, vector<4x256xf32>, vector<4x256xf32> -> vector<4x256xf32>
    %199 = arith.addf %190, %198 : vector<4x256xf32>
    %c4_150 = arith.constant 4 : index
    %c0_151 = arith.constant 0 : index
    %c0_152 = arith.constant 0 : index
    %200 = vector.load %arg5[%c4_150, %c0_151, %c0_152] : memref<9x4x4xf32, #tpu.memory_space<vmem>>, vector<1x4x4xf32>
    %201 = vector.shape_cast %200 : vector<1x4x4xf32> to vector<4x4xf32>
    %cst_153 = arith.constant dense<0.000000e+00> : vector<4x256xf32>
    %202 = tpu.matmul %201, %195, %cst_153 {dimension_numbers = #tpu.dot_dimension_numbers<[1], [0], [0], [1], [0, 0, 1, 1], [], []>} : vector<4x4xf32>, vector<4x256xf32>, vector<4x256xf32> -> vector<4x256xf32>
    %203 = arith.addf %194, %202 : vector<4x256xf32>
    %c0_154 = arith.constant 0 : index
    %c129_155 = arith.constant 129 : index
    %204 = vector.load %arg11[%c0_154, %c129_155] : memref<4x512xf32, #tpu.memory_space<vmem>>, vector<4x256xf32>
    %cst_156 = arith.constant 0.000000e+00 : f32
    %205 = vector.broadcast %cst_156 : f32 to vector<4x256xf32>
    %206 = vector.shape_cast %24 : vector<1x256xi1> to vector<1x256xi1>
    %207 = vector.broadcast %206 : vector<1x256xi1> to vector<4x256xi1>
    %208 = arith.select %207, %204, %205 : vector<4x256xi1>, vector<4x256xf32>
    %c5_157 = arith.constant 5 : index
    %c0_158 = arith.constant 0 : index
    %c0_159 = arith.constant 0 : index
    %209 = vector.load %arg4[%c5_157, %c0_158, %c0_159] : memref<9x4x4xf32, #tpu.memory_space<vmem>>, vector<1x4x4xf32>
    %210 = vector.shape_cast %209 : vector<1x4x4xf32> to vector<4x4xf32>
    %cst_160 = arith.constant dense<0.000000e+00> : vector<4x256xf32>
    %211 = tpu.matmul %210, %208, %cst_160 {dimension_numbers = #tpu.dot_dimension_numbers<[1], [0], [0], [1], [0, 0, 1, 1], [], []>} : vector<4x4xf32>, vector<4x256xf32>, vector<4x256xf32> -> vector<4x256xf32>
    %212 = arith.addf %199, %211 : vector<4x256xf32>
    %c5_161 = arith.constant 5 : index
    %c0_162 = arith.constant 0 : index
    %c0_163 = arith.constant 0 : index
    %213 = vector.load %arg5[%c5_161, %c0_162, %c0_163] : memref<9x4x4xf32, #tpu.memory_space<vmem>>, vector<1x4x4xf32>
    %214 = vector.shape_cast %213 : vector<1x4x4xf32> to vector<4x4xf32>
    %cst_164 = arith.constant dense<0.000000e+00> : vector<4x256xf32>
    %215 = tpu.matmul %214, %208, %cst_164 {dimension_numbers = #tpu.dot_dimension_numbers<[1], [0], [0], [1], [0, 0, 1, 1], [], []>} : vector<4x4xf32>, vector<4x256xf32>, vector<4x256xf32> -> vector<4x256xf32>
    %216 = arith.addf %203, %215 : vector<4x256xf32>
    %c0_165 = arith.constant 0 : index
    %c143_166 = arith.constant 143 : index
    %217 = vector.load %arg11[%c0_165, %c143_166] : memref<4x512xf32, #tpu.memory_space<vmem>>, vector<4x256xf32>
    %cst_167 = arith.constant 0.000000e+00 : f32
    %218 = vector.broadcast %cst_167 : f32 to vector<4x256xf32>
    %219 = vector.shape_cast %22 : vector<1x256xi1> to vector<1x256xi1>
    %220 = vector.broadcast %219 : vector<1x256xi1> to vector<4x256xi1>
    %221 = arith.select %220, %217, %218 : vector<4x256xi1>, vector<4x256xf32>
    %c6_168 = arith.constant 6 : index
    %c0_169 = arith.constant 0 : index
    %c0_170 = arith.constant 0 : index
    %222 = vector.load %arg4[%c6_168, %c0_169, %c0_170] : memref<9x4x4xf32, #tpu.memory_space<vmem>>, vector<1x4x4xf32>
    %223 = vector.shape_cast %222 : vector<1x4x4xf32> to vector<4x4xf32>
    %cst_171 = arith.constant dense<0.000000e+00> : vector<4x256xf32>
    %224 = tpu.matmul %223, %221, %cst_171 {dimension_numbers = #tpu.dot_dimension_numbers<[1], [0], [0], [1], [0, 0, 1, 1], [], []>} : vector<4x4xf32>, vector<4x256xf32>, vector<4x256xf32> -> vector<4x256xf32>
    %225 = arith.addf %212, %224 : vector<4x256xf32>
    %c6_172 = arith.constant 6 : index
    %c0_173 = arith.constant 0 : index
    %c0_174 = arith.constant 0 : index
    %226 = vector.load %arg5[%c6_172, %c0_173, %c0_174] : memref<9x4x4xf32, #tpu.memory_space<vmem>>, vector<1x4x4xf32>
    %227 = vector.shape_cast %226 : vector<1x4x4xf32> to vector<4x4xf32>
    %cst_175 = arith.constant dense<0.000000e+00> : vector<4x256xf32>
    %228 = tpu.matmul %227, %221, %cst_175 {dimension_numbers = #tpu.dot_dimension_numbers<[1], [0], [0], [1], [0, 0, 1, 1], [], []>} : vector<4x4xf32>, vector<4x256xf32>, vector<4x256xf32> -> vector<4x256xf32>
    %229 = arith.addf %216, %228 : vector<4x256xf32>
    %c0_176 = arith.constant 0 : index
    %c144_177 = arith.constant 144 : index
    %230 = vector.load %arg11[%c0_176, %c144_177] : memref<4x512xf32, #tpu.memory_space<vmem>>, vector<4x256xf32>
    %c7_178 = arith.constant 7 : index
    %c0_179 = arith.constant 0 : index
    %c0_180 = arith.constant 0 : index
    %231 = vector.load %arg4[%c7_178, %c0_179, %c0_180] : memref<9x4x4xf32, #tpu.memory_space<vmem>>, vector<1x4x4xf32>
    %232 = vector.shape_cast %231 : vector<1x4x4xf32> to vector<4x4xf32>
    %cst_181 = arith.constant dense<0.000000e+00> : vector<4x256xf32>
    %233 = tpu.matmul %232, %230, %cst_181 {dimension_numbers = #tpu.dot_dimension_numbers<[1], [0], [0], [1], [0, 0, 1, 1], [], []>} : vector<4x4xf32>, vector<4x256xf32>, vector<4x256xf32> -> vector<4x256xf32>
    %234 = arith.addf %225, %233 : vector<4x256xf32>
    %c7_182 = arith.constant 7 : index
    %c0_183 = arith.constant 0 : index
    %c0_184 = arith.constant 0 : index
    %235 = vector.load %arg5[%c7_182, %c0_183, %c0_184] : memref<9x4x4xf32, #tpu.memory_space<vmem>>, vector<1x4x4xf32>
    %236 = vector.shape_cast %235 : vector<1x4x4xf32> to vector<4x4xf32>
    %cst_185 = arith.constant dense<0.000000e+00> : vector<4x256xf32>
    %237 = tpu.matmul %236, %230, %cst_185 {dimension_numbers = #tpu.dot_dimension_numbers<[1], [0], [0], [1], [0, 0, 1, 1], [], []>} : vector<4x4xf32>, vector<4x256xf32>, vector<4x256xf32> -> vector<4x256xf32>
    %238 = arith.addf %229, %237 : vector<4x256xf32>
    %c0_186 = arith.constant 0 : index
    %c145_187 = arith.constant 145 : index
    %239 = vector.load %arg11[%c0_186, %c145_187] : memref<4x512xf32, #tpu.memory_space<vmem>>, vector<4x256xf32>
    %cst_188 = arith.constant 0.000000e+00 : f32
    %240 = vector.broadcast %cst_188 : f32 to vector<4x256xf32>
    %241 = vector.shape_cast %24 : vector<1x256xi1> to vector<1x256xi1>
    %242 = vector.broadcast %241 : vector<1x256xi1> to vector<4x256xi1>
    %243 = arith.select %242, %239, %240 : vector<4x256xi1>, vector<4x256xf32>
    %c8_189 = arith.constant 8 : index
    %c0_190 = arith.constant 0 : index
    %c0_191 = arith.constant 0 : index
    %244 = vector.load %arg4[%c8_189, %c0_190, %c0_191] : memref<9x4x4xf32, #tpu.memory_space<vmem>>, vector<1x4x4xf32>
    %245 = vector.shape_cast %244 : vector<1x4x4xf32> to vector<4x4xf32>
    %cst_192 = arith.constant dense<0.000000e+00> : vector<4x256xf32>
    %246 = tpu.matmul %245, %243, %cst_192 {dimension_numbers = #tpu.dot_dimension_numbers<[1], [0], [0], [1], [0, 0, 1, 1], [], []>} : vector<4x4xf32>, vector<4x256xf32>, vector<4x256xf32> -> vector<4x256xf32>
    %247 = arith.addf %234, %246 : vector<4x256xf32>
    %c8_193 = arith.constant 8 : index
    %c0_194 = arith.constant 0 : index
    %c0_195 = arith.constant 0 : index
    %248 = vector.load %arg5[%c8_193, %c0_194, %c0_195] : memref<9x4x4xf32, #tpu.memory_space<vmem>>, vector<1x4x4xf32>
    %249 = vector.shape_cast %248 : vector<1x4x4xf32> to vector<4x4xf32>
    %cst_196 = arith.constant dense<0.000000e+00> : vector<4x256xf32>
    %250 = tpu.matmul %249, %243, %cst_196 {dimension_numbers = #tpu.dot_dimension_numbers<[1], [0], [0], [1], [0, 0, 1, 1], [], []>} : vector<4x4xf32>, vector<4x256xf32>, vector<4x256xf32> -> vector<4x256xf32>
    %251 = arith.addf %238, %250 : vector<4x256xf32>
    %252 = arith.maximumf %247, %251 : vector<4x256xf32>
    %253 = arith.addf %252, %26 : vector<4x256xf32>
    %c0_197 = arith.constant 0 : index
    %c0_198 = arith.constant 0 : index
    %c0_199 = arith.constant 0 : index
    %254 = vector.load %arg10[%c0_197, %c0_198, %c0_199] : memref<2x4x256xf32, #tpu.memory_space<vmem>>, vector<1x4x256xf32>
    %255 = vector.shape_cast %254 : vector<1x4x256xf32> to vector<4x256xf32>
    %256 = vector.shape_cast %253 : vector<4x256xf32> to vector<1x4x256xf32>
    tpu.vector_store %arg10[%c0_197, %c0_198, %c0_199], %256 {strides = array<i32>} : memref<2x4x256xf32, #tpu.memory_space<vmem>>, vector<1x4x256xf32>,
    %c1_200 = arith.constant 1 : index
    %c0_201 = arith.constant 0 : index
    %c0_202 = arith.constant 0 : index
    %257 = vector.load %arg1[%c1_200, %c0_201, %c0_202] : memref<2x4x256xf32, #tpu.memory_space<vmem>>, vector<1x4x256xf32>
    %258 = vector.shape_cast %257 : vector<1x4x256xf32> to vector<4x256xf32>
    %c0_203 = arith.constant 0 : index
    %c128_204 = arith.constant 128 : index
    %259 = vector.load %arg11[%c0_203, %c128_204] : memref<4x512xf32, #tpu.memory_space<vmem>>, vector<4x256xf32>
    tpu.vector_store %arg11[%c0_203, %c128_204], %258 {strides = array<i32>} : memref<4x512xf32, #tpu.memory_space<vmem>>, vector<4x256xf32>,
    %c0_205 = arith.constant 0 : index
    %c0_206 = arith.constant 0 : index
    %260 = vector.load %arg6[%c0_205, %c0_206] : memref<4x1xf32, #tpu.memory_space<vmem>>, vector<4x1xf32>
    %261 = vector.shape_cast %260 : vector<4x1xf32> to vector<4x1xf32>
    %262 = vector.broadcast %261 : vector<4x1xf32> to vector<4x256xf32>
    %c0_207 = arith.constant 0 : index
    %c0_208 = arith.constant 0 : index
    %263 = vector.load %arg7[%c0_207, %c0_208] : memref<4x1xf32, #tpu.memory_space<vmem>>, vector<4x1xf32>
    %264 = vector.shape_cast %263 : vector<4x1xf32> to vector<4x1xf32>
    %265 = vector.broadcast %264 : vector<4x1xf32> to vector<4x256xf32>
    %c0_209 = arith.constant 0 : index
    %c111_210 = arith.constant 111 : index
    %266 = vector.load %arg11[%c0_209, %c111_210] : memref<4x512xf32, #tpu.memory_space<vmem>>, vector<4x256xf32>
    %cst_211 = arith.constant 0.000000e+00 : f32
    %267 = vector.broadcast %cst_211 : f32 to vector<4x256xf32>
    %268 = vector.shape_cast %22 : vector<1x256xi1> to vector<1x256xi1>
    %269 = vector.broadcast %268 : vector<1x256xi1> to vector<4x256xi1>
    %270 = arith.select %269, %266, %267 : vector<4x256xi1>, vector<4x256xf32>
    %c0_212 = arith.constant 0 : index
    %c0_213 = arith.constant 0 : index
    %c0_214 = arith.constant 0 : index
    %271 = vector.load %arg2[%c0_212, %c0_213, %c0_214] : memref<9x4x4xf32, #tpu.memory_space<vmem>>, vector<1x4x4xf32>
    %272 = vector.shape_cast %271 : vector<1x4x4xf32> to vector<4x4xf32>
    %cst_215 = arith.constant dense<0.000000e+00> : vector<4x256xf32>
    %273 = tpu.matmul %272, %270, %cst_215 {dimension_numbers = #tpu.dot_dimension_numbers<[1], [0], [0], [1], [0, 0, 1, 1], [], []>} : vector<4x4xf32>, vector<4x256xf32>, vector<4x256xf32> -> vector<4x256xf32>
    %274 = arith.addf %262, %273 : vector<4x256xf32>
    %c0_216 = arith.constant 0 : index
    %c0_217 = arith.constant 0 : index
    %c0_218 = arith.constant 0 : index
    %275 = vector.load %arg3[%c0_216, %c0_217, %c0_218] : memref<9x4x4xf32, #tpu.memory_space<vmem>>, vector<1x4x4xf32>
    %276 = vector.shape_cast %275 : vector<1x4x4xf32> to vector<4x4xf32>
    %cst_219 = arith.constant dense<0.000000e+00> : vector<4x256xf32>
    %277 = tpu.matmul %276, %270, %cst_219 {dimension_numbers = #tpu.dot_dimension_numbers<[1], [0], [0], [1], [0, 0, 1, 1], [], []>} : vector<4x4xf32>, vector<4x256xf32>, vector<4x256xf32> -> vector<4x256xf32>
    %278 = arith.addf %265, %277 : vector<4x256xf32>
    %c0_220 = arith.constant 0 : index
    %c112_221 = arith.constant 112 : index
    %279 = vector.load %arg11[%c0_220, %c112_221] : memref<4x512xf32, #tpu.memory_space<vmem>>, vector<4x256xf32>
    %c1_222 = arith.constant 1 : index
    %c0_223 = arith.constant 0 : index
    %c0_224 = arith.constant 0 : index
    %280 = vector.load %arg2[%c1_222, %c0_223, %c0_224] : memref<9x4x4xf32, #tpu.memory_space<vmem>>, vector<1x4x4xf32>
    %281 = vector.shape_cast %280 : vector<1x4x4xf32> to vector<4x4xf32>
    %cst_225 = arith.constant dense<0.000000e+00> : vector<4x256xf32>
    %282 = tpu.matmul %281, %279, %cst_225 {dimension_numbers = #tpu.dot_dimension_numbers<[1], [0], [0], [1], [0, 0, 1, 1], [], []>} : vector<4x4xf32>, vector<4x256xf32>, vector<4x256xf32> -> vector<4x256xf32>
    %283 = arith.addf %274, %282 : vector<4x256xf32>
    %c1_226 = arith.constant 1 : index
    %c0_227 = arith.constant 0 : index
    %c0_228 = arith.constant 0 : index
    %284 = vector.load %arg3[%c1_226, %c0_227, %c0_228] : memref<9x4x4xf32, #tpu.memory_space<vmem>>, vector<1x4x4xf32>
    %285 = vector.shape_cast %284 : vector<1x4x4xf32> to vector<4x4xf32>
    %cst_229 = arith.constant dense<0.000000e+00> : vector<4x256xf32>
    %286 = tpu.matmul %285, %279, %cst_229 {dimension_numbers = #tpu.dot_dimension_numbers<[1], [0], [0], [1], [0, 0, 1, 1], [], []>} : vector<4x4xf32>, vector<4x256xf32>, vector<4x256xf32> -> vector<4x256xf32>
    %287 = arith.addf %278, %286 : vector<4x256xf32>
    %c0_230 = arith.constant 0 : index
    %c113_231 = arith.constant 113 : index
    %288 = vector.load %arg11[%c0_230, %c113_231] : memref<4x512xf32, #tpu.memory_space<vmem>>, vector<4x256xf32>
    %cst_232 = arith.constant 0.000000e+00 : f32
    %289 = vector.broadcast %cst_232 : f32 to vector<4x256xf32>
    %290 = vector.shape_cast %24 : vector<1x256xi1> to vector<1x256xi1>
    %291 = vector.broadcast %290 : vector<1x256xi1> to vector<4x256xi1>
    %292 = arith.select %291, %288, %289 : vector<4x256xi1>, vector<4x256xf32>
    %c2_233 = arith.constant 2 : index
    %c0_234 = arith.constant 0 : index
    %c0_235 = arith.constant 0 : index
    %293 = vector.load %arg2[%c2_233, %c0_234, %c0_235] : memref<9x4x4xf32, #tpu.memory_space<vmem>>, vector<1x4x4xf32>
    %294 = vector.shape_cast %293 : vector<1x4x4xf32> to vector<4x4xf32>
    %cst_236 = arith.constant dense<0.000000e+00> : vector<4x256xf32>
    %295 = tpu.matmul %294, %292, %cst_236 {dimension_numbers = #tpu.dot_dimension_numbers<[1], [0], [0], [1], [0, 0, 1, 1], [], []>} : vector<4x4xf32>, vector<4x256xf32>, vector<4x256xf32> -> vector<4x256xf32>
    %296 = arith.addf %283, %295 : vector<4x256xf32>
    %c2_237 = arith.constant 2 : index
    %c0_238 = arith.constant 0 : index
    %c0_239 = arith.constant 0 : index
    %297 = vector.load %arg3[%c2_237, %c0_238, %c0_239] : memref<9x4x4xf32, #tpu.memory_space<vmem>>, vector<1x4x4xf32>
    %298 = vector.shape_cast %297 : vector<1x4x4xf32> to vector<4x4xf32>
    %cst_240 = arith.constant dense<0.000000e+00> : vector<4x256xf32>
    %299 = tpu.matmul %298, %292, %cst_240 {dimension_numbers = #tpu.dot_dimension_numbers<[1], [0], [0], [1], [0, 0, 1, 1], [], []>} : vector<4x4xf32>, vector<4x256xf32>, vector<4x256xf32> -> vector<4x256xf32>
    %300 = arith.addf %287, %299 : vector<4x256xf32>
    %c0_241 = arith.constant 0 : index
    %c127_242 = arith.constant 127 : index
    %301 = vector.load %arg11[%c0_241, %c127_242] : memref<4x512xf32, #tpu.memory_space<vmem>>, vector<4x256xf32>
    %cst_243 = arith.constant 0.000000e+00 : f32
    %302 = vector.broadcast %cst_243 : f32 to vector<4x256xf32>
    %303 = vector.shape_cast %22 : vector<1x256xi1> to vector<1x256xi1>
    %304 = vector.broadcast %303 : vector<1x256xi1> to vector<4x256xi1>
    %305 = arith.select %304, %301, %302 : vector<4x256xi1>, vector<4x256xf32>
    %c3_244 = arith.constant 3 : index
    %c0_245 = arith.constant 0 : index
    %c0_246 = arith.constant 0 : index
    %306 = vector.load %arg2[%c3_244, %c0_245, %c0_246] : memref<9x4x4xf32, #tpu.memory_space<vmem>>, vector<1x4x4xf32>
    %307 = vector.shape_cast %306 : vector<1x4x4xf32> to vector<4x4xf32>
    %cst_247 = arith.constant dense<0.000000e+00> : vector<4x256xf32>
    %308 = tpu.matmul %307, %305, %cst_247 {dimension_numbers = #tpu.dot_dimension_numbers<[1], [0], [0], [1], [0, 0, 1, 1], [], []>} : vector<4x4xf32>, vector<4x256xf32>, vector<4x256xf32> -> vector<4x256xf32>
    %309 = arith.addf %296, %308 : vector<4x256xf32>
    %c3_248 = arith.constant 3 : index
    %c0_249 = arith.constant 0 : index
    %c0_250 = arith.constant 0 : index
    %310 = vector.load %arg3[%c3_248, %c0_249, %c0_250] : memref<9x4x4xf32, #tpu.memory_space<vmem>>, vector<1x4x4xf32>
    %311 = vector.shape_cast %310 : vector<1x4x4xf32> to vector<4x4xf32>
    %cst_251 = arith.constant dense<0.000000e+00> : vector<4x256xf32>
    %312 = tpu.matmul %311, %305, %cst_251 {dimension_numbers = #tpu.dot_dimension_numbers<[1], [0], [0], [1], [0, 0, 1, 1], [], []>} : vector<4x4xf32>, vector<4x256xf32>, vector<4x256xf32> -> vector<4x256xf32>
    %313 = arith.addf %300, %312 : vector<4x256xf32>
    %c0_252 = arith.constant 0 : index
    %c128_253 = arith.constant 128 : index
    %314 = vector.load %arg11[%c0_252, %c128_253] : memref<4x512xf32, #tpu.memory_space<vmem>>, vector<4x256xf32>
    %c4_254 = arith.constant 4 : index
    %c0_255 = arith.constant 0 : index
    %c0_256 = arith.constant 0 : index
    %315 = vector.load %arg2[%c4_254, %c0_255, %c0_256] : memref<9x4x4xf32, #tpu.memory_space<vmem>>, vector<1x4x4xf32>
    %316 = vector.shape_cast %315 : vector<1x4x4xf32> to vector<4x4xf32>
    %cst_257 = arith.constant dense<0.000000e+00> : vector<4x256xf32>
    %317 = tpu.matmul %316, %314, %cst_257 {dimension_numbers = #tpu.dot_dimension_numbers<[1], [0], [0], [1], [0, 0, 1, 1], [], []>} : vector<4x4xf32>, vector<4x256xf32>, vector<4x256xf32> -> vector<4x256xf32>
    %318 = arith.addf %309, %317 : vector<4x256xf32>
    %c4_258 = arith.constant 4 : index
    %c0_259 = arith.constant 0 : index
    %c0_260 = arith.constant 0 : index
    %319 = vector.load %arg3[%c4_258, %c0_259, %c0_260] : memref<9x4x4xf32, #tpu.memory_space<vmem>>, vector<1x4x4xf32>
    %320 = vector.shape_cast %319 : vector<1x4x4xf32> to vector<4x4xf32>
    %cst_261 = arith.constant dense<0.000000e+00> : vector<4x256xf32>
    %321 = tpu.matmul %320, %314, %cst_261 {dimension_numbers = #tpu.dot_dimension_numbers<[1], [0], [0], [1], [0, 0, 1, 1], [], []>} : vector<4x4xf32>, vector<4x256xf32>, vector<4x256xf32> -> vector<4x256xf32>
    %322 = arith.addf %313, %321 : vector<4x256xf32>
    %c0_262 = arith.constant 0 : index
    %c129_263 = arith.constant 129 : index
    %323 = vector.load %arg11[%c0_262, %c129_263] : memref<4x512xf32, #tpu.memory_space<vmem>>, vector<4x256xf32>
    %cst_264 = arith.constant 0.000000e+00 : f32
    %324 = vector.broadcast %cst_264 : f32 to vector<4x256xf32>
    %325 = vector.shape_cast %24 : vector<1x256xi1> to vector<1x256xi1>
    %326 = vector.broadcast %325 : vector<1x256xi1> to vector<4x256xi1>
    %327 = arith.select %326, %323, %324 : vector<4x256xi1>, vector<4x256xf32>
    %c5_265 = arith.constant 5 : index
    %c0_266 = arith.constant 0 : index
    %c0_267 = arith.constant 0 : index
    %328 = vector.load %arg2[%c5_265, %c0_266, %c0_267] : memref<9x4x4xf32, #tpu.memory_space<vmem>>, vector<1x4x4xf32>
    %329 = vector.shape_cast %328 : vector<1x4x4xf32> to vector<4x4xf32>
    %cst_268 = arith.constant dense<0.000000e+00> : vector<4x256xf32>
    %330 = tpu.matmul %329, %327, %cst_268 {dimension_numbers = #tpu.dot_dimension_numbers<[1], [0], [0], [1], [0, 0, 1, 1], [], []>} : vector<4x4xf32>, vector<4x256xf32>, vector<4x256xf32> -> vector<4x256xf32>
    %331 = arith.addf %318, %330 : vector<4x256xf32>
    %c5_269 = arith.constant 5 : index
    %c0_270 = arith.constant 0 : index
    %c0_271 = arith.constant 0 : index
    %332 = vector.load %arg3[%c5_269, %c0_270, %c0_271] : memref<9x4x4xf32, #tpu.memory_space<vmem>>, vector<1x4x4xf32>
    %333 = vector.shape_cast %332 : vector<1x4x4xf32> to vector<4x4xf32>
    %cst_272 = arith.constant dense<0.000000e+00> : vector<4x256xf32>
    %334 = tpu.matmul %333, %327, %cst_272 {dimension_numbers = #tpu.dot_dimension_numbers<[1], [0], [0], [1], [0, 0, 1, 1], [], []>} : vector<4x4xf32>, vector<4x256xf32>, vector<4x256xf32> -> vector<4x256xf32>
    %335 = arith.addf %322, %334 : vector<4x256xf32>
    %c0_273 = arith.constant 0 : index
    %c143_274 = arith.constant 143 : index
    %336 = vector.load %arg11[%c0_273, %c143_274] : memref<4x512xf32, #tpu.memory_space<vmem>>, vector<4x256xf32>
    %cst_275 = arith.constant 0.000000e+00 : f32
    %337 = vector.broadcast %cst_275 : f32 to vector<4x256xf32>
    %338 = vector.shape_cast %22 : vector<1x256xi1> to vector<1x256xi1>
    %339 = vector.broadcast %338 : vector<1x256xi1> to vector<4x256xi1>
    %340 = arith.select %339, %336, %337 : vector<4x256xi1>, vector<4x256xf32>
    %c6_276 = arith.constant 6 : index
    %c0_277 = arith.constant 0 : index
    %c0_278 = arith.constant 0 : index
    %341 = vector.load %arg2[%c6_276, %c0_277, %c0_278] : memref<9x4x4xf32, #tpu.memory_space<vmem>>, vector<1x4x4xf32>
    %342 = vector.shape_cast %341 : vector<1x4x4xf32> to vector<4x4xf32>
    %cst_279 = arith.constant dense<0.000000e+00> : vector<4x256xf32>
    %343 = tpu.matmul %342, %340, %cst_279 {dimension_numbers = #tpu.dot_dimension_numbers<[1], [0], [0], [1], [0, 0, 1, 1], [], []>} : vector<4x4xf32>, vector<4x256xf32>, vector<4x256xf32> -> vector<4x256xf32>
    %344 = arith.addf %331, %343 : vector<4x256xf32>
    %c6_280 = arith.constant 6 : index
    %c0_281 = arith.constant 0 : index
    %c0_282 = arith.constant 0 : index
    %345 = vector.load %arg3[%c6_280, %c0_281, %c0_282] : memref<9x4x4xf32, #tpu.memory_space<vmem>>, vector<1x4x4xf32>
    %346 = vector.shape_cast %345 : vector<1x4x4xf32> to vector<4x4xf32>
    %cst_283 = arith.constant dense<0.000000e+00> : vector<4x256xf32>
    %347 = tpu.matmul %346, %340, %cst_283 {dimension_numbers = #tpu.dot_dimension_numbers<[1], [0], [0], [1], [0, 0, 1, 1], [], []>} : vector<4x4xf32>, vector<4x256xf32>, vector<4x256xf32> -> vector<4x256xf32>
    %348 = arith.addf %335, %347 : vector<4x256xf32>
    %c0_284 = arith.constant 0 : index
    %c144_285 = arith.constant 144 : index
    %349 = vector.load %arg11[%c0_284, %c144_285] : memref<4x512xf32, #tpu.memory_space<vmem>>, vector<4x256xf32>
    %c7_286 = arith.constant 7 : index
    %c0_287 = arith.constant 0 : index
    %c0_288 = arith.constant 0 : index
    %350 = vector.load %arg2[%c7_286, %c0_287, %c0_288] : memref<9x4x4xf32, #tpu.memory_space<vmem>>, vector<1x4x4xf32>
    %351 = vector.shape_cast %350 : vector<1x4x4xf32> to vector<4x4xf32>
    %cst_289 = arith.constant dense<0.000000e+00> : vector<4x256xf32>
    %352 = tpu.matmul %351, %349, %cst_289 {dimension_numbers = #tpu.dot_dimension_numbers<[1], [0], [0], [1], [0, 0, 1, 1], [], []>} : vector<4x4xf32>, vector<4x256xf32>, vector<4x256xf32> -> vector<4x256xf32>
    %353 = arith.addf %344, %352 : vector<4x256xf32>
    %c7_290 = arith.constant 7 : index
    %c0_291 = arith.constant 0 : index
    %c0_292 = arith.constant 0 : index
    %354 = vector.load %arg3[%c7_290, %c0_291, %c0_292] : memref<9x4x4xf32, #tpu.memory_space<vmem>>, vector<1x4x4xf32>
    %355 = vector.shape_cast %354 : vector<1x4x4xf32> to vector<4x4xf32>
    %cst_293 = arith.constant dense<0.000000e+00> : vector<4x256xf32>
    %356 = tpu.matmul %355, %349, %cst_293 {dimension_numbers = #tpu.dot_dimension_numbers<[1], [0], [0], [1], [0, 0, 1, 1], [], []>} : vector<4x4xf32>, vector<4x256xf32>, vector<4x256xf32> -> vector<4x256xf32>
    %357 = arith.addf %348, %356 : vector<4x256xf32>
    %c0_294 = arith.constant 0 : index
    %c145_295 = arith.constant 145 : index
    %358 = vector.load %arg11[%c0_294, %c145_295] : memref<4x512xf32, #tpu.memory_space<vmem>>, vector<4x256xf32>
    %cst_296 = arith.constant 0.000000e+00 : f32
    %359 = vector.broadcast %cst_296 : f32 to vector<4x256xf32>
    %360 = vector.shape_cast %24 : vector<1x256xi1> to vector<1x256xi1>
    %361 = vector.broadcast %360 : vector<1x256xi1> to vector<4x256xi1>
    %362 = arith.select %361, %358, %359 : vector<4x256xi1>, vector<4x256xf32>
    %c8_297 = arith.constant 8 : index
    %c0_298 = arith.constant 0 : index
    %c0_299 = arith.constant 0 : index
    %363 = vector.load %arg2[%c8_297, %c0_298, %c0_299] : memref<9x4x4xf32, #tpu.memory_space<vmem>>, vector<1x4x4xf32>
    %364 = vector.shape_cast %363 : vector<1x4x4xf32> to vector<4x4xf32>
    %cst_300 = arith.constant dense<0.000000e+00> : vector<4x256xf32>
    %365 = tpu.matmul %364, %362, %cst_300 {dimension_numbers = #tpu.dot_dimension_numbers<[1], [0], [0], [1], [0, 0, 1, 1], [], []>} : vector<4x4xf32>, vector<4x256xf32>, vector<4x256xf32> -> vector<4x256xf32>
    %366 = arith.addf %353, %365 : vector<4x256xf32>
    %c8_301 = arith.constant 8 : index
    %c0_302 = arith.constant 0 : index
    %c0_303 = arith.constant 0 : index
    %367 = vector.load %arg3[%c8_301, %c0_302, %c0_303] : memref<9x4x4xf32, #tpu.memory_space<vmem>>, vector<1x4x4xf32>
    %368 = vector.shape_cast %367 : vector<1x4x4xf32> to vector<4x4xf32>
    %cst_304 = arith.constant dense<0.000000e+00> : vector<4x256xf32>
    %369 = tpu.matmul %368, %362, %cst_304 {dimension_numbers = #tpu.dot_dimension_numbers<[1], [0], [0], [1], [0, 0, 1, 1], [], []>} : vector<4x4xf32>, vector<4x256xf32>, vector<4x256xf32> -> vector<4x256xf32>
    %370 = arith.addf %357, %369 : vector<4x256xf32>
    %371 = arith.maximumf %366, %370 : vector<4x256xf32>
    %c0_305 = arith.constant 0 : index
    %c128_306 = arith.constant 128 : index
    %372 = vector.load %arg11[%c0_305, %c128_306] : memref<4x512xf32, #tpu.memory_space<vmem>>, vector<4x256xf32>
    tpu.vector_store %arg11[%c0_305, %c128_306], %371 {strides = array<i32>} : memref<4x512xf32, #tpu.memory_space<vmem>>, vector<4x256xf32>,
    %c0_307 = arith.constant 0 : index
    %c0_308 = arith.constant 0 : index
    %373 = vector.load %arg8[%c0_307, %c0_308] : memref<4x1xf32, #tpu.memory_space<vmem>>, vector<4x1xf32>
    %374 = vector.shape_cast %373 : vector<4x1xf32> to vector<4x1xf32>
    %375 = vector.broadcast %374 : vector<4x1xf32> to vector<4x256xf32>
    %c0_309 = arith.constant 0 : index
    %c0_310 = arith.constant 0 : index
    %376 = vector.load %arg9[%c0_309, %c0_310] : memref<4x1xf32, #tpu.memory_space<vmem>>, vector<4x1xf32>
    %377 = vector.shape_cast %376 : vector<4x1xf32> to vector<4x1xf32>
    %378 = vector.broadcast %377 : vector<4x1xf32> to vector<4x256xf32>
    %c0_311 = arith.constant 0 : index
    %c111_312 = arith.constant 111 : index
    %379 = vector.load %arg11[%c0_311, %c111_312] : memref<4x512xf32, #tpu.memory_space<vmem>>, vector<4x256xf32>
    %cst_313 = arith.constant 0.000000e+00 : f32
    %380 = vector.broadcast %cst_313 : f32 to vector<4x256xf32>
    %381 = vector.shape_cast %22 : vector<1x256xi1> to vector<1x256xi1>
    %382 = vector.broadcast %381 : vector<1x256xi1> to vector<4x256xi1>
    %383 = arith.select %382, %379, %380 : vector<4x256xi1>, vector<4x256xf32>
    %c0_314 = arith.constant 0 : index
    %c0_315 = arith.constant 0 : index
    %c0_316 = arith.constant 0 : index
    %384 = vector.load %arg4[%c0_314, %c0_315, %c0_316] : memref<9x4x4xf32, #tpu.memory_space<vmem>>, vector<1x4x4xf32>
    %385 = vector.shape_cast %384 : vector<1x4x4xf32> to vector<4x4xf32>
    %cst_317 = arith.constant dense<0.000000e+00> : vector<4x256xf32>
    %386 = tpu.matmul %385, %383, %cst_317 {dimension_numbers = #tpu.dot_dimension_numbers<[1], [0], [0], [1], [0, 0, 1, 1], [], []>} : vector<4x4xf32>, vector<4x256xf32>, vector<4x256xf32> -> vector<4x256xf32>
    %387 = arith.addf %375, %386 : vector<4x256xf32>
    %c0_318 = arith.constant 0 : index
    %c0_319 = arith.constant 0 : index
    %c0_320 = arith.constant 0 : index
    %388 = vector.load %arg5[%c0_318, %c0_319, %c0_320] : memref<9x4x4xf32, #tpu.memory_space<vmem>>, vector<1x4x4xf32>
    %389 = vector.shape_cast %388 : vector<1x4x4xf32> to vector<4x4xf32>
    %cst_321 = arith.constant dense<0.000000e+00> : vector<4x256xf32>
    %390 = tpu.matmul %389, %383, %cst_321 {dimension_numbers = #tpu.dot_dimension_numbers<[1], [0], [0], [1], [0, 0, 1, 1], [], []>} : vector<4x4xf32>, vector<4x256xf32>, vector<4x256xf32> -> vector<4x256xf32>
    %391 = arith.addf %378, %390 : vector<4x256xf32>
    %c0_322 = arith.constant 0 : index
    %c112_323 = arith.constant 112 : index
    %392 = vector.load %arg11[%c0_322, %c112_323] : memref<4x512xf32, #tpu.memory_space<vmem>>, vector<4x256xf32>
    %c1_324 = arith.constant 1 : index
    %c0_325 = arith.constant 0 : index
    %c0_326 = arith.constant 0 : index
    %393 = vector.load %arg4[%c1_324, %c0_325, %c0_326] : memref<9x4x4xf32, #tpu.memory_space<vmem>>, vector<1x4x4xf32>
    %394 = vector.shape_cast %393 : vector<1x4x4xf32> to vector<4x4xf32>
    %cst_327 = arith.constant dense<0.000000e+00> : vector<4x256xf32>
    %395 = tpu.matmul %394, %392, %cst_327 {dimension_numbers = #tpu.dot_dimension_numbers<[1], [0], [0], [1], [0, 0, 1, 1], [], []>} : vector<4x4xf32>, vector<4x256xf32>, vector<4x256xf32> -> vector<4x256xf32>
    %396 = arith.addf %387, %395 : vector<4x256xf32>
    %c1_328 = arith.constant 1 : index
    %c0_329 = arith.constant 0 : index
    %c0_330 = arith.constant 0 : index
    %397 = vector.load %arg5[%c1_328, %c0_329, %c0_330] : memref<9x4x4xf32, #tpu.memory_space<vmem>>, vector<1x4x4xf32>
    %398 = vector.shape_cast %397 : vector<1x4x4xf32> to vector<4x4xf32>
    %cst_331 = arith.constant dense<0.000000e+00> : vector<4x256xf32>
    %399 = tpu.matmul %398, %392, %cst_331 {dimension_numbers = #tpu.dot_dimension_numbers<[1], [0], [0], [1], [0, 0, 1, 1], [], []>} : vector<4x4xf32>, vector<4x256xf32>, vector<4x256xf32> -> vector<4x256xf32>
    %400 = arith.addf %391, %399 : vector<4x256xf32>
    %c0_332 = arith.constant 0 : index
    %c113_333 = arith.constant 113 : index
    %401 = vector.load %arg11[%c0_332, %c113_333] : memref<4x512xf32, #tpu.memory_space<vmem>>, vector<4x256xf32>
    %cst_334 = arith.constant 0.000000e+00 : f32
    %402 = vector.broadcast %cst_334 : f32 to vector<4x256xf32>
    %403 = vector.shape_cast %24 : vector<1x256xi1> to vector<1x256xi1>
    %404 = vector.broadcast %403 : vector<1x256xi1> to vector<4x256xi1>
    %405 = arith.select %404, %401, %402 : vector<4x256xi1>, vector<4x256xf32>
    %c2_335 = arith.constant 2 : index
    %c0_336 = arith.constant 0 : index
    %c0_337 = arith.constant 0 : index
    %406 = vector.load %arg4[%c2_335, %c0_336, %c0_337] : memref<9x4x4xf32, #tpu.memory_space<vmem>>, vector<1x4x4xf32>
    %407 = vector.shape_cast %406 : vector<1x4x4xf32> to vector<4x4xf32>
    %cst_338 = arith.constant dense<0.000000e+00> : vector<4x256xf32>
    %408 = tpu.matmul %407, %405, %cst_338 {dimension_numbers = #tpu.dot_dimension_numbers<[1], [0], [0], [1], [0, 0, 1, 1], [], []>} : vector<4x4xf32>, vector<4x256xf32>, vector<4x256xf32> -> vector<4x256xf32>
    %409 = arith.addf %396, %408 : vector<4x256xf32>
    %c2_339 = arith.constant 2 : index
    %c0_340 = arith.constant 0 : index
    %c0_341 = arith.constant 0 : index
    %410 = vector.load %arg5[%c2_339, %c0_340, %c0_341] : memref<9x4x4xf32, #tpu.memory_space<vmem>>, vector<1x4x4xf32>
    %411 = vector.shape_cast %410 : vector<1x4x4xf32> to vector<4x4xf32>
    %cst_342 = arith.constant dense<0.000000e+00> : vector<4x256xf32>
    %412 = tpu.matmul %411, %405, %cst_342 {dimension_numbers = #tpu.dot_dimension_numbers<[1], [0], [0], [1], [0, 0, 1, 1], [], []>} : vector<4x4xf32>, vector<4x256xf32>, vector<4x256xf32> -> vector<4x256xf32>
    %413 = arith.addf %400, %412 : vector<4x256xf32>
    %c0_343 = arith.constant 0 : index
    %c127_344 = arith.constant 127 : index
    %414 = vector.load %arg11[%c0_343, %c127_344] : memref<4x512xf32, #tpu.memory_space<vmem>>, vector<4x256xf32>
    %cst_345 = arith.constant 0.000000e+00 : f32
    %415 = vector.broadcast %cst_345 : f32 to vector<4x256xf32>
    %416 = vector.shape_cast %22 : vector<1x256xi1> to vector<1x256xi1>
    %417 = vector.broadcast %416 : vector<1x256xi1> to vector<4x256xi1>
    %418 = arith.select %417, %414, %415 : vector<4x256xi1>, vector<4x256xf32>
    %c3_346 = arith.constant 3 : index
    %c0_347 = arith.constant 0 : index
    %c0_348 = arith.constant 0 : index
    %419 = vector.load %arg4[%c3_346, %c0_347, %c0_348] : memref<9x4x4xf32, #tpu.memory_space<vmem>>, vector<1x4x4xf32>
    %420 = vector.shape_cast %419 : vector<1x4x4xf32> to vector<4x4xf32>
    %cst_349 = arith.constant dense<0.000000e+00> : vector<4x256xf32>
    %421 = tpu.matmul %420, %418, %cst_349 {dimension_numbers = #tpu.dot_dimension_numbers<[1], [0], [0], [1], [0, 0, 1, 1], [], []>} : vector<4x4xf32>, vector<4x256xf32>, vector<4x256xf32> -> vector<4x256xf32>
    %422 = arith.addf %409, %421 : vector<4x256xf32>
    %c3_350 = arith.constant 3 : index
    %c0_351 = arith.constant 0 : index
    %c0_352 = arith.constant 0 : index
    %423 = vector.load %arg5[%c3_350, %c0_351, %c0_352] : memref<9x4x4xf32, #tpu.memory_space<vmem>>, vector<1x4x4xf32>
    %424 = vector.shape_cast %423 : vector<1x4x4xf32> to vector<4x4xf32>
    %cst_353 = arith.constant dense<0.000000e+00> : vector<4x256xf32>
    %425 = tpu.matmul %424, %418, %cst_353 {dimension_numbers = #tpu.dot_dimension_numbers<[1], [0], [0], [1], [0, 0, 1, 1], [], []>} : vector<4x4xf32>, vector<4x256xf32>, vector<4x256xf32> -> vector<4x256xf32>
    %426 = arith.addf %413, %425 : vector<4x256xf32>
    %c0_354 = arith.constant 0 : index
    %c128_355 = arith.constant 128 : index
    %427 = vector.load %arg11[%c0_354, %c128_355] : memref<4x512xf32, #tpu.memory_space<vmem>>, vector<4x256xf32>
    %c4_356 = arith.constant 4 : index
    %c0_357 = arith.constant 0 : index
    %c0_358 = arith.constant 0 : index
    %428 = vector.load %arg4[%c4_356, %c0_357, %c0_358] : memref<9x4x4xf32, #tpu.memory_space<vmem>>, vector<1x4x4xf32>
    %429 = vector.shape_cast %428 : vector<1x4x4xf32> to vector<4x4xf32>
    %cst_359 = arith.constant dense<0.000000e+00> : vector<4x256xf32>
    %430 = tpu.matmul %429, %427, %cst_359 {dimension_numbers = #tpu.dot_dimension_numbers<[1], [0], [0], [1], [0, 0, 1, 1], [], []>} : vector<4x4xf32>, vector<4x256xf32>, vector<4x256xf32> -> vector<4x256xf32>
    %431 = arith.addf %422, %430 : vector<4x256xf32>
    %c4_360 = arith.constant 4 : index
    %c0_361 = arith.constant 0 : index
    %c0_362 = arith.constant 0 : index
    %432 = vector.load %arg5[%c4_360, %c0_361, %c0_362] : memref<9x4x4xf32, #tpu.memory_space<vmem>>, vector<1x4x4xf32>
    %433 = vector.shape_cast %432 : vector<1x4x4xf32> to vector<4x4xf32>
    %cst_363 = arith.constant dense<0.000000e+00> : vector<4x256xf32>
    %434 = tpu.matmul %433, %427, %cst_363 {dimension_numbers = #tpu.dot_dimension_numbers<[1], [0], [0], [1], [0, 0, 1, 1], [], []>} : vector<4x4xf32>, vector<4x256xf32>, vector<4x256xf32> -> vector<4x256xf32>
    %435 = arith.addf %426, %434 : vector<4x256xf32>
    %c0_364 = arith.constant 0 : index
    %c129_365 = arith.constant 129 : index
    %436 = vector.load %arg11[%c0_364, %c129_365] : memref<4x512xf32, #tpu.memory_space<vmem>>, vector<4x256xf32>
    %cst_366 = arith.constant 0.000000e+00 : f32
    %437 = vector.broadcast %cst_366 : f32 to vector<4x256xf32>
    %438 = vector.shape_cast %24 : vector<1x256xi1> to vector<1x256xi1>
    %439 = vector.broadcast %438 : vector<1x256xi1> to vector<4x256xi1>
    %440 = arith.select %439, %436, %437 : vector<4x256xi1>, vector<4x256xf32>
    %c5_367 = arith.constant 5 : index
    %c0_368 = arith.constant 0 : index
    %c0_369 = arith.constant 0 : index
    %441 = vector.load %arg4[%c5_367, %c0_368, %c0_369] : memref<9x4x4xf32, #tpu.memory_space<vmem>>, vector<1x4x4xf32>
    %442 = vector.shape_cast %441 : vector<1x4x4xf32> to vector<4x4xf32>
    %cst_370 = arith.constant dense<0.000000e+00> : vector<4x256xf32>
    %443 = tpu.matmul %442, %440, %cst_370 {dimension_numbers = #tpu.dot_dimension_numbers<[1], [0], [0], [1], [0, 0, 1, 1], [], []>} : vector<4x4xf32>, vector<4x256xf32>, vector<4x256xf32> -> vector<4x256xf32>
    %444 = arith.addf %431, %443 : vector<4x256xf32>
    %c5_371 = arith.constant 5 : index
    %c0_372 = arith.constant 0 : index
    %c0_373 = arith.constant 0 : index
    %445 = vector.load %arg5[%c5_371, %c0_372, %c0_373] : memref<9x4x4xf32, #tpu.memory_space<vmem>>, vector<1x4x4xf32>
    %446 = vector.shape_cast %445 : vector<1x4x4xf32> to vector<4x4xf32>
    %cst_374 = arith.constant dense<0.000000e+00> : vector<4x256xf32>
    %447 = tpu.matmul %446, %440, %cst_374 {dimension_numbers = #tpu.dot_dimension_numbers<[1], [0], [0], [1], [0, 0, 1, 1], [], []>} : vector<4x4xf32>, vector<4x256xf32>, vector<4x256xf32> -> vector<4x256xf32>
    %448 = arith.addf %435, %447 : vector<4x256xf32>
    %c0_375 = arith.constant 0 : index
    %c143_376 = arith.constant 143 : index
    %449 = vector.load %arg11[%c0_375, %c143_376] : memref<4x512xf32, #tpu.memory_space<vmem>>, vector<4x256xf32>
    %cst_377 = arith.constant 0.000000e+00 : f32
    %450 = vector.broadcast %cst_377 : f32 to vector<4x256xf32>
    %451 = vector.shape_cast %22 : vector<1x256xi1> to vector<1x256xi1>
    %452 = vector.broadcast %451 : vector<1x256xi1> to vector<4x256xi1>
    %453 = arith.select %452, %449, %450 : vector<4x256xi1>, vector<4x256xf32>
    %c6_378 = arith.constant 6 : index
    %c0_379 = arith.constant 0 : index
    %c0_380 = arith.constant 0 : index
    %454 = vector.load %arg4[%c6_378, %c0_379, %c0_380] : memref<9x4x4xf32, #tpu.memory_space<vmem>>, vector<1x4x4xf32>
    %455 = vector.shape_cast %454 : vector<1x4x4xf32> to vector<4x4xf32>
    %cst_381 = arith.constant dense<0.000000e+00> : vector<4x256xf32>
    %456 = tpu.matmul %455, %453, %cst_381 {dimension_numbers = #tpu.dot_dimension_numbers<[1], [0], [0], [1], [0, 0, 1, 1], [], []>} : vector<4x4xf32>, vector<4x256xf32>, vector<4x256xf32> -> vector<4x256xf32>
    %457 = arith.addf %444, %456 : vector<4x256xf32>
    %c6_382 = arith.constant 6 : index
    %c0_383 = arith.constant 0 : index
    %c0_384 = arith.constant 0 : index
    %458 = vector.load %arg5[%c6_382, %c0_383, %c0_384] : memref<9x4x4xf32, #tpu.memory_space<vmem>>, vector<1x4x4xf32>
    %459 = vector.shape_cast %458 : vector<1x4x4xf32> to vector<4x4xf32>
    %cst_385 = arith.constant dense<0.000000e+00> : vector<4x256xf32>
    %460 = tpu.matmul %459, %453, %cst_385 {dimension_numbers = #tpu.dot_dimension_numbers<[1], [0], [0], [1], [0, 0, 1, 1], [], []>} : vector<4x4xf32>, vector<4x256xf32>, vector<4x256xf32> -> vector<4x256xf32>
    %461 = arith.addf %448, %460 : vector<4x256xf32>
    %c0_386 = arith.constant 0 : index
    %c144_387 = arith.constant 144 : index
    %462 = vector.load %arg11[%c0_386, %c144_387] : memref<4x512xf32, #tpu.memory_space<vmem>>, vector<4x256xf32>
    %c7_388 = arith.constant 7 : index
    %c0_389 = arith.constant 0 : index
    %c0_390 = arith.constant 0 : index
    %463 = vector.load %arg4[%c7_388, %c0_389, %c0_390] : memref<9x4x4xf32, #tpu.memory_space<vmem>>, vector<1x4x4xf32>
    %464 = vector.shape_cast %463 : vector<1x4x4xf32> to vector<4x4xf32>
    %cst_391 = arith.constant dense<0.000000e+00> : vector<4x256xf32>
    %465 = tpu.matmul %464, %462, %cst_391 {dimension_numbers = #tpu.dot_dimension_numbers<[1], [0], [0], [1], [0, 0, 1, 1], [], []>} : vector<4x4xf32>, vector<4x256xf32>, vector<4x256xf32> -> vector<4x256xf32>
    %466 = arith.addf %457, %465 : vector<4x256xf32>
    %c7_392 = arith.constant 7 : index
    %c0_393 = arith.constant 0 : index
    %c0_394 = arith.constant 0 : index
    %467 = vector.load %arg5[%c7_392, %c0_393, %c0_394] : memref<9x4x4xf32, #tpu.memory_space<vmem>>, vector<1x4x4xf32>
    %468 = vector.shape_cast %467 : vector<1x4x4xf32> to vector<4x4xf32>
    %cst_395 = arith.constant dense<0.000000e+00> : vector<4x256xf32>
    %469 = tpu.matmul %468, %462, %cst_395 {dimension_numbers = #tpu.dot_dimension_numbers<[1], [0], [0], [1], [0, 0, 1, 1], [], []>} : vector<4x4xf32>, vector<4x256xf32>, vector<4x256xf32> -> vector<4x256xf32>
    %470 = arith.addf %461, %469 : vector<4x256xf32>
    %c0_396 = arith.constant 0 : index
    %c145_397 = arith.constant 145 : index
    %471 = vector.load %arg11[%c0_396, %c145_397] : memref<4x512xf32, #tpu.memory_space<vmem>>, vector<4x256xf32>
    %cst_398 = arith.constant 0.000000e+00 : f32
    %472 = vector.broadcast %cst_398 : f32 to vector<4x256xf32>
    %473 = vector.shape_cast %24 : vector<1x256xi1> to vector<1x256xi1>
    %474 = vector.broadcast %473 : vector<1x256xi1> to vector<4x256xi1>
    %475 = arith.select %474, %471, %472 : vector<4x256xi1>, vector<4x256xf32>
    %c8_399 = arith.constant 8 : index
    %c0_400 = arith.constant 0 : index
    %c0_401 = arith.constant 0 : index
    %476 = vector.load %arg4[%c8_399, %c0_400, %c0_401] : memref<9x4x4xf32, #tpu.memory_space<vmem>>, vector<1x4x4xf32>
    %477 = vector.shape_cast %476 : vector<1x4x4xf32> to vector<4x4xf32>
    %cst_402 = arith.constant dense<0.000000e+00> : vector<4x256xf32>
    %478 = tpu.matmul %477, %475, %cst_402 {dimension_numbers = #tpu.dot_dimension_numbers<[1], [0], [0], [1], [0, 0, 1, 1], [], []>} : vector<4x4xf32>, vector<4x256xf32>, vector<4x256xf32> -> vector<4x256xf32>
    %479 = arith.addf %466, %478 : vector<4x256xf32>
    %c8_403 = arith.constant 8 : index
    %c0_404 = arith.constant 0 : index
    %c0_405 = arith.constant 0 : index
    %480 = vector.load %arg5[%c8_403, %c0_404, %c0_405] : memref<9x4x4xf32, #tpu.memory_space<vmem>>, vector<1x4x4xf32>
    %481 = vector.shape_cast %480 : vector<1x4x4xf32> to vector<4x4xf32>
    %cst_406 = arith.constant dense<0.000000e+00> : vector<4x256xf32>
    %482 = tpu.matmul %481, %475, %cst_406 {dimension_numbers = #tpu.dot_dimension_numbers<[1], [0], [0], [1], [0, 0, 1, 1], [], []>} : vector<4x4xf32>, vector<4x256xf32>, vector<4x256xf32> -> vector<4x256xf32>
    %483 = arith.addf %470, %482 : vector<4x256xf32>
    %484 = arith.maximumf %479, %483 : vector<4x256xf32>
    %485 = arith.addf %484, %258 : vector<4x256xf32>
    %c1_407 = arith.constant 1 : index
    %c0_408 = arith.constant 0 : index
    %c0_409 = arith.constant 0 : index
    %486 = vector.load %arg10[%c1_407, %c0_408, %c0_409] : memref<2x4x256xf32, #tpu.memory_space<vmem>>, vector<1x4x256xf32>
    %487 = vector.shape_cast %486 : vector<1x4x256xf32> to vector<4x256xf32>
    %488 = vector.shape_cast %485 : vector<4x256xf32> to vector<1x4x256xf32>
    tpu.vector_store %arg10[%c1_407, %c0_408, %c0_409], %488 {strides = array<i32>} : memref<2x4x256xf32, #tpu.memory_space<vmem>>, vector<1x4x256xf32>,
    return
  }
  func.func @transform_0(%arg0: i32) -> (i32, i32, i32) {
    %c0_i32 = arith.constant 0 : i32
    %c0_i32_0 = arith.constant 0 : i32
    %c0_i32_1 = arith.constant 0 : i32
    return %arg0, %c0_i32, %c0_i32_0 : i32, i32, i32
  }
  func.func @transform_1(%arg0: i32) -> (i32, i32, i32) {
    %c0_i32 = arith.constant 0 : i32
    %c0_i32_0 = arith.constant 0 : i32
    %c0_i32_1 = arith.constant 0 : i32
    %c0_i32_2 = arith.constant 0 : i32
    return %c0_i32, %c0_i32_0, %c0_i32_1 : i32, i32, i32
  }
  func.func @transform_2(%arg0: i32) -> (i32, i32, i32) {
    %c0_i32 = arith.constant 0 : i32
    %c0_i32_0 = arith.constant 0 : i32
    %c0_i32_1 = arith.constant 0 : i32
    %c0_i32_2 = arith.constant 0 : i32
    return %c0_i32, %c0_i32_0, %c0_i32_1 : i32, i32, i32
  }
  func.func @transform_3(%arg0: i32) -> (i32, i32, i32) {
    %c0_i32 = arith.constant 0 : i32
    %c0_i32_0 = arith.constant 0 : i32
    %c0_i32_1 = arith.constant 0 : i32
    %c0_i32_2 = arith.constant 0 : i32
    return %c0_i32, %c0_i32_0, %c0_i32_1 : i32, i32, i32
  }
  func.func @transform_4(%arg0: i32) -> (i32, i32, i32) {
    %c0_i32 = arith.constant 0 : i32
    %c0_i32_0 = arith.constant 0 : i32
    %c0_i32_1 = arith.constant 0 : i32
    %c0_i32_2 = arith.constant 0 : i32
    return %c0_i32, %c0_i32_0, %c0_i32_1 : i32, i32, i32
  }
  func.func @transform_5(%arg0: i32) -> (i32, i32) {
    %c0_i32 = arith.constant 0 : i32
    %c0_i32_0 = arith.constant 0 : i32
    %c0_i32_1 = arith.constant 0 : i32
    return %c0_i32, %c0_i32_0 : i32, i32
  }
  func.func @transform_6(%arg0: i32) -> (i32, i32) {
    %c0_i32 = arith.constant 0 : i32
    %c0_i32_0 = arith.constant 0 : i32
    %c0_i32_1 = arith.constant 0 : i32
    return %c0_i32, %c0_i32_0 : i32, i32
  }
  func.func @transform_7(%arg0: i32) -> (i32, i32) {
    %c0_i32 = arith.constant 0 : i32
    %c0_i32_0 = arith.constant 0 : i32
    %c0_i32_1 = arith.constant 0 : i32
    return %c0_i32, %c0_i32_0 : i32, i32
  }
  func.func @transform_8(%arg0: i32) -> (i32, i32) {
    %c0_i32 = arith.constant 0 : i32
    %c0_i32_0 = arith.constant 0 : i32
    %c0_i32_1 = arith.constant 0 : i32
    return %c0_i32, %c0_i32_0 : i32, i32
  }
  func.func @transform_9(%arg0: i32) -> (i32, i32, i32) {
    %c0_i32 = arith.constant 0 : i32
    %c0_i32_0 = arith.constant 0 : i32
    %c0_i32_1 = arith.constant 0 : i32
    return %arg0, %c0_i32, %c0_i32_0 : i32, i32, i32
  }
}

</mosaic_0001>

<llo_original>
// kernel: resblock_forward.1
$region0: #{resblock_forward.1}
  #allocation0 [shape = 'u32[]', space=smem, size = 0x4, offset = 0x4, fixed_abs, tag = 'smem constant byte address 0x4 - core index']
  #allocation1 [shape = 'u32[144,128]{1,0:T(1,128)}', space=vmem, size = 0x12000, scoped, tag = 'internal scratch']
  #allocation2 [shape = 'f32[4,512]{1,0:T(4,128)}', space=vmem, size = 0x2000, scoped, tag = 'scratch operand']
  %s0 = inlined_call_operand.vmem [shape: f32[2,4,256], index: 0, kind: input, shape index: {}]
  %s1 = inlined_call_operand.vmem [shape: f32[9,4,4], index: 1, kind: input, shape index: {}]
  %s2 = inlined_call_operand.vmem [shape: f32[9,4,4], index: 2, kind: input, shape index: {}]
  %s3 = inlined_call_operand.vmem [shape: f32[9,4,4], index: 3, kind: input, shape index: {}]
  %s4 = inlined_call_operand.vmem [shape: f32[9,4,4], index: 4, kind: input, shape index: {}]
  %s5 = inlined_call_operand.vmem [shape: f32[4,1], index: 5, kind: input, shape index: {}]
  %s6 = inlined_call_operand.vmem [shape: f32[4,1], index: 6, kind: input, shape index: {}]
  %s7 = inlined_call_operand.vmem [shape: f32[4,1], index: 7, kind: input, shape index: {}]
  %s8 = inlined_call_operand.vmem [shape: f32[4,1], index: 8, kind: input, shape index: {}]
  %s9 = inlined_call_operand.vmem [shape: f32[2,4,256], index: 9, kind: output, shape index: {}]
  %s10 = sld [smem:[#allocation0]]
  $region46: #{resblock_forward.1} parent=0
    _
  %s12 = ssub.s32 1, %s10
  %s13 = scalar_select 0, %s12, %s10
  // Predicated region
  $region2: #{resblock_forward.1} parent=0 // pred_check
    _
  $region3: #{resblock_forward.1} parent=0 // pred_check_branch
    %15 = sbr.rel (0) target = $region5
  $region4: #{resblock_forward.1} parent=0 // pred_region
    _
  $region5: #{resblock_forward.1} parent=0 // pred_fallthru
    _
  // Predicated region
  $region6: #{resblock_forward.1} parent=0 // pred_check
    _
  $region7: #{resblock_forward.1} parent=0 // pred_check_branch
    %17 = sbr.rel (0) target = $region9
  $region8: #{resblock_forward.1} parent=0 // pred_region
    _
  $region9: #{resblock_forward.1} parent=0 // pred_fallthru
    _
  // Predicated region
  $region10: #{resblock_forward.1} parent=0 // pred_check
    _
  $region11: #{resblock_forward.1} parent=0 // pred_check_branch
    %19 = sbr.rel (0) target = $region13
  $region12: #{resblock_forward.1} parent=0 // pred_region
    _
  $region13: #{resblock_forward.1} parent=0 // pred_fallthru
    _
  // Predicated region
  $region14: #{resblock_forward.1} parent=0 // pred_check
    _
  $region15: #{resblock_forward.1} parent=0 // pred_check_branch
    %21 = sbr.rel (0) target = $region17
  $region16: #{resblock_forward.1} parent=0 // pred_region
    _
  $region17: #{resblock_forward.1} parent=0 // pred_fallthru
    _
  // Predicated region
  $region18: #{resblock_forward.1} parent=0 // pred_check
    _
  $region19: #{resblock_forward.1} parent=0 // pred_check_branch
    %23 = sbr.rel (0) target = $region21
  $region20: #{resblock_forward.1} parent=0 // pred_region
    _
  $region21: #{resblock_forward.1} parent=0 // pred_fallthru
    _
  // Predicated region
  $region22: #{resblock_forward.1} parent=0 // pred_check
    _
  $region23: #{resblock_forward.1} parent=0 // pred_check_branch
    %25 = sbr.rel (0) target = $region25
  $region24: #{resblock_forward.1} parent=0 // pred_region
    _
  $region25: #{resblock_forward.1} parent=0 // pred_fallthru
    _
  // Predicated region
  $region26: #{resblock_forward.1} parent=0 // pred_check
    _
  $region27: #{resblock_forward.1} parent=0 // pred_check_branch
    %27 = sbr.rel (0) target = $region29
  $region28: #{resblock_forward.1} parent=0 // pred_region
    _
  $region29: #{resblock_forward.1} parent=0 // pred_fallthru
    _
  // Predicated region
  $region30: #{resblock_forward.1} parent=0 // pred_check
    _
  $region31: #{resblock_forward.1} parent=0 // pred_check_branch
    %29 = sbr.rel (0) target = $region33
  $region32: #{resblock_forward.1} parent=0 // pred_region
    _
  $region33: #{resblock_forward.1} parent=0 // pred_fallthru
    _
  // Predicated region
  $region34: #{resblock_forward.1} parent=0 // pred_check
    _
  $region35: #{resblock_forward.1} parent=0 // pred_check_branch
    %31 = sbr.rel (0) target = $region37
  $region36: #{resblock_forward.1} parent=0 // pred_region
    _
  $region37: #{resblock_forward.1} parent=0 // pred_fallthru
    _
  %32 = vst [vmem:[#allocation2] sm:$0xf] 0.0
  %33 = vst [vmem:[#allocation2 + $0xc] sm:$0xf] 0.0
  %v34 = vlaneseq
  %v35 = vand.u32 %v34, 127
  %v36 = vadd.s32 %v35, 128
  %vm37 = vcmp.lt.s32.totalorder %v35, 0
  %v38 = vsub.s32 0, %v35
  %v39 = vsel %vm37, %v38, %v35
  %v40 = vshrl.u32 %v39, 4
  %v41 = vand.u32 %v39, 15
  %v42 = vsub.s32 0, %v41
  %v43 = vsel %vm37, %v42, %v41
  %vm44 = vcmp.lt.s32.totalorder %v36, 0
  %v45 = vsub.s32 0, %v36
  %v46 = vsel %vm44, %v45, %v36
  %v47 = vshrl.u32 %v46, 4
  %v48 = vand.u32 %v46, 15
  %v49 = vsub.s32 0, %v48
  %v50 = vsel %vm44, %v49, %v48
  %vm51 = vcmp.ne.s32.totalorder %v43, 0
  %vm52 = vcmp.ne.s32.totalorder %v50, 0
  %vm53 = vcmp.lt.s32.totalorder %v43, 0
  %vm54 = vcmp.lt.s32.totalorder %v50, 0
  %vm55 = vmand %vm53, %vm51
  %vm56 = vmand %vm54, %vm52
  %v57 = vadd.s32 %v43, 16
  %v58 = vadd.s32 %v50, 16
  %v59 = vsel %vm55, %v57, %v43
  %v60 = vsel %vm56, %v58, %v50
  %vm61 = vcmp.ne.s32.totalorder %v59, 0
  %vm62 = vcmp.ne.s32.totalorder %v60, 0
  %vm63 = vcmp.ne.s32.totalorder %v59, 15
  %vm64 = vcmp.ne.s32.totalorder %v60, 15
  %v65 = vld [vmem:[%s0] sm:$0xff]
  %66 = vst [vmem:[#allocation2 + $0x4] sm:$0xff] %v65
  %v67 = vld [vmem:[%s5] sm:$0xf]
  %69 = vset.pattern.permute.xlu0 0
  %70 = vperm.xlu0 %69, %v67
  %v71 = vpop.permute.xlu0 %70
  %v73 = vld [vmem:[%s6] sm:$0xf]
  %75 = vset.pattern.permute.xlu0 0
  %76 = vperm.xlu0 %75, %v73
  %v77 = vpop.permute.xlu0 %76
  %v79 = vld [vmem:[#allocation2] sm:$0xff]
  %v80 = vld [vmem:[#allocation2 + $0x8] sm:$0xf]
  %v81 = vsel %vm61, 1, 0
  %v82 = vsel %vm62, 1, 0
  %vm83 = vcmp.eq.s32.totalorder %v81, 1
  %vm84 = vcmp.eq.s32.totalorder %v82, 1
  %v87 = vcombine.high %v79, %v79
  %88 = vrot.lane.b32.xlu0 %v79, 17
  %v89 = vpop.permute.xlu0 %88
  %90 = vrot.lane.b32.xlu0 %v87, 17
  %v91 = vpop.permute.xlu0 %90
  %92 = vrot.lane.b32.xlu0 %v80, 17
  %v93 = vpop.permute.xlu0 %92
  %vm94 = vcmask 138240
  %v95 = vsel %vm94, %v89, %v91
  %v96 = vsel %vm94, %v91, %v93
  %v99 = vsel %vm83, %v95, 0.0
  %v100 = vsel %vm84, %v96, 0.0
  %v101 = vld [vmem:[%s1] sm:$0xf]
  %vm102 = vcmask 31744
  %v104 = vsel %vm102, %v101, 0
  %vm106 = vcmask 1043456
  %v108 = vsel %vm106, %v99, 0
  %v111 = vsel %vm106, %v100, 0
  %113 = vmatprep.subr.mxu0 %v111
  %114 = vmatpush1.msra.mxu0 %v108
  %115 = vmatprep.subr.mxu0 0.0
  %116 = vmatpush1.msra.mxu0 0.0
  %117 = vmatprep.subr.mxu0 0.0
  %118 = vmatpush1.msra.mxu0 0.0
  %119 = vmatprep.subr.mxu0 0.0
  %120 = vmatpush1.msra.mxu0 0.0
  %121 = vmatprep.subr.mxu0 0.0
  %122 = vmatpush1.msra.mxu0 0.0
  %123 = vmatprep.subr.mxu0 0.0
  %124 = vmatpush1.msra.mxu0 0.0
  %125 = vmatprep.subr.mxu0 0.0
  %126 = vmatpush1.msra.mxu0 0.0
  %127 = vmatprep.subr.mxu0 0.0
  %128 = vmatpush1.msra.mxu0 0.0
  %129 = vmatprep.subr.mxu0 0.0
  %130 = vmatpush1.msra.mxu0 0.0
  %131 = vmatprep.subr.mxu0 0.0
  %132 = vmatpush1.msra.mxu0 0.0
  %133 = vmatprep.subr.mxu0 0.0
  %134 = vmatpush1.msra.mxu0 0.0
  %135 = vmatprep.subr.mxu0 0.0
  %136 = vmatpush1.msra.mxu0 0.0
  %137 = vmatprep.subr.mxu0 0.0
  %138 = vmatpush1.msra.mxu0 0.0
  %139 = vmatprep.subr.mxu0 0.0
  %140 = vmatpush1.msra.mxu0 0.0
  %141 = vmatprep.subr.mxu0 0.0
  %142 = vmatpush1.msra.mxu0 0.0
  %143 = vmatprep.subr.mxu0 0.0
  %144 = vmatpush1.msra.mxu0 0.0
  %145 = vmatprep.subr.mxu0 0.0
  %146 = vmatpush1.msra.mxu0 0.0
  %147 = vmatprep.subr.mxu0 0.0
  %148 = vmatpush1.msra.mxu0 0.0
  %149 = vmatprep.subr.mxu0 0.0
  %150 = vmatpush1.msra.mxu0 0.0
  %151 = vmatprep.subr.mxu0 0.0
  %152 = vmatpush1.msra.mxu0 0.0
  %153 = vmatprep.subr.mxu0 0.0
  %154 = vmatpush1.msra.mxu0 0.0
  %155 = vmatprep.subr.mxu0 0.0
  %156 = vmatpush1.msra.mxu0 0.0
  %157 = vmatprep.subr.mxu0 0.0
  %158 = vmatpush1.msra.mxu0 0.0
  %159 = vmatprep.subr.mxu0 0.0
  %160 = vmatpush1.msra.mxu0 0.0
  %161 = vmatprep.subr.mxu0 0.0
  %162 = vmatpush1.msra.mxu0 0.0
  %163 = vmatprep.subr.mxu0 0.0
  %164 = vmatpush1.msra.mxu0 0.0
  %165 = vmatprep.subr.mxu0 0.0
  %166 = vmatpush1.msra.mxu0 0.0
  %167 = vmatprep.subr.mxu0 0.0
  %168 = vmatpush1.msra.mxu0 0.0
  %169 = vmatprep.subr.mxu0 0.0
  %170 = vmatpush1.msra.mxu0 0.0
  %171 = vmatprep.subr.mxu0 0.0
  %172 = vmatpush1.msra.mxu0 0.0
  %173 = vmatprep.subr.mxu0 0.0
  %174 = vmatpush1.msra.mxu0 0.0
  %175 = vmatprep.subr.mxu0 0.0
  %176 = vmatpush1.msra.mxu0 0.0
  %177 = vmatprep.mubr.f32.mxu0 0.0
  %178 = vmatmul.mubr.f32.gmra.mrb[0].mxu0 %v104
  %v179 = vpop.f32.mrb[0].mxu0
  %v180 = vadd.f32 0.0, %v179
  %v181 = vpop.f32.mrb[0].mxu0
  %v182 = vadd.f32 0.0, %v181
  %183 = vdwg.mxu0
  %v184 = vadd.f32 %v71, %v180
  %v185 = vadd.f32 %v71, %v182
  %v186 = vld [vmem:[%s2] sm:$0xf]
  %v188 = vsel %vm102, %v186, 0
  %190 = vmatprep.subr.mxu0 %v111
  %191 = vmatpush1.msra.mxu0 %v108
  %192 = vmatprep.subr.mxu0 0.0
  %193 = vmatpush1.msra.mxu0 0.0
  %194 = vmatprep.subr.mxu0 0.0
  %195 = vmatpush1.msra.mxu0 0.0
  %196 = vmatprep.subr.mxu0 0.0
  %197 = vmatpush1.msra.mxu0 0.0
  %198 = vmatprep.subr.mxu0 0.0
  %199 = vmatpush1.msra.mxu0 0.0
  %200 = vmatprep.subr.mxu0 0.0
  %201 = vmatpush1.msra.mxu0 0.0
  %202 = vmatprep.subr.mxu0 0.0
  %203 = vmatpush1.msra.mxu0 0.0
  %204 = vmatprep.subr.mxu0 0.0
  %205 = vmatpush1.msra.mxu0 0.0
  %206 = vmatprep.subr.mxu0 0.0
  %207 = vmatpush1.msra.mxu0 0.0
  %208 = vmatprep.subr.mxu0 0.0
  %209 = vmatpush1.msra.mxu0 0.0
  %210 = vmatprep.subr.mxu0 0.0
  %211 = vmatpush1.msra.mxu0 0.0
  %212 = vmatprep.subr.mxu0 0.0
  %213 = vmatpush1.msra.mxu0 0.0
  %214 = vmatprep.subr.mxu0 0.0
  %215 = vmatpush1.msra.mxu0 0.0
  %216 = vmatprep.subr.mxu0 0.0
  %217 = vmatpush1.msra.mxu0 0.0
  %218 = vmatprep.subr.mxu0 0.0
  %219 = vmatpush1.msra.mxu0 0.0
  %220 = vmatprep.subr.mxu0 0.0
  %221 = vmatpush1.msra.mxu0 0.0
  %222 = vmatprep.subr.mxu0 0.0
  %223 = vmatpush1.msra.mxu0 0.0
  %224 = vmatprep.subr.mxu0 0.0
  %225 = vmatpush1.msra.mxu0 0.0
  %226 = vmatprep.subr.mxu0 0.0
  %227 = vmatpush1.msra.mxu0 0.0
  %228 = vmatprep.subr.mxu0 0.0
  %229 = vmatpush1.msra.mxu0 0.0
  %230 = vmatprep.subr.mxu0 0.0
  %231 = vmatpush1.msra.mxu0 0.0
  %232 = vmatprep.subr.mxu0 0.0
  %233 = vmatpush1.msra.mxu0 0.0
  %234 = vmatprep.subr.mxu0 0.0
  %235 = vmatpush1.msra.mxu0 0.0
  %236 = vmatprep.subr.mxu0 0.0
  %237 = vmatpush1.msra.mxu0 0.0
  %238 = vmatprep.subr.mxu0 0.0
  %239 = vmatpush1.msra.mxu0 0.0
  %240 = vmatprep.subr.mxu0 0.0
  %241 = vmatpush1.msra.mxu0 0.0
  %242 = vmatprep.subr.mxu0 0.0
  %243 = vmatpush1.msra.mxu0 0.0
  %244 = vmatprep.subr.mxu0 0.0
  %245 = vmatpush1.msra.mxu0 0.0
  %246 = vmatprep.subr.mxu0 0.0
  %247 = vmatpush1.msra.mxu0 0.0
  %248 = vmatprep.subr.mxu0 0.0
  %249 = vmatpush1.msra.mxu0 0.0
  %250 = vmatprep.subr.mxu0 0.0
  %251 = vmatpush1.msra.mxu0 0.0
  %252 = vmatprep.subr.mxu0 0.0
  %253 = vmatpush1.msra.mxu0 0.0
  %254 = vmatprep.mubr.f32.mxu0 0.0
  %255 = vmatmul.mubr.f32.gmra.mrb[0].mxu0 %v188
  %v256 = vpop.f32.mrb[0].mxu0
  %v257 = vadd.f32 0.0, %v256
  %v258 = vpop.f32.mrb[0].mxu0
  %v259 = vadd.f32 0.0, %v258
  %260 = vdwg.mxu0
  %v261 = vadd.f32 %v77, %v257
  %v262 = vadd.f32 %v77, %v259
  %v263 = vld [vmem:[#allocation2] sm:$0xff]
  %v264 = vld [vmem:[#allocation2 + $0x8] sm:$0xf]
  %s265 = scalar_lea.vmem %s1, 4
  %v266 = vld [vmem:[%s265] sm:$0xf]
  %v269 = vcombine.high %v263, %v263
  %270 = vrot.lane.b32.xlu0 %v263, 16
  %v271 = vpop.permute.xlu0 %270
  %272 = vrot.lane.b32.xlu0 %v269, 16
  %v273 = vpop.permute.xlu0 %272
  %274 = vrot.lane.b32.xlu0 %v264, 16
  %v275 = vpop.permute.xlu0 %274
  %vm276 = vcmask 130048
  %v277 = vsel %vm276, %v271, %v273
  %v278 = vsel %vm276, %v273, %v275
  %v280 = vsel %vm102, %v266, 0
  %v282 = vsel %vm106, %v277, 0
  %v284 = vsel %vm106, %v278, 0
  %286 = vmatprep.subr.mxu0 %v284
  %287 = vmatpush1.msra.mxu0 %v282
  %288 = vmatprep.subr.mxu0 0.0
  %289 = vmatpush1.msra.mxu0 0.0
  %290 = vmatprep.subr.mxu0 0.0
  %291 = vmatpush1.msra.mxu0 0.0
  %292 = vmatprep.subr.mxu0 0.0
  %293 = vmatpush1.msra.mxu0 0.0
  %294 = vmatprep.subr.mxu0 0.0
  %295 = vmatpush1.msra.mxu0 0.0
  %296 = vmatprep.subr.mxu0 0.0
  %297 = vmatpush1.msra.mxu0 0.0
  %298 = vmatprep.subr.mxu0 0.0
  %299 = vmatpush1.msra.mxu0 0.0
  %300 = vmatprep.subr.mxu0 0.0
  %301 = vmatpush1.msra.mxu0 0.0
  %302 = vmatprep.subr.mxu0 0.0
  %303 = vmatpush1.msra.mxu0 0.0
  %304 = vmatprep.subr.mxu0 0.0
  %305 = vmatpush1.msra.mxu0 0.0
  %306 = vmatprep.subr.mxu0 0.0
  %307 = vmatpush1.msra.mxu0 0.0
  %308 = vmatprep.subr.mxu0 0.0
  %309 = vmatpush1.msra.mxu0 0.0
  %310 = vmatprep.subr.mxu0 0.0
  %311 = vmatpush1.msra.mxu0 0.0
  %312 = vmatprep.subr.mxu0 0.0
  %313 = vmatpush1.msra.mxu0 0.0
  %314 = vmatprep.subr.mxu0 0.0
  %315 = vmatpush1.msra.mxu0 0.0
  %316 = vmatprep.subr.mxu0 0.0
  %317 = vmatpush1.msra.mxu0 0.0
  %318 = vmatprep.subr.mxu0 0.0
  %319 = vmatpush1.msra.mxu0 0.0
  %320 = vmatprep.subr.mxu0 0.0
  %321 = vmatpush1.msra.mxu0 0.0
  %322 = vmatprep.subr.mxu0 0.0
  %323 = vmatpush1.msra.mxu0 0.0
  %324 = vmatprep.subr.mxu0 0.0
  %325 = vmatpush1.msra.mxu0 0.0
  %326 = vmatprep.subr.mxu0 0.0
  %327 = vmatpush1.msra.mxu0 0.0
  %328 = vmatprep.subr.mxu0 0.0
  %329 = vmatpush1.msra.mxu0 0.0
  %330 = vmatprep.subr.mxu0 0.0
  %331 = vmatpush1.msra.mxu0 0.0
  %332 = vmatprep.subr.mxu0 0.0
  %333 = vmatpush1.msra.mxu0 0.0
  %334 = vmatprep.subr.mxu0 0.0
  %335 = vmatpush1.msra.mxu0 0.0
  %336 = vmatprep.subr.mxu0 0.0
  %337 = vmatpush1.msra.mxu0 0.0
  %338 = vmatprep.subr.mxu0 0.0
  %339 = vmatpush1.msra.mxu0 0.0
  %340 = vmatprep.subr.mxu0 0.0
  %341 = vmatpush1.msra.mxu0 0.0
  %342 = vmatprep.subr.mxu0 0.0
  %343 = vmatpush1.msra.mxu0 0.0
  %344 = vmatprep.subr.mxu0 0.0
  %345 = vmatpush1.msra.mxu0 0.0
  %346 = vmatprep.subr.mxu0 0.0
  %347 = vmatpush1.msra.mxu0 0.0
  %348 = vmatprep.subr.mxu0 0.0
  %349 = vmatpush1.msra.mxu0 0.0
  %350 = vmatprep.mubr.f32.mxu0 0.0
  %351 = vmatmul.mubr.f32.gmra.mrb[0].mxu0 %v280
  %v352 = vpop.f32.mrb[0].mxu0
  %v353 = vadd.f32 0.0, %v352
  %v354 = vpop.f32.mrb[0].mxu0
  %v355 = vadd.f32 0.0, %v354
  %356 = vdwg.mxu0
  %v357 = vadd.f32 %v184, %v353
  %v358 = vadd.f32 %v185, %v355
  %s359 = scalar_lea.vmem %s2, 4
  %v360 = vld [vmem:[%s359] sm:$0xf]
  %v362 = vsel %vm102, %v360, 0
  %364 = vmatprep.subr.mxu0 %v284
  %365 = vmatpush1.msra.mxu0 %v282
  %366 = vmatprep.subr.mxu0 0.0
  %367 = vmatpush1.msra.mxu0 0.0
  %368 = vmatprep.subr.mxu0 0.0
  %369 = vmatpush1.msra.mxu0 0.0
  %370 = vmatprep.subr.mxu0 0.0
  %371 = vmatpush1.msra.mxu0 0.0
  %372 = vmatprep.subr.mxu0 0.0
  %373 = vmatpush1.msra.mxu0 0.0
  %374 = vmatprep.subr.mxu0 0.0
  %375 = vmatpush1.msra.mxu0 0.0
  %376 = vmatprep.subr.mxu0 0.0
  %377 = vmatpush1.msra.mxu0 0.0
  %378 = vmatprep.subr.mxu0 0.0
  %379 = vmatpush1.msra.mxu0 0.0
  %380 = vmatprep.subr.mxu0 0.0
  %381 = vmatpush1.msra.mxu0 0.0
  %382 = vmatprep.subr.mxu0 0.0
  %383 = vmatpush1.msra.mxu0 0.0
  %384 = vmatprep.subr.mxu0 0.0
  %385 = vmatpush1.msra.mxu0 0.0
  %386 = vmatprep.subr.mxu0 0.0
  %387 = vmatpush1.msra.mxu0 0.0
  %388 = vmatprep.subr.mxu0 0.0
  %389 = vmatpush1.msra.mxu0 0.0
  %390 = vmatprep.subr.mxu0 0.0
  %391 = vmatpush1.msra.mxu0 0.0
  %392 = vmatprep.subr.mxu0 0.0
  %393 = vmatpush1.msra.mxu0 0.0
  %394 = vmatprep.subr.mxu0 0.0
  %395 = vmatpush1.msra.mxu0 0.0
  %396 = vmatprep.subr.mxu0 0.0
  %397 = vmatpush1.msra.mxu0 0.0
  %398 = vmatprep.subr.mxu0 0.0
  %399 = vmatpush1.msra.mxu0 0.0
  %400 = vmatprep.subr.mxu0 0.0
  %401 = vmatpush1.msra.mxu0 0.0
  %402 = vmatprep.subr.mxu0 0.0
  %403 = vmatpush1.msra.mxu0 0.0
  %404 = vmatprep.subr.mxu0 0.0
  %405 = vmatpush1.msra.mxu0 0.0
  %406 = vmatprep.subr.mxu0 0.0
  %407 = vmatpush1.msra.mxu0 0.0
  %408 = vmatprep.subr.mxu0 0.0
  %409 = vmatpush1.msra.mxu0 0.0
  %410 = vmatprep.subr.mxu0 0.0
  %411 = vmatpush1.msra.mxu0 0.0
  %412 = vmatprep.subr.mxu0 0.0
  %413 = vmatpush1.msra.mxu0 0.0
  %414 = vmatprep.subr.mxu0 0.0
  %415 = vmatpush1.msra.mxu0 0.0
  %416 = vmatprep.subr.mxu0 0.0
  %417 = vmatpush1.msra.mxu0 0.0
  %418 = vmatprep.subr.mxu0 0.0
  %419 = vmatpush1.msra.mxu0 0.0
  %420 = vmatprep.subr.mxu0 0.0
  %421 = vmatpush1.msra.mxu0 0.0
  %422 = vmatprep.subr.mxu0 0.0
  %423 = vmatpush1.msra.mxu0 0.0
  %424 = vmatprep.subr.mxu0 0.0
  %425 = vmatpush1.msra.mxu0 0.0
  %426 = vmatprep.subr.mxu0 0.0
  %427 = vmatpush1.msra.mxu0 0.0
  %428 = vmatprep.mubr.f32.mxu0 0.0
  %429 = vmatmul.mubr.f32.gmra.mrb[0].mxu0 %v362
  %v430 = vpop.f32.mrb[0].mxu0
  %v431 = vadd.f32 0.0, %v430
  %v432 = vpop.f32.mrb[0].mxu0
  %v433 = vadd.f32 0.0, %v432
  %434 = vdwg.mxu0
  %v435 = vadd.f32 %v261, %v431
  %v436 = vadd.f32 %v262, %v433
  %v437 = vld [vmem:[#allocation2] sm:$0xff]
  %v438 = vld [vmem:[#allocation2 + $0x8] sm:$0xf]
  %v439 = vsel %vm63, 1, 0
  %v440 = vsel %vm64, 1, 0
  %vm441 = vcmp.eq.s32.totalorder %v439, 1
  %vm442 = vcmp.eq.s32.totalorder %v440, 1
  %v445 = vcombine.high %v437, %v437
  %446 = vrot.lane.b32.xlu0 %v437, 15
  %v447 = vpop.permute.xlu0 %446
  %448 = vrot.lane.b32.xlu0 %v445, 15
  %v449 = vpop.permute.xlu0 %448
  %450 = vrot.lane.b32.xlu0 %v438, 15
  %v451 = vpop.permute.xlu0 %450
  %vm452 = vcmask 121856
  %v453 = vsel %vm452, %v447, %v449
  %v454 = vsel %vm452, %v449, %v451
  %v457 = vsel %vm441, %v453, 0.0
  %v458 = vsel %vm442, %v454, 0.0
  %s459 = scalar_lea.vmem %s1, 8
  %v460 = vld [vmem:[%s459] sm:$0xf]
  %v462 = vsel %vm102, %v460, 0
  %v465 = vsel %vm106, %v457, 0
  %v468 = vsel %vm106, %v458, 0
  %470 = vmatprep.subr.mxu0 %v468
  %471 = vmatpush1.msra.mxu0 %v465
  %472 = vmatprep.subr.mxu0 0.0
  %473 = vmatpush1.msra.mxu0 0.0
  %474 = vmatprep.subr.mxu0 0.0
  %475 = vmatpush1.msra.mxu0 0.0
  %476 = vmatprep.subr.mxu0 0.0
  %477 = vmatpush1.msra.mxu0 0.0
  %478 = vmatprep.subr.mxu0 0.0
  %479 = vmatpush1.msra.mxu0 0.0
  %480 = vmatprep.subr.mxu0 0.0
  %481 = vmatpush1.msra.mxu0 0.0
  %482 = vmatprep.subr.mxu0 0.0
  %483 = vmatpush1.msra.mxu0 0.0
  %484 = vmatprep.subr.mxu0 0.0
  %485 = vmatpush1.msra.mxu0 0.0
  %486 = vmatprep.subr.mxu0 0.0
  %487 = vmatpush1.msra.mxu0 0.0
  %488 = vmatprep.subr.mxu0 0.0
  %489 = vmatpush1.msra.mxu0 0.0
  %490 = vmatprep.subr.mxu0 0.0
  %491 = vmatpush1.msra.mxu0 0.0
  %492 = vmatprep.subr.mxu0 0.0
  %493 = vmatpush1.msra.mxu0 0.0
  %494 = vmatprep.subr.mxu0 0.0
  %495 = vmatpush1.msra.mxu0 0.0
  %496 = vmatprep.subr.mxu0 0.0
  %497 = vmatpush1.msra.mxu0 0.0
  %498 = vmatprep.subr.mxu0 0.0
  %499 = vmatpush1.msra.mxu0 0.0
  %500 = vmatprep.subr.mxu0 0.0
  %501 = vmatpush1.msra.mxu0 0.0
  %502 = vmatprep.subr.mxu0 0.0
  %503 = vmatpush1.msra.mxu0 0.0
  %504 = vmatprep.subr.mxu0 0.0
  %505 = vmatpush1.msra.mxu0 0.0
  %506 = vmatprep.subr.mxu0 0.0
  %507 = vmatpush1.msra.mxu0 0.0
  %508 = vmatprep.subr.mxu0 0.0
  %509 = vmatpush1.msra.mxu0 0.0
  %510 = vmatprep.subr.mxu0 0.0
  %511 = vmatpush1.msra.mxu0 0.0
  %512 = vmatprep.subr.mxu0 0.0
  %513 = vmatpush1.msra.mxu0 0.0
  %514 = vmatprep.subr.mxu0 0.0
  %515 = vmatpush1.msra.mxu0 0.0
  %516 = vmatprep.subr.mxu0 0.0
  %517 = vmatpush1.msra.mxu0 0.0
  %518 = vmatprep.subr.mxu0 0.0
  %519 = vmatpush1.msra.mxu0 0.0
  %520 = vmatprep.subr.mxu0 0.0
  %521 = vmatpush1.msra.mxu0 0.0
  %522 = vmatprep.subr.mxu0 0.0
  %523 = vmatpush1.msra.mxu0 0.0
  %524 = vmatprep.subr.mxu0 0.0
  %525 = vmatpush1.msra.mxu0 0.0
  %526 = vmatprep.subr.mxu0 0.0
  %527 = vmatpush1.msra.mxu0 0.0
  %528 = vmatprep.subr.mxu0 0.0
  %529 = vmatpush1.msra.mxu0 0.0
  %530 = vmatprep.subr.mxu0 0.0
  %531 = vmatpush1.msra.mxu0 0.0
  %532 = vmatprep.subr.mxu0 0.0
  %533 = vmatpush1.msra.mxu0 0.0
  %534 = vmatprep.mubr.f32.mxu0 0.0
  %535 = vmatmul.mubr.f32.gmra.mrb[0].mxu0 %v462
  %v536 = vpop.f32.mrb[0].mxu0
  %v537 = vadd.f32 0.0, %v536
  %v538 = vpop.f32.mrb[0].mxu0
  %v539 = vadd.f32 0.0, %v538
  %540 = vdwg.mxu0
  %v541 = vadd.f32 %v357, %v537
  %v542 = vadd.f32 %v358, %v539
  %s543 = scalar_lea.vmem %s2, 8
  %v544 = vld [vmem:[%s543] sm:$0xf]
  %v546 = vsel %vm102, %v544, 0
  %548 = vmatprep.subr.mxu0 %v468
  %549 = vmatpush1.msra.mxu0 %v465
  %550 = vmatprep.subr.mxu0 0.0
  %551 = vmatpush1.msra.mxu0 0.0
  %552 = vmatprep.subr.mxu0 0.0
  %553 = vmatpush1.msra.mxu0 0.0
  %554 = vmatprep.subr.mxu0 0.0
  %555 = vmatpush1.msra.mxu0 0.0
  %556 = vmatprep.subr.mxu0 0.0
  %557 = vmatpush1.msra.mxu0 0.0
  %558 = vmatprep.subr.mxu0 0.0
  %559 = vmatpush1.msra.mxu0 0.0
  %560 = vmatprep.subr.mxu0 0.0
  %561 = vmatpush1.msra.mxu0 0.0
  %562 = vmatprep.subr.mxu0 0.0
  %563 = vmatpush1.msra.mxu0 0.0
  %564 = vmatprep.subr.mxu0 0.0
  %565 = vmatpush1.msra.mxu0 0.0
  %566 = vmatprep.subr.mxu0 0.0
  %567 = vmatpush1.msra.mxu0 0.0
  %568 = vmatprep.subr.mxu0 0.0
  %569 = vmatpush1.msra.mxu0 0.0
  %570 = vmatprep.subr.mxu0 0.0
  %571 = vmatpush1.msra.mxu0 0.0
  %572 = vmatprep.subr.mxu0 0.0
  %573 = vmatpush1.msra.mxu0 0.0
  %574 = vmatprep.subr.mxu0 0.0
  %575 = vmatpush1.msra.mxu0 0.0
  %576 = vmatprep.subr.mxu0 0.0
  %577 = vmatpush1.msra.mxu0 0.0
  %578 = vmatprep.subr.mxu0 0.0
  %579 = vmatpush1.msra.mxu0 0.0
  %580 = vmatprep.subr.mxu0 0.0
  %581 = vmatpush1.msra.mxu0 0.0
  %582 = vmatprep.subr.mxu0 0.0
  %583 = vmatpush1.msra.mxu0 0.0
  %584 = vmatprep.subr.mxu0 0.0
  %585 = vmatpush1.msra.mxu0 0.0
  %586 = vmatprep.subr.mxu0 0.0
  %587 = vmatpush1.msra.mxu0 0.0
  %588 = vmatprep.subr.mxu0 0.0
  %589 = vmatpush1.msra.mxu0 0.0
  %590 = vmatprep.subr.mxu0 0.0
  %591 = vmatpush1.msra.mxu0 0.0
  %592 = vmatprep.subr.mxu0 0.0
  %593 = vmatpush1.msra.mxu0 0.0
  %594 = vmatprep.subr.mxu0 0.0
  %595 = vmatpush1.msra.mxu0 0.0
  %596 = vmatprep.subr.mxu0 0.0
  %597 = vmatpush1.msra.mxu0 0.0
  %598 = vmatprep.subr.mxu0 0.0
  %599 = vmatpush1.msra.mxu0 0.0
  %600 = vmatprep.subr.mxu0 0.0
  %601 = vmatpush1.msra.mxu0 0.0
  %602 = vmatprep.subr.mxu0 0.0
  %603 = vmatpush1.msra.mxu0 0.0
  %604 = vmatprep.subr.mxu0 0.0
  %605 = vmatpush1.msra.mxu0 0.0
  %606 = vmatprep.subr.mxu0 0.0
  %607 = vmatpush1.msra.mxu0 0.0
  %608 = vmatprep.subr.mxu0 0.0
  %609 = vmatpush1.msra.mxu0 0.0
  %610 = vmatprep.subr.mxu0 0.0
  %611 = vmatpush1.msra.mxu0 0.0
  %612 = vmatprep.mubr.f32.mxu0 0.0
  %613 = vmatmul.mubr.f32.gmra.mrb[0].mxu0 %v546
  %v614 = vpop.f32.mrb[0].mxu0
  %v615 = vadd.f32 0.0, %v614
  %v616 = vpop.f32.mrb[0].mxu0
  %v617 = vadd.f32 0.0, %v616
  %618 = vdwg.mxu0
  %v619 = vadd.f32 %v435, %v615
  %v620 = vadd.f32 %v436, %v617
  %v621 = vld [vmem:[#allocation2] sm:$0xff]
  %v622 = vld [vmem:[#allocation2 + $0x8] sm:$0xf]
  %v625 = vcombine.high %v621, %v621
  %626 = vrot.lane.b32.xlu0 %v621, 1
  %v627 = vpop.permute.xlu0 %626
  %628 = vrot.lane.b32.xlu0 %v625, 1
  %v629 = vpop.permute.xlu0 %628
  %630 = vrot.lane.b32.xlu0 %v622, 1
  %v631 = vpop.permute.xlu0 %630
  %vm632 = vcmask 7168
  %v633 = vsel %vm632, %v627, %v629
  %v634 = vsel %vm632, %v629, %v631
  %v637 = vsel %vm83, %v633, 0.0
  %v638 = vsel %vm84, %v634, 0.0
  %s639 = scalar_lea.vmem %s1, 12
  %v640 = vld [vmem:[%s639] sm:$0xf]
  %v642 = vsel %vm102, %v640, 0
  %v645 = vsel %vm106, %v637, 0
  %v648 = vsel %vm106, %v638, 0
  %650 = vmatprep.subr.mxu0 %v648
  %651 = vmatpush1.msra.mxu0 %v645
  %652 = vmatprep.subr.mxu0 0.0
  %653 = vmatpush1.msra.mxu0 0.0
  %654 = vmatprep.subr.mxu0 0.0
  %655 = vmatpush1.msra.mxu0 0.0
  %656 = vmatprep.subr.mxu0 0.0
  %657 = vmatpush1.msra.mxu0 0.0
  %658 = vmatprep.subr.mxu0 0.0
  %659 = vmatpush1.msra.mxu0 0.0
  %660 = vmatprep.subr.mxu0 0.0
  %661 = vmatpush1.msra.mxu0 0.0
  %662 = vmatprep.subr.mxu0 0.0
  %663 = vmatpush1.msra.mxu0 0.0
  %664 = vmatprep.subr.mxu0 0.0
  %665 = vmatpush1.msra.mxu0 0.0
  %666 = vmatprep.subr.mxu0 0.0
  %667 = vmatpush1.msra.mxu0 0.0
  %668 = vmatprep.subr.mxu0 0.0
  %669 = vmatpush1.msra.mxu0 0.0
  %670 = vmatprep.subr.mxu0 0.0
  %671 = vmatpush1.msra.mxu0 0.0
  %672 = vmatprep.subr.mxu0 0.0
  %673 = vmatpush1.msra.mxu0 0.0
  %674 = vmatprep.subr.mxu0 0.0
  %675 = vmatpush1.msra.mxu0 0.0
  %676 = vmatprep.subr.mxu0 0.0
  %677 = vmatpush1.msra.mxu0 0.0
  %678 = vmatprep.subr.mxu0 0.0
  %679 = vmatpush1.msra.mxu0 0.0
  %680 = vmatprep.subr.mxu0 0.0
  %681 = vmatpush1.msra.mxu0 0.0
  %682 = vmatprep.subr.mxu0 0.0
  %683 = vmatpush1.msra.mxu0 0.0
  %684 = vmatprep.subr.mxu0 0.0
  %685 = vmatpush1.msra.mxu0 0.0
  %686 = vmatprep.subr.mxu0 0.0
  %687 = vmatpush1.msra.mxu0 0.0
  %688 = vmatprep.subr.mxu0 0.0
  %689 = vmatpush1.msra.mxu0 0.0
  %690 = vmatprep.subr.mxu0 0.0
  %691 = vmatpush1.msra.mxu0 0.0
  %692 = vmatprep.subr.mxu0 0.0
  %693 = vmatpush1.msra.mxu0 0.0
  %694 = vmatprep.subr.mxu0 0.0
  %695 = vmatpush1.msra.mxu0 0.0
  %696 = vmatprep.subr.mxu0 0.0
  %697 = vmatpush1.msra.mxu0 0.0
  %698 = vmatprep.subr.mxu0 0.0
  %699 = vmatpush1.msra.mxu0 0.0
  %700 = vmatprep.subr.mxu0 0.0
  %701 = vmatpush1.msra.mxu0 0.0
  %702 = vmatprep.subr.mxu0 0.0
  %703 = vmatpush1.msra.mxu0 0.0
  %704 = vmatprep.subr.mxu0 0.0
  %705 = vmatpush1.msra.mxu0 0.0
  %706 = vmatprep.subr.mxu0 0.0
  %707 = vmatpush1.msra.mxu0 0.0
  %708 = vmatprep.subr.mxu0 0.0
  %709 = vmatpush1.msra.mxu0 0.0
  %710 = vmatprep.subr.mxu0 0.0
  %711 = vmatpush1.msra.mxu0 0.0
  %712 = vmatprep.subr.mxu0 0.0
  %713 = vmatpush1.msra.mxu0 0.0
  %714 = vmatprep.mubr.f32.mxu0 0.0
  %715 = vmatmul.mubr.f32.gmra.mrb[0].mxu0 %v642
  %v716 = vpop.f32.mrb[0].mxu0
  %v717 = vadd.f32 0.0, %v716
  %v718 = vpop.f32.mrb[0].mxu0
  %v719 = vadd.f32 0.0, %v718
  %720 = vdwg.mxu0
  %v721 = vadd.f32 %v541, %v717
  %v722 = vadd.f32 %v542, %v719
  %s723 = scalar_lea.vmem %s2, 12
  %v724 = vld [vmem:[%s723] sm:$0xf]
  %v726 = vsel %vm102, %v724, 0
  %728 = vmatprep.subr.mxu0 %v648
  %729 = vmatpush1.msra.mxu0 %v645
  %730 = vmatprep.subr.mxu0 0.0
  %731 = vmatpush1.msra.mxu0 0.0
  %732 = vmatprep.subr.mxu0 0.0
  %733 = vmatpush1.msra.mxu0 0.0
  %734 = vmatprep.subr.mxu0 0.0
  %735 = vmatpush1.msra.mxu0 0.0
  %736 = vmatprep.subr.mxu0 0.0
  %737 = vmatpush1.msra.mxu0 0.0
  %738 = vmatprep.subr.mxu0 0.0
  %739 = vmatpush1.msra.mxu0 0.0
  %740 = vmatprep.subr.mxu0 0.0
  %741 = vmatpush1.msra.mxu0 0.0
  %742 = vmatprep.subr.mxu0 0.0
  %743 = vmatpush1.msra.mxu0 0.0
  %744 = vmatprep.subr.mxu0 0.0
  %745 = vmatpush1.msra.mxu0 0.0
  %746 = vmatprep.subr.mxu0 0.0
  %747 = vmatpush1.msra.mxu0 0.0
  %748 = vmatprep.subr.mxu0 0.0
  %749 = vmatpush1.msra.mxu0 0.0
  %750 = vmatprep.subr.mxu0 0.0
  %751 = vmatpush1.msra.mxu0 0.0
  %752 = vmatprep.subr.mxu0 0.0
  %753 = vmatpush1.msra.mxu0 0.0
  %754 = vmatprep.subr.mxu0 0.0
  %755 = vmatpush1.msra.mxu0 0.0
  %756 = vmatprep.subr.mxu0 0.0
  %757 = vmatpush1.msra.mxu0 0.0
  %758 = vmatprep.subr.mxu0 0.0
  %759 = vmatpush1.msra.mxu0 0.0
  %760 = vmatprep.subr.mxu0 0.0
  %761 = vmatpush1.msra.mxu0 0.0
  %762 = vmatprep.subr.mxu0 0.0
  %763 = vmatpush1.msra.mxu0 0.0
  %764 = vmatprep.subr.mxu0 0.0
  %765 = vmatpush1.msra.mxu0 0.0
  %766 = vmatprep.subr.mxu0 0.0
  %767 = vmatpush1.msra.mxu0 0.0
  %768 = vmatprep.subr.mxu0 0.0
  %769 = vmatpush1.msra.mxu0 0.0
  %770 = vmatprep.subr.mxu0 0.0
  %771 = vmatpush1.msra.mxu0 0.0
  %772 = vmatprep.subr.mxu0 0.0
  %773 = vmatpush1.msra.mxu0 0.0
  %774 = vmatprep.subr.mxu0 0.0
  %775 = vmatpush1.msra.mxu0 0.0
  %776 = vmatprep.subr.mxu0 0.0
  %777 = vmatpush1.msra.mxu0 0.0
  %778 = vmatprep.subr.mxu0 0.0
  %779 = vmatpush1.msra.mxu0 0.0
  %780 = vmatprep.subr.mxu0 0.0
  %781 = vmatpush1.msra.mxu0 0.0
  %782 = vmatprep.subr.mxu0 0.0
  %783 = vmatpush1.msra.mxu0 0.0
  %784 = vmatprep.subr.mxu0 0.0
  %785 = vmatpush1.msra.mxu0 0.0
  %786 = vmatprep.subr.mxu0 0.0
  %787 = vmatpush1.msra.mxu0 0.0
  %788 = vmatprep.subr.mxu0 0.0
  %789 = vmatpush1.msra.mxu0 0.0
  %790 = vmatprep.subr.mxu0 0.0
  %791 = vmatpush1.msra.mxu0 0.0
  %792 = vmatprep.mubr.f32.mxu0 0.0
  %793 = vmatmul.mubr.f32.gmra.mrb[0].mxu0 %v726
  %v794 = vpop.f32.mrb[0].mxu0
  %v795 = vadd.f32 0.0, %v794
  %v796 = vpop.f32.mrb[0].mxu0
  %v797 = vadd.f32 0.0, %v796
  %798 = vdwg.mxu0
  %v799 = vadd.f32 %v619, %v795
  %v800 = vadd.f32 %v620, %v797
  %v801 = vld [vmem:[#allocation2 + $0x4] sm:$0xff]
  %s802 = scalar_lea.vmem %s1, 16
  %v803 = vld [vmem:[%s802] sm:$0xf]
  %v805 = vcombine.high %v801, %v801
  %v807 = vsel %vm102, %v803, 0
  %v809 = vsel %vm106, %v801, 0
  %v811 = vsel %vm106, %v805, 0
  %813 = vmatprep.subr.mxu0 %v811
  %814 = vmatpush1.msra.mxu0 %v809
  %815 = vmatprep.subr.mxu0 0.0
  %816 = vmatpush1.msra.mxu0 0.0
  %817 = vmatprep.subr.mxu0 0.0
  %818 = vmatpush1.msra.mxu0 0.0
  %819 = vmatprep.subr.mxu0 0.0
  %820 = vmatpush1.msra.mxu0 0.0
  %821 = vmatprep.subr.mxu0 0.0
  %822 = vmatpush1.msra.mxu0 0.0
  %823 = vmatprep.subr.mxu0 0.0
  %824 = vmatpush1.msra.mxu0 0.0
  %825 = vmatprep.subr.mxu0 0.0
  %826 = vmatpush1.msra.mxu0 0.0
  %827 = vmatprep.subr.mxu0 0.0
  %828 = vmatpush1.msra.mxu0 0.0
  %829 = vmatprep.subr.mxu0 0.0
  %830 = vmatpush1.msra.mxu0 0.0
  %831 = vmatprep.subr.mxu0 0.0
  %832 = vmatpush1.msra.mxu0 0.0
  %833 = vmatprep.subr.mxu0 0.0
  %834 = vmatpush1.msra.mxu0 0.0
  %835 = vmatprep.subr.mxu0 0.0
  %836 = vmatpush1.msra.mxu0 0.0
  %837 = vmatprep.subr.mxu0 0.0
  %838 = vmatpush1.msra.mxu0 0.0
  %839 = vmatprep.subr.mxu0 0.0
  %840 = vmatpush1.msra.mxu0 0.0
  %841 = vmatprep.subr.mxu0 0.0
  %842 = vmatpush1.msra.mxu0 0.0
  %843 = vmatprep.subr.mxu0 0.0
  %844 = vmatpush1.msra.mxu0 0.0
  %845 = vmatprep.subr.mxu0 0.0
  %846 = vmatpush1.msra.mxu0 0.0
  %847 = vmatprep.subr.mxu0 0.0
  %848 = vmatpush1.msra.mxu0 0.0
  %849 = vmatprep.subr.mxu0 0.0
  %850 = vmatpush1.msra.mxu0 0.0
  %851 = vmatprep.subr.mxu0 0.0
  %852 = vmatpush1.msra.mxu0 0.0
  %853 = vmatprep.subr.mxu0 0.0
  %854 = vmatpush1.msra.mxu0 0.0
  %855 = vmatprep.subr.mxu0 0.0
  %856 = vmatpush1.msra.mxu0 0.0
  %857 = vmatprep.subr.mxu0 0.0
  %858 = vmatpush1.msra.mxu0 0.0
  %859 = vmatprep.subr.mxu0 0.0
  %860 = vmatpush1.msra.mxu0 0.0
  %861 = vmatprep.subr.mxu0 0.0
  %862 = vmatpush1.msra.mxu0 0.0
  %863 = vmatprep.subr.mxu0 0.0
  %864 = vmatpush1.msra.mxu0 0.0
  %865 = vmatprep.subr.mxu0 0.0
  %866 = vmatpush1.msra.mxu0 0.0
  %867 = vmatprep.subr.mxu0 0.0
  %868 = vmatpush1.msra.mxu0 0.0
  %869 = vmatprep.subr.mxu0 0.0
  %870 = vmatpush1.msra.mxu0 0.0
  %871 = vmatprep.subr.mxu0 0.0
  %872 = vmatpush1.msra.mxu0 0.0
  %873 = vmatprep.subr.mxu0 0.0
  %874 = vmatpush1.msra.mxu0 0.0
  %875 = vmatprep.subr.mxu0 0.0
  %876 = vmatpush1.msra.mxu0 0.0
  %877 = vmatprep.mubr.f32.mxu0 0.0
  %878 = vmatmul.mubr.f32.gmra.mrb[0].mxu0 %v807
  %v879 = vpop.f32.mrb[0].mxu0
  %v880 = vadd.f32 0.0, %v879
  %v881 = vpop.f32.mrb[0].mxu0
  %v882 = vadd.f32 0.0, %v881
  %883 = vdwg.mxu0
  %v884 = vadd.f32 %v721, %v880
  %v885 = vadd.f32 %v722, %v882
  %s886 = scalar_lea.vmem %s2, 16
  %v887 = vld [vmem:[%s886] sm:$0xf]
  %v889 = vsel %vm102, %v887, 0
  %891 = vmatprep.subr.mxu0 %v811
  %892 = vmatpush1.msra.mxu0 %v809
  %893 = vmatprep.subr.mxu0 0.0
  %894 = vmatpush1.msra.mxu0 0.0
  %895 = vmatprep.subr.mxu0 0.0
  %896 = vmatpush1.msra.mxu0 0.0
  %897 = vmatprep.subr.mxu0 0.0
  %898 = vmatpush1.msra.mxu0 0.0
  %899 = vmatprep.subr.mxu0 0.0
  %900 = vmatpush1.msra.mxu0 0.0
  %901 = vmatprep.subr.mxu0 0.0
  %902 = vmatpush1.msra.mxu0 0.0
  %903 = vmatprep.subr.mxu0 0.0
  %904 = vmatpush1.msra.mxu0 0.0
  %905 = vmatprep.subr.mxu0 0.0
  %906 = vmatpush1.msra.mxu0 0.0
  %907 = vmatprep.subr.mxu0 0.0
  %908 = vmatpush1.msra.mxu0 0.0
  %909 = vmatprep.subr.mxu0 0.0
  %910 = vmatpush1.msra.mxu0 0.0
  %911 = vmatprep.subr.mxu0 0.0
  %912 = vmatpush1.msra.mxu0 0.0
  %913 = vmatprep.subr.mxu0 0.0
  %914 = vmatpush1.msra.mxu0 0.0
  %915 = vmatprep.subr.mxu0 0.0
  %916 = vmatpush1.msra.mxu0 0.0
  %917 = vmatprep.subr.mxu0 0.0
  %918 = vmatpush1.msra.mxu0 0.0
  %919 = vmatprep.subr.mxu0 0.0
  %920 = vmatpush1.msra.mxu0 0.0
  %921 = vmatprep.subr.mxu0 0.0
  %922 = vmatpush1.msra.mxu0 0.0
  %923 = vmatprep.subr.mxu0 0.0
  %924 = vmatpush1.msra.mxu0 0.0
  %925 = vmatprep.subr.mxu0 0.0
  %926 = vmatpush1.msra.mxu0 0.0
  %927 = vmatprep.subr.mxu0 0.0
  %928 = vmatpush1.msra.mxu0 0.0
  %929 = vmatprep.subr.mxu0 0.0
  %930 = vmatpush1.msra.mxu0 0.0
  %931 = vmatprep.subr.mxu0 0.0
  %932 = vmatpush1.msra.mxu0 0.0
  %933 = vmatprep.subr.mxu0 0.0
  %934 = vmatpush1.msra.mxu0 0.0
  %935 = vmatprep.subr.mxu0 0.0
  %936 = vmatpush1.msra.mxu0 0.0
  %937 = vmatprep.subr.mxu0 0.0
  %938 = vmatpush1.msra.mxu0 0.0
  %939 = vmatprep.subr.mxu0 0.0
  %940 = vmatpush1.msra.mxu0 0.0
  %941 = vmatprep.subr.mxu0 0.0
  %942 = vmatpush1.msra.mxu0 0.0
  %943 = vmatprep.subr.mxu0 0.0
  %944 = vmatpush1.msra.mxu0 0.0
  %945 = vmatprep.subr.mxu0 0.0
  %946 = vmatpush1.msra.mxu0 0.0
  %947 = vmatprep.subr.mxu0 0.0
  %948 = vmatpush1.msra.mxu0 0.0
  %949 = vmatprep.subr.mxu0 0.0
  %950 = vmatpush1.msra.mxu0 0.0
  %951 = vmatprep.subr.mxu0 0.0
  %952 = vmatpush1.msra.mxu0 0.0
  %953 = vmatprep.subr.mxu0 0.0
  %954 = vmatpush1.msra.mxu0 0.0
  %955 = vmatprep.mubr.f32.mxu0 0.0
  %956 = vmatmul.mubr.f32.gmra.mrb[0].mxu0 %v889
  %v957 = vpop.f32.mrb[0].mxu0
  %v958 = vadd.f32 0.0, %v957
  %v959 = vpop.f32.mrb[0].mxu0
  %v960 = vadd.f32 0.0, %v959
  %961 = vdwg.mxu0
  %v962 = vadd.f32 %v799, %v958
  %v963 = vadd.f32 %v800, %v960
  %v964 = vld [vmem:[#allocation2 + $0x4] sm:$0xff]
  %v965 = vld [vmem:[#allocation2 + $0xc] sm:$0xf]
  %v968 = vcombine.high %v964, %v964
  %969 = vrot.lane.b32.xlu0 %v964, 127
  %v970 = vpop.permute.xlu0 %969
  %971 = vrot.lane.b32.xlu0 %v968, 127
  %v972 = vpop.permute.xlu0 %971
  %973 = vrot.lane.b32.xlu0 %v965, 127
  %v974 = vpop.permute.xlu0 %973
  %vm975 = vcmask 1039360
  %v976 = vsel %vm975, %v970, %v972
  %v977 = vsel %vm975, %v972, %v974
  %v980 = vsel %vm441, %v976, 0.0
  %v981 = vsel %vm442, %v977, 0.0
  %s982 = scalar_lea.vmem %s1, 20
  %v983 = vld [vmem:[%s982] sm:$0xf]
  %v985 = vsel %vm102, %v983, 0
  %v988 = vsel %vm106, %v980, 0
  %v991 = vsel %vm106, %v981, 0
  %993 = vmatprep.subr.mxu0 %v991
  %994 = vmatpush1.msra.mxu0 %v988
  %995 = vmatprep.subr.mxu0 0.0
  %996 = vmatpush1.msra.mxu0 0.0
  %997 = vmatprep.subr.mxu0 0.0
  %998 = vmatpush1.msra.mxu0 0.0
  %999 = vmatprep.subr.mxu0 0.0
  %1000 = vmatpush1.msra.mxu0 0.0
  %1001 = vmatprep.subr.mxu0 0.0
  %1002 = vmatpush1.msra.mxu0 0.0
  %1003 = vmatprep.subr.mxu0 0.0
  %1004 = vmatpush1.msra.mxu0 0.0
  %1005 = vmatprep.subr.mxu0 0.0
  %1006 = vmatpush1.msra.mxu0 0.0
  %1007 = vmatprep.subr.mxu0 0.0
  %1008 = vmatpush1.msra.mxu0 0.0
  %1009 = vmatprep.subr.mxu0 0.0
  %1010 = vmatpush1.msra.mxu0 0.0
  %1011 = vmatprep.subr.mxu0 0.0
  %1012 = vmatpush1.msra.mxu0 0.0
  %1013 = vmatprep.subr.mxu0 0.0
  %1014 = vmatpush1.msra.mxu0 0.0
  %1015 = vmatprep.subr.mxu0 0.0
  %1016 = vmatpush1.msra.mxu0 0.0
  %1017 = vmatprep.subr.mxu0 0.0
  %1018 = vmatpush1.msra.mxu0 0.0
  %1019 = vmatprep.subr.mxu0 0.0
  %1020 = vmatpush1.msra.mxu0 0.0
  %1021 = vmatprep.subr.mxu0 0.0
  %1022 = vmatpush1.msra.mxu0 0.0
  %1023 = vmatprep.subr.mxu0 0.0
  %1024 = vmatpush1.msra.mxu0 0.0
  %1025 = vmatprep.subr.mxu0 0.0
  %1026 = vmatpush1.msra.mxu0 0.0
  %1027 = vmatprep.subr.mxu0 0.0
  %1028 = vmatpush1.msra.mxu0 0.0
  %1029 = vmatprep.subr.mxu0 0.0
  %1030 = vmatpush1.msra.mxu0 0.0
  %1031 = vmatprep.subr.mxu0 0.0
  %1032 = vmatpush1.msra.mxu0 0.0
  %1033 = vmatprep.subr.mxu0 0.0
  %1034 = vmatpush1.msra.mxu0 0.0
  %1035 = vmatprep.subr.mxu0 0.0
  %1036 = vmatpush1.msra.mxu0 0.0
  %1037 = vmatprep.subr.mxu0 0.0
  %1038 = vmatpush1.msra.mxu0 0.0
  %1039 = vmatprep.subr.mxu0 0.0
  %1040 = vmatpush1.msra.mxu0 0.0
  %1041 = vmatprep.subr.mxu0 0.0
  %1042 = vmatpush1.msra.mxu0 0.0
  %1043 = vmatprep.subr.mxu0 0.0
  %1044 = vmatpush1.msra.mxu0 0.0
  %1045 = vmatprep.subr.mxu0 0.0
  %1046 = vmatpush1.msra.mxu0 0.0
  %1047 = vmatprep.subr.mxu0 0.0
  %1048 = vmatpush1.msra.mxu0 0.0
  %1049 = vmatprep.subr.mxu0 0.0
  %1050 = vmatpush1.msra.mxu0 0.0
  %1051 = vmatprep.subr.mxu0 0.0
  %1052 = vmatpush1.msra.mxu0 0.0
  %1053 = vmatprep.subr.mxu0 0.0
  %1054 = vmatpush1.msra.mxu0 0.0
  %1055 = vmatprep.subr.mxu0 0.0
  %1056 = vmatpush1.msra.mxu0 0.0
  %1057 = vmatprep.mubr.f32.mxu0 0.0
  %1058 = vmatmul.mubr.f32.gmra.mrb[0].mxu0 %v985
  %v1059 = vpop.f32.mrb[0].mxu0
  %v1060 = vadd.f32 0.0, %v1059
  %v1061 = vpop.f32.mrb[0].mxu0
  %v1062 = vadd.f32 0.0, %v1061
  %1063 = vdwg.mxu0
  %v1064 = vadd.f32 %v884, %v1060
  %v1065 = vadd.f32 %v885, %v1062
  %s1066 = scalar_lea.vmem %s2, 20
  %v1067 = vld [vmem:[%s1066] sm:$0xf]
  %v1069 = vsel %vm102, %v1067, 0
  %1071 = vmatprep.subr.mxu0 %v991
  %1072 = vmatpush1.msra.mxu0 %v988
  %1073 = vmatprep.subr.mxu0 0.0
  %1074 = vmatpush1.msra.mxu0 0.0
  %1075 = vmatprep.subr.mxu0 0.0
  %1076 = vmatpush1.msra.mxu0 0.0
  %1077 = vmatprep.subr.mxu0 0.0
  %1078 = vmatpush1.msra.mxu0 0.0
  %1079 = vmatprep.subr.mxu0 0.0
  %1080 = vmatpush1.msra.mxu0 0.0
  %1081 = vmatprep.subr.mxu0 0.0
  %1082 = vmatpush1.msra.mxu0 0.0
  %1083 = vmatprep.subr.mxu0 0.0
  %1084 = vmatpush1.msra.mxu0 0.0
  %1085 = vmatprep.subr.mxu0 0.0
  %1086 = vmatpush1.msra.mxu0 0.0
  %1087 = vmatprep.subr.mxu0 0.0
  %1088 = vmatpush1.msra.mxu0 0.0
  %1089 = vmatprep.subr.mxu0 0.0
  %1090 = vmatpush1.msra.mxu0 0.0
  %1091 = vmatprep.subr.mxu0 0.0
  %1092 = vmatpush1.msra.mxu0 0.0
  %1093 = vmatprep.subr.mxu0 0.0
  %1094 = vmatpush1.msra.mxu0 0.0
  %1095 = vmatprep.subr.mxu0 0.0
  %1096 = vmatpush1.msra.mxu0 0.0
  %1097 = vmatprep.subr.mxu0 0.0
  %1098 = vmatpush1.msra.mxu0 0.0
  %1099 = vmatprep.subr.mxu0 0.0
  %1100 = vmatpush1.msra.mxu0 0.0
  %1101 = vmatprep.subr.mxu0 0.0
  %1102 = vmatpush1.msra.mxu0 0.0
  %1103 = vmatprep.subr.mxu0 0.0
  %1104 = vmatpush1.msra.mxu0 0.0
  %1105 = vmatprep.subr.mxu0 0.0
  %1106 = vmatpush1.msra.mxu0 0.0
  %1107 = vmatprep.subr.mxu0 0.0
  %1108 = vmatpush1.msra.mxu0 0.0
  %1109 = vmatprep.subr.mxu0 0.0
  %1110 = vmatpush1.msra.mxu0 0.0
  %1111 = vmatprep.subr.mxu0 0.0
  %1112 = vmatpush1.msra.mxu0 0.0
  %1113 = vmatprep.subr.mxu0 0.0
  %1114 = vmatpush1.msra.mxu0 0.0
  %1115 = vmatprep.subr.mxu0 0.0
  %1116 = vmatpush1.msra.mxu0 0.0
  %1117 = vmatprep.subr.mxu0 0.0
  %1118 = vmatpush1.msra.mxu0 0.0
  %1119 = vmatprep.subr.mxu0 0.0
  %1120 = vmatpush1.msra.mxu0 0.0
  %1121 = vmatprep.subr.mxu0 0.0
  %1122 = vmatpush1.msra.mxu0 0.0
  %1123 = vmatprep.subr.mxu0 0.0
  %1124 = vmatpush1.msra.mxu0 0.0
  %1125 = vmatprep.subr.mxu0 0.0
  %1126 = vmatpush1.msra.mxu0 0.0
  %1127 = vmatprep.subr.mxu0 0.0
  %1128 = vmatpush1.msra.mxu0 0.0
  %1129 = vmatprep.subr.mxu0 0.0
  %1130 = vmatpush1.msra.mxu0 0.0
  %1131 = vmatprep.subr.mxu0 0.0
  %1132 = vmatpush1.msra.mxu0 0.0
  %1133 = vmatprep.subr.mxu0 0.0
  %1134 = vmatpush1.msra.mxu0 0.0
  %1135 = vmatprep.mubr.f32.mxu0 0.0
  %1136 = vmatmul.mubr.f32.gmra.mrb[0].mxu0 %v1069
  %v1137 = vpop.f32.mrb[0].mxu0
  %v1138 = vadd.f32 0.0, %v1137
  %v1139 = vpop.f32.mrb[0].mxu0
  %v1140 = vadd.f32 0.0, %v1139
  %1141 = vdwg.mxu0
  %v1142 = vadd.f32 %v962, %v1138
  %v1143 = vadd.f32 %v963, %v1140
  %v1144 = vld [vmem:[#allocation2 + $0x4] sm:$0xff]
  %v1145 = vld [vmem:[#allocation2 + $0xc] sm:$0xf]
  %v1148 = vcombine.high %v1144, %v1144
  %1149 = vrot.lane.b32.xlu0 %v1144, 113
  %v1150 = vpop.permute.xlu0 %1149
  %1151 = vrot.lane.b32.xlu0 %v1148, 113
  %v1152 = vpop.permute.xlu0 %1151
  %1153 = vrot.lane.b32.xlu0 %v1145, 113
  %v1154 = vpop.permute.xlu0 %1153
  %vm1155 = vcmask 924672
  %v1156 = vsel %vm1155, %v1150, %v1152
  %v1157 = vsel %vm1155, %v1152, %v1154
  %v1160 = vsel %vm83, %v1156, 0.0
  %v1161 = vsel %vm84, %v1157, 0.0
  %s1162 = scalar_lea.vmem %s1, 24
  %v1163 = vld [vmem:[%s1162] sm:$0xf]
  %v1165 = vsel %vm102, %v1163, 0
  %v1168 = vsel %vm106, %v1160, 0
  %v1171 = vsel %vm106, %v1161, 0
  %1173 = vmatprep.subr.mxu0 %v1171
  %1174 = vmatpush1.msra.mxu0 %v1168
  %1175 = vmatprep.subr.mxu0 0.0
  %1176 = vmatpush1.msra.mxu0 0.0
  %1177 = vmatprep.subr.mxu0 0.0
  %1178 = vmatpush1.msra.mxu0 0.0
  %1179 = vmatprep.subr.mxu0 0.0
  %1180 = vmatpush1.msra.mxu0 0.0
  %1181 = vmatprep.subr.mxu0 0.0
  %1182 = vmatpush1.msra.mxu0 0.0
  %1183 = vmatprep.subr.mxu0 0.0
  %1184 = vmatpush1.msra.mxu0 0.0
  %1185 = vmatprep.subr.mxu0 0.0
  %1186 = vmatpush1.msra.mxu0 0.0
  %1187 = vmatprep.subr.mxu0 0.0
  %1188 = vmatpush1.msra.mxu0 0.0
  %1189 = vmatprep.subr.mxu0 0.0
  %1190 = vmatpush1.msra.mxu0 0.0
  %1191 = vmatprep.subr.mxu0 0.0
  %1192 = vmatpush1.msra.mxu0 0.0
  %1193 = vmatprep.subr.mxu0 0.0
  %1194 = vmatpush1.msra.mxu0 0.0
  %1195 = vmatprep.subr.mxu0 0.0
  %1196 = vmatpush1.msra.mxu0 0.0
  %1197 = vmatprep.subr.mxu0 0.0
  %1198 = vmatpush1.msra.mxu0 0.0
  %1199 = vmatprep.subr.mxu0 0.0
  %1200 = vmatpush1.msra.mxu0 0.0
  %1201 = vmatprep.subr.mxu0 0.0
  %1202 = vmatpush1.msra.mxu0 0.0
  %1203 = vmatprep.subr.mxu0 0.0
  %1204 = vmatpush1.msra.mxu0 0.0
  %1205 = vmatprep.subr.mxu0 0.0
  %1206 = vmatpush1.msra.mxu0 0.0
  %1207 = vmatprep.subr.mxu0 0.0
  %1208 = vmatpush1.msra.mxu0 0.0
  %1209 = vmatprep.subr.mxu0 0.0
  %1210 = vmatpush1.msra.mxu0 0.0
  %1211 = vmatprep.subr.mxu0 0.0
  %1212 = vmatpush1.msra.mxu0 0.0
  %1213 = vmatprep.subr.mxu0 0.0
  %1214 = vmatpush1.msra.mxu0 0.0
  %1215 = vmatprep.subr.mxu0 0.0
  %1216 = vmatpush1.msra.mxu0 0.0
  %1217 = vmatprep.subr.mxu0 0.0
  %1218 = vmatpush1.msra.mxu0 0.0
  %1219 = vmatprep.subr.mxu0 0.0
  %1220 = vmatpush1.msra.mxu0 0.0
  %1221 = vmatprep.subr.mxu0 0.0
  %1222 = vmatpush1.msra.mxu0 0.0
  %1223 = vmatprep.subr.mxu0 0.0
  %1224 = vmatpush1.msra.mxu0 0.0
  %1225 = vmatprep.subr.mxu0 0.0
  %1226 = vmatpush1.msra.mxu0 0.0
  %1227 = vmatprep.subr.mxu0 0.0
  %1228 = vmatpush1.msra.mxu0 0.0
  %1229 = vmatprep.subr.mxu0 0.0
  %1230 = vmatpush1.msra.mxu0 0.0
  %1231 = vmatprep.subr.mxu0 0.0
  %1232 = vmatpush1.msra.mxu0 0.0
  %1233 = vmatprep.subr.mxu0 0.0
  %1234 = vmatpush1.msra.mxu0 0.0
  %1235 = vmatprep.subr.mxu0 0.0
  %1236 = vmatpush1.msra.mxu0 0.0
  %1237 = vmatprep.mubr.f32.mxu0 0.0
  %1238 = vmatmul.mubr.f32.gmra.mrb[0].mxu0 %v1165
  %v1239 = vpop.f32.mrb[0].mxu0
  %v1240 = vadd.f32 0.0, %v1239
  %v1241 = vpop.f32.mrb[0].mxu0
  %v1242 = vadd.f32 0.0, %v1241
  %1243 = vdwg.mxu0
  %v1244 = vadd.f32 %v1064, %v1240
  %v1245 = vadd.f32 %v1065, %v1242
  %s1246 = scalar_lea.vmem %s2, 24
  %v1247 = vld [vmem:[%s1246] sm:$0xf]
  %v1249 = vsel %vm102, %v1247, 0
  %1251 = vmatprep.subr.mxu0 %v1171
  %1252 = vmatpush1.msra.mxu0 %v1168
  %1253 = vmatprep.subr.mxu0 0.0
  %1254 = vmatpush1.msra.mxu0 0.0
  %1255 = vmatprep.subr.mxu0 0.0
  %1256 = vmatpush1.msra.mxu0 0.0
  %1257 = vmatprep.subr.mxu0 0.0
  %1258 = vmatpush1.msra.mxu0 0.0
  %1259 = vmatprep.subr.mxu0 0.0
  %1260 = vmatpush1.msra.mxu0 0.0
  %1261 = vmatprep.subr.mxu0 0.0
  %1262 = vmatpush1.msra.mxu0 0.0
  %1263 = vmatprep.subr.mxu0 0.0
  %1264 = vmatpush1.msra.mxu0 0.0
  %1265 = vmatprep.subr.mxu0 0.0
  %1266 = vmatpush1.msra.mxu0 0.0
  %1267 = vmatprep.subr.mxu0 0.0
  %1268 = vmatpush1.msra.mxu0 0.0
  %1269 = vmatprep.subr.mxu0 0.0
  %1270 = vmatpush1.msra.mxu0 0.0
  %1271 = vmatprep.subr.mxu0 0.0
  %1272 = vmatpush1.msra.mxu0 0.0
  %1273 = vmatprep.subr.mxu0 0.0
  %1274 = vmatpush1.msra.mxu0 0.0
  %1275 = vmatprep.subr.mxu0 0.0
  %1276 = vmatpush1.msra.mxu0 0.0
  %1277 = vmatprep.subr.mxu0 0.0
  %1278 = vmatpush1.msra.mxu0 0.0
  %1279 = vmatprep.subr.mxu0 0.0
  %1280 = vmatpush1.msra.mxu0 0.0
  %1281 = vmatprep.subr.mxu0 0.0
  %1282 = vmatpush1.msra.mxu0 0.0
  %1283 = vmatprep.subr.mxu0 0.0
  %1284 = vmatpush1.msra.mxu0 0.0
  %1285 = vmatprep.subr.mxu0 0.0
  %1286 = vmatpush1.msra.mxu0 0.0
  %1287 = vmatprep.subr.mxu0 0.0
  %1288 = vmatpush1.msra.mxu0 0.0
  %1289 = vmatprep.subr.mxu0 0.0
  %1290 = vmatpush1.msra.mxu0 0.0
  %1291 = vmatprep.subr.mxu0 0.0
  %1292 = vmatpush1.msra.mxu0 0.0
  %1293 = vmatprep.subr.mxu0 0.0
  %1294 = vmatpush1.msra.mxu0 0.0
  %1295 = vmatprep.subr.mxu0 0.0
  %1296 = vmatpush1.msra.mxu0 0.0
  %1297 = vmatprep.subr.mxu0 0.0
  %1298 = vmatpush1.msra.mxu0 0.0
  %1299 = vmatprep.subr.mxu0 0.0
  %1300 = vmatpush1.msra.mxu0 0.0
  %1301 = vmatprep.subr.mxu0 0.0
  %1302 = vmatpush1.msra.mxu0 0.0
  %1303 = vmatprep.subr.mxu0 0.0
  %1304 = vmatpush1.msra.mxu0 0.0
  %1305 = vmatprep.subr.mxu0 0.0
  %1306 = vmatpush1.msra.mxu0 0.0
  %1307 = vmatprep.subr.mxu0 0.0
  %1308 = vmatpush1.msra.mxu0 0.0
  %1309 = vmatprep.subr.mxu0 0.0
  %1310 = vmatpush1.msra.mxu0 0.0
  %1311 = vmatprep.subr.mxu0 0.0
  %1312 = vmatpush1.msra.mxu0 0.0
  %1313 = vmatprep.subr.mxu0 0.0
  %1314 = vmatpush1.msra.mxu0 0.0
  %1315 = vmatprep.mubr.f32.mxu0 0.0
  %1316 = vmatmul.mubr.f32.gmra.mrb[0].mxu0 %v1249
  %v1317 = vpop.f32.mrb[0].mxu0
  %v1318 = vadd.f32 0.0, %v1317
  %v1319 = vpop.f32.mrb[0].mxu0
  %v1320 = vadd.f32 0.0, %v1319
  %1321 = vdwg.mxu0
  %v1322 = vadd.f32 %v1142, %v1318
  %v1323 = vadd.f32 %v1143, %v1320
  %v1324 = vld [vmem:[#allocation2 + $0x4] sm:$0xff]
  %v1325 = vld [vmem:[#allocation2 + $0xc] sm:$0xf]
  %s1326 = scalar_lea.vmem %s1, 28
  %v1327 = vld [vmem:[%s1326] sm:$0xf]
  %v1330 = vcombine.high %v1324, %v1324
  %1331 = vrot.lane.b32.xlu0 %v1324, 112
  %v1332 = vpop.permute.xlu0 %1331
  %1333 = vrot.lane.b32.xlu0 %v1330, 112
  %v1334 = vpop.permute.xlu0 %1333
  %1335 = vrot.lane.b32.xlu0 %v1325, 112
  %v1336 = vpop.permute.xlu0 %1335
  %vm1337 = vcmask 916480
  %v1338 = vsel %vm1337, %v1332, %v1334
  %v1339 = vsel %vm1337, %v1334, %v1336
  %v1341 = vsel %vm102, %v1327, 0
  %v1343 = vsel %vm106, %v1338, 0
  %v1345 = vsel %vm106, %v1339, 0
  %1347 = vmatprep.subr.mxu0 %v1345
  %1348 = vmatpush1.msra.mxu0 %v1343
  %1349 = vmatprep.subr.mxu0 0.0
  %1350 = vmatpush1.msra.mxu0 0.0
  %1351 = vmatprep.subr.mxu0 0.0
  %1352 = vmatpush1.msra.mxu0 0.0
  %1353 = vmatprep.subr.mxu0 0.0
  %1354 = vmatpush1.msra.mxu0 0.0
  %1355 = vmatprep.subr.mxu0 0.0
  %1356 = vmatpush1.msra.mxu0 0.0
  %1357 = vmatprep.subr.mxu0 0.0
  %1358 = vmatpush1.msra.mxu0 0.0
  %1359 = vmatprep.subr.mxu0 0.0
  %1360 = vmatpush1.msra.mxu0 0.0
  %1361 = vmatprep.subr.mxu0 0.0
  %1362 = vmatpush1.msra.mxu0 0.0
  %1363 = vmatprep.subr.mxu0 0.0
  %1364 = vmatpush1.msra.mxu0 0.0
  %1365 = vmatprep.subr.mxu0 0.0
  %1366 = vmatpush1.msra.mxu0 0.0
  %1367 = vmatprep.subr.mxu0 0.0
  %1368 = vmatpush1.msra.mxu0 0.0
  %1369 = vmatprep.subr.mxu0 0.0
  %1370 = vmatpush1.msra.mxu0 0.0
  %1371 = vmatprep.subr.mxu0 0.0
  %1372 = vmatpush1.msra.mxu0 0.0
  %1373 = vmatprep.subr.mxu0 0.0
  %1374 = vmatpush1.msra.mxu0 0.0
  %1375 = vmatprep.subr.mxu0 0.0
  %1376 = vmatpush1.msra.mxu0 0.0
  %1377 = vmatprep.subr.mxu0 0.0
  %1378 = vmatpush1.msra.mxu0 0.0
  %1379 = vmatprep.subr.mxu0 0.0
  %1380 = vmatpush1.msra.mxu0 0.0
  %1381 = vmatprep.subr.mxu0 0.0
  %1382 = vmatpush1.msra.mxu0 0.0
  %1383 = vmatprep.subr.mxu0 0.0
  %1384 = vmatpush1.msra.mxu0 0.0
  %1385 = vmatprep.subr.mxu0 0.0
  %1386 = vmatpush1.msra.mxu0 0.0
  %1387 = vmatprep.subr.mxu0 0.0
  %1388 = vmatpush1.msra.mxu0 0.0
  %1389 = vmatprep.subr.mxu0 0.0
  %1390 = vmatpush1.msra.mxu0 0.0
  %1391 = vmatprep.subr.mxu0 0.0
  %1392 = vmatpush1.msra.mxu0 0.0
  %1393 = vmatprep.subr.mxu0 0.0
  %1394 = vmatpush1.msra.mxu0 0.0
  %1395 = vmatprep.subr.mxu0 0.0
  %1396 = vmatpush1.msra.mxu0 0.0
  %1397 = vmatprep.subr.mxu0 0.0
  %1398 = vmatpush1.msra.mxu0 0.0
  %1399 = vmatprep.subr.mxu0 0.0
  %1400 = vmatpush1.msra.mxu0 0.0
  %1401 = vmatprep.subr.mxu0 0.0
  %1402 = vmatpush1.msra.mxu0 0.0
  %1403 = vmatprep.subr.mxu0 0.0
  %1404 = vmatpush1.msra.mxu0 0.0
  %1405 = vmatprep.subr.mxu0 0.0
  %1406 = vmatpush1.msra.mxu0 0.0
  %1407 = vmatprep.subr.mxu0 0.0
  %1408 = vmatpush1.msra.mxu0 0.0
  %1409 = vmatprep.subr.mxu0 0.0
  %1410 = vmatpush1.msra.mxu0 0.0
  %1411 = vmatprep.mubr.f32.mxu0 0.0
  %1412 = vmatmul.mubr.f32.gmra.mrb[0].mxu0 %v1341
  %v1413 = vpop.f32.mrb[0].mxu0
  %v1414 = vadd.f32 0.0, %v1413
  %v1415 = vpop.f32.mrb[0].mxu0
  %v1416 = vadd.f32 0.0, %v1415
  %1417 = vdwg.mxu0
  %v1418 = vadd.f32 %v1244, %v1414
  %v1419 = vadd.f32 %v1245, %v1416
  %s1420 = scalar_lea.vmem %s2, 28
  %v1421 = vld [vmem:[%s1420] sm:$0xf]
  %v1423 = vsel %vm102, %v1421, 0
  %1425 = vmatprep.subr.mxu0 %v1345
  %1426 = vmatpush1.msra.mxu0 %v1343
  %1427 = vmatprep.subr.mxu0 0.0
  %1428 = vmatpush1.msra.mxu0 0.0
  %1429 = vmatprep.subr.mxu0 0.0
  %1430 = vmatpush1.msra.mxu0 0.0
  %1431 = vmatprep.subr.mxu0 0.0
  %1432 = vmatpush1.msra.mxu0 0.0
  %1433 = vmatprep.subr.mxu0 0.0
  %1434 = vmatpush1.msra.mxu0 0.0
  %1435 = vmatprep.subr.mxu0 0.0
  %1436 = vmatpush1.msra.mxu0 0.0
  %1437 = vmatprep.subr.mxu0 0.0
  %1438 = vmatpush1.msra.mxu0 0.0
  %1439 = vmatprep.subr.mxu0 0.0
  %1440 = vmatpush1.msra.mxu0 0.0
  %1441 = vmatprep.subr.mxu0 0.0
  %1442 = vmatpush1.msra.mxu0 0.0
  %1443 = vmatprep.subr.mxu0 0.0
  %1444 = vmatpush1.msra.mxu0 0.0
  %1445 = vmatprep.subr.mxu0 0.0
  %1446 = vmatpush1.msra.mxu0 0.0
  %1447 = vmatprep.subr.mxu0 0.0
  %1448 = vmatpush1.msra.mxu0 0.0
  %1449 = vmatprep.subr.mxu0 0.0
  %1450 = vmatpush1.msra.mxu0 0.0
  %1451 = vmatprep.subr.mxu0 0.0
  %1452 = vmatpush1.msra.mxu0 0.0
  %1453 = vmatprep.subr.mxu0 0.0
  %1454 = vmatpush1.msra.mxu0 0.0
  %1455 = vmatprep.subr.mxu0 0.0
  %1456 = vmatpush1.msra.mxu0 0.0
  %1457 = vmatprep.subr.mxu0 0.0
  %1458 = vmatpush1.msra.mxu0 0.0
  %1459 = vmatprep.subr.mxu0 0.0
  %1460 = vmatpush1.msra.mxu0 0.0
  %1461 = vmatprep.subr.mxu0 0.0
  %1462 = vmatpush1.msra.mxu0 0.0
  %1463 = vmatprep.subr.mxu0 0.0
  %1464 = vmatpush1.msra.mxu0 0.0
  %1465 = vmatprep.subr.mxu0 0.0
  %1466 = vmatpush1.msra.mxu0 0.0
  %1467 = vmatprep.subr.mxu0 0.0
  %1468 = vmatpush1.msra.mxu0 0.0
  %1469 = vmatprep.subr.mxu0 0.0
  %1470 = vmatpush1.msra.mxu0 0.0
  %1471 = vmatprep.subr.mxu0 0.0
  %1472 = vmatpush1.msra.mxu0 0.0
  %1473 = vmatprep.subr.mxu0 0.0
  %1474 = vmatpush1.msra.mxu0 0.0
  %1475 = vmatprep.subr.mxu0 0.0
  %1476 = vmatpush1.msra.mxu0 0.0
  %1477 = vmatprep.subr.mxu0 0.0
  %1478 = vmatpush1.msra.mxu0 0.0
  %1479 = vmatprep.subr.mxu0 0.0
  %1480 = vmatpush1.msra.mxu0 0.0
  %1481 = vmatprep.subr.mxu0 0.0
  %1482 = vmatpush1.msra.mxu0 0.0
  %1483 = vmatprep.subr.mxu0 0.0
  %1484 = vmatpush1.msra.mxu0 0.0
  %1485 = vmatprep.subr.mxu0 0.0
  %1486 = vmatpush1.msra.mxu0 0.0
  %1487 = vmatprep.subr.mxu0 0.0
  %1488 = vmatpush1.msra.mxu0 0.0
  %1489 = vmatprep.mubr.f32.mxu0 0.0
  %1490 = vmatmul.mubr.f32.gmra.mrb[0].mxu0 %v1423
  %v1491 = vpop.f32.mrb[0].mxu0
  %v1492 = vadd.f32 0.0, %v1491
  %v1493 = vpop.f32.mrb[0].mxu0
  %v1494 = vadd.f32 0.0, %v1493
  %1495 = vdwg.mxu0
  %v1496 = vadd.f32 %v1322, %v1492
  %v1497 = vadd.f32 %v1323, %v1494
  %v1498 = vld [vmem:[#allocation2 + $0x4] sm:$0xff]
  %v1499 = vld [vmem:[#allocation2 + $0xc] sm:$0xf]
  %v1502 = vcombine.high %v1498, %v1498
  %1503 = vrot.lane.b32.xlu0 %v1498, 111
  %v1504 = vpop.permute.xlu0 %1503
  %1505 = vrot.lane.b32.xlu0 %v1502, 111
  %v1506 = vpop.permute.xlu0 %1505
  %1507 = vrot.lane.b32.xlu0 %v1499, 111
  %v1508 = vpop.permute.xlu0 %1507
  %vm1509 = vcmask 908288
  %v1510 = vsel %vm1509, %v1504, %v1506
  %v1511 = vsel %vm1509, %v1506, %v1508
  %v1514 = vsel %vm441, %v1510, 0.0
  %v1515 = vsel %vm442, %v1511, 0.0
  %s1516 = scalar_lea.vmem %s1, 32
  %v1517 = vld [vmem:[%s1516] sm:$0xf]
  %v1519 = vsel %vm102, %v1517, 0
  %v1522 = vsel %vm106, %v1514, 0
  %v1525 = vsel %vm106, %v1515, 0
  %1527 = vmatprep.subr.mxu0 %v1525
  %1528 = vmatpush1.msra.mxu0 %v1522
  %1529 = vmatprep.subr.mxu0 0.0
  %1530 = vmatpush1.msra.mxu0 0.0
  %1531 = vmatprep.subr.mxu0 0.0
  %1532 = vmatpush1.msra.mxu0 0.0
  %1533 = vmatprep.subr.mxu0 0.0
  %1534 = vmatpush1.msra.mxu0 0.0
  %1535 = vmatprep.subr.mxu0 0.0
  %1536 = vmatpush1.msra.mxu0 0.0
  %1537 = vmatprep.subr.mxu0 0.0
  %1538 = vmatpush1.msra.mxu0 0.0
  %1539 = vmatprep.subr.mxu0 0.0
  %1540 = vmatpush1.msra.mxu0 0.0
  %1541 = vmatprep.subr.mxu0 0.0
  %1542 = vmatpush1.msra.mxu0 0.0
  %1543 = vmatprep.subr.mxu0 0.0
  %1544 = vmatpush1.msra.mxu0 0.0
  %1545 = vmatprep.subr.mxu0 0.0
  %1546 = vmatpush1.msra.mxu0 0.0
  %1547 = vmatprep.subr.mxu0 0.0
  %1548 = vmatpush1.msra.mxu0 0.0
  %1549 = vmatprep.subr.mxu0 0.0
  %1550 = vmatpush1.msra.mxu0 0.0
  %1551 = vmatprep.subr.mxu0 0.0
  %1552 = vmatpush1.msra.mxu0 0.0
  %1553 = vmatprep.subr.mxu0 0.0
  %1554 = vmatpush1.msra.mxu0 0.0
  %1555 = vmatprep.subr.mxu0 0.0
  %1556 = vmatpush1.msra.mxu0 0.0
  %1557 = vmatprep.subr.mxu0 0.0
  %1558 = vmatpush1.msra.mxu0 0.0
  %1559 = vmatprep.subr.mxu0 0.0
  %1560 = vmatpush1.msra.mxu0 0.0
  %1561 = vmatprep.subr.mxu0 0.0
  %1562 = vmatpush1.msra.mxu0 0.0
  %1563 = vmatprep.subr.mxu0 0.0
  %1564 = vmatpush1.msra.mxu0 0.0
  %1565 = vmatprep.subr.mxu0 0.0
  %1566 = vmatpush1.msra.mxu0 0.0
  %1567 = vmatprep.subr.mxu0 0.0
  %1568 = vmatpush1.msra.mxu0 0.0
  %1569 = vmatprep.subr.mxu0 0.0
  %1570 = vmatpush1.msra.mxu0 0.0
  %1571 = vmatprep.subr.mxu0 0.0
  %1572 = vmatpush1.msra.mxu0 0.0
  %1573 = vmatprep.subr.mxu0 0.0
  %1574 = vmatpush1.msra.mxu0 0.0
  %1575 = vmatprep.subr.mxu0 0.0
  %1576 = vmatpush1.msra.mxu0 0.0
  %1577 = vmatprep.subr.mxu0 0.0
  %1578 = vmatpush1.msra.mxu0 0.0
  %1579 = vmatprep.subr.mxu0 0.0
  %1580 = vmatpush1.msra.mxu0 0.0
  %1581 = vmatprep.subr.mxu0 0.0
  %1582 = vmatpush1.msra.mxu0 0.0
  %1583 = vmatprep.subr.mxu0 0.0
  %1584 = vmatpush1.msra.mxu0 0.0
  %1585 = vmatprep.subr.mxu0 0.0
  %1586 = vmatpush1.msra.mxu0 0.0
  %1587 = vmatprep.subr.mxu0 0.0
  %1588 = vmatpush1.msra.mxu0 0.0
  %1589 = vmatprep.subr.mxu0 0.0
  %1590 = vmatpush1.msra.mxu0 0.0
  %1591 = vmatprep.mubr.f32.mxu0 0.0
  %1592 = vmatmul.mubr.f32.gmra.mrb[0].mxu0 %v1519
  %v1593 = vpop.f32.mrb[0].mxu0
  %v1594 = vadd.f32 0.0, %v1593
  %v1595 = vpop.f32.mrb[0].mxu0
  %v1596 = vadd.f32 0.0, %v1595
  %1597 = vdwg.mxu0
  %v1598 = vadd.f32 %v1418, %v1594
  %v1599 = vadd.f32 %v1419, %v1596
  %s1600 = scalar_lea.vmem %s2, 32
  %v1601 = vld [vmem:[%s1600] sm:$0xf]
  %v1603 = vsel %vm102, %v1601, 0
  %1605 = vmatprep.subr.mxu0 %v1525
  %1606 = vmatpush1.msra.mxu0 %v1522
  %1607 = vmatprep.subr.mxu0 0.0
  %1608 = vmatpush1.msra.mxu0 0.0
  %1609 = vmatprep.subr.mxu0 0.0
  %1610 = vmatpush1.msra.mxu0 0.0
  %1611 = vmatprep.subr.mxu0 0.0
  %1612 = vmatpush1.msra.mxu0 0.0
  %1613 = vmatprep.subr.mxu0 0.0
  %1614 = vmatpush1.msra.mxu0 0.0
  %1615 = vmatprep.subr.mxu0 0.0
  %1616 = vmatpush1.msra.mxu0 0.0
  %1617 = vmatprep.subr.mxu0 0.0
  %1618 = vmatpush1.msra.mxu0 0.0
  %1619 = vmatprep.subr.mxu0 0.0
  %1620 = vmatpush1.msra.mxu0 0.0
  %1621 = vmatprep.subr.mxu0 0.0
  %1622 = vmatpush1.msra.mxu0 0.0
  %1623 = vmatprep.subr.mxu0 0.0
  %1624 = vmatpush1.msra.mxu0 0.0
  %1625 = vmatprep.subr.mxu0 0.0
  %1626 = vmatpush1.msra.mxu0 0.0
  %1627 = vmatprep.subr.mxu0 0.0
  %1628 = vmatpush1.msra.mxu0 0.0
  %1629 = vmatprep.subr.mxu0 0.0
  %1630 = vmatpush1.msra.mxu0 0.0
  %1631 = vmatprep.subr.mxu0 0.0
  %1632 = vmatpush1.msra.mxu0 0.0
  %1633 = vmatprep.subr.mxu0 0.0
  %1634 = vmatpush1.msra.mxu0 0.0
  %1635 = vmatprep.subr.mxu0 0.0
  %1636 = vmatpush1.msra.mxu0 0.0
  %1637 = vmatprep.subr.mxu0 0.0
  %1638 = vmatpush1.msra.mxu0 0.0
  %1639 = vmatprep.subr.mxu0 0.0
  %1640 = vmatpush1.msra.mxu0 0.0
  %1641 = vmatprep.subr.mxu0 0.0
  %1642 = vmatpush1.msra.mxu0 0.0
  %1643 = vmatprep.subr.mxu0 0.0
  %1644 = vmatpush1.msra.mxu0 0.0
  %1645 = vmatprep.subr.mxu0 0.0
  %1646 = vmatpush1.msra.mxu0 0.0
  %1647 = vmatprep.subr.mxu0 0.0
  %1648 = vmatpush1.msra.mxu0 0.0
  %1649 = vmatprep.subr.mxu0 0.0
  %1650 = vmatpush1.msra.mxu0 0.0
  %1651 = vmatprep.subr.mxu0 0.0
  %1652 = vmatpush1.msra.mxu0 0.0
  %1653 = vmatprep.subr.mxu0 0.0
  %1654 = vmatpush1.msra.mxu0 0.0
  %1655 = vmatprep.subr.mxu0 0.0
  %1656 = vmatpush1.msra.mxu0 0.0
  %1657 = vmatprep.subr.mxu0 0.0
  %1658 = vmatpush1.msra.mxu0 0.0
  %1659 = vmatprep.subr.mxu0 0.0
  %1660 = vmatpush1.msra.mxu0 0.0
  %1661 = vmatprep.subr.mxu0 0.0
  %1662 = vmatpush1.msra.mxu0 0.0
  %1663 = vmatprep.subr.mxu0 0.0
  %1664 = vmatpush1.msra.mxu0 0.0
  %1665 = vmatprep.subr.mxu0 0.0
  %1666 = vmatpush1.msra.mxu0 0.0
  %1667 = vmatprep.subr.mxu0 0.0
  %1668 = vmatpush1.msra.mxu0 0.0
  %1669 = vmatprep.mubr.f32.mxu0 0.0
  %1670 = vmatmul.mubr.f32.gmra.mrb[0].mxu0 %v1603
  %v1671 = vpop.f32.mrb[0].mxu0
  %v1672 = vadd.f32 0.0, %v1671
  %v1673 = vpop.f32.mrb[0].mxu0
  %v1674 = vadd.f32 0.0, %v1673
  %1675 = vdwg.mxu0
  %v1676 = vadd.f32 %v1496, %v1672
  %v1677 = vadd.f32 %v1497, %v1674
  %v1678 = vmax.f32 %v1598, %v1676
  %v1679 = vmax.f32 %v1599, %v1677
  %v1682 = vcombine.low %v1678, %v1679
  %1684 = vst [vmem:[#allocation2 + $0x4] sm:$0xff] %v1682
  %v1685 = vld [vmem:[%s7] sm:$0xf]
  %1687 = vset.pattern.permute.xlu0 0
  %1688 = vperm.xlu0 %1687, %v1685
  %v1689 = vpop.permute.xlu0 %1688
  %v1691 = vld [vmem:[%s8] sm:$0xf]
  %1693 = vset.pattern.permute.xlu0 0
  %1694 = vperm.xlu0 %1693, %v1691
  %v1695 = vpop.permute.xlu0 %1694
  %v1697 = vld [vmem:[#allocation2] sm:$0xff]
  %v1698 = vld [vmem:[#allocation2 + $0x8] sm:$0xf]
  %v1701 = vcombine.high %v1697, %v1697
  %1702 = vrot.lane.b32.xlu0 %v1697, 17
  %v1703 = vpop.permute.xlu0 %1702
  %1704 = vrot.lane.b32.xlu0 %v1701, 17
  %v1705 = vpop.permute.xlu0 %1704
  %1706 = vrot.lane.b32.xlu0 %v1698, 17
  %v1707 = vpop.permute.xlu0 %1706
  %v1708 = vsel %vm94, %v1703, %v1705
  %v1709 = vsel %vm94, %v1705, %v1707
  %v1712 = vsel %vm83, %v1708, 0.0
  %v1713 = vsel %vm84, %v1709, 0.0
  %v1714 = vld [vmem:[%s3] sm:$0xf]
  %v1716 = vsel %vm102, %v1714, 0
  %v1719 = vsel %vm106, %v1712, 0
  %v1722 = vsel %vm106, %v1713, 0
  %1724 = vmatprep.subr.mxu0 %v1722
  %1725 = vmatpush1.msra.mxu0 %v1719
  %1726 = vmatprep.subr.mxu0 0.0
  %1727 = vmatpush1.msra.mxu0 0.0
  %1728 = vmatprep.subr.mxu0 0.0
  %1729 = vmatpush1.msra.mxu0 0.0
  %1730 = vmatprep.subr.mxu0 0.0
  %1731 = vmatpush1.msra.mxu0 0.0
  %1732 = vmatprep.subr.mxu0 0.0
  %1733 = vmatpush1.msra.mxu0 0.0
  %1734 = vmatprep.subr.mxu0 0.0
  %1735 = vmatpush1.msra.mxu0 0.0
  %1736 = vmatprep.subr.mxu0 0.0
  %1737 = vmatpush1.msra.mxu0 0.0
  %1738 = vmatprep.subr.mxu0 0.0
  %1739 = vmatpush1.msra.mxu0 0.0
  %1740 = vmatprep.subr.mxu0 0.0
  %1741 = vmatpush1.msra.mxu0 0.0
  %1742 = vmatprep.subr.mxu0 0.0
  %1743 = vmatpush1.msra.mxu0 0.0
  %1744 = vmatprep.subr.mxu0 0.0
  %1745 = vmatpush1.msra.mxu0 0.0
  %1746 = vmatprep.subr.mxu0 0.0
  %1747 = vmatpush1.msra.mxu0 0.0
  %1748 = vmatprep.subr.mxu0 0.0
  %1749 = vmatpush1.msra.mxu0 0.0
  %1750 = vmatprep.subr.mxu0 0.0
  %1751 = vmatpush1.msra.mxu0 0.0
  %1752 = vmatprep.subr.mxu0 0.0
  %1753 = vmatpush1.msra.mxu0 0.0
  %1754 = vmatprep.subr.mxu0 0.0
  %1755 = vmatpush1.msra.mxu0 0.0
  %1756 = vmatprep.subr.mxu0 0.0
  %1757 = vmatpush1.msra.mxu0 0.0
  %1758 = vmatprep.subr.mxu0 0.0
  %1759 = vmatpush1.msra.mxu0 0.0
  %1760 = vmatprep.subr.mxu0 0.0
  %1761 = vmatpush1.msra.mxu0 0.0
  %1762 = vmatprep.subr.mxu0 0.0
  %1763 = vmatpush1.msra.mxu0 0.0
  %1764 = vmatprep.subr.mxu0 0.0
  %1765 = vmatpush1.msra.mxu0 0.0
  %1766 = vmatprep.subr.mxu0 0.0
  %1767 = vmatpush1.msra.mxu0 0.0
  %1768 = vmatprep.subr.mxu0 0.0
  %1769 = vmatpush1.msra.mxu0 0.0
  %1770 = vmatprep.subr.mxu0 0.0
  %1771 = vmatpush1.msra.mxu0 0.0
  %1772 = vmatprep.subr.mxu0 0.0
  %1773 = vmatpush1.msra.mxu0 0.0
  %1774 = vmatprep.subr.mxu0 0.0
  %1775 = vmatpush1.msra.mxu0 0.0
  %1776 = vmatprep.subr.mxu0 0.0
  %1777 = vmatpush1.msra.mxu0 0.0
  %1778 = vmatprep.subr.mxu0 0.0
  %1779 = vmatpush1.msra.mxu0 0.0
  %1780 = vmatprep.subr.mxu0 0.0
  %1781 = vmatpush1.msra.mxu0 0.0
  %1782 = vmatprep.subr.mxu0 0.0
  %1783 = vmatpush1.msra.mxu0 0.0
  %1784 = vmatprep.subr.mxu0 0.0
  %1785 = vmatpush1.msra.mxu0 0.0
  %1786 = vmatprep.subr.mxu0 0.0
  %1787 = vmatpush1.msra.mxu0 0.0
  %1788 = vmatprep.mubr.f32.mxu0 0.0
  %1789 = vmatmul.mubr.f32.gmra.mrb[0].mxu0 %v1716
  %v1790 = vpop.f32.mrb[0].mxu0
  %v1791 = vadd.f32 0.0, %v1790
  %v1792 = vpop.f32.mrb[0].mxu0
  %v1793 = vadd.f32 0.0, %v1792
  %1794 = vdwg.mxu0
  %v1795 = vadd.f32 %v1689, %v1791
  %v1796 = vadd.f32 %v1689, %v1793
  %v1797 = vld [vmem:[%s4] sm:$0xf]
  %v1799 = vsel %vm102, %v1797, 0
  %1801 = vmatprep.subr.mxu0 %v1722
  %1802 = vmatpush1.msra.mxu0 %v1719
  %1803 = vmatprep.subr.mxu0 0.0
  %1804 = vmatpush1.msra.mxu0 0.0
  %1805 = vmatprep.subr.mxu0 0.0
  %1806 = vmatpush1.msra.mxu0 0.0
  %1807 = vmatprep.subr.mxu0 0.0
  %1808 = vmatpush1.msra.mxu0 0.0
  %1809 = vmatprep.subr.mxu0 0.0
  %1810 = vmatpush1.msra.mxu0 0.0
  %1811 = vmatprep.subr.mxu0 0.0
  %1812 = vmatpush1.msra.mxu0 0.0
  %1813 = vmatprep.subr.mxu0 0.0
  %1814 = vmatpush1.msra.mxu0 0.0
  %1815 = vmatprep.subr.mxu0 0.0
  %1816 = vmatpush1.msra.mxu0 0.0
  %1817 = vmatprep.subr.mxu0 0.0
  %1818 = vmatpush1.msra.mxu0 0.0
  %1819 = vmatprep.subr.mxu0 0.0
  %1820 = vmatpush1.msra.mxu0 0.0
  %1821 = vmatprep.subr.mxu0 0.0
  %1822 = vmatpush1.msra.mxu0 0.0
  %1823 = vmatprep.subr.mxu0 0.0
  %1824 = vmatpush1.msra.mxu0 0.0
  %1825 = vmatprep.subr.mxu0 0.0
  %1826 = vmatpush1.msra.mxu0 0.0
  %1827 = vmatprep.subr.mxu0 0.0
  %1828 = vmatpush1.msra.mxu0 0.0
  %1829 = vmatprep.subr.mxu0 0.0
  %1830 = vmatpush1.msra.mxu0 0.0
  %1831 = vmatprep.subr.mxu0 0.0
  %1832 = vmatpush1.msra.mxu0 0.0
  %1833 = vmatprep.subr.mxu0 0.0
  %1834 = vmatpush1.msra.mxu0 0.0
  %1835 = vmatprep.subr.mxu0 0.0
  %1836 = vmatpush1.msra.mxu0 0.0
  %1837 = vmatprep.subr.mxu0 0.0
  %1838 = vmatpush1.msra.mxu0 0.0
  %1839 = vmatprep.subr.mxu0 0.0
  %1840 = vmatpush1.msra.mxu0 0.0
  %1841 = vmatprep.subr.mxu0 0.0
  %1842 = vmatpush1.msra.mxu0 0.0
  %1843 = vmatprep.subr.mxu0 0.0
  %1844 = vmatpush1.msra.mxu0 0.0
  %1845 = vmatprep.subr.mxu0 0.0
  %1846 = vmatpush1.msra.mxu0 0.0
  %1847 = vmatprep.subr.mxu0 0.0
  %1848 = vmatpush1.msra.mxu0 0.0
  %1849 = vmatprep.subr.mxu0 0.0
  %1850 = vmatpush1.msra.mxu0 0.0
  %1851 = vmatprep.subr.mxu0 0.0
  %1852 = vmatpush1.msra.mxu0 0.0
  %1853 = vmatprep.subr.mxu0 0.0
  %1854 = vmatpush1.msra.mxu0 0.0
  %1855 = vmatprep.subr.mxu0 0.0
  %1856 = vmatpush1.msra.mxu0 0.0
  %1857 = vmatprep.subr.mxu0 0.0
  %1858 = vmatpush1.msra.mxu0 0.0
  %1859 = vmatprep.subr.mxu0 0.0
  %1860 = vmatpush1.msra.mxu0 0.0
  %1861 = vmatprep.subr.mxu0 0.0
  %1862 = vmatpush1.msra.mxu0 0.0
  %1863 = vmatprep.subr.mxu0 0.0
  %1864 = vmatpush1.msra.mxu0 0.0
  %1865 = vmatprep.mubr.f32.mxu0 0.0
  %1866 = vmatmul.mubr.f32.gmra.mrb[0].mxu0 %v1799
  %v1867 = vpop.f32.mrb[0].mxu0
  %v1868 = vadd.f32 0.0, %v1867
  %v1869 = vpop.f32.mrb[0].mxu0
  %v1870 = vadd.f32 0.0, %v1869
  %1871 = vdwg.mxu0
  %v1872 = vadd.f32 %v1695, %v1868
  %v1873 = vadd.f32 %v1695, %v1870
  %v1874 = vld [vmem:[#allocation2] sm:$0xff]
  %v1875 = vld [vmem:[#allocation2 + $0x8] sm:$0xf]
  %s1876 = scalar_lea.vmem %s3, 4
  %v1877 = vld [vmem:[%s1876] sm:$0xf]
  %v1880 = vcombine.high %v1874, %v1874
  %1881 = vrot.lane.b32.xlu0 %v1874, 16
  %v1882 = vpop.permute.xlu0 %1881
  %1883 = vrot.lane.b32.xlu0 %v1880, 16
  %v1884 = vpop.permute.xlu0 %1883
  %1885 = vrot.lane.b32.xlu0 %v1875, 16
  %v1886 = vpop.permute.xlu0 %1885
  %v1887 = vsel %vm276, %v1882, %v1884
  %v1888 = vsel %vm276, %v1884, %v1886
  %v1890 = vsel %vm102, %v1877, 0
  %v1892 = vsel %vm106, %v1887, 0
  %v1894 = vsel %vm106, %v1888, 0
  %1896 = vmatprep.subr.mxu0 %v1894
  %1897 = vmatpush1.msra.mxu0 %v1892
  %1898 = vmatprep.subr.mxu0 0.0
  %1899 = vmatpush1.msra.mxu0 0.0
  %1900 = vmatprep.subr.mxu0 0.0
  %1901 = vmatpush1.msra.mxu0 0.0
  %1902 = vmatprep.subr.mxu0 0.0
  %1903 = vmatpush1.msra.mxu0 0.0
  %1904 = vmatprep.subr.mxu0 0.0
  %1905 = vmatpush1.msra.mxu0 0.0
  %1906 = vmatprep.subr.mxu0 0.0
  %1907 = vmatpush1.msra.mxu0 0.0
  %1908 = vmatprep.subr.mxu0 0.0
  %1909 = vmatpush1.msra.mxu0 0.0
  %1910 = vmatprep.subr.mxu0 0.0
  %1911 = vmatpush1.msra.mxu0 0.0
  %1912 = vmatprep.subr.mxu0 0.0
  %1913 = vmatpush1.msra.mxu0 0.0
  %1914 = vmatprep.subr.mxu0 0.0
  %1915 = vmatpush1.msra.mxu0 0.0
  %1916 = vmatprep.subr.mxu0 0.0
  %1917 = vmatpush1.msra.mxu0 0.0
  %1918 = vmatprep.subr.mxu0 0.0
  %1919 = vmatpush1.msra.mxu0 0.0
  %1920 = vmatprep.subr.mxu0 0.0
  %1921 = vmatpush1.msra.mxu0 0.0
  %1922 = vmatprep.subr.mxu0 0.0
  %1923 = vmatpush1.msra.mxu0 0.0
  %1924 = vmatprep.subr.mxu0 0.0
  %1925 = vmatpush1.msra.mxu0 0.0
  %1926 = vmatprep.subr.mxu0 0.0
  %1927 = vmatpush1.msra.mxu0 0.0
  %1928 = vmatprep.subr.mxu0 0.0
  %1929 = vmatpush1.msra.mxu0 0.0
  %1930 = vmatprep.subr.mxu0 0.0
  %1931 = vmatpush1.msra.mxu0 0.0
  %1932 = vmatprep.subr.mxu0 0.0
  %1933 = vmatpush1.msra.mxu0 0.0
  %1934 = vmatprep.subr.mxu0 0.0
  %1935 = vmatpush1.msra.mxu0 0.0
  %1936 = vmatprep.subr.mxu0 0.0
  %1937 = vmatpush1.msra.mxu0 0.0
  %1938 = vmatprep.subr.mxu0 0.0
  %1939 = vmatpush1.msra.mxu0 0.0
  %1940 = vmatprep.subr.mxu0 0.0
  %1941 = vmatpush1.msra.mxu0 0.0
  %1942 = vmatprep.subr.mxu0 0.0
  %1943 = vmatpush1.msra.mxu0 0.0
  %1944 = vmatprep.subr.mxu0 0.0
  %1945 = vmatpush1.msra.mxu0 0.0
  %1946 = vmatprep.subr.mxu0 0.0
  %1947 = vmatpush1.msra.mxu0 0.0
  %1948 = vmatprep.subr.mxu0 0.0
  %1949 = vmatpush1.msra.mxu0 0.0
  %1950 = vmatprep.subr.mxu0 0.0
  %1951 = vmatpush1.msra.mxu0 0.0
  %1952 = vmatprep.subr.mxu0 0.0
  %1953 = vmatpush1.msra.mxu0 0.0
  %1954 = vmatprep.subr.mxu0 0.0
  %1955 = vmatpush1.msra.mxu0 0.0
  %1956 = vmatprep.subr.mxu0 0.0
  %1957 = vmatpush1.msra.mxu0 0.0
  %1958 = vmatprep.subr.mxu0 0.0
  %1959 = vmatpush1.msra.mxu0 0.0
  %1960 = vmatprep.mubr.f32.mxu0 0.0
  %1961 = vmatmul.mubr.f32.gmra.mrb[0].mxu0 %v1890
  %v1962 = vpop.f32.mrb[0].mxu0
  %v1963 = vadd.f32 0.0, %v1962
  %v1964 = vpop.f32.mrb[0].mxu0
  %v1965 = vadd.f32 0.0, %v1964
  %1966 = vdwg.mxu0
  %v1967 = vadd.f32 %v1795, %v1963
  %v1968 = vadd.f32 %v1796, %v1965
  %s1969 = scalar_lea.vmem %s4, 4
  %v1970 = vld [vmem:[%s1969] sm:$0xf]
  %v1972 = vsel %vm102, %v1970, 0
  %1974 = vmatprep.subr.mxu0 %v1894
  %1975 = vmatpush1.msra.mxu0 %v1892
  %1976 = vmatprep.subr.mxu0 0.0
  %1977 = vmatpush1.msra.mxu0 0.0
  %1978 = vmatprep.subr.mxu0 0.0
  %1979 = vmatpush1.msra.mxu0 0.0
  %1980 = vmatprep.subr.mxu0 0.0
  %1981 = vmatpush1.msra.mxu0 0.0
  %1982 = vmatprep.subr.mxu0 0.0
  %1983 = vmatpush1.msra.mxu0 0.0
  %1984 = vmatprep.subr.mxu0 0.0
  %1985 = vmatpush1.msra.mxu0 0.0
  %1986 = vmatprep.subr.mxu0 0.0
  %1987 = vmatpush1.msra.mxu0 0.0
  %1988 = vmatprep.subr.mxu0 0.0
  %1989 = vmatpush1.msra.mxu0 0.0
  %1990 = vmatprep.subr.mxu0 0.0
  %1991 = vmatpush1.msra.mxu0 0.0
  %1992 = vmatprep.subr.mxu0 0.0
  %1993 = vmatpush1.msra.mxu0 0.0
  %1994 = vmatprep.subr.mxu0 0.0
  %1995 = vmatpush1.msra.mxu0 0.0
  %1996 = vmatprep.subr.mxu0 0.0
  %1997 = vmatpush1.msra.mxu0 0.0
  %1998 = vmatprep.subr.mxu0 0.0
  %1999 = vmatpush1.msra.mxu0 0.0
  %2000 = vmatprep.subr.mxu0 0.0
  %2001 = vmatpush1.msra.mxu0 0.0
  %2002 = vmatprep.subr.mxu0 0.0
  %2003 = vmatpush1.msra.mxu0 0.0
  %2004 = vmatprep.subr.mxu0 0.0
  %2005 = vmatpush1.msra.mxu0 0.0
  %2006 = vmatprep.subr.mxu0 0.0
  %2007 = vmatpush1.msra.mxu0 0.0
  %2008 = vmatprep.subr.mxu0 0.0
  %2009 = vmatpush1.msra.mxu0 0.0
  %2010 = vmatprep.subr.mxu0 0.0
  %2011 = vmatpush1.msra.mxu0 0.0
  %2012 = vmatprep.subr.mxu0 0.0
  %2013 = vmatpush1.msra.mxu0 0.0
  %2014 = vmatprep.subr.mxu0 0.0
  %2015 = vmatpush1.msra.mxu0 0.0
  %2016 = vmatprep.subr.mxu0 0.0
  %2017 = vmatpush1.msra.mxu0 0.0
  %2018 = vmatprep.subr.mxu0 0.0
  %2019 = vmatpush1.msra.mxu0 0.0
  %2020 = vmatprep.subr.mxu0 0.0
  %2021 = vmatpush1.msra.mxu0 0.0
  %2022 = vmatprep.subr.mxu0 0.0
  %2023 = vmatpush1.msra.mxu0 0.0
  %2024 = vmatprep.subr.mxu0 0.0
  %2025 = vmatpush1.msra.mxu0 0.0
  %2026 = vmatprep.subr.mxu0 0.0
  %2027 = vmatpush1.msra.mxu0 0.0
  %2028 = vmatprep.subr.mxu0 0.0
  %2029 = vmatpush1.msra.mxu0 0.0
  %2030 = vmatprep.subr.mxu0 0.0
  %2031 = vmatpush1.msra.mxu0 0.0
  %2032 = vmatprep.subr.mxu0 0.0
  %2033 = vmatpush1.msra.mxu0 0.0
  %2034 = vmatprep.subr.mxu0 0.0
  %2035 = vmatpush1.msra.mxu0 0.0
  %2036 = vmatprep.subr.mxu0 0.0
  %2037 = vmatpush1.msra.mxu0 0.0
  %2038 = vmatprep.mubr.f32.mxu0 0.0
  %2039 = vmatmul.mubr.f32.gmra.mrb[0].mxu0 %v1972
  %v2040 = vpop.f32.mrb[0].mxu0
  %v2041 = vadd.f32 0.0, %v2040
  %v2042 = vpop.f32.mrb[0].mxu0
  %v2043 = vadd.f32 0.0, %v2042
  %2044 = vdwg.mxu0
  %v2045 = vadd.f32 %v1872, %v2041
  %v2046 = vadd.f32 %v1873, %v2043
  %v2047 = vld [vmem:[#allocation2] sm:$0xff]
  %v2048 = vld [vmem:[#allocation2 + $0x8] sm:$0xf]
  %v2051 = vcombine.high %v2047, %v2047
  %2052 = vrot.lane.b32.xlu0 %v2047, 15
  %v2053 = vpop.permute.xlu0 %2052
  %2054 = vrot.lane.b32.xlu0 %v2051, 15
  %v2055 = vpop.permute.xlu0 %2054
  %2056 = vrot.lane.b32.xlu0 %v2048, 15
  %v2057 = vpop.permute.xlu0 %2056
  %v2058 = vsel %vm452, %v2053, %v2055
  %v2059 = vsel %vm452, %v2055, %v2057
  %v2062 = vsel %vm441, %v2058, 0.0
  %v2063 = vsel %vm442, %v2059, 0.0
  %s2064 = scalar_lea.vmem %s3, 8
  %v2065 = vld [vmem:[%s2064] sm:$0xf]
  %v2067 = vsel %vm102, %v2065, 0
  %v2070 = vsel %vm106, %v2062, 0
  %v2073 = vsel %vm106, %v2063, 0
  %2075 = vmatprep.subr.mxu0 %v2073
  %2076 = vmatpush1.msra.mxu0 %v2070
  %2077 = vmatprep.subr.mxu0 0.0
  %2078 = vmatpush1.msra.mxu0 0.0
  %2079 = vmatprep.subr.mxu0 0.0
  %2080 = vmatpush1.msra.mxu0 0.0
  %2081 = vmatprep.subr.mxu0 0.0
  %2082 = vmatpush1.msra.mxu0 0.0
  %2083 = vmatprep.subr.mxu0 0.0
  %2084 = vmatpush1.msra.mxu0 0.0
  %2085 = vmatprep.subr.mxu0 0.0
  %2086 = vmatpush1.msra.mxu0 0.0
  %2087 = vmatprep.subr.mxu0 0.0
  %2088 = vmatpush1.msra.mxu0 0.0
  %2089 = vmatprep.subr.mxu0 0.0
  %2090 = vmatpush1.msra.mxu0 0.0
  %2091 = vmatprep.subr.mxu0 0.0
  %2092 = vmatpush1.msra.mxu0 0.0
  %2093 = vmatprep.subr.mxu0 0.0
  %2094 = vmatpush1.msra.mxu0 0.0
  %2095 = vmatprep.subr.mxu0 0.0
  %2096 = vmatpush1.msra.mxu0 0.0
  %2097 = vmatprep.subr.mxu0 0.0
  %2098 = vmatpush1.msra.mxu0 0.0
  %2099 = vmatprep.subr.mxu0 0.0
  %2100 = vmatpush1.msra.mxu0 0.0
  %2101 = vmatprep.subr.mxu0 0.0
  %2102 = vmatpush1.msra.mxu0 0.0
  %2103 = vmatprep.subr.mxu0 0.0
  %2104 = vmatpush1.msra.mxu0 0.0
  %2105 = vmatprep.subr.mxu0 0.0
  %2106 = vmatpush1.msra.mxu0 0.0
  %2107 = vmatprep.subr.mxu0 0.0
  %2108 = vmatpush1.msra.mxu0 0.0
  %2109 = vmatprep.subr.mxu0 0.0
  %2110 = vmatpush1.msra.mxu0 0.0
  %2111 = vmatprep.subr.mxu0 0.0
  %2112 = vmatpush1.msra.mxu0 0.0
  %2113 = vmatprep.subr.mxu0 0.0
  %2114 = vmatpush1.msra.mxu0 0.0
  %2115 = vmatprep.subr.mxu0 0.0
  %2116 = vmatpush1.msra.mxu0 0.0
  %2117 = vmatprep.subr.mxu0 0.0
  %2118 = vmatpush1.msra.mxu0 0.0
  %2119 = vmatprep.subr.mxu0 0.0
  %2120 = vmatpush1.msra.mxu0 0.0
  %2121 = vmatprep.subr.mxu0 0.0
  %2122 = vmatpush1.msra.mxu0 0.0
  %2123 = vmatprep.subr.mxu0 0.0
  %2124 = vmatpush1.msra.mxu0 0.0
  %2125 = vmatprep.subr.mxu0 0.0
  %2126 = vmatpush1.msra.mxu0 0.0
  %2127 = vmatprep.subr.mxu0 0.0
  %2128 = vmatpush1.msra.mxu0 0.0
  %2129 = vmatprep.subr.mxu0 0.0
  %2130 = vmatpush1.msra.mxu0 0.0
  %2131 = vmatprep.subr.mxu0 0.0
  %2132 = vmatpush1.msra.mxu0 0.0
  %2133 = vmatprep.subr.mxu0 0.0
  %2134 = vmatpush1.msra.mxu0 0.0
  %2135 = vmatprep.subr.mxu0 0.0
  %2136 = vmatpush1.msra.mxu0 0.0
  %2137 = vmatprep.subr.mxu0 0.0
  %2138 = vmatpush1.msra.mxu0 0.0
  %2139 = vmatprep.mubr.f32.mxu0 0.0
  %2140 = vmatmul.mubr.f32.gmra.mrb[0].mxu0 %v2067
  %v2141 = vpop.f32.mrb[0].mxu0
  %v2142 = vadd.f32 0.0, %v2141
  %v2143 = vpop.f32.mrb[0].mxu0
  %v2144 = vadd.f32 0.0, %v2143
  %2145 = vdwg.mxu0
  %v2146 = vadd.f32 %v1967, %v2142
  %v2147 = vadd.f32 %v1968, %v2144
  %s2148 = scalar_lea.vmem %s4, 8
  %v2149 = vld [vmem:[%s2148] sm:$0xf]
  %v2151 = vsel %vm102, %v2149, 0
  %2153 = vmatprep.subr.mxu0 %v2073
  %2154 = vmatpush1.msra.mxu0 %v2070
  %2155 = vmatprep.subr.mxu0 0.0
  %2156 = vmatpush1.msra.mxu0 0.0
  %2157 = vmatprep.subr.mxu0 0.0
  %2158 = vmatpush1.msra.mxu0 0.0
  %2159 = vmatprep.subr.mxu0 0.0
  %2160 = vmatpush1.msra.mxu0 0.0
  %2161 = vmatprep.subr.mxu0 0.0
  %2162 = vmatpush1.msra.mxu0 0.0
  %2163 = vmatprep.subr.mxu0 0.0
  %2164 = vmatpush1.msra.mxu0 0.0
  %2165 = vmatprep.subr.mxu0 0.0
  %2166 = vmatpush1.msra.mxu0 0.0
  %2167 = vmatprep.subr.mxu0 0.0
  %2168 = vmatpush1.msra.mxu0 0.0
  %2169 = vmatprep.subr.mxu0 0.0
  %2170 = vmatpush1.msra.mxu0 0.0
  %2171 = vmatprep.subr.mxu0 0.0
  %2172 = vmatpush1.msra.mxu0 0.0
  %2173 = vmatprep.subr.mxu0 0.0
  %2174 = vmatpush1.msra.mxu0 0.0
  %2175 = vmatprep.subr.mxu0 0.0
  %2176 = vmatpush1.msra.mxu0 0.0
  %2177 = vmatprep.subr.mxu0 0.0
  %2178 = vmatpush1.msra.mxu0 0.0
  %2179 = vmatprep.subr.mxu0 0.0
  %2180 = vmatpush1.msra.mxu0 0.0
  %2181 = vmatprep.subr.mxu0 0.0
  %2182 = vmatpush1.msra.mxu0 0.0
  %2183 = vmatprep.subr.mxu0 0.0
  %2184 = vmatpush1.msra.mxu0 0.0
  %2185 = vmatprep.subr.mxu0 0.0
  %2186 = vmatpush1.msra.mxu0 0.0
  %2187 = vmatprep.subr.mxu0 0.0
  %2188 = vmatpush1.msra.mxu0 0.0
  %2189 = vmatprep.subr.mxu0 0.0
  %2190 = vmatpush1.msra.mxu0 0.0
  %2191 = vmatprep.subr.mxu0 0.0
  %2192 = vmatpush1.msra.mxu0 0.0
  %2193 = vmatprep.subr.mxu0 0.0
  %2194 = vmatpush1.msra.mxu0 0.0
  %2195 = vmatprep.subr.mxu0 0.0
  %2196 = vmatpush1.msra.mxu0 0.0
  %2197 = vmatprep.subr.mxu0 0.0
  %2198 = vmatpush1.msra.mxu0 0.0
  %2199 = vmatprep.subr.mxu0 0.0
  %2200 = vmatpush1.msra.mxu0 0.0
  %2201 = vmatprep.subr.mxu0 0.0
  %2202 = vmatpush1.msra.mxu0 0.0
  %2203 = vmatprep.subr.mxu0 0.0
  %2204 = vmatpush1.msra.mxu0 0.0
  %2205 = vmatprep.subr.mxu0 0.0
  %2206 = vmatpush1.msra.mxu0 0.0
  %2207 = vmatprep.subr.mxu0 0.0
  %2208 = vmatpush1.msra.mxu0 0.0
  %2209 = vmatprep.subr.mxu0 0.0
  %2210 = vmatpush1.msra.mxu0 0.0
  %2211 = vmatprep.subr.mxu0 0.0
  %2212 = vmatpush1.msra.mxu0 0.0
  %2213 = vmatprep.subr.mxu0 0.0
  %2214 = vmatpush1.msra.mxu0 0.0
  %2215 = vmatprep.subr.mxu0 0.0
  %2216 = vmatpush1.msra.mxu0 0.0
  %2217 = vmatprep.mubr.f32.mxu0 0.0
  %2218 = vmatmul.mubr.f32.gmra.mrb[0].mxu0 %v2151
  %v2219 = vpop.f32.mrb[0].mxu0
  %v2220 = vadd.f32 0.0, %v2219
  %v2221 = vpop.f32.mrb[0].mxu0
  %v2222 = vadd.f32 0.0, %v2221
  %2223 = vdwg.mxu0
  %v2224 = vadd.f32 %v2045, %v2220
  %v2225 = vadd.f32 %v2046, %v2222
  %v2226 = vld [vmem:[#allocation2] sm:$0xff]
  %v2227 = vld [vmem:[#allocation2 + $0x8] sm:$0xf]
  %v2230 = vcombine.high %v2226, %v2226
  %2231 = vrot.lane.b32.xlu0 %v2226, 1
  %v2232 = vpop.permute.xlu0 %2231
  %2233 = vrot.lane.b32.xlu0 %v2230, 1
  %v2234 = vpop.permute.xlu0 %2233
  %2235 = vrot.lane.b32.xlu0 %v2227, 1
  %v2236 = vpop.permute.xlu0 %2235
  %v2237 = vsel %vm632, %v2232, %v2234
  %v2238 = vsel %vm632, %v2234, %v2236
  %v2241 = vsel %vm83, %v2237, 0.0
  %v2242 = vsel %vm84, %v2238, 0.0
  %s2243 = scalar_lea.vmem %s3, 12
  %v2244 = vld [vmem:[%s2243] sm:$0xf]
  %v2246 = vsel %vm102, %v2244, 0
  %v2249 = vsel %vm106, %v2241, 0
  %v2252 = vsel %vm106, %v2242, 0
  %2254 = vmatprep.subr.mxu0 %v2252
  %2255 = vmatpush1.msra.mxu0 %v2249
  %2256 = vmatprep.subr.mxu0 0.0
  %2257 = vmatpush1.msra.mxu0 0.0
  %2258 = vmatprep.subr.mxu0 0.0
  %2259 = vmatpush1.msra.mxu0 0.0
  %2260 = vmatprep.subr.mxu0 0.0
  %2261 = vmatpush1.msra.mxu0 0.0
  %2262 = vmatprep.subr.mxu0 0.0
  %2263 = vmatpush1.msra.mxu0 0.0
  %2264 = vmatprep.subr.mxu0 0.0
  %2265 = vmatpush1.msra.mxu0 0.0
  %2266 = vmatprep.subr.mxu0 0.0
  %2267 = vmatpush1.msra.mxu0 0.0
  %2268 = vmatprep.subr.mxu0 0.0
  %2269 = vmatpush1.msra.mxu0 0.0
  %2270 = vmatprep.subr.mxu0 0.0
  %2271 = vmatpush1.msra.mxu0 0.0
  %2272 = vmatprep.subr.mxu0 0.0
  %2273 = vmatpush1.msra.mxu0 0.0
  %2274 = vmatprep.subr.mxu0 0.0
  %2275 = vmatpush1.msra.mxu0 0.0
  %2276 = vmatprep.subr.mxu0 0.0
  %2277 = vmatpush1.msra.mxu0 0.0
  %2278 = vmatprep.subr.mxu0 0.0
  %2279 = vmatpush1.msra.mxu0 0.0
  %2280 = vmatprep.subr.mxu0 0.0
  %2281 = vmatpush1.msra.mxu0 0.0
  %2282 = vmatprep.subr.mxu0 0.0
  %2283 = vmatpush1.msra.mxu0 0.0
  %2284 = vmatprep.subr.mxu0 0.0
  %2285 = vmatpush1.msra.mxu0 0.0
  %2286 = vmatprep.subr.mxu0 0.0
  %2287 = vmatpush1.msra.mxu0 0.0
  %2288 = vmatprep.subr.mxu0 0.0
  %2289 = vmatpush1.msra.mxu0 0.0
  %2290 = vmatprep.subr.mxu0 0.0
  %2291 = vmatpush1.msra.mxu0 0.0
  %2292 = vmatprep.subr.mxu0 0.0
  %2293 = vmatpush1.msra.mxu0 0.0
  %2294 = vmatprep.subr.mxu0 0.0
  %2295 = vmatpush1.msra.mxu0 0.0
  %2296 = vmatprep.subr.mxu0 0.0
  %2297 = vmatpush1.msra.mxu0 0.0
  %2298 = vmatprep.subr.mxu0 0.0
  %2299 = vmatpush1.msra.mxu0 0.0
  %2300 = vmatprep.subr.mxu0 0.0
  %2301 = vmatpush1.msra.mxu0 0.0
  %2302 = vmatprep.subr.mxu0 0.0
  %2303 = vmatpush1.msra.mxu0 0.0
  %2304 = vmatprep.subr.mxu0 0.0
  %2305 = vmatpush1.msra.mxu0 0.0
  %2306 = vmatprep.subr.mxu0 0.0
  %2307 = vmatpush1.msra.mxu0 0.0
  %2308 = vmatprep.subr.mxu0 0.0
  %2309 = vmatpush1.msra.mxu0 0.0
  %2310 = vmatprep.subr.mxu0 0.0
  %2311 = vmatpush1.msra.mxu0 0.0
  %2312 = vmatprep.subr.mxu0 0.0
  %2313 = vmatpush1.msra.mxu0 0.0
  %2314 = vmatprep.subr.mxu0 0.0
  %2315 = vmatpush1.msra.mxu0 0.0
  %2316 = vmatprep.subr.mxu0 0.0
  %2317 = vmatpush1.msra.mxu0 0.0
  %2318 = vmatprep.mubr.f32.mxu0 0.0
  %2319 = vmatmul.mubr.f32.gmra.mrb[0].mxu0 %v2246
  %v2320 = vpop.f32.mrb[0].mxu0
  %v2321 = vadd.f32 0.0, %v2320
  %v2322 = vpop.f32.mrb[0].mxu0
  %v2323 = vadd.f32 0.0, %v2322
  %2324 = vdwg.mxu0
  %v2325 = vadd.f32 %v2146, %v2321
  %v2326 = vadd.f32 %v2147, %v2323
  %s2327 = scalar_lea.vmem %s4, 12
  %v2328 = vld [vmem:[%s2327] sm:$0xf]
  %v2330 = vsel %vm102, %v2328, 0
  %2332 = vmatprep.subr.mxu0 %v2252
  %2333 = vmatpush1.msra.mxu0 %v2249
  %2334 = vmatprep.subr.mxu0 0.0
  %2335 = vmatpush1.msra.mxu0 0.0
  %2336 = vmatprep.subr.mxu0 0.0
  %2337 = vmatpush1.msra.mxu0 0.0
  %2338 = vmatprep.subr.mxu0 0.0
  %2339 = vmatpush1.msra.mxu0 0.0
  %2340 = vmatprep.subr.mxu0 0.0
  %2341 = vmatpush1.msra.mxu0 0.0
  %2342 = vmatprep.subr.mxu0 0.0
  %2343 = vmatpush1.msra.mxu0 0.0
  %2344 = vmatprep.subr.mxu0 0.0
  %2345 = vmatpush1.msra.mxu0 0.0
  %2346 = vmatprep.subr.mxu0 0.0
  %2347 = vmatpush1.msra.mxu0 0.0
  %2348 = vmatprep.subr.mxu0 0.0
  %2349 = vmatpush1.msra.mxu0 0.0
  %2350 = vmatprep.subr.mxu0 0.0
  %2351 = vmatpush1.msra.mxu0 0.0
  %2352 = vmatprep.subr.mxu0 0.0
  %2353 = vmatpush1.msra.mxu0 0.0
  %2354 = vmatprep.subr.mxu0 0.0
  %2355 = vmatpush1.msra.mxu0 0.0
  %2356 = vmatprep.subr.mxu0 0.0
  %2357 = vmatpush1.msra.mxu0 0.0
  %2358 = vmatprep.subr.mxu0 0.0
  %2359 = vmatpush1.msra.mxu0 0.0
  %2360 = vmatprep.subr.mxu0 0.0
  %2361 = vmatpush1.msra.mxu0 0.0
  %2362 = vmatprep.subr.mxu0 0.0
  %2363 = vmatpush1.msra.mxu0 0.0
  %2364 = vmatprep.subr.mxu0 0.0
  %2365 = vmatpush1.msra.mxu0 0.0
  %2366 = vmatprep.subr.mxu0 0.0
  %2367 = vmatpush1.msra.mxu0 0.0
  %2368 = vmatprep.subr.mxu0 0.0
  %2369 = vmatpush1.msra.mxu0 0.0
  %2370 = vmatprep.subr.mxu0 0.0
  %2371 = vmatpush1.msra.mxu0 0.0
  %2372 = vmatprep.subr.mxu0 0.0
  %2373 = vmatpush1.msra.mxu0 0.0
  %2374 = vmatprep.subr.mxu0 0.0
  %2375 = vmatpush1.msra.mxu0 0.0
  %2376 = vmatprep.subr.mxu0 0.0
  %2377 = vmatpush1.msra.mxu0 0.0
  %2378 = vmatprep.subr.mxu0 0.0
  %2379 = vmatpush1.msra.mxu0 0.0
  %2380 = vmatprep.subr.mxu0 0.0
  %2381 = vmatpush1.msra.mxu0 0.0
  %2382 = vmatprep.subr.mxu0 0.0
  %2383 = vmatpush1.msra.mxu0 0.0
  %2384 = vmatprep.subr.mxu0 0.0
  %2385 = vmatpush1.msra.mxu0 0.0
  %2386 = vmatprep.subr.mxu0 0.0
  %2387 = vmatpush1.msra.mxu0 0.0
  %2388 = vmatprep.subr.mxu0 0.0
  %2389 = vmatpush1.msra.mxu0 0.0
  %2390 = vmatprep.subr.mxu0 0.0
  %2391 = vmatpush1.msra.mxu0 0.0
  %2392 = vmatprep.subr.mxu0 0.0
  %2393 = vmatpush1.msra.mxu0 0.0
  %2394 = vmatprep.subr.mxu0 0.0
  %2395 = vmatpush1.msra.mxu0 0.0
  %2396 = vmatprep.mubr.f32.mxu0 0.0
  %2397 = vmatmul.mubr.f32.gmra.mrb[0].mxu0 %v2330
  %v2398 = vpop.f32.mrb[0].mxu0
  %v2399 = vadd.f32 0.0, %v2398
  %v2400 = vpop.f32.mrb[0].mxu0
  %v2401 = vadd.f32 0.0, %v2400
  %2402 = vdwg.mxu0
  %v2403 = vadd.f32 %v2224, %v2399
  %v2404 = vadd.f32 %v2225, %v2401
  %v2405 = vld [vmem:[#allocation2 + $0x4] sm:$0xff]
  %s2406 = scalar_lea.vmem %s3, 16
  %v2407 = vld [vmem:[%s2406] sm:$0xf]
  %v2409 = vcombine.high %v2405, %v2405
  %v2411 = vsel %vm102, %v2407, 0
  %v2413 = vsel %vm106, %v2405, 0
  %v2415 = vsel %vm106, %v2409, 0
  %2417 = vmatprep.subr.mxu0 %v2415
  %2418 = vmatpush1.msra.mxu0 %v2413
  %2419 = vmatprep.subr.mxu0 0.0
  %2420 = vmatpush1.msra.mxu0 0.0
  %2421 = vmatprep.subr.mxu0 0.0
  %2422 = vmatpush1.msra.mxu0 0.0
  %2423 = vmatprep.subr.mxu0 0.0
  %2424 = vmatpush1.msra.mxu0 0.0
  %2425 = vmatprep.subr.mxu0 0.0
  %2426 = vmatpush1.msra.mxu0 0.0
  %2427 = vmatprep.subr.mxu0 0.0
  %2428 = vmatpush1.msra.mxu0 0.0
  %2429 = vmatprep.subr.mxu0 0.0
  %2430 = vmatpush1.msra.mxu0 0.0
  %2431 = vmatprep.subr.mxu0 0.0
  %2432 = vmatpush1.msra.mxu0 0.0
  %2433 = vmatprep.subr.mxu0 0.0
  %2434 = vmatpush1.msra.mxu0 0.0
  %2435 = vmatprep.subr.mxu0 0.0
  %2436 = vmatpush1.msra.mxu0 0.0
  %2437 = vmatprep.subr.mxu0 0.0
  %2438 = vmatpush1.msra.mxu0 0.0
  %2439 = vmatprep.subr.mxu0 0.0
  %2440 = vmatpush1.msra.mxu0 0.0
  %2441 = vmatprep.subr.mxu0 0.0
  %2442 = vmatpush1.msra.mxu0 0.0
  %2443 = vmatprep.subr.mxu0 0.0
  %2444 = vmatpush1.msra.mxu0 0.0
  %2445 = vmatprep.subr.mxu0 0.0
  %2446 = vmatpush1.msra.mxu0 0.0
  %2447 = vmatprep.subr.mxu0 0.0
  %2448 = vmatpush1.msra.mxu0 0.0
  %2449 = vmatprep.subr.mxu0 0.0
  %2450 = vmatpush1.msra.mxu0 0.0
  %2451 = vmatprep.subr.mxu0 0.0
  %2452 = vmatpush1.msra.mxu0 0.0
  %2453 = vmatprep.subr.mxu0 0.0
  %2454 = vmatpush1.msra.mxu0 0.0
  %2455 = vmatprep.subr.mxu0 0.0
  %2456 = vmatpush1.msra.mxu0 0.0
  %2457 = vmatprep.subr.mxu0 0.0
  %2458 = vmatpush1.msra.mxu0 0.0
  %2459 = vmatprep.subr.mxu0 0.0
  %2460 = vmatpush1.msra.mxu0 0.0
  %2461 = vmatprep.subr.mxu0 0.0
  %2462 = vmatpush1.msra.mxu0 0.0
  %2463 = vmatprep.subr.mxu0 0.0
  %2464 = vmatpush1.msra.mxu0 0.0
  %2465 = vmatprep.subr.mxu0 0.0
  %2466 = vmatpush1.msra.mxu0 0.0
  %2467 = vmatprep.subr.mxu0 0.0
  %2468 = vmatpush1.msra.mxu0 0.0
  %2469 = vmatprep.subr.mxu0 0.0
  %2470 = vmatpush1.msra.mxu0 0.0
  %2471 = vmatprep.subr.mxu0 0.0
  %2472 = vmatpush1.msra.mxu0 0.0
  %2473 = vmatprep.subr.mxu0 0.0
  %2474 = vmatpush1.msra.mxu0 0.0
  %2475 = vmatprep.subr.mxu0 0.0
  %2476 = vmatpush1.msra.mxu0 0.0
  %2477 = vmatprep.subr.mxu0 0.0
  %2478 = vmatpush1.msra.mxu0 0.0
  %2479 = vmatprep.subr.mxu0 0.0
  %2480 = vmatpush1.msra.mxu0 0.0
  %2481 = vmatprep.mubr.f32.mxu0 0.0
  %2482 = vmatmul.mubr.f32.gmra.mrb[0].mxu0 %v2411
  %v2483 = vpop.f32.mrb[0].mxu0
  %v2484 = vadd.f32 0.0, %v2483
  %v2485 = vpop.f32.mrb[0].mxu0
  %v2486 = vadd.f32 0.0, %v2485
  %2487 = vdwg.mxu0
  %v2488 = vadd.f32 %v2325, %v2484
  %v2489 = vadd.f32 %v2326, %v2486
  %s2490 = scalar_lea.vmem %s4, 16
  %v2491 = vld [vmem:[%s2490] sm:$0xf]
  %v2493 = vsel %vm102, %v2491, 0
  %2495 = vmatprep.subr.mxu0 %v2415
  %2496 = vmatpush1.msra.mxu0 %v2413
  %2497 = vmatprep.subr.mxu0 0.0
  %2498 = vmatpush1.msra.mxu0 0.0
  %2499 = vmatprep.subr.mxu0 0.0
  %2500 = vmatpush1.msra.mxu0 0.0
  %2501 = vmatprep.subr.mxu0 0.0
  %2502 = vmatpush1.msra.mxu0 0.0
  %2503 = vmatprep.subr.mxu0 0.0
  %2504 = vmatpush1.msra.mxu0 0.0
  %2505 = vmatprep.subr.mxu0 0.0
  %2506 = vmatpush1.msra.mxu0 0.0
  %2507 = vmatprep.subr.mxu0 0.0
  %2508 = vmatpush1.msra.mxu0 0.0
  %2509 = vmatprep.subr.mxu0 0.0
  %2510 = vmatpush1.msra.mxu0 0.0
  %2511 = vmatprep.subr.mxu0 0.0
  %2512 = vmatpush1.msra.mxu0 0.0
  %2513 = vmatprep.subr.mxu0 0.0
  %2514 = vmatpush1.msra.mxu0 0.0
  %2515 = vmatprep.subr.mxu0 0.0
  %2516 = vmatpush1.msra.mxu0 0.0
  %2517 = vmatprep.subr.mxu0 0.0
  %2518 = vmatpush1.msra.mxu0 0.0
  %2519 = vmatprep.subr.mxu0 0.0
  %2520 = vmatpush1.msra.mxu0 0.0
  %2521 = vmatprep.subr.mxu0 0.0
  %2522 = vmatpush1.msra.mxu0 0.0
  %2523 = vmatprep.subr.mxu0 0.0
  %2524 = vmatpush1.msra.mxu0 0.0
  %2525 = vmatprep.subr.mxu0 0.0
  %2526 = vmatpush1.msra.mxu0 0.0
  %2527 = vmatprep.subr.mxu0 0.0
  %2528 = vmatpush1.msra.mxu0 0.0
  %2529 = vmatprep.subr.mxu0 0.0
  %2530 = vmatpush1.msra.mxu0 0.0
  %2531 = vmatprep.subr.mxu0 0.0
  %2532 = vmatpush1.msra.mxu0 0.0
  %2533 = vmatprep.subr.mxu0 0.0
  %2534 = vmatpush1.msra.mxu0 0.0
  %2535 = vmatprep.subr.mxu0 0.0
  %2536 = vmatpush1.msra.mxu0 0.0
  %2537 = vmatprep.subr.mxu0 0.0
  %2538 = vmatpush1.msra.mxu0 0.0
  %2539 = vmatprep.subr.mxu0 0.0
  %2540 = vmatpush1.msra.mxu0 0.0
  %2541 = vmatprep.subr.mxu0 0.0
  %2542 = vmatpush1.msra.mxu0 0.0
  %2543 = vmatprep.subr.mxu0 0.0
  %2544 = vmatpush1.msra.mxu0 0.0
  %2545 = vmatprep.subr.mxu0 0.0
  %2546 = vmatpush1.msra.mxu0 0.0
  %2547 = vmatprep.subr.mxu0 0.0
  %2548 = vmatpush1.msra.mxu0 0.0
  %2549 = vmatprep.subr.mxu0 0.0
  %2550 = vmatpush1.msra.mxu0 0.0
  %2551 = vmatprep.subr.mxu0 0.0
  %2552 = vmatpush1.msra.mxu0 0.0
  %2553 = vmatprep.subr.mxu0 0.0
  %2554 = vmatpush1.msra.mxu0 0.0
  %2555 = vmatprep.subr.mxu0 0.0
  %2556 = vmatpush1.msra.mxu0 0.0
  %2557 = vmatprep.subr.mxu0 0.0
  %2558 = vmatpush1.msra.mxu0 0.0
  %2559 = vmatprep.mubr.f32.mxu0 0.0
  %2560 = vmatmul.mubr.f32.gmra.mrb[0].mxu0 %v2493
  %v2561 = vpop.f32.mrb[0].mxu0
  %v2562 = vadd.f32 0.0, %v2561
  %v2563 = vpop.f32.mrb[0].mxu0
  %v2564 = vadd.f32 0.0, %v2563
  %2565 = vdwg.mxu0
  %v2566 = vadd.f32 %v2403, %v2562
  %v2567 = vadd.f32 %v2404, %v2564
  %v2568 = vld [vmem:[#allocation2 + $0x4] sm:$0xff]
  %v2569 = vld [vmem:[#allocation2 + $0xc] sm:$0xf]
  %v2572 = vcombine.high %v2568, %v2568
  %2573 = vrot.lane.b32.xlu0 %v2568, 127
  %v2574 = vpop.permute.xlu0 %2573
  %2575 = vrot.lane.b32.xlu0 %v2572, 127
  %v2576 = vpop.permute.xlu0 %2575
  %2577 = vrot.lane.b32.xlu0 %v2569, 127
  %v2578 = vpop.permute.xlu0 %2577
  %v2579 = vsel %vm975, %v2574, %v2576
  %v2580 = vsel %vm975, %v2576, %v2578
  %v2583 = vsel %vm441, %v2579, 0.0
  %v2584 = vsel %vm442, %v2580, 0.0
  %s2585 = scalar_lea.vmem %s3, 20
  %v2586 = vld [vmem:[%s2585] sm:$0xf]
  %v2588 = vsel %vm102, %v2586, 0
  %v2591 = vsel %vm106, %v2583, 0
  %v2594 = vsel %vm106, %v2584, 0
  %2596 = vmatprep.subr.mxu0 %v2594
  %2597 = vmatpush1.msra.mxu0 %v2591
  %2598 = vmatprep.subr.mxu0 0.0
  %2599 = vmatpush1.msra.mxu0 0.0
  %2600 = vmatprep.subr.mxu0 0.0
  %2601 = vmatpush1.msra.mxu0 0.0
  %2602 = vmatprep.subr.mxu0 0.0
  %2603 = vmatpush1.msra.mxu0 0.0
  %2604 = vmatprep.subr.mxu0 0.0
  %2605 = vmatpush1.msra.mxu0 0.0
  %2606 = vmatprep.subr.mxu0 0.0
  %2607 = vmatpush1.msra.mxu0 0.0
  %2608 = vmatprep.subr.mxu0 0.0
  %2609 = vmatpush1.msra.mxu0 0.0
  %2610 = vmatprep.subr.mxu0 0.0
  %2611 = vmatpush1.msra.mxu0 0.0
  %2612 = vmatprep.subr.mxu0 0.0
  %2613 = vmatpush1.msra.mxu0 0.0
  %2614 = vmatprep.subr.mxu0 0.0
  %2615 = vmatpush1.msra.mxu0 0.0
  %2616 = vmatprep.subr.mxu0 0.0
  %2617 = vmatpush1.msra.mxu0 0.0
  %2618 = vmatprep.subr.mxu0 0.0
  %2619 = vmatpush1.msra.mxu0 0.0
  %2620 = vmatprep.subr.mxu0 0.0
  %2621 = vmatpush1.msra.mxu0 0.0
  %2622 = vmatprep.subr.mxu0 0.0
  %2623 = vmatpush1.msra.mxu0 0.0
  %2624 = vmatprep.subr.mxu0 0.0
  %2625 = vmatpush1.msra.mxu0 0.0
  %2626 = vmatprep.subr.mxu0 0.0
  %2627 = vmatpush1.msra.mxu0 0.0
  %2628 = vmatprep.subr.mxu0 0.0
  %2629 = vmatpush1.msra.mxu0 0.0
  %2630 = vmatprep.subr.mxu0 0.0
  %2631 = vmatpush1.msra.mxu0 0.0
  %2632 = vmatprep.subr.mxu0 0.0
  %2633 = vmatpush1.msra.mxu0 0.0
  %2634 = vmatprep.subr.mxu0 0.0
  %2635 = vmatpush1.msra.mxu0 0.0
  %2636 = vmatprep.subr.mxu0 0.0
  %2637 = vmatpush1.msra.mxu0 0.0
  %2638 = vmatprep.subr.mxu0 0.0
  %2639 = vmatpush1.msra.mxu0 0.0
  %2640 = vmatprep.subr.mxu0 0.0
  %2641 = vmatpush1.msra.mxu0 0.0
  %2642 = vmatprep.subr.mxu0 0.0
  %2643 = vmatpush1.msra.mxu0 0.0
  %2644 = vmatprep.subr.mxu0 0.0
  %2645 = vmatpush1.msra.mxu0 0.0
  %2646 = vmatprep.subr.mxu0 0.0
  %2647 = vmatpush1.msra.mxu0 0.0
  %2648 = vmatprep.subr.mxu0 0.0
  %2649 = vmatpush1.msra.mxu0 0.0
  %2650 = vmatprep.subr.mxu0 0.0
  %2651 = vmatpush1.msra.mxu0 0.0
  %2652 = vmatprep.subr.mxu0 0.0
  %2653 = vmatpush1.msra.mxu0 0.0
  %2654 = vmatprep.subr.mxu0 0.0
  %2655 = vmatpush1.msra.mxu0 0.0
  %2656 = vmatprep.subr.mxu0 0.0
  %2657 = vmatpush1.msra.mxu0 0.0
  %2658 = vmatprep.subr.mxu0 0.0
  %2659 = vmatpush1.msra.mxu0 0.0
  %2660 = vmatprep.mubr.f32.mxu0 0.0
  %2661 = vmatmul.mubr.f32.gmra.mrb[0].mxu0 %v2588
  %v2662 = vpop.f32.mrb[0].mxu0
  %v2663 = vadd.f32 0.0, %v2662
  %v2664 = vpop.f32.mrb[0].mxu0
  %v2665 = vadd.f32 0.0, %v2664
  %2666 = vdwg.mxu0
  %v2667 = vadd.f32 %v2488, %v2663
  %v2668 = vadd.f32 %v2489, %v2665
  %s2669 = scalar_lea.vmem %s4, 20
  %v2670 = vld [vmem:[%s2669] sm:$0xf]
  %v2672 = vsel %vm102, %v2670, 0
  %2674 = vmatprep.subr.mxu0 %v2594
  %2675 = vmatpush1.msra.mxu0 %v2591
  %2676 = vmatprep.subr.mxu0 0.0
  %2677 = vmatpush1.msra.mxu0 0.0
  %2678 = vmatprep.subr.mxu0 0.0
  %2679 = vmatpush1.msra.mxu0 0.0
  %2680 = vmatprep.subr.mxu0 0.0
  %2681 = vmatpush1.msra.mxu0 0.0
  %2682 = vmatprep.subr.mxu0 0.0
  %2683 = vmatpush1.msra.mxu0 0.0
  %2684 = vmatprep.subr.mxu0 0.0
  %2685 = vmatpush1.msra.mxu0 0.0
  %2686 = vmatprep.subr.mxu0 0.0
  %2687 = vmatpush1.msra.mxu0 0.0
  %2688 = vmatprep.subr.mxu0 0.0
  %2689 = vmatpush1.msra.mxu0 0.0
  %2690 = vmatprep.subr.mxu0 0.0
  %2691 = vmatpush1.msra.mxu0 0.0
  %2692 = vmatprep.subr.mxu0 0.0
  %2693 = vmatpush1.msra.mxu0 0.0
  %2694 = vmatprep.subr.mxu0 0.0
  %2695 = vmatpush1.msra.mxu0 0.0
  %2696 = vmatprep.subr.mxu0 0.0
  %2697 = vmatpush1.msra.mxu0 0.0
  %2698 = vmatprep.subr.mxu0 0.0
  %2699 = vmatpush1.msra.mxu0 0.0
  %2700 = vmatprep.subr.mxu0 0.0
  %2701 = vmatpush1.msra.mxu0 0.0
  %2702 = vmatprep.subr.mxu0 0.0
  %2703 = vmatpush1.msra.mxu0 0.0
  %2704 = vmatprep.subr.mxu0 0.0
  %2705 = vmatpush1.msra.mxu0 0.0
  %2706 = vmatprep.subr.mxu0 0.0
  %2707 = vmatpush1.msra.mxu0 0.0
  %2708 = vmatprep.subr.mxu0 0.0
  %2709 = vmatpush1.msra.mxu0 0.0
  %2710 = vmatprep.subr.mxu0 0.0
  %2711 = vmatpush1.msra.mxu0 0.0
  %2712 = vmatprep.subr.mxu0 0.0
  %2713 = vmatpush1.msra.mxu0 0.0
  %2714 = vmatprep.subr.mxu0 0.0
  %2715 = vmatpush1.msra.mxu0 0.0
  %2716 = vmatprep.subr.mxu0 0.0
  %2717 = vmatpush1.msra.mxu0 0.0
  %2718 = vmatprep.subr.mxu0 0.0
  %2719 = vmatpush1.msra.mxu0 0.0
  %2720 = vmatprep.subr.mxu0 0.0
  %2721 = vmatpush1.msra.mxu0 0.0
  %2722 = vmatprep.subr.mxu0 0.0
  %2723 = vmatpush1.msra.mxu0 0.0
  %2724 = vmatprep.subr.mxu0 0.0
  %2725 = vmatpush1.msra.mxu0 0.0
  %2726 = vmatprep.subr.mxu0 0.0
  %2727 = vmatpush1.msra.mxu0 0.0
  %2728 = vmatprep.subr.mxu0 0.0
  %2729 = vmatpush1.msra.mxu0 0.0
  %2730 = vmatprep.subr.mxu0 0.0
  %2731 = vmatpush1.msra.mxu0 0.0
  %2732 = vmatprep.subr.mxu0 0.0
  %2733 = vmatpush1.msra.mxu0 0.0
  %2734 = vmatprep.subr.mxu0 0.0
  %2735 = vmatpush1.msra.mxu0 0.0
  %2736 = vmatprep.subr.mxu0 0.0
  %2737 = vmatpush1.msra.mxu0 0.0
  %2738 = vmatprep.mubr.f32.mxu0 0.0
  %2739 = vmatmul.mubr.f32.gmra.mrb[0].mxu0 %v2672
  %v2740 = vpop.f32.mrb[0].mxu0
  %v2741 = vadd.f32 0.0, %v2740
  %v2742 = vpop.f32.mrb[0].mxu0
  %v2743 = vadd.f32 0.0, %v2742
  %2744 = vdwg.mxu0
  %v2745 = vadd.f32 %v2566, %v2741
  %v2746 = vadd.f32 %v2567, %v2743
  %v2747 = vld [vmem:[#allocation2 + $0x4] sm:$0xff]
  %v2748 = vld [vmem:[#allocation2 + $0xc] sm:$0xf]
  %v2751 = vcombine.high %v2747, %v2747
  %2752 = vrot.lane.b32.xlu0 %v2747, 113
  %v2753 = vpop.permute.xlu0 %2752
  %2754 = vrot.lane.b32.xlu0 %v2751, 113
  %v2755 = vpop.permute.xlu0 %2754
  %2756 = vrot.lane.b32.xlu0 %v2748, 113
  %v2757 = vpop.permute.xlu0 %2756
  %v2758 = vsel %vm1155, %v2753, %v2755
  %v2759 = vsel %vm1155, %v2755, %v2757
  %v2762 = vsel %vm83, %v2758, 0.0
  %v2763 = vsel %vm84, %v2759, 0.0
  %s2764 = scalar_lea.vmem %s3, 24
  %v2765 = vld [vmem:[%s2764] sm:$0xf]
  %v2767 = vsel %vm102, %v2765, 0
  %v2770 = vsel %vm106, %v2762, 0
  %v2773 = vsel %vm106, %v2763, 0
  %2775 = vmatprep.subr.mxu0 %v2773
  %2776 = vmatpush1.msra.mxu0 %v2770
  %2777 = vmatprep.subr.mxu0 0.0
  %2778 = vmatpush1.msra.mxu0 0.0
  %2779 = vmatprep.subr.mxu0 0.0
  %2780 = vmatpush1.msra.mxu0 0.0
  %2781 = vmatprep.subr.mxu0 0.0
  %2782 = vmatpush1.msra.mxu0 0.0
  %2783 = vmatprep.subr.mxu0 0.0
  %2784 = vmatpush1.msra.mxu0 0.0
  %2785 = vmatprep.subr.mxu0 0.0
  %2786 = vmatpush1.msra.mxu0 0.0
  %2787 = vmatprep.subr.mxu0 0.0
  %2788 = vmatpush1.msra.mxu0 0.0
  %2789 = vmatprep.subr.mxu0 0.0
  %2790 = vmatpush1.msra.mxu0 0.0
  %2791 = vmatprep.subr.mxu0 0.0
  %2792 = vmatpush1.msra.mxu0 0.0
  %2793 = vmatprep.subr.mxu0 0.0
  %2794 = vmatpush1.msra.mxu0 0.0
  %2795 = vmatprep.subr.mxu0 0.0
  %2796 = vmatpush1.msra.mxu0 0.0
  %2797 = vmatprep.subr.mxu0 0.0
  %2798 = vmatpush1.msra.mxu0 0.0
  %2799 = vmatprep.subr.mxu0 0.0
  %2800 = vmatpush1.msra.mxu0 0.0
  %2801 = vmatprep.subr.mxu0 0.0
  %2802 = vmatpush1.msra.mxu0 0.0
  %2803 = vmatprep.subr.mxu0 0.0
  %2804 = vmatpush1.msra.mxu0 0.0
  %2805 = vmatprep.subr.mxu0 0.0
  %2806 = vmatpush1.msra.mxu0 0.0
  %2807 = vmatprep.subr.mxu0 0.0
  %2808 = vmatpush1.msra.mxu0 0.0
  %2809 = vmatprep.subr.mxu0 0.0
  %2810 = vmatpush1.msra.mxu0 0.0
  %2811 = vmatprep.subr.mxu0 0.0
  %2812 = vmatpush1.msra.mxu0 0.0
  %2813 = vmatprep.subr.mxu0 0.0
  %2814 = vmatpush1.msra.mxu0 0.0
  %2815 = vmatprep.subr.mxu0 0.0
  %2816 = vmatpush1.msra.mxu0 0.0
  %2817 = vmatprep.subr.mxu0 0.0
  %2818 = vmatpush1.msra.mxu0 0.0
  %2819 = vmatprep.subr.mxu0 0.0
  %2820 = vmatpush1.msra.mxu0 0.0
  %2821 = vmatprep.subr.mxu0 0.0
  %2822 = vmatpush1.msra.mxu0 0.0
  %2823 = vmatprep.subr.mxu0 0.0
  %2824 = vmatpush1.msra.mxu0 0.0
  %2825 = vmatprep.subr.mxu0 0.0
  %2826 = vmatpush1.msra.mxu0 0.0
  %2827 = vmatprep.subr.mxu0 0.0
  %2828 = vmatpush1.msra.mxu0 0.0
  %2829 = vmatprep.subr.mxu0 0.0
  %2830 = vmatpush1.msra.mxu0 0.0
  %2831 = vmatprep.subr.mxu0 0.0
  %2832 = vmatpush1.msra.mxu0 0.0
  %2833 = vmatprep.subr.mxu0 0.0
  %2834 = vmatpush1.msra.mxu0 0.0
  %2835 = vmatprep.subr.mxu0 0.0
  %2836 = vmatpush1.msra.mxu0 0.0
  %2837 = vmatprep.subr.mxu0 0.0
  %2838 = vmatpush1.msra.mxu0 0.0
  %2839 = vmatprep.mubr.f32.mxu0 0.0
  %2840 = vmatmul.mubr.f32.gmra.mrb[0].mxu0 %v2767
  %v2841 = vpop.f32.mrb[0].mxu0
  %v2842 = vadd.f32 0.0, %v2841
  %v2843 = vpop.f32.mrb[0].mxu0
  %v2844 = vadd.f32 0.0, %v2843
  %2845 = vdwg.mxu0
  %v2846 = vadd.f32 %v2667, %v2842
  %v2847 = vadd.f32 %v2668, %v2844
  %s2848 = scalar_lea.vmem %s4, 24
  %v2849 = vld [vmem:[%s2848] sm:$0xf]
  %v2851 = vsel %vm102, %v2849, 0
  %2853 = vmatprep.subr.mxu0 %v2773
  %2854 = vmatpush1.msra.mxu0 %v2770
  %2855 = vmatprep.subr.mxu0 0.0
  %2856 = vmatpush1.msra.mxu0 0.0
  %2857 = vmatprep.subr.mxu0 0.0
  %2858 = vmatpush1.msra.mxu0 0.0
  %2859 = vmatprep.subr.mxu0 0.0
  %2860 = vmatpush1.msra.mxu0 0.0
  %2861 = vmatprep.subr.mxu0 0.0
  %2862 = vmatpush1.msra.mxu0 0.0
  %2863 = vmatprep.subr.mxu0 0.0
  %2864 = vmatpush1.msra.mxu0 0.0
  %2865 = vmatprep.subr.mxu0 0.0
  %2866 = vmatpush1.msra.mxu0 0.0
  %2867 = vmatprep.subr.mxu0 0.0
  %2868 = vmatpush1.msra.mxu0 0.0
  %2869 = vmatprep.subr.mxu0 0.0
  %2870 = vmatpush1.msra.mxu0 0.0
  %2871 = vmatprep.subr.mxu0 0.0
  %2872 = vmatpush1.msra.mxu0 0.0
  %2873 = vmatprep.subr.mxu0 0.0
  %2874 = vmatpush1.msra.mxu0 0.0
  %2875 = vmatprep.subr.mxu0 0.0
  %2876 = vmatpush1.msra.mxu0 0.0
  %2877 = vmatprep.subr.mxu0 0.0
  %2878 = vmatpush1.msra.mxu0 0.0
  %2879 = vmatprep.subr.mxu0 0.0
  %2880 = vmatpush1.msra.mxu0 0.0
  %2881 = vmatprep.subr.mxu0 0.0
  %2882 = vmatpush1.msra.mxu0 0.0
  %2883 = vmatprep.subr.mxu0 0.0
  %2884 = vmatpush1.msra.mxu0 0.0
  %2885 = vmatprep.subr.mxu0 0.0
  %2886 = vmatpush1.msra.mxu0 0.0
  %2887 = vmatprep.subr.mxu0 0.0
  %2888 = vmatpush1.msra.mxu0 0.0
  %2889 = vmatprep.subr.mxu0 0.0
  %2890 = vmatpush1.msra.mxu0 0.0
  %2891 = vmatprep.subr.mxu0 0.0
  %2892 = vmatpush1.msra.mxu0 0.0
  %2893 = vmatprep.subr.mxu0 0.0
  %2894 = vmatpush1.msra.mxu0 0.0
  %2895 = vmatprep.subr.mxu0 0.0
  %2896 = vmatpush1.msra.mxu0 0.0
  %2897 = vmatprep.subr.mxu0 0.0
  %2898 = vmatpush1.msra.mxu0 0.0
  %2899 = vmatprep.subr.mxu0 0.0
  %2900 = vmatpush1.msra.mxu0 0.0
  %2901 = vmatprep.subr.mxu0 0.0
  %2902 = vmatpush1.msra.mxu0 0.0
  %2903 = vmatprep.subr.mxu0 0.0
  %2904 = vmatpush1.msra.mxu0 0.0
  %2905 = vmatprep.subr.mxu0 0.0
  %2906 = vmatpush1.msra.mxu0 0.0
  %2907 = vmatprep.subr.mxu0 0.0
  %2908 = vmatpush1.msra.mxu0 0.0
  %2909 = vmatprep.subr.mxu0 0.0
  %2910 = vmatpush1.msra.mxu0 0.0
  %2911 = vmatprep.subr.mxu0 0.0
  %2912 = vmatpush1.msra.mxu0 0.0
  %2913 = vmatprep.subr.mxu0 0.0
  %2914 = vmatpush1.msra.mxu0 0.0
  %2915 = vmatprep.subr.mxu0 0.0
  %2916 = vmatpush1.msra.mxu0 0.0
  %2917 = vmatprep.mubr.f32.mxu0 0.0
  %2918 = vmatmul.mubr.f32.gmra.mrb[0].mxu0 %v2851
  %v2919 = vpop.f32.mrb[0].mxu0
  %v2920 = vadd.f32 0.0, %v2919
  %v2921 = vpop.f32.mrb[0].mxu0
  %v2922 = vadd.f32 0.0, %v2921
  %2923 = vdwg.mxu0
  %v2924 = vadd.f32 %v2745, %v2920
  %v2925 = vadd.f32 %v2746, %v2922
  %v2926 = vld [vmem:[#allocation2 + $0x4] sm:$0xff]
  %v2927 = vld [vmem:[#allocation2 + $0xc] sm:$0xf]
  %s2928 = scalar_lea.vmem %s3, 28
  %v2929 = vld [vmem:[%s2928] sm:$0xf]
  %v2932 = vcombine.high %v2926, %v2926
  %2933 = vrot.lane.b32.xlu0 %v2926, 112
  %v2934 = vpop.permute.xlu0 %2933
  %2935 = vrot.lane.b32.xlu0 %v2932, 112
  %v2936 = vpop.permute.xlu0 %2935
  %2937 = vrot.lane.b32.xlu0 %v2927, 112
  %v2938 = vpop.permute.xlu0 %2937
  %v2939 = vsel %vm1337, %v2934, %v2936
  %v2940 = vsel %vm1337, %v2936, %v2938
  %v2942 = vsel %vm102, %v2929, 0
  %v2944 = vsel %vm106, %v2939, 0
  %v2946 = vsel %vm106, %v2940, 0
  %2948 = vmatprep.subr.mxu0 %v2946
  %2949 = vmatpush1.msra.mxu0 %v2944
  %2950 = vmatprep.subr.mxu0 0.0
  %2951 = vmatpush1.msra.mxu0 0.0
  %2952 = vmatprep.subr.mxu0 0.0
  %2953 = vmatpush1.msra.mxu0 0.0
  %2954 = vmatprep.subr.mxu0 0.0
  %2955 = vmatpush1.msra.mxu0 0.0
  %2956 = vmatprep.subr.mxu0 0.0
  %2957 = vmatpush1.msra.mxu0 0.0
  %2958 = vmatprep.subr.mxu0 0.0
  %2959 = vmatpush1.msra.mxu0 0.0
  %2960 = vmatprep.subr.mxu0 0.0
  %2961 = vmatpush1.msra.mxu0 0.0
  %2962 = vmatprep.subr.mxu0 0.0
  %2963 = vmatpush1.msra.mxu0 0.0
  %2964 = vmatprep.subr.mxu0 0.0
  %2965 = vmatpush1.msra.mxu0 0.0
  %2966 = vmatprep.subr.mxu0 0.0
  %2967 = vmatpush1.msra.mxu0 0.0
  %2968 = vmatprep.subr.mxu0 0.0
  %2969 = vmatpush1.msra.mxu0 0.0
  %2970 = vmatprep.subr.mxu0 0.0
  %2971 = vmatpush1.msra.mxu0 0.0
  %2972 = vmatprep.subr.mxu0 0.0
  %2973 = vmatpush1.msra.mxu0 0.0
  %2974 = vmatprep.subr.mxu0 0.0
  %2975 = vmatpush1.msra.mxu0 0.0
  %2976 = vmatprep.subr.mxu0 0.0
  %2977 = vmatpush1.msra.mxu0 0.0
  %2978 = vmatprep.subr.mxu0 0.0
  %2979 = vmatpush1.msra.mxu0 0.0
  %2980 = vmatprep.subr.mxu0 0.0
  %2981 = vmatpush1.msra.mxu0 0.0
  %2982 = vmatprep.subr.mxu0 0.0
  %2983 = vmatpush1.msra.mxu0 0.0
  %2984 = vmatprep.subr.mxu0 0.0
  %2985 = vmatpush1.msra.mxu0 0.0
  %2986 = vmatprep.subr.mxu0 0.0
  %2987 = vmatpush1.msra.mxu0 0.0
  %2988 = vmatprep.subr.mxu0 0.0
  %2989 = vmatpush1.msra.mxu0 0.0
  %2990 = vmatprep.subr.mxu0 0.0
  %2991 = vmatpush1.msra.mxu0 0.0
  %2992 = vmatprep.subr.mxu0 0.0
  %2993 = vmatpush1.msra.mxu0 0.0
  %2994 = vmatprep.subr.mxu0 0.0
  %2995 = vmatpush1.msra.mxu0 0.0
  %2996 = vmatprep.subr.mxu0 0.0
  %2997 = vmatpush1.msra.mxu0 0.0
  %2998 = vmatprep.subr.mxu0 0.0
  %2999 = vmatpush1.msra.mxu0 0.0
  %3000 = vmatprep.subr.mxu0 0.0
  %3001 = vmatpush1.msra.mxu0 0.0
  %3002 = vmatprep.subr.mxu0 0.0
  %3003 = vmatpush1.msra.mxu0 0.0
  %3004 = vmatprep.subr.mxu0 0.0
  %3005 = vmatpush1.msra.mxu0 0.0
  %3006 = vmatprep.subr.mxu0 0.0
  %3007 = vmatpush1.msra.mxu0 0.0
  %3008 = vmatprep.subr.mxu0 0.0
  %3009 = vmatpush1.msra.mxu0 0.0
  %3010 = vmatprep.subr.mxu0 0.0
  %3011 = vmatpush1.msra.mxu0 0.0
  %3012 = vmatprep.mubr.f32.mxu0 0.0
  %3013 = vmatmul.mubr.f32.gmra.mrb[0].mxu0 %v2942
  %v3014 = vpop.f32.mrb[0].mxu0
  %v3015 = vadd.f32 0.0, %v3014
  %v3016 = vpop.f32.mrb[0].mxu0
  %v3017 = vadd.f32 0.0, %v3016
  %3018 = vdwg.mxu0
  %v3019 = vadd.f32 %v2846, %v3015
  %v3020 = vadd.f32 %v2847, %v3017
  %s3021 = scalar_lea.vmem %s4, 28
  %v3022 = vld [vmem:[%s3021] sm:$0xf]
  %v3024 = vsel %vm102, %v3022, 0
  %3026 = vmatprep.subr.mxu0 %v2946
  %3027 = vmatpush1.msra.mxu0 %v2944
  %3028 = vmatprep.subr.mxu0 0.0
  %3029 = vmatpush1.msra.mxu0 0.0
  %3030 = vmatprep.subr.mxu0 0.0
  %3031 = vmatpush1.msra.mxu0 0.0
  %3032 = vmatprep.subr.mxu0 0.0
  %3033 = vmatpush1.msra.mxu0 0.0
  %3034 = vmatprep.subr.mxu0 0.0
  %3035 = vmatpush1.msra.mxu0 0.0
  %3036 = vmatprep.subr.mxu0 0.0
  %3037 = vmatpush1.msra.mxu0 0.0
  %3038 = vmatprep.subr.mxu0 0.0
  %3039 = vmatpush1.msra.mxu0 0.0
  %3040 = vmatprep.subr.mxu0 0.0
  %3041 = vmatpush1.msra.mxu0 0.0
  %3042 = vmatprep.subr.mxu0 0.0
  %3043 = vmatpush1.msra.mxu0 0.0
  %3044 = vmatprep.subr.mxu0 0.0
  %3045 = vmatpush1.msra.mxu0 0.0
  %3046 = vmatprep.subr.mxu0 0.0
  %3047 = vmatpush1.msra.mxu0 0.0
  %3048 = vmatprep.subr.mxu0 0.0
  %3049 = vmatpush1.msra.mxu0 0.0
  %3050 = vmatprep.subr.mxu0 0.0
  %3051 = vmatpush1.msra.mxu0 0.0
  %3052 = vmatprep.subr.mxu0 0.0
  %3053 = vmatpush1.msra.mxu0 0.0
  %3054 = vmatprep.subr.mxu0 0.0
  %3055 = vmatpush1.msra.mxu0 0.0
  %3056 = vmatprep.subr.mxu0 0.0
  %3057 = vmatpush1.msra.mxu0 0.0
  %3058 = vmatprep.subr.mxu0 0.0
  %3059 = vmatpush1.msra.mxu0 0.0
  %3060 = vmatprep.subr.mxu0 0.0
  %3061 = vmatpush1.msra.mxu0 0.0
  %3062 = vmatprep.subr.mxu0 0.0
  %3063 = vmatpush1.msra.mxu0 0.0
  %3064 = vmatprep.subr.mxu0 0.0
  %3065 = vmatpush1.msra.mxu0 0.0
  %3066 = vmatprep.subr.mxu0 0.0
  %3067 = vmatpush1.msra.mxu0 0.0
  %3068 = vmatprep.subr.mxu0 0.0
  %3069 = vmatpush1.msra.mxu0 0.0
  %3070 = vmatprep.subr.mxu0 0.0
  %3071 = vmatpush1.msra.mxu0 0.0
  %3072 = vmatprep.subr.mxu0 0.0
  %3073 = vmatpush1.msra.mxu0 0.0
  %3074 = vmatprep.subr.mxu0 0.0
  %3075 = vmatpush1.msra.mxu0 0.0
  %3076 = vmatprep.subr.mxu0 0.0
  %3077 = vmatpush1.msra.mxu0 0.0
  %3078 = vmatprep.subr.mxu0 0.0
  %3079 = vmatpush1.msra.mxu0 0.0
  %3080 = vmatprep.subr.mxu0 0.0
  %3081 = vmatpush1.msra.mxu0 0.0
  %3082 = vmatprep.subr.mxu0 0.0
  %3083 = vmatpush1.msra.mxu0 0.0
  %3084 = vmatprep.subr.mxu0 0.0
  %3085 = vmatpush1.msra.mxu0 0.0
  %3086 = vmatprep.subr.mxu0 0.0
  %3087 = vmatpush1.msra.mxu0 0.0
  %3088 = vmatprep.subr.mxu0 0.0
  %3089 = vmatpush1.msra.mxu0 0.0
  %3090 = vmatprep.mubr.f32.mxu0 0.0
  %3091 = vmatmul.mubr.f32.gmra.mrb[0].mxu0 %v3024
  %v3092 = vpop.f32.mrb[0].mxu0
  %v3093 = vadd.f32 0.0, %v3092
  %v3094 = vpop.f32.mrb[0].mxu0
  %v3095 = vadd.f32 0.0, %v3094
  %3096 = vdwg.mxu0
  %v3097 = vadd.f32 %v2924, %v3093
  %v3098 = vadd.f32 %v2925, %v3095
  %v3099 = vld [vmem:[#allocation2 + $0x4] sm:$0xff]
  %v3100 = vld [vmem:[#allocation2 + $0xc] sm:$0xf]
  %v3103 = vcombine.high %v3099, %v3099
  %3104 = vrot.lane.b32.xlu0 %v3099, 111
  %v3105 = vpop.permute.xlu0 %3104
  %3106 = vrot.lane.b32.xlu0 %v3103, 111
  %v3107 = vpop.permute.xlu0 %3106
  %3108 = vrot.lane.b32.xlu0 %v3100, 111
  %v3109 = vpop.permute.xlu0 %3108
  %v3110 = vsel %vm1509, %v3105, %v3107
  %v3111 = vsel %vm1509, %v3107, %v3109
  %v3114 = vsel %vm441, %v3110, 0.0
  %v3115 = vsel %vm442, %v3111, 0.0
  %s3116 = scalar_lea.vmem %s3, 32
  %v3117 = vld [vmem:[%s3116] sm:$0xf]
  %v3119 = vsel %vm102, %v3117, 0
  %v3122 = vsel %vm106, %v3114, 0
  %v3125 = vsel %vm106, %v3115, 0
  %3127 = vmatprep.subr.mxu0 %v3125
  %3128 = vmatpush1.msra.mxu0 %v3122
  %3129 = vmatprep.subr.mxu0 0.0
  %3130 = vmatpush1.msra.mxu0 0.0
  %3131 = vmatprep.subr.mxu0 0.0
  %3132 = vmatpush1.msra.mxu0 0.0
  %3133 = vmatprep.subr.mxu0 0.0
  %3134 = vmatpush1.msra.mxu0 0.0
  %3135 = vmatprep.subr.mxu0 0.0
  %3136 = vmatpush1.msra.mxu0 0.0
  %3137 = vmatprep.subr.mxu0 0.0
  %3138 = vmatpush1.msra.mxu0 0.0
  %3139 = vmatprep.subr.mxu0 0.0
  %3140 = vmatpush1.msra.mxu0 0.0
  %3141 = vmatprep.subr.mxu0 0.0
  %3142 = vmatpush1.msra.mxu0 0.0
  %3143 = vmatprep.subr.mxu0 0.0
  %3144 = vmatpush1.msra.mxu0 0.0
  %3145 = vmatprep.subr.mxu0 0.0
  %3146 = vmatpush1.msra.mxu0 0.0
  %3147 = vmatprep.subr.mxu0 0.0
  %3148 = vmatpush1.msra.mxu0 0.0
  %3149 = vmatprep.subr.mxu0 0.0
  %3150 = vmatpush1.msra.mxu0 0.0
  %3151 = vmatprep.subr.mxu0 0.0
  %3152 = vmatpush1.msra.mxu0 0.0
  %3153 = vmatprep.subr.mxu0 0.0
  %3154 = vmatpush1.msra.mxu0 0.0
  %3155 = vmatprep.subr.mxu0 0.0
  %3156 = vmatpush1.msra.mxu0 0.0
  %3157 = vmatprep.subr.mxu0 0.0
  %3158 = vmatpush1.msra.mxu0 0.0
  %3159 = vmatprep.subr.mxu0 0.0
  %3160 = vmatpush1.msra.mxu0 0.0
  %3161 = vmatprep.subr.mxu0 0.0
  %3162 = vmatpush1.msra.mxu0 0.0
  %3163 = vmatprep.subr.mxu0 0.0
  %3164 = vmatpush1.msra.mxu0 0.0
  %3165 = vmatprep.subr.mxu0 0.0
  %3166 = vmatpush1.msra.mxu0 0.0
  %3167 = vmatprep.subr.mxu0 0.0
  %3168 = vmatpush1.msra.mxu0 0.0
  %3169 = vmatprep.subr.mxu0 0.0
  %3170 = vmatpush1.msra.mxu0 0.0
  %3171 = vmatprep.subr.mxu0 0.0
  %3172 = vmatpush1.msra.mxu0 0.0
  %3173 = vmatprep.subr.mxu0 0.0
  %3174 = vmatpush1.msra.mxu0 0.0
  %3175 = vmatprep.subr.mxu0 0.0
  %3176 = vmatpush1.msra.mxu0 0.0
  %3177 = vmatprep.subr.mxu0 0.0
  %3178 = vmatpush1.msra.mxu0 0.0
  %3179 = vmatprep.subr.mxu0 0.0
  %3180 = vmatpush1.msra.mxu0 0.0
  %3181 = vmatprep.subr.mxu0 0.0
  %3182 = vmatpush1.msra.mxu0 0.0
  %3183 = vmatprep.subr.mxu0 0.0
  %3184 = vmatpush1.msra.mxu0 0.0
  %3185 = vmatprep.subr.mxu0 0.0
  %3186 = vmatpush1.msra.mxu0 0.0
  %3187 = vmatprep.subr.mxu0 0.0
  %3188 = vmatpush1.msra.mxu0 0.0
  %3189 = vmatprep.subr.mxu0 0.0
  %3190 = vmatpush1.msra.mxu0 0.0
  %3191 = vmatprep.mubr.f32.mxu0 0.0
  %3192 = vmatmul.mubr.f32.gmra.mrb[0].mxu0 %v3119
  %v3193 = vpop.f32.mrb[0].mxu0
  %v3194 = vadd.f32 0.0, %v3193
  %v3195 = vpop.f32.mrb[0].mxu0
  %v3196 = vadd.f32 0.0, %v3195
  %3197 = vdwg.mxu0
  %v3198 = vadd.f32 %v3019, %v3194
  %v3199 = vadd.f32 %v3020, %v3196
  %s3200 = scalar_lea.vmem %s4, 32
  %v3201 = vld [vmem:[%s3200] sm:$0xf]
  %v3203 = vsel %vm102, %v3201, 0
  %3205 = vmatprep.subr.mxu0 %v3125
  %3206 = vmatpush1.msra.mxu0 %v3122
  %3207 = vmatprep.subr.mxu0 0.0
  %3208 = vmatpush1.msra.mxu0 0.0
  %3209 = vmatprep.subr.mxu0 0.0
  %3210 = vmatpush1.msra.mxu0 0.0
  %3211 = vmatprep.subr.mxu0 0.0
  %3212 = vmatpush1.msra.mxu0 0.0
  %3213 = vmatprep.subr.mxu0 0.0
  %3214 = vmatpush1.msra.mxu0 0.0
  %3215 = vmatprep.subr.mxu0 0.0
  %3216 = vmatpush1.msra.mxu0 0.0
  %3217 = vmatprep.subr.mxu0 0.0
  %3218 = vmatpush1.msra.mxu0 0.0
  %3219 = vmatprep.subr.mxu0 0.0
  %3220 = vmatpush1.msra.mxu0 0.0
  %3221 = vmatprep.subr.mxu0 0.0
  %3222 = vmatpush1.msra.mxu0 0.0
  %3223 = vmatprep.subr.mxu0 0.0
  %3224 = vmatpush1.msra.mxu0 0.0
  %3225 = vmatprep.subr.mxu0 0.0
  %3226 = vmatpush1.msra.mxu0 0.0
  %3227 = vmatprep.subr.mxu0 0.0
  %3228 = vmatpush1.msra.mxu0 0.0
  %3229 = vmatprep.subr.mxu0 0.0
  %3230 = vmatpush1.msra.mxu0 0.0
  %3231 = vmatprep.subr.mxu0 0.0
  %3232 = vmatpush1.msra.mxu0 0.0
  %3233 = vmatprep.subr.mxu0 0.0
  %3234 = vmatpush1.msra.mxu0 0.0
  %3235 = vmatprep.subr.mxu0 0.0
  %3236 = vmatpush1.msra.mxu0 0.0
  %3237 = vmatprep.subr.mxu0 0.0
  %3238 = vmatpush1.msra.mxu0 0.0
  %3239 = vmatprep.subr.mxu0 0.0
  %3240 = vmatpush1.msra.mxu0 0.0
  %3241 = vmatprep.subr.mxu0 0.0
  %3242 = vmatpush1.msra.mxu0 0.0
  %3243 = vmatprep.subr.mxu0 0.0
  %3244 = vmatpush1.msra.mxu0 0.0
  %3245 = vmatprep.subr.mxu0 0.0
  %3246 = vmatpush1.msra.mxu0 0.0
  %3247 = vmatprep.subr.mxu0 0.0
  %3248 = vmatpush1.msra.mxu0 0.0
  %3249 = vmatprep.subr.mxu0 0.0
  %3250 = vmatpush1.msra.mxu0 0.0
  %3251 = vmatprep.subr.mxu0 0.0
  %3252 = vmatpush1.msra.mxu0 0.0
  %3253 = vmatprep.subr.mxu0 0.0
  %3254 = vmatpush1.msra.mxu0 0.0
  %3255 = vmatprep.subr.mxu0 0.0
  %3256 = vmatpush1.msra.mxu0 0.0
  %3257 = vmatprep.subr.mxu0 0.0
  %3258 = vmatpush1.msra.mxu0 0.0
  %3259 = vmatprep.subr.mxu0 0.0
  %3260 = vmatpush1.msra.mxu0 0.0
  %3261 = vmatprep.subr.mxu0 0.0
  %3262 = vmatpush1.msra.mxu0 0.0
  %3263 = vmatprep.subr.mxu0 0.0
  %3264 = vmatpush1.msra.mxu0 0.0
  %3265 = vmatprep.subr.mxu0 0.0
  %3266 = vmatpush1.msra.mxu0 0.0
  %3267 = vmatprep.subr.mxu0 0.0
  %3268 = vmatpush1.msra.mxu0 0.0
  %3269 = vmatprep.mubr.f32.mxu0 0.0
  %3270 = vmatmul.mubr.f32.gmra.mrb[0].mxu0 %v3203
  %v3271 = vpop.f32.mrb[0].mxu0
  %v3272 = vadd.f32 0.0, %v3271
  %v3273 = vpop.f32.mrb[0].mxu0
  %v3274 = vadd.f32 0.0, %v3273
  %3275 = vdwg.mxu0
  %v3276 = vadd.f32 %v3097, %v3272
  %v3277 = vadd.f32 %v3098, %v3274
  %v3278 = vmax.f32 %v3198, %v3276
  %v3279 = vmax.f32 %v3199, %v3277
  %v3281 = vcombine.high %v65, %v65
  %v3283 = vadd.f32 %v3278, %v65
  %v3284 = vadd.f32 %v3279, %v3281
  %v3287 = vcombine.low %v3283, %v3284
  %3289 = vst [vmem:[%s9] sm:$0xff] %v3287
  %s3290 = scalar_lea.vmem %s0, 8
  %v3291 = vld [vmem:[%s3290] sm:$0xff]
  %3292 = vst [vmem:[#allocation2 + $0x4] sm:$0xff] %v3291
  %v3293 = vld [vmem:[%s5] sm:$0xf]
  %3295 = vset.pattern.permute.xlu0 0
  %3296 = vperm.xlu0 %3295, %v3293
  %v3297 = vpop.permute.xlu0 %3296
  %v3299 = vld [vmem:[%s6] sm:$0xf]
  %3301 = vset.pattern.permute.xlu0 0
  %3302 = vperm.xlu0 %3301, %v3299
  %v3303 = vpop.permute.xlu0 %3302
  %v3305 = vld [vmem:[#allocation2] sm:$0xff]
  %v3306 = vld [vmem:[#allocation2 + $0x8] sm:$0xf]
  %v3309 = vcombine.high %v3305, %v3305
  %3310 = vrot.lane.b32.xlu0 %v3305, 17
  %v3311 = vpop.permute.xlu0 %3310
  %3312 = vrot.lane.b32.xlu0 %v3309, 17
  %v3313 = vpop.permute.xlu0 %3312
  %3314 = vrot.lane.b32.xlu0 %v3306, 17
  %v3315 = vpop.permute.xlu0 %3314
  %v3316 = vsel %vm94, %v3311, %v3313
  %v3317 = vsel %vm94, %v3313, %v3315
  %v3320 = vsel %vm83, %v3316, 0.0
  %v3321 = vsel %vm84, %v3317, 0.0
  %v3322 = vld [vmem:[%s1] sm:$0xf]
  %v3324 = vsel %vm102, %v3322, 0
  %v3327 = vsel %vm106, %v3320, 0
  %v3330 = vsel %vm106, %v3321, 0
  %3332 = vmatprep.subr.mxu0 %v3330
  %3333 = vmatpush1.msra.mxu0 %v3327
  %3334 = vmatprep.subr.mxu0 0.0
  %3335 = vmatpush1.msra.mxu0 0.0
  %3336 = vmatprep.subr.mxu0 0.0
  %3337 = vmatpush1.msra.mxu0 0.0
  %3338 = vmatprep.subr.mxu0 0.0
  %3339 = vmatpush1.msra.mxu0 0.0
  %3340 = vmatprep.subr.mxu0 0.0
  %3341 = vmatpush1.msra.mxu0 0.0
  %3342 = vmatprep.subr.mxu0 0.0
  %3343 = vmatpush1.msra.mxu0 0.0
  %3344 = vmatprep.subr.mxu0 0.0
  %3345 = vmatpush1.msra.mxu0 0.0
  %3346 = vmatprep.subr.mxu0 0.0
  %3347 = vmatpush1.msra.mxu0 0.0
  %3348 = vmatprep.subr.mxu0 0.0
  %3349 = vmatpush1.msra.mxu0 0.0
  %3350 = vmatprep.subr.mxu0 0.0
  %3351 = vmatpush1.msra.mxu0 0.0
  %3352 = vmatprep.subr.mxu0 0.0
  %3353 = vmatpush1.msra.mxu0 0.0
  %3354 = vmatprep.subr.mxu0 0.0
  %3355 = vmatpush1.msra.mxu0 0.0
  %3356 = vmatprep.subr.mxu0 0.0
  %3357 = vmatpush1.msra.mxu0 0.0
  %3358 = vmatprep.subr.mxu0 0.0
  %3359 = vmatpush1.msra.mxu0 0.0
  %3360 = vmatprep.subr.mxu0 0.0
  %3361 = vmatpush1.msra.mxu0 0.0
  %3362 = vmatprep.subr.mxu0 0.0
  %3363 = vmatpush1.msra.mxu0 0.0
  %3364 = vmatprep.subr.mxu0 0.0
  %3365 = vmatpush1.msra.mxu0 0.0
  %3366 = vmatprep.subr.mxu0 0.0
  %3367 = vmatpush1.msra.mxu0 0.0
  %3368 = vmatprep.subr.mxu0 0.0
  %3369 = vmatpush1.msra.mxu0 0.0
  %3370 = vmatprep.subr.mxu0 0.0
  %3371 = vmatpush1.msra.mxu0 0.0
  %3372 = vmatprep.subr.mxu0 0.0
  %3373 = vmatpush1.msra.mxu0 0.0
  %3374 = vmatprep.subr.mxu0 0.0
  %3375 = vmatpush1.msra.mxu0 0.0
  %3376 = vmatprep.subr.mxu0 0.0
  %3377 = vmatpush1.msra.mxu0 0.0
  %3378 = vmatprep.subr.mxu0 0.0
  %3379 = vmatpush1.msra.mxu0 0.0
  %3380 = vmatprep.subr.mxu0 0.0
  %3381 = vmatpush1.msra.mxu0 0.0
  %3382 = vmatprep.subr.mxu0 0.0
  %3383 = vmatpush1.msra.mxu0 0.0
  %3384 = vmatprep.subr.mxu0 0.0
  %3385 = vmatpush1.msra.mxu0 0.0
  %3386 = vmatprep.subr.mxu0 0.0
  %3387 = vmatpush1.msra.mxu0 0.0
  %3388 = vmatprep.subr.mxu0 0.0
  %3389 = vmatpush1.msra.mxu0 0.0
  %3390 = vmatprep.subr.mxu0 0.0
  %3391 = vmatpush1.msra.mxu0 0.0
  %3392 = vmatprep.subr.mxu0 0.0
  %3393 = vmatpush1.msra.mxu0 0.0
  %3394 = vmatprep.subr.mxu0 0.0
  %3395 = vmatpush1.msra.mxu0 0.0
  %3396 = vmatprep.mubr.f32.mxu0 0.0
  %3397 = vmatmul.mubr.f32.gmra.mrb[0].mxu0 %v3324
  %v3398 = vpop.f32.mrb[0].mxu0
  %v3399 = vadd.f32 0.0, %v3398
  %v3400 = vpop.f32.mrb[0].mxu0
  %v3401 = vadd.f32 0.0, %v3400
  %3402 = vdwg.mxu0
  %v3403 = vadd.f32 %v3297, %v3399
  %v3404 = vadd.f32 %v3297, %v3401
  %v3405 = vld [vmem:[%s2] sm:$0xf]
  %v3407 = vsel %vm102, %v3405, 0
  %3409 = vmatprep.subr.mxu0 %v3330
  %3410 = vmatpush1.msra.mxu0 %v3327
  %3411 = vmatprep.subr.mxu0 0.0
  %3412 = vmatpush1.msra.mxu0 0.0
  %3413 = vmatprep.subr.mxu0 0.0
  %3414 = vmatpush1.msra.mxu0 0.0
  %3415 = vmatprep.subr.mxu0 0.0
  %3416 = vmatpush1.msra.mxu0 0.0
  %3417 = vmatprep.subr.mxu0 0.0
  %3418 = vmatpush1.msra.mxu0 0.0
  %3419 = vmatprep.subr.mxu0 0.0
  %3420 = vmatpush1.msra.mxu0 0.0
  %3421 = vmatprep.subr.mxu0 0.0
  %3422 = vmatpush1.msra.mxu0 0.0
  %3423 = vmatprep.subr.mxu0 0.0
  %3424 = vmatpush1.msra.mxu0 0.0
  %3425 = vmatprep.subr.mxu0 0.0
  %3426 = vmatpush1.msra.mxu0 0.0
  %3427 = vmatprep.subr.mxu0 0.0
  %3428 = vmatpush1.msra.mxu0 0.0
  %3429 = vmatprep.subr.mxu0 0.0
  %3430 = vmatpush1.msra.mxu0 0.0
  %3431 = vmatprep.subr.mxu0 0.0
  %3432 = vmatpush1.msra.mxu0 0.0
  %3433 = vmatprep.subr.mxu0 0.0
  %3434 = vmatpush1.msra.mxu0 0.0
  %3435 = vmatprep.subr.mxu0 0.0
  %3436 = vmatpush1.msra.mxu0 0.0
  %3437 = vmatprep.subr.mxu0 0.0
  %3438 = vmatpush1.msra.mxu0 0.0
  %3439 = vmatprep.subr.mxu0 0.0
  %3440 = vmatpush1.msra.mxu0 0.0
  %3441 = vmatprep.subr.mxu0 0.0
  %3442 = vmatpush1.msra.mxu0 0.0
  %3443 = vmatprep.subr.mxu0 0.0
  %3444 = vmatpush1.msra.mxu0 0.0
  %3445 = vmatprep.subr.mxu0 0.0
  %3446 = vmatpush1.msra.mxu0 0.0
  %3447 = vmatprep.subr.mxu0 0.0
  %3448 = vmatpush1.msra.mxu0 0.0
  %3449 = vmatprep.subr.mxu0 0.0
  %3450 = vmatpush1.msra.mxu0 0.0
  %3451 = vmatprep.subr.mxu0 0.0
  %3452 = vmatpush1.msra.mxu0 0.0
  %3453 = vmatprep.subr.mxu0 0.0
  %3454 = vmatpush1.msra.mxu0 0.0
  %3455 = vmatprep.subr.mxu0 0.0
  %3456 = vmatpush1.msra.mxu0 0.0
  %3457 = vmatprep.subr.mxu0 0.0
  %3458 = vmatpush1.msra.mxu0 0.0
  %3459 = vmatprep.subr.mxu0 0.0
  %3460 = vmatpush1.msra.mxu0 0.0
  %3461 = vmatprep.subr.mxu0 0.0
  %3462 = vmatpush1.msra.mxu0 0.0
  %3463 = vmatprep.subr.mxu0 0.0
  %3464 = vmatpush1.msra.mxu0 0.0
  %3465 = vmatprep.subr.mxu0 0.0
  %3466 = vmatpush1.msra.mxu0 0.0
  %3467 = vmatprep.subr.mxu0 0.0
  %3468 = vmatpush1.msra.mxu0 0.0
  %3469 = vmatprep.subr.mxu0 0.0
  %3470 = vmatpush1.msra.mxu0 0.0
  %3471 = vmatprep.subr.mxu0 0.0
  %3472 = vmatpush1.msra.mxu0 0.0
  %3473 = vmatprep.mubr.f32.mxu0 0.0
  %3474 = vmatmul.mubr.f32.gmra.mrb[0].mxu0 %v3407
  %v3475 = vpop.f32.mrb[0].mxu0
  %v3476 = vadd.f32 0.0, %v3475
  %v3477 = vpop.f32.mrb[0].mxu0
  %v3478 = vadd.f32 0.0, %v3477
  %3479 = vdwg.mxu0
  %v3480 = vadd.f32 %v3303, %v3476
  %v3481 = vadd.f32 %v3303, %v3478
  %v3482 = vld [vmem:[#allocation2] sm:$0xff]
  %v3483 = vld [vmem:[#allocation2 + $0x8] sm:$0xf]
  %v3484 = vld [vmem:[%s265] sm:$0xf]
  %v3487 = vcombine.high %v3482, %v3482
  %3488 = vrot.lane.b32.xlu0 %v3482, 16
  %v3489 = vpop.permute.xlu0 %3488
  %3490 = vrot.lane.b32.xlu0 %v3487, 16
  %v3491 = vpop.permute.xlu0 %3490
  %3492 = vrot.lane.b32.xlu0 %v3483, 16
  %v3493 = vpop.permute.xlu0 %3492
  %v3494 = vsel %vm276, %v3489, %v3491
  %v3495 = vsel %vm276, %v3491, %v3493
  %v3497 = vsel %vm102, %v3484, 0
  %v3499 = vsel %vm106, %v3494, 0
  %v3501 = vsel %vm106, %v3495, 0
  %3503 = vmatprep.subr.mxu0 %v3501
  %3504 = vmatpush1.msra.mxu0 %v3499
  %3505 = vmatprep.subr.mxu0 0.0
  %3506 = vmatpush1.msra.mxu0 0.0
  %3507 = vmatprep.subr.mxu0 0.0
  %3508 = vmatpush1.msra.mxu0 0.0
  %3509 = vmatprep.subr.mxu0 0.0
  %3510 = vmatpush1.msra.mxu0 0.0
  %3511 = vmatprep.subr.mxu0 0.0
  %3512 = vmatpush1.msra.mxu0 0.0
  %3513 = vmatprep.subr.mxu0 0.0
  %3514 = vmatpush1.msra.mxu0 0.0
  %3515 = vmatprep.subr.mxu0 0.0
  %3516 = vmatpush1.msra.mxu0 0.0
  %3517 = vmatprep.subr.mxu0 0.0
  %3518 = vmatpush1.msra.mxu0 0.0
  %3519 = vmatprep.subr.mxu0 0.0
  %3520 = vmatpush1.msra.mxu0 0.0
  %3521 = vmatprep.subr.mxu0 0.0
  %3522 = vmatpush1.msra.mxu0 0.0
  %3523 = vmatprep.subr.mxu0 0.0
  %3524 = vmatpush1.msra.mxu0 0.0
  %3525 = vmatprep.subr.mxu0 0.0
  %3526 = vmatpush1.msra.mxu0 0.0
  %3527 = vmatprep.subr.mxu0 0.0
  %3528 = vmatpush1.msra.mxu0 0.0
  %3529 = vmatprep.subr.mxu0 0.0
  %3530 = vmatpush1.msra.mxu0 0.0
  %3531 = vmatprep.subr.mxu0 0.0
  %3532 = vmatpush1.msra.mxu0 0.0
  %3533 = vmatprep.subr.mxu0 0.0
  %3534 = vmatpush1.msra.mxu0 0.0
  %3535 = vmatprep.subr.mxu0 0.0
  %3536 = vmatpush1.msra.mxu0 0.0
  %3537 = vmatprep.subr.mxu0 0.0
  %3538 = vmatpush1.msra.mxu0 0.0
  %3539 = vmatprep.subr.mxu0 0.0
  %3540 = vmatpush1.msra.mxu0 0.0
  %3541 = vmatprep.subr.mxu0 0.0
  %3542 = vmatpush1.msra.mxu0 0.0
  %3543 = vmatprep.subr.mxu0 0.0
  %3544 = vmatpush1.msra.mxu0 0.0
  %3545 = vmatprep.subr.mxu0 0.0
  %3546 = vmatpush1.msra.mxu0 0.0
  %3547 = vmatprep.subr.mxu0 0.0
  %3548 = vmatpush1.msra.mxu0 0.0
  %3549 = vmatprep.subr.mxu0 0.0
  %3550 = vmatpush1.msra.mxu0 0.0
  %3551 = vmatprep.subr.mxu0 0.0
  %3552 = vmatpush1.msra.mxu0 0.0
  %3553 = vmatprep.subr.mxu0 0.0
  %3554 = vmatpush1.msra.mxu0 0.0
  %3555 = vmatprep.subr.mxu0 0.0
  %3556 = vmatpush1.msra.mxu0 0.0
  %3557 = vmatprep.subr.mxu0 0.0
  %3558 = vmatpush1.msra.mxu0 0.0
  %3559 = vmatprep.subr.mxu0 0.0
  %3560 = vmatpush1.msra.mxu0 0.0
  %3561 = vmatprep.subr.mxu0 0.0
  %3562 = vmatpush1.msra.mxu0 0.0
  %3563 = vmatprep.subr.mxu0 0.0
  %3564 = vmatpush1.msra.mxu0 0.0
  %3565 = vmatprep.subr.mxu0 0.0
  %3566 = vmatpush1.msra.mxu0 0.0
  %3567 = vmatprep.mubr.f32.mxu0 0.0
  %3568 = vmatmul.mubr.f32.gmra.mrb[0].mxu0 %v3497
  %v3569 = vpop.f32.mrb[0].mxu0
  %v3570 = vadd.f32 0.0, %v3569
  %v3571 = vpop.f32.mrb[0].mxu0
  %v3572 = vadd.f32 0.0, %v3571
  %3573 = vdwg.mxu0
  %v3574 = vadd.f32 %v3403, %v3570
  %v3575 = vadd.f32 %v3404, %v3572
  %v3576 = vld [vmem:[%s359] sm:$0xf]
  %v3578 = vsel %vm102, %v3576, 0
  %3580 = vmatprep.subr.mxu0 %v3501
  %3581 = vmatpush1.msra.mxu0 %v3499
  %3582 = vmatprep.subr.mxu0 0.0
  %3583 = vmatpush1.msra.mxu0 0.0
  %3584 = vmatprep.subr.mxu0 0.0
  %3585 = vmatpush1.msra.mxu0 0.0
  %3586 = vmatprep.subr.mxu0 0.0
  %3587 = vmatpush1.msra.mxu0 0.0
  %3588 = vmatprep.subr.mxu0 0.0
  %3589 = vmatpush1.msra.mxu0 0.0
  %3590 = vmatprep.subr.mxu0 0.0
  %3591 = vmatpush1.msra.mxu0 0.0
  %3592 = vmatprep.subr.mxu0 0.0
  %3593 = vmatpush1.msra.mxu0 0.0
  %3594 = vmatprep.subr.mxu0 0.0
  %3595 = vmatpush1.msra.mxu0 0.0
  %3596 = vmatprep.subr.mxu0 0.0
  %3597 = vmatpush1.msra.mxu0 0.0
  %3598 = vmatprep.subr.mxu0 0.0
  %3599 = vmatpush1.msra.mxu0 0.0
  %3600 = vmatprep.subr.mxu0 0.0
  %3601 = vmatpush1.msra.mxu0 0.0
  %3602 = vmatprep.subr.mxu0 0.0
  %3603 = vmatpush1.msra.mxu0 0.0
  %3604 = vmatprep.subr.mxu0 0.0
  %3605 = vmatpush1.msra.mxu0 0.0
  %3606 = vmatprep.subr.mxu0 0.0
  %3607 = vmatpush1.msra.mxu0 0.0
  %3608 = vmatprep.subr.mxu0 0.0
  %3609 = vmatpush1.msra.mxu0 0.0
  %3610 = vmatprep.subr.mxu0 0.0
  %3611 = vmatpush1.msra.mxu0 0.0
  %3612 = vmatprep.subr.mxu0 0.0
  %3613 = vmatpush1.msra.mxu0 0.0
  %3614 = vmatprep.subr.mxu0 0.0
  %3615 = vmatpush1.msra.mxu0 0.0
  %3616 = vmatprep.subr.mxu0 0.0
  %3617 = vmatpush1.msra.mxu0 0.0
  %3618 = vmatprep.subr.mxu0 0.0
  %3619 = vmatpush1.msra.mxu0 0.0
  %3620 = vmatprep.subr.mxu0 0.0
  %3621 = vmatpush1.msra.mxu0 0.0
  %3622 = vmatprep.subr.mxu0 0.0
  %3623 = vmatpush1.msra.mxu0 0.0
  %3624 = vmatprep.subr.mxu0 0.0
  %3625 = vmatpush1.msra.mxu0 0.0
  %3626 = vmatprep.subr.mxu0 0.0
  %3627 = vmatpush1.msra.mxu0 0.0
  %3628 = vmatprep.subr.mxu0 0.0
  %3629 = vmatpush1.msra.mxu0 0.0
  %3630 = vmatprep.subr.mxu0 0.0
  %3631 = vmatpush1.msra.mxu0 0.0
  %3632 = vmatprep.subr.mxu0 0.0
  %3633 = vmatpush1.msra.mxu0 0.0
  %3634 = vmatprep.subr.mxu0 0.0
  %3635 = vmatpush1.msra.mxu0 0.0
  %3636 = vmatprep.subr.mxu0 0.0
  %3637 = vmatpush1.msra.mxu0 0.0
  %3638 = vmatprep.subr.mxu0 0.0
  %3639 = vmatpush1.msra.mxu0 0.0
  %3640 = vmatprep.subr.mxu0 0.0
  %3641 = vmatpush1.msra.mxu0 0.0
  %3642 = vmatprep.subr.mxu0 0.0
  %3643 = vmatpush1.msra.mxu0 0.0
  %3644 = vmatprep.mubr.f32.mxu0 0.0
  %3645 = vmatmul.mubr.f32.gmra.mrb[0].mxu0 %v3578
  %v3646 = vpop.f32.mrb[0].mxu0
  %v3647 = vadd.f32 0.0, %v3646
  %v3648 = vpop.f32.mrb[0].mxu0
  %v3649 = vadd.f32 0.0, %v3648
  %3650 = vdwg.mxu0
  %v3651 = vadd.f32 %v3480, %v3647
  %v3652 = vadd.f32 %v3481, %v3649
  %v3653 = vld [vmem:[#allocation2] sm:$0xff]
  %v3654 = vld [vmem:[#allocation2 + $0x8] sm:$0xf]
  %v3657 = vcombine.high %v3653, %v3653
  %3658 = vrot.lane.b32.xlu0 %v3653, 15
  %v3659 = vpop.permute.xlu0 %3658
  %3660 = vrot.lane.b32.xlu0 %v3657, 15
  %v3661 = vpop.permute.xlu0 %3660
  %3662 = vrot.lane.b32.xlu0 %v3654, 15
  %v3663 = vpop.permute.xlu0 %3662
  %v3664 = vsel %vm452, %v3659, %v3661
  %v3665 = vsel %vm452, %v3661, %v3663
  %v3668 = vsel %vm441, %v3664, 0.0
  %v3669 = vsel %vm442, %v3665, 0.0
  %v3670 = vld [vmem:[%s459] sm:$0xf]
  %v3672 = vsel %vm102, %v3670, 0
  %v3675 = vsel %vm106, %v3668, 0
  %v3678 = vsel %vm106, %v3669, 0
  %3680 = vmatprep.subr.mxu0 %v3678
  %3681 = vmatpush1.msra.mxu0 %v3675
  %3682 = vmatprep.subr.mxu0 0.0
  %3683 = vmatpush1.msra.mxu0 0.0
  %3684 = vmatprep.subr.mxu0 0.0
  %3685 = vmatpush1.msra.mxu0 0.0
  %3686 = vmatprep.subr.mxu0 0.0
  %3687 = vmatpush1.msra.mxu0 0.0
  %3688 = vmatprep.subr.mxu0 0.0
  %3689 = vmatpush1.msra.mxu0 0.0
  %3690 = vmatprep.subr.mxu0 0.0
  %3691 = vmatpush1.msra.mxu0 0.0
  %3692 = vmatprep.subr.mxu0 0.0
  %3693 = vmatpush1.msra.mxu0 0.0
  %3694 = vmatprep.subr.mxu0 0.0
  %3695 = vmatpush1.msra.mxu0 0.0
  %3696 = vmatprep.subr.mxu0 0.0
  %3697 = vmatpush1.msra.mxu0 0.0
  %3698 = vmatprep.subr.mxu0 0.0
  %3699 = vmatpush1.msra.mxu0 0.0
  %3700 = vmatprep.subr.mxu0 0.0
  %3701 = vmatpush1.msra.mxu0 0.0
  %3702 = vmatprep.subr.mxu0 0.0
  %3703 = vmatpush1.msra.mxu0 0.0
  %3704 = vmatprep.subr.mxu0 0.0
  %3705 = vmatpush1.msra.mxu0 0.0
  %3706 = vmatprep.subr.mxu0 0.0
  %3707 = vmatpush1.msra.mxu0 0.0
  %3708 = vmatprep.subr.mxu0 0.0
  %3709 = vmatpush1.msra.mxu0 0.0
  %3710 = vmatprep.subr.mxu0 0.0
  %3711 = vmatpush1.msra.mxu0 0.0
  %3712 = vmatprep.subr.mxu0 0.0
  %3713 = vmatpush1.msra.mxu0 0.0
  %3714 = vmatprep.subr.mxu0 0.0
  %3715 = vmatpush1.msra.mxu0 0.0
  %3716 = vmatprep.subr.mxu0 0.0
  %3717 = vmatpush1.msra.mxu0 0.0
  %3718 = vmatprep.subr.mxu0 0.0
  %3719 = vmatpush1.msra.mxu0 0.0
  %3720 = vmatprep.subr.mxu0 0.0
  %3721 = vmatpush1.msra.mxu0 0.0
  %3722 = vmatprep.subr.mxu0 0.0
  %3723 = vmatpush1.msra.mxu0 0.0
  %3724 = vmatprep.subr.mxu0 0.0
  %3725 = vmatpush1.msra.mxu0 0.0
  %3726 = vmatprep.subr.mxu0 0.0
  %3727 = vmatpush1.msra.mxu0 0.0
  %3728 = vmatprep.subr.mxu0 0.0
  %3729 = vmatpush1.msra.mxu0 0.0
  %3730 = vmatprep.subr.mxu0 0.0
  %3731 = vmatpush1.msra.mxu0 0.0
  %3732 = vmatprep.subr.mxu0 0.0
  %3733 = vmatpush1.msra.mxu0 0.0
  %3734 = vmatprep.subr.mxu0 0.0
  %3735 = vmatpush1.msra.mxu0 0.0
  %3736 = vmatprep.subr.mxu0 0.0
  %3737 = vmatpush1.msra.mxu0 0.0
  %3738 = vmatprep.subr.mxu0 0.0
  %3739 = vmatpush1.msra.mxu0 0.0
  %3740 = vmatprep.subr.mxu0 0.0
  %3741 = vmatpush1.msra.mxu0 0.0
  %3742 = vmatprep.subr.mxu0 0.0
  %3743 = vmatpush1.msra.mxu0 0.0
  %3744 = vmatprep.mubr.f32.mxu0 0.0
  %3745 = vmatmul.mubr.f32.gmra.mrb[0].mxu0 %v3672
  %v3746 = vpop.f32.mrb[0].mxu0
  %v3747 = vadd.f32 0.0, %v3746
  %v3748 = vpop.f32.mrb[0].mxu0
  %v3749 = vadd.f32 0.0, %v3748
  %3750 = vdwg.mxu0
  %v3751 = vadd.f32 %v3574, %v3747
  %v3752 = vadd.f32 %v3575, %v3749
  %v3753 = vld [vmem:[%s543] sm:$0xf]
  %v3755 = vsel %vm102, %v3753, 0
  %3757 = vmatprep.subr.mxu0 %v3678
  %3758 = vmatpush1.msra.mxu0 %v3675
  %3759 = vmatprep.subr.mxu0 0.0
  %3760 = vmatpush1.msra.mxu0 0.0
  %3761 = vmatprep.subr.mxu0 0.0
  %3762 = vmatpush1.msra.mxu0 0.0
  %3763 = vmatprep.subr.mxu0 0.0
  %3764 = vmatpush1.msra.mxu0 0.0
  %3765 = vmatprep.subr.mxu0 0.0
  %3766 = vmatpush1.msra.mxu0 0.0
  %3767 = vmatprep.subr.mxu0 0.0
  %3768 = vmatpush1.msra.mxu0 0.0
  %3769 = vmatprep.subr.mxu0 0.0
  %3770 = vmatpush1.msra.mxu0 0.0
  %3771 = vmatprep.subr.mxu0 0.0
  %3772 = vmatpush1.msra.mxu0 0.0
  %3773 = vmatprep.subr.mxu0 0.0
  %3774 = vmatpush1.msra.mxu0 0.0
  %3775 = vmatprep.subr.mxu0 0.0
  %3776 = vmatpush1.msra.mxu0 0.0
  %3777 = vmatprep.subr.mxu0 0.0
  %3778 = vmatpush1.msra.mxu0 0.0
  %3779 = vmatprep.subr.mxu0 0.0
  %3780 = vmatpush1.msra.mxu0 0.0
  %3781 = vmatprep.subr.mxu0 0.0
  %3782 = vmatpush1.msra.mxu0 0.0
  %3783 = vmatprep.subr.mxu0 0.0
  %3784 = vmatpush1.msra.mxu0 0.0
  %3785 = vmatprep.subr.mxu0 0.0
  %3786 = vmatpush1.msra.mxu0 0.0
  %3787 = vmatprep.subr.mxu0 0.0
  %3788 = vmatpush1.msra.mxu0 0.0
  %3789 = vmatprep.subr.mxu0 0.0
  %3790 = vmatpush1.msra.mxu0 0.0
  %3791 = vmatprep.subr.mxu0 0.0
  %3792 = vmatpush1.msra.mxu0 0.0
  %3793 = vmatprep.subr.mxu0 0.0
  %3794 = vmatpush1.msra.mxu0 0.0
  %3795 = vmatprep.subr.mxu0 0.0
  %3796 = vmatpush1.msra.mxu0 0.0
  %3797 = vmatprep.subr.mxu0 0.0
  %3798 = vmatpush1.msra.mxu0 0.0
  %3799 = vmatprep.subr.mxu0 0.0
  %3800 = vmatpush1.msra.mxu0 0.0
  %3801 = vmatprep.subr.mxu0 0.0
  %3802 = vmatpush1.msra.mxu0 0.0
  %3803 = vmatprep.subr.mxu0 0.0
  %3804 = vmatpush1.msra.mxu0 0.0
  %3805 = vmatprep.subr.mxu0 0.0
  %3806 = vmatpush1.msra.mxu0 0.0
  %3807 = vmatprep.subr.mxu0 0.0
  %3808 = vmatpush1.msra.mxu0 0.0
  %3809 = vmatprep.subr.mxu0 0.0
  %3810 = vmatpush1.msra.mxu0 0.0
  %3811 = vmatprep.subr.mxu0 0.0
  %3812 = vmatpush1.msra.mxu0 0.0
  %3813 = vmatprep.subr.mxu0 0.0
  %3814 = vmatpush1.msra.mxu0 0.0
  %3815 = vmatprep.subr.mxu0 0.0
  %3816 = vmatpush1.msra.mxu0 0.0
  %3817 = vmatprep.subr.mxu0 0.0
  %3818 = vmatpush1.msra.mxu0 0.0
  %3819 = vmatprep.subr.mxu0 0.0
  %3820 = vmatpush1.msra.mxu0 0.0
  %3821 = vmatprep.mubr.f32.mxu0 0.0
  %3822 = vmatmul.mubr.f32.gmra.mrb[0].mxu0 %v3755
  %v3823 = vpop.f32.mrb[0].mxu0
  %v3824 = vadd.f32 0.0, %v3823
  %v3825 = vpop.f32.mrb[0].mxu0
  %v3826 = vadd.f32 0.0, %v3825
  %3827 = vdwg.mxu0
  %v3828 = vadd.f32 %v3651, %v3824
  %v3829 = vadd.f32 %v3652, %v3826
  %v3830 = vld [vmem:[#allocation2] sm:$0xff]
  %v3831 = vld [vmem:[#allocation2 + $0x8] sm:$0xf]
  %v3834 = vcombine.high %v3830, %v3830
  %3835 = vrot.lane.b32.xlu0 %v3830, 1
  %v3836 = vpop.permute.xlu0 %3835
  %3837 = vrot.lane.b32.xlu0 %v3834, 1
  %v3838 = vpop.permute.xlu0 %3837
  %3839 = vrot.lane.b32.xlu0 %v3831, 1
  %v3840 = vpop.permute.xlu0 %3839
  %v3841 = vsel %vm632, %v3836, %v3838
  %v3842 = vsel %vm632, %v3838, %v3840
  %v3845 = vsel %vm83, %v3841, 0.0
  %v3846 = vsel %vm84, %v3842, 0.0
  %v3847 = vld [vmem:[%s639] sm:$0xf]
  %v3849 = vsel %vm102, %v3847, 0
  %v3852 = vsel %vm106, %v3845, 0
  %v3855 = vsel %vm106, %v3846, 0
  %3857 = vmatprep.subr.mxu0 %v3855
  %3858 = vmatpush1.msra.mxu0 %v3852
  %3859 = vmatprep.subr.mxu0 0.0
  %3860 = vmatpush1.msra.mxu0 0.0
  %3861 = vmatprep.subr.mxu0 0.0
  %3862 = vmatpush1.msra.mxu0 0.0
  %3863 = vmatprep.subr.mxu0 0.0
  %3864 = vmatpush1.msra.mxu0 0.0
  %3865 = vmatprep.subr.mxu0 0.0
  %3866 = vmatpush1.msra.mxu0 0.0
  %3867 = vmatprep.subr.mxu0 0.0
  %3868 = vmatpush1.msra.mxu0 0.0
  %3869 = vmatprep.subr.mxu0 0.0
  %3870 = vmatpush1.msra.mxu0 0.0
  %3871 = vmatprep.subr.mxu0 0.0
  %3872 = vmatpush1.msra.mxu0 0.0
  %3873 = vmatprep.subr.mxu0 0.0
  %3874 = vmatpush1.msra.mxu0 0.0
  %3875 = vmatprep.subr.mxu0 0.0
  %3876 = vmatpush1.msra.mxu0 0.0
  %3877 = vmatprep.subr.mxu0 0.0
  %3878 = vmatpush1.msra.mxu0 0.0
  %3879 = vmatprep.subr.mxu0 0.0
  %3880 = vmatpush1.msra.mxu0 0.0
  %3881 = vmatprep.subr.mxu0 0.0
  %3882 = vmatpush1.msra.mxu0 0.0
  %3883 = vmatprep.subr.mxu0 0.0
  %3884 = vmatpush1.msra.mxu0 0.0
  %3885 = vmatprep.subr.mxu0 0.0
  %3886 = vmatpush1.msra.mxu0 0.0
  %3887 = vmatprep.subr.mxu0 0.0
  %3888 = vmatpush1.msra.mxu0 0.0
  %3889 = vmatprep.subr.mxu0 0.0
  %3890 = vmatpush1.msra.mxu0 0.0
  %3891 = vmatprep.subr.mxu0 0.0
  %3892 = vmatpush1.msra.mxu0 0.0
  %3893 = vmatprep.subr.mxu0 0.0
  %3894 = vmatpush1.msra.mxu0 0.0
  %3895 = vmatprep.subr.mxu0 0.0
  %3896 = vmatpush1.msra.mxu0 0.0
  %3897 = vmatprep.subr.mxu0 0.0
  %3898 = vmatpush1.msra.mxu0 0.0
  %3899 = vmatprep.subr.mxu0 0.0
  %3900 = vmatpush1.msra.mxu0 0.0
  %3901 = vmatprep.subr.mxu0 0.0
  %3902 = vmatpush1.msra.mxu0 0.0
  %3903 = vmatprep.subr.mxu0 0.0
  %3904 = vmatpush1.msra.mxu0 0.0
  %3905 = vmatprep.subr.mxu0 0.0
  %3906 = vmatpush1.msra.mxu0 0.0
  %3907 = vmatprep.subr.mxu0 0.0
  %3908 = vmatpush1.msra.mxu0 0.0
  %3909 = vmatprep.subr.mxu0 0.0
  %3910 = vmatpush1.msra.mxu0 0.0
  %3911 = vmatprep.subr.mxu0 0.0
  %3912 = vmatpush1.msra.mxu0 0.0
  %3913 = vmatprep.subr.mxu0 0.0
  %3914 = vmatpush1.msra.mxu0 0.0
  %3915 = vmatprep.subr.mxu0 0.0
  %3916 = vmatpush1.msra.mxu0 0.0
  %3917 = vmatprep.subr.mxu0 0.0
  %3918 = vmatpush1.msra.mxu0 0.0
  %3919 = vmatprep.subr.mxu0 0.0
  %3920 = vmatpush1.msra.mxu0 0.0
  %3921 = vmatprep.mubr.f32.mxu0 0.0
  %3922 = vmatmul.mubr.f32.gmra.mrb[0].mxu0 %v3849
  %v3923 = vpop.f32.mrb[0].mxu0
  %v3924 = vadd.f32 0.0, %v3923
  %v3925 = vpop.f32.mrb[0].mxu0
  %v3926 = vadd.f32 0.0, %v3925
  %3927 = vdwg.mxu0
  %v3928 = vadd.f32 %v3751, %v3924
  %v3929 = vadd.f32 %v3752, %v3926
  %v3930 = vld [vmem:[%s723] sm:$0xf]
  %v3932 = vsel %vm102, %v3930, 0
  %3934 = vmatprep.subr.mxu0 %v3855
  %3935 = vmatpush1.msra.mxu0 %v3852
  %3936 = vmatprep.subr.mxu0 0.0
  %3937 = vmatpush1.msra.mxu0 0.0
  %3938 = vmatprep.subr.mxu0 0.0
  %3939 = vmatpush1.msra.mxu0 0.0
  %3940 = vmatprep.subr.mxu0 0.0
  %3941 = vmatpush1.msra.mxu0 0.0
  %3942 = vmatprep.subr.mxu0 0.0
  %3943 = vmatpush1.msra.mxu0 0.0
  %3944 = vmatprep.subr.mxu0 0.0
  %3945 = vmatpush1.msra.mxu0 0.0
  %3946 = vmatprep.subr.mxu0 0.0
  %3947 = vmatpush1.msra.mxu0 0.0
  %3948 = vmatprep.subr.mxu0 0.0
  %3949 = vmatpush1.msra.mxu0 0.0
  %3950 = vmatprep.subr.mxu0 0.0
  %3951 = vmatpush1.msra.mxu0 0.0
  %3952 = vmatprep.subr.mxu0 0.0
  %3953 = vmatpush1.msra.mxu0 0.0
  %3954 = vmatprep.subr.mxu0 0.0
  %3955 = vmatpush1.msra.mxu0 0.0
  %3956 = vmatprep.subr.mxu0 0.0
  %3957 = vmatpush1.msra.mxu0 0.0
  %3958 = vmatprep.subr.mxu0 0.0
  %3959 = vmatpush1.msra.mxu0 0.0
  %3960 = vmatprep.subr.mxu0 0.0
  %3961 = vmatpush1.msra.mxu0 0.0
  %3962 = vmatprep.subr.mxu0 0.0
  %3963 = vmatpush1.msra.mxu0 0.0
  %3964 = vmatprep.subr.mxu0 0.0
  %3965 = vmatpush1.msra.mxu0 0.0
  %3966 = vmatprep.subr.mxu0 0.0
  %3967 = vmatpush1.msra.mxu0 0.0
  %3968 = vmatprep.subr.mxu0 0.0
  %3969 = vmatpush1.msra.mxu0 0.0
  %3970 = vmatprep.subr.mxu0 0.0
  %3971 = vmatpush1.msra.mxu0 0.0
  %3972 = vmatprep.subr.mxu0 0.0
  %3973 = vmatpush1.msra.mxu0 0.0
  %3974 = vmatprep.subr.mxu0 0.0
  %3975 = vmatpush1.msra.mxu0 0.0
  %3976 = vmatprep.subr.mxu0 0.0
  %3977 = vmatpush1.msra.mxu0 0.0
  %3978 = vmatprep.subr.mxu0 0.0
  %3979 = vmatpush1.msra.mxu0 0.0
  %3980 = vmatprep.subr.mxu0 0.0
  %3981 = vmatpush1.msra.mxu0 0.0
  %3982 = vmatprep.subr.mxu0 0.0
  %3983 = vmatpush1.msra.mxu0 0.0
  %3984 = vmatprep.subr.mxu0 0.0
  %3985 = vmatpush1.msra.mxu0 0.0
  %3986 = vmatprep.subr.mxu0 0.0
  %3987 = vmatpush1.msra.mxu0 0.0
  %3988 = vmatprep.subr.mxu0 0.0
  %3989 = vmatpush1.msra.mxu0 0.0
  %3990 = vmatprep.subr.mxu0 0.0
  %3991 = vmatpush1.msra.mxu0 0.0
  %3992 = vmatprep.subr.mxu0 0.0
  %3993 = vmatpush1.msra.mxu0 0.0
  %3994 = vmatprep.subr.mxu0 0.0
  %3995 = vmatpush1.msra.mxu0 0.0
  %3996 = vmatprep.subr.mxu0 0.0
  %3997 = vmatpush1.msra.mxu0 0.0
  %3998 = vmatprep.mubr.f32.mxu0 0.0
  %3999 = vmatmul.mubr.f32.gmra.mrb[0].mxu0 %v3932
  %v4000 = vpop.f32.mrb[0].mxu0
  %v4001 = vadd.f32 0.0, %v4000
  %v4002 = vpop.f32.mrb[0].mxu0
  %v4003 = vadd.f32 0.0, %v4002
  %4004 = vdwg.mxu0
  %v4005 = vadd.f32 %v3828, %v4001
  %v4006 = vadd.f32 %v3829, %v4003
  %v4007 = vld [vmem:[#allocation2 + $0x4] sm:$0xff]
  %v4008 = vld [vmem:[%s802] sm:$0xf]
  %v4010 = vcombine.high %v4007, %v4007
  %v4012 = vsel %vm102, %v4008, 0
  %v4014 = vsel %vm106, %v4007, 0
  %v4016 = vsel %vm106, %v4010, 0
  %4018 = vmatprep.subr.mxu0 %v4016
  %4019 = vmatpush1.msra.mxu0 %v4014
  %4020 = vmatprep.subr.mxu0 0.0
  %4021 = vmatpush1.msra.mxu0 0.0
  %4022 = vmatprep.subr.mxu0 0.0
  %4023 = vmatpush1.msra.mxu0 0.0
  %4024 = vmatprep.subr.mxu0 0.0
  %4025 = vmatpush1.msra.mxu0 0.0
  %4026 = vmatprep.subr.mxu0 0.0
  %4027 = vmatpush1.msra.mxu0 0.0
  %4028 = vmatprep.subr.mxu0 0.0
  %4029 = vmatpush1.msra.mxu0 0.0
  %4030 = vmatprep.subr.mxu0 0.0
  %4031 = vmatpush1.msra.mxu0 0.0
  %4032 = vmatprep.subr.mxu0 0.0
  %4033 = vmatpush1.msra.mxu0 0.0
  %4034 = vmatprep.subr.mxu0 0.0
  %4035 = vmatpush1.msra.mxu0 0.0
  %4036 = vmatprep.subr.mxu0 0.0
  %4037 = vmatpush1.msra.mxu0 0.0
  %4038 = vmatprep.subr.mxu0 0.0
  %4039 = vmatpush1.msra.mxu0 0.0
  %4040 = vmatprep.subr.mxu0 0.0
  %4041 = vmatpush1.msra.mxu0 0.0
  %4042 = vmatprep.subr.mxu0 0.0
  %4043 = vmatpush1.msra.mxu0 0.0
  %4044 = vmatprep.subr.mxu0 0.0
  %4045 = vmatpush1.msra.mxu0 0.0
  %4046 = vmatprep.subr.mxu0 0.0
  %4047 = vmatpush1.msra.mxu0 0.0
  %4048 = vmatprep.subr.mxu0 0.0
  %4049 = vmatpush1.msra.mxu0 0.0
  %4050 = vmatprep.subr.mxu0 0.0
  %4051 = vmatpush1.msra.mxu0 0.0
  %4052 = vmatprep.subr.mxu0 0.0
  %4053 = vmatpush1.msra.mxu0 0.0
  %4054 = vmatprep.subr.mxu0 0.0
  %4055 = vmatpush1.msra.mxu0 0.0
  %4056 = vmatprep.subr.mxu0 0.0
  %4057 = vmatpush1.msra.mxu0 0.0
  %4058 = vmatprep.subr.mxu0 0.0
  %4059 = vmatpush1.msra.mxu0 0.0
  %4060 = vmatprep.subr.mxu0 0.0
  %4061 = vmatpush1.msra.mxu0 0.0
  %4062 = vmatprep.subr.mxu0 0.0
  %4063 = vmatpush1.msra.mxu0 0.0
  %4064 = vmatprep.subr.mxu0 0.0
  %4065 = vmatpush1.msra.mxu0 0.0
  %4066 = vmatprep.subr.mxu0 0.0
  %4067 = vmatpush1.msra.mxu0 0.0
  %4068 = vmatprep.subr.mxu0 0.0
  %4069 = vmatpush1.msra.mxu0 0.0
  %4070 = vmatprep.subr.mxu0 0.0
  %4071 = vmatpush1.msra.mxu0 0.0
  %4072 = vmatprep.subr.mxu0 0.0
  %4073 = vmatpush1.msra.mxu0 0.0
  %4074 = vmatprep.subr.mxu0 0.0
  %4075 = vmatpush1.msra.mxu0 0.0
  %4076 = vmatprep.subr.mxu0 0.0
  %4077 = vmatpush1.msra.mxu0 0.0
  %4078 = vmatprep.subr.mxu0 0.0
  %4079 = vmatpush1.msra.mxu0 0.0
  %4080 = vmatprep.subr.mxu0 0.0
  %4081 = vmatpush1.msra.mxu0 0.0
  %4082 = vmatprep.mubr.f32.mxu0 0.0
  %4083 = vmatmul.mubr.f32.gmra.mrb[0].mxu0 %v4012
  %v4084 = vpop.f32.mrb[0].mxu0
  %v4085 = vadd.f32 0.0, %v4084
  %v4086 = vpop.f32.mrb[0].mxu0
  %v4087 = vadd.f32 0.0, %v4086
  %4088 = vdwg.mxu0
  %v4089 = vadd.f32 %v3928, %v4085
  %v4090 = vadd.f32 %v3929, %v4087
  %v4091 = vld [vmem:[%s886] sm:$0xf]
  %v4093 = vsel %vm102, %v4091, 0
  %4095 = vmatprep.subr.mxu0 %v4016
  %4096 = vmatpush1.msra.mxu0 %v4014
  %4097 = vmatprep.subr.mxu0 0.0
  %4098 = vmatpush1.msra.mxu0 0.0
  %4099 = vmatprep.subr.mxu0 0.0
  %4100 = vmatpush1.msra.mxu0 0.0
  %4101 = vmatprep.subr.mxu0 0.0
  %4102 = vmatpush1.msra.mxu0 0.0
  %4103 = vmatprep.subr.mxu0 0.0
  %4104 = vmatpush1.msra.mxu0 0.0
  %4105 = vmatprep.subr.mxu0 0.0
  %4106 = vmatpush1.msra.mxu0 0.0
  %4107 = vmatprep.subr.mxu0 0.0
  %4108 = vmatpush1.msra.mxu0 0.0
  %4109 = vmatprep.subr.mxu0 0.0
  %4110 = vmatpush1.msra.mxu0 0.0
  %4111 = vmatprep.subr.mxu0 0.0
  %4112 = vmatpush1.msra.mxu0 0.0
  %4113 = vmatprep.subr.mxu0 0.0
  %4114 = vmatpush1.msra.mxu0 0.0
  %4115 = vmatprep.subr.mxu0 0.0
  %4116 = vmatpush1.msra.mxu0 0.0
  %4117 = vmatprep.subr.mxu0 0.0
  %4118 = vmatpush1.msra.mxu0 0.0
  %4119 = vmatprep.subr.mxu0 0.0
  %4120 = vmatpush1.msra.mxu0 0.0
  %4121 = vmatprep.subr.mxu0 0.0
  %4122 = vmatpush1.msra.mxu0 0.0
  %4123 = vmatprep.subr.mxu0 0.0
  %4124 = vmatpush1.msra.mxu0 0.0
  %4125 = vmatprep.subr.mxu0 0.0
  %4126 = vmatpush1.msra.mxu0 0.0
  %4127 = vmatprep.subr.mxu0 0.0
  %4128 = vmatpush1.msra.mxu0 0.0
  %4129 = vmatprep.subr.mxu0 0.0
  %4130 = vmatpush1.msra.mxu0 0.0
  %4131 = vmatprep.subr.mxu0 0.0
  %4132 = vmatpush1.msra.mxu0 0.0
  %4133 = vmatprep.subr.mxu0 0.0
  %4134 = vmatpush1.msra.mxu0 0.0
  %4135 = vmatprep.subr.mxu0 0.0
  %4136 = vmatpush1.msra.mxu0 0.0
  %4137 = vmatprep.subr.mxu0 0.0
  %4138 = vmatpush1.msra.mxu0 0.0
  %4139 = vmatprep.subr.mxu0 0.0
  %4140 = vmatpush1.msra.mxu0 0.0
  %4141 = vmatprep.subr.mxu0 0.0
  %4142 = vmatpush1.msra.mxu0 0.0
  %4143 = vmatprep.subr.mxu0 0.0
  %4144 = vmatpush1.msra.mxu0 0.0
  %4145 = vmatprep.subr.mxu0 0.0
  %4146 = vmatpush1.msra.mxu0 0.0
  %4147 = vmatprep.subr.mxu0 0.0
  %4148 = vmatpush1.msra.mxu0 0.0
  %4149 = vmatprep.subr.mxu0 0.0
  %4150 = vmatpush1.msra.mxu0 0.0
  %4151 = vmatprep.subr.mxu0 0.0
  %4152 = vmatpush1.msra.mxu0 0.0
  %4153 = vmatprep.subr.mxu0 0.0
  %4154 = vmatpush1.msra.mxu0 0.0
  %4155 = vmatprep.subr.mxu0 0.0
  %4156 = vmatpush1.msra.mxu0 0.0
  %4157 = vmatprep.subr.mxu0 0.0
  %4158 = vmatpush1.msra.mxu0 0.0
  %4159 = vmatprep.mubr.f32.mxu0 0.0
  %4160 = vmatmul.mubr.f32.gmra.mrb[0].mxu0 %v4093
  %v4161 = vpop.f32.mrb[0].mxu0
  %v4162 = vadd.f32 0.0, %v4161
  %v4163 = vpop.f32.mrb[0].mxu0
  %v4164 = vadd.f32 0.0, %v4163
  %4165 = vdwg.mxu0
  %v4166 = vadd.f32 %v4005, %v4162
  %v4167 = vadd.f32 %v4006, %v4164
  %v4168 = vld [vmem:[#allocation2 + $0x4] sm:$0xff]
  %v4169 = vld [vmem:[#allocation2 + $0xc] sm:$0xf]
  %v4172 = vcombine.high %v4168, %v4168
  %4173 = vrot.lane.b32.xlu0 %v4168, 127
  %v4174 = vpop.permute.xlu0 %4173
  %4175 = vrot.lane.b32.xlu0 %v4172, 127
  %v4176 = vpop.permute.xlu0 %4175
  %4177 = vrot.lane.b32.xlu0 %v4169, 127
  %v4178 = vpop.permute.xlu0 %4177
  %v4179 = vsel %vm975, %v4174, %v4176
  %v4180 = vsel %vm975, %v4176, %v4178
  %v4183 = vsel %vm441, %v4179, 0.0
  %v4184 = vsel %vm442, %v4180, 0.0
  %v4185 = vld [vmem:[%s982] sm:$0xf]
  %v4187 = vsel %vm102, %v4185, 0
  %v4190 = vsel %vm106, %v4183, 0
  %v4193 = vsel %vm106, %v4184, 0
  %4195 = vmatprep.subr.mxu0 %v4193
  %4196 = vmatpush1.msra.mxu0 %v4190
  %4197 = vmatprep.subr.mxu0 0.0
  %4198 = vmatpush1.msra.mxu0 0.0
  %4199 = vmatprep.subr.mxu0 0.0
  %4200 = vmatpush1.msra.mxu0 0.0
  %4201 = vmatprep.subr.mxu0 0.0
  %4202 = vmatpush1.msra.mxu0 0.0
  %4203 = vmatprep.subr.mxu0 0.0
  %4204 = vmatpush1.msra.mxu0 0.0
  %4205 = vmatprep.subr.mxu0 0.0
  %4206 = vmatpush1.msra.mxu0 0.0
  %4207 = vmatprep.subr.mxu0 0.0
  %4208 = vmatpush1.msra.mxu0 0.0
  %4209 = vmatprep.subr.mxu0 0.0
  %4210 = vmatpush1.msra.mxu0 0.0
  %4211 = vmatprep.subr.mxu0 0.0
  %4212 = vmatpush1.msra.mxu0 0.0
  %4213 = vmatprep.subr.mxu0 0.0
  %4214 = vmatpush1.msra.mxu0 0.0
  %4215 = vmatprep.subr.mxu0 0.0
  %4216 = vmatpush1.msra.mxu0 0.0
  %4217 = vmatprep.subr.mxu0 0.0
  %4218 = vmatpush1.msra.mxu0 0.0
  %4219 = vmatprep.subr.mxu0 0.0
  %4220 = vmatpush1.msra.mxu0 0.0
  %4221 = vmatprep.subr.mxu0 0.0
  %4222 = vmatpush1.msra.mxu0 0.0
  %4223 = vmatprep.subr.mxu0 0.0
  %4224 = vmatpush1.msra.mxu0 0.0
  %4225 = vmatprep.subr.mxu0 0.0
  %4226 = vmatpush1.msra.mxu0 0.0
  %4227 = vmatprep.subr.mxu0 0.0
  %4228 = vmatpush1.msra.mxu0 0.0
  %4229 = vmatprep.subr.mxu0 0.0
  %4230 = vmatpush1.msra.mxu0 0.0
  %4231 = vmatprep.subr.mxu0 0.0
  %4232 = vmatpush1.msra.mxu0 0.0
  %4233 = vmatprep.subr.mxu0 0.0
  %4234 = vmatpush1.msra.mxu0 0.0
  %4235 = vmatprep.subr.mxu0 0.0
  %4236 = vmatpush1.msra.mxu0 0.0
  %4237 = vmatprep.subr.mxu0 0.0
  %4238 = vmatpush1.msra.mxu0 0.0
  %4239 = vmatprep.subr.mxu0 0.0
  %4240 = vmatpush1.msra.mxu0 0.0
  %4241 = vmatprep.subr.mxu0 0.0
  %4242 = vmatpush1.msra.mxu0 0.0
  %4243 = vmatprep.subr.mxu0 0.0
  %4244 = vmatpush1.msra.mxu0 0.0
  %4245 = vmatprep.subr.mxu0 0.0
  %4246 = vmatpush1.msra.mxu0 0.0
  %4247 = vmatprep.subr.mxu0 0.0
  %4248 = vmatpush1.msra.mxu0 0.0
  %4249 = vmatprep.subr.mxu0 0.0
  %4250 = vmatpush1.msra.mxu0 0.0
  %4251 = vmatprep.subr.mxu0 0.0
  %4252 = vmatpush1.msra.mxu0 0.0
  %4253 = vmatprep.subr.mxu0 0.0
  %4254 = vmatpush1.msra.mxu0 0.0
  %4255 = vmatprep.subr.mxu0 0.0
  %4256 = vmatpush1.msra.mxu0 0.0
  %4257 = vmatprep.subr.mxu0 0.0
  %4258 = vmatpush1.msra.mxu0 0.0
  %4259 = vmatprep.mubr.f32.mxu0 0.0
  %4260 = vmatmul.mubr.f32.gmra.mrb[0].mxu0 %v4187
  %v4261 = vpop.f32.mrb[0].mxu0
  %v4262 = vadd.f32 0.0, %v4261
  %v4263 = vpop.f32.mrb[0].mxu0
  %v4264 = vadd.f32 0.0, %v4263
  %4265 = vdwg.mxu0
  %v4266 = vadd.f32 %v4089, %v4262
  %v4267 = vadd.f32 %v4090, %v4264
  %v4268 = vld [vmem:[%s1066] sm:$0xf]
  %v4270 = vsel %vm102, %v4268, 0
  %4272 = vmatprep.subr.mxu0 %v4193
  %4273 = vmatpush1.msra.mxu0 %v4190
  %4274 = vmatprep.subr.mxu0 0.0
  %4275 = vmatpush1.msra.mxu0 0.0
  %4276 = vmatprep.subr.mxu0 0.0
  %4277 = vmatpush1.msra.mxu0 0.0
  %4278 = vmatprep.subr.mxu0 0.0
  %4279 = vmatpush1.msra.mxu0 0.0
  %4280 = vmatprep.subr.mxu0 0.0
  %4281 = vmatpush1.msra.mxu0 0.0
  %4282 = vmatprep.subr.mxu0 0.0
  %4283 = vmatpush1.msra.mxu0 0.0
  %4284 = vmatprep.subr.mxu0 0.0
  %4285 = vmatpush1.msra.mxu0 0.0
  %4286 = vmatprep.subr.mxu0 0.0
  %4287 = vmatpush1.msra.mxu0 0.0
  %4288 = vmatprep.subr.mxu0 0.0
  %4289 = vmatpush1.msra.mxu0 0.0
  %4290 = vmatprep.subr.mxu0 0.0
  %4291 = vmatpush1.msra.mxu0 0.0
  %4292 = vmatprep.subr.mxu0 0.0
  %4293 = vmatpush1.msra.mxu0 0.0
  %4294 = vmatprep.subr.mxu0 0.0
  %4295 = vmatpush1.msra.mxu0 0.0
  %4296 = vmatprep.subr.mxu0 0.0
  %4297 = vmatpush1.msra.mxu0 0.0
  %4298 = vmatprep.subr.mxu0 0.0
  %4299 = vmatpush1.msra.mxu0 0.0
  %4300 = vmatprep.subr.mxu0 0.0
  %4301 = vmatpush1.msra.mxu0 0.0
  %4302 = vmatprep.subr.mxu0 0.0
  %4303 = vmatpush1.msra.mxu0 0.0
  %4304 = vmatprep.subr.mxu0 0.0
  %4305 = vmatpush1.msra.mxu0 0.0
  %4306 = vmatprep.subr.mxu0 0.0
  %4307 = vmatpush1.msra.mxu0 0.0
  %4308 = vmatprep.subr.mxu0 0.0
  %4309 = vmatpush1.msra.mxu0 0.0
  %4310 = vmatprep.subr.mxu0 0.0
  %4311 = vmatpush1.msra.mxu0 0.0
  %4312 = vmatprep.subr.mxu0 0.0
  %4313 = vmatpush1.msra.mxu0 0.0
  %4314 = vmatprep.subr.mxu0 0.0
  %4315 = vmatpush1.msra.mxu0 0.0
  %4316 = vmatprep.subr.mxu0 0.0
  %4317 = vmatpush1.msra.mxu0 0.0
  %4318 = vmatprep.subr.mxu0 0.0
  %4319 = vmatpush1.msra.mxu0 0.0
  %4320 = vmatprep.subr.mxu0 0.0
  %4321 = vmatpush1.msra.mxu0 0.0
  %4322 = vmatprep.subr.mxu0 0.0
  %4323 = vmatpush1.msra.mxu0 0.0
  %4324 = vmatprep.subr.mxu0 0.0
  %4325 = vmatpush1.msra.mxu0 0.0
  %4326 = vmatprep.subr.mxu0 0.0
  %4327 = vmatpush1.msra.mxu0 0.0
  %4328 = vmatprep.subr.mxu0 0.0
  %4329 = vmatpush1.msra.mxu0 0.0
  %4330 = vmatprep.subr.mxu0 0.0
  %4331 = vmatpush1.msra.mxu0 0.0
  %4332 = vmatprep.subr.mxu0 0.0
  %4333 = vmatpush1.msra.mxu0 0.0
  %4334 = vmatprep.subr.mxu0 0.0
  %4335 = vmatpush1.msra.mxu0 0.0
  %4336 = vmatprep.mubr.f32.mxu0 0.0
  %4337 = vmatmul.mubr.f32.gmra.mrb[0].mxu0 %v4270
  %v4338 = vpop.f32.mrb[0].mxu0
  %v4339 = vadd.f32 0.0, %v4338
  %v4340 = vpop.f32.mrb[0].mxu0
  %v4341 = vadd.f32 0.0, %v4340
  %4342 = vdwg.mxu0
  %v4343 = vadd.f32 %v4166, %v4339
  %v4344 = vadd.f32 %v4167, %v4341
  %v4345 = vld [vmem:[#allocation2 + $0x4] sm:$0xff]
  %v4346 = vld [vmem:[#allocation2 + $0xc] sm:$0xf]
  %v4349 = vcombine.high %v4345, %v4345
  %4350 = vrot.lane.b32.xlu0 %v4345, 113
  %v4351 = vpop.permute.xlu0 %4350
  %4352 = vrot.lane.b32.xlu0 %v4349, 113
  %v4353 = vpop.permute.xlu0 %4352
  %4354 = vrot.lane.b32.xlu0 %v4346, 113
  %v4355 = vpop.permute.xlu0 %4354
  %v4356 = vsel %vm1155, %v4351, %v4353
  %v4357 = vsel %vm1155, %v4353, %v4355
  %v4360 = vsel %vm83, %v4356, 0.0
  %v4361 = vsel %vm84, %v4357, 0.0
  %v4362 = vld [vmem:[%s1162] sm:$0xf]
  %v4364 = vsel %vm102, %v4362, 0
  %v4367 = vsel %vm106, %v4360, 0
  %v4370 = vsel %vm106, %v4361, 0
  %4372 = vmatprep.subr.mxu0 %v4370
  %4373 = vmatpush1.msra.mxu0 %v4367
  %4374 = vmatprep.subr.mxu0 0.0
  %4375 = vmatpush1.msra.mxu0 0.0
  %4376 = vmatprep.subr.mxu0 0.0
  %4377 = vmatpush1.msra.mxu0 0.0
  %4378 = vmatprep.subr.mxu0 0.0
  %4379 = vmatpush1.msra.mxu0 0.0
  %4380 = vmatprep.subr.mxu0 0.0
  %4381 = vmatpush1.msra.mxu0 0.0
  %4382 = vmatprep.subr.mxu0 0.0
  %4383 = vmatpush1.msra.mxu0 0.0
  %4384 = vmatprep.subr.mxu0 0.0
  %4385 = vmatpush1.msra.mxu0 0.0
  %4386 = vmatprep.subr.mxu0 0.0
  %4387 = vmatpush1.msra.mxu0 0.0
  %4388 = vmatprep.subr.mxu0 0.0
  %4389 = vmatpush1.msra.mxu0 0.0
  %4390 = vmatprep.subr.mxu0 0.0
  %4391 = vmatpush1.msra.mxu0 0.0
  %4392 = vmatprep.subr.mxu0 0.0
  %4393 = vmatpush1.msra.mxu0 0.0
  %4394 = vmatprep.subr.mxu0 0.0
  %4395 = vmatpush1.msra.mxu0 0.0
  %4396 = vmatprep.subr.mxu0 0.0
  %4397 = vmatpush1.msra.mxu0 0.0
  %4398 = vmatprep.subr.mxu0 0.0
  %4399 = vmatpush1.msra.mxu0 0.0
  %4400 = vmatprep.subr.mxu0 0.0
  %4401 = vmatpush1.msra.mxu0 0.0
  %4402 = vmatprep.subr.mxu0 0.0
  %4403 = vmatpush1.msra.mxu0 0.0
  %4404 = vmatprep.subr.mxu0 0.0
  %4405 = vmatpush1.msra.mxu0 0.0
  %4406 = vmatprep.subr.mxu0 0.0
  %4407 = vmatpush1.msra.mxu0 0.0
  %4408 = vmatprep.subr.mxu0 0.0
  %4409 = vmatpush1.msra.mxu0 0.0
  %4410 = vmatprep.subr.mxu0 0.0
  %4411 = vmatpush1.msra.mxu0 0.0
  %4412 = vmatprep.subr.mxu0 0.0
  %4413 = vmatpush1.msra.mxu0 0.0
  %4414 = vmatprep.subr.mxu0 0.0
  %4415 = vmatpush1.msra.mxu0 0.0
  %4416 = vmatprep.subr.mxu0 0.0
  %4417 = vmatpush1.msra.mxu0 0.0
  %4418 = vmatprep.subr.mxu0 0.0
  %4419 = vmatpush1.msra.mxu0 0.0
  %4420 = vmatprep.subr.mxu0 0.0
  %4421 = vmatpush1.msra.mxu0 0.0
  %4422 = vmatprep.subr.mxu0 0.0
  %4423 = vmatpush1.msra.mxu0 0.0
  %4424 = vmatprep.subr.mxu0 0.0
  %4425 = vmatpush1.msra.mxu0 0.0
  %4426 = vmatprep.subr.mxu0 0.0
  %4427 = vmatpush1.msra.mxu0 0.0
  %4428 = vmatprep.subr.mxu0 0.0
  %4429 = vmatpush1.msra.mxu0 0.0
  %4430 = vmatprep.subr.mxu0 0.0
  %4431 = vmatpush1.msra.mxu0 0.0
  %4432 = vmatprep.subr.mxu0 0.0
  %4433 = vmatpush1.msra.mxu0 0.0
  %4434 = vmatprep.subr.mxu0 0.0
  %4435 = vmatpush1.msra.mxu0 0.0
  %4436 = vmatprep.mubr.f32.mxu0 0.0
  %4437 = vmatmul.mubr.f32.gmra.mrb[0].mxu0 %v4364
  %v4438 = vpop.f32.mrb[0].mxu0
  %v4439 = vadd.f32 0.0, %v4438
  %v4440 = vpop.f32.mrb[0].mxu0
  %v4441 = vadd.f32 0.0, %v4440
  %4442 = vdwg.mxu0
  %v4443 = vadd.f32 %v4266, %v4439
  %v4444 = vadd.f32 %v4267, %v4441
  %v4445 = vld [vmem:[%s1246] sm:$0xf]
  %v4447 = vsel %vm102, %v4445, 0
  %4449 = vmatprep.subr.mxu0 %v4370
  %4450 = vmatpush1.msra.mxu0 %v4367
  %4451 = vmatprep.subr.mxu0 0.0
  %4452 = vmatpush1.msra.mxu0 0.0
  %4453 = vmatprep.subr.mxu0 0.0
  %4454 = vmatpush1.msra.mxu0 0.0
  %4455 = vmatprep.subr.mxu0 0.0
  %4456 = vmatpush1.msra.mxu0 0.0
  %4457 = vmatprep.subr.mxu0 0.0
  %4458 = vmatpush1.msra.mxu0 0.0
  %4459 = vmatprep.subr.mxu0 0.0
  %4460 = vmatpush1.msra.mxu0 0.0
  %4461 = vmatprep.subr.mxu0 0.0
  %4462 = vmatpush1.msra.mxu0 0.0
  %4463 = vmatprep.subr.mxu0 0.0
  %4464 = vmatpush1.msra.mxu0 0.0
  %4465 = vmatprep.subr.mxu0 0.0
  %4466 = vmatpush1.msra.mxu0 0.0
  %4467 = vmatprep.subr.mxu0 0.0
  %4468 = vmatpush1.msra.mxu0 0.0
  %4469 = vmatprep.subr.mxu0 0.0
  %4470 = vmatpush1.msra.mxu0 0.0
  %4471 = vmatprep.subr.mxu0 0.0
  %4472 = vmatpush1.msra.mxu0 0.0
  %4473 = vmatprep.subr.mxu0 0.0
  %4474 = vmatpush1.msra.mxu0 0.0
  %4475 = vmatprep.subr.mxu0 0.0
  %4476 = vmatpush1.msra.mxu0 0.0
  %4477 = vmatprep.subr.mxu0 0.0
  %4478 = vmatpush1.msra.mxu0 0.0
  %4479 = vmatprep.subr.mxu0 0.0
  %4480 = vmatpush1.msra.mxu0 0.0
  %4481 = vmatprep.subr.mxu0 0.0
  %4482 = vmatpush1.msra.mxu0 0.0
  %4483 = vmatprep.subr.mxu0 0.0
  %4484 = vmatpush1.msra.mxu0 0.0
  %4485 = vmatprep.subr.mxu0 0.0
  %4486 = vmatpush1.msra.mxu0 0.0
  %4487 = vmatprep.subr.mxu0 0.0
  %4488 = vmatpush1.msra.mxu0 0.0
  %4489 = vmatprep.subr.mxu0 0.0
  %4490 = vmatpush1.msra.mxu0 0.0
  %4491 = vmatprep.subr.mxu0 0.0
  %4492 = vmatpush1.msra.mxu0 0.0
  %4493 = vmatprep.subr.mxu0 0.0
  %4494 = vmatpush1.msra.mxu0 0.0
  %4495 = vmatprep.subr.mxu0 0.0
  %4496 = vmatpush1.msra.mxu0 0.0
  %4497 = vmatprep.subr.mxu0 0.0
  %4498 = vmatpush1.msra.mxu0 0.0
  %4499 = vmatprep.subr.mxu0 0.0
  %4500 = vmatpush1.msra.mxu0 0.0
  %4501 = vmatprep.subr.mxu0 0.0
  %4502 = vmatpush1.msra.mxu0 0.0
  %4503 = vmatprep.subr.mxu0 0.0
  %4504 = vmatpush1.msra.mxu0 0.0
  %4505 = vmatprep.subr.mxu0 0.0
  %4506 = vmatpush1.msra.mxu0 0.0
  %4507 = vmatprep.subr.mxu0 0.0
  %4508 = vmatpush1.msra.mxu0 0.0
  %4509 = vmatprep.subr.mxu0 0.0
  %4510 = vmatpush1.msra.mxu0 0.0
  %4511 = vmatprep.subr.mxu0 0.0
  %4512 = vmatpush1.msra.mxu0 0.0
  %4513 = vmatprep.mubr.f32.mxu0 0.0
  %4514 = vmatmul.mubr.f32.gmra.mrb[0].mxu0 %v4447
  %v4515 = vpop.f32.mrb[0].mxu0
  %v4516 = vadd.f32 0.0, %v4515
  %v4517 = vpop.f32.mrb[0].mxu0
  %v4518 = vadd.f32 0.0, %v4517
  %4519 = vdwg.mxu0
  %v4520 = vadd.f32 %v4343, %v4516
  %v4521 = vadd.f32 %v4344, %v4518
  %v4522 = vld [vmem:[#allocation2 + $0x4] sm:$0xff]
  %v4523 = vld [vmem:[#allocation2 + $0xc] sm:$0xf]
  %v4524 = vld [vmem:[%s1326] sm:$0xf]
  %v4527 = vcombine.high %v4522, %v4522
  %4528 = vrot.lane.b32.xlu0 %v4522, 112
  %v4529 = vpop.permute.xlu0 %4528
  %4530 = vrot.lane.b32.xlu0 %v4527, 112
  %v4531 = vpop.permute.xlu0 %4530
  %4532 = vrot.lane.b32.xlu0 %v4523, 112
  %v4533 = vpop.permute.xlu0 %4532
  %v4534 = vsel %vm1337, %v4529, %v4531
  %v4535 = vsel %vm1337, %v4531, %v4533
  %v4537 = vsel %vm102, %v4524, 0
  %v4539 = vsel %vm106, %v4534, 0
  %v4541 = vsel %vm106, %v4535, 0
  %4543 = vmatprep.subr.mxu0 %v4541
  %4544 = vmatpush1.msra.mxu0 %v4539
  %4545 = vmatprep.subr.mxu0 0.0
  %4546 = vmatpush1.msra.mxu0 0.0
  %4547 = vmatprep.subr.mxu0 0.0
  %4548 = vmatpush1.msra.mxu0 0.0
  %4549 = vmatprep.subr.mxu0 0.0
  %4550 = vmatpush1.msra.mxu0 0.0
  %4551 = vmatprep.subr.mxu0 0.0
  %4552 = vmatpush1.msra.mxu0 0.0
  %4553 = vmatprep.subr.mxu0 0.0
  %4554 = vmatpush1.msra.mxu0 0.0
  %4555 = vmatprep.subr.mxu0 0.0
  %4556 = vmatpush1.msra.mxu0 0.0
  %4557 = vmatprep.subr.mxu0 0.0
  %4558 = vmatpush1.msra.mxu0 0.0
  %4559 = vmatprep.subr.mxu0 0.0
  %4560 = vmatpush1.msra.mxu0 0.0
  %4561 = vmatprep.subr.mxu0 0.0
  %4562 = vmatpush1.msra.mxu0 0.0
  %4563 = vmatprep.subr.mxu0 0.0
  %4564 = vmatpush1.msra.mxu0 0.0
  %4565 = vmatprep.subr.mxu0 0.0
  %4566 = vmatpush1.msra.mxu0 0.0
  %4567 = vmatprep.subr.mxu0 0.0
  %4568 = vmatpush1.msra.mxu0 0.0
  %4569 = vmatprep.subr.mxu0 0.0
  %4570 = vmatpush1.msra.mxu0 0.0
  %4571 = vmatprep.subr.mxu0 0.0
  %4572 = vmatpush1.msra.mxu0 0.0
  %4573 = vmatprep.subr.mxu0 0.0
  %4574 = vmatpush1.msra.mxu0 0.0
  %4575 = vmatprep.subr.mxu0 0.0
  %4576 = vmatpush1.msra.mxu0 0.0
  %4577 = vmatprep.subr.mxu0 0.0
  %4578 = vmatpush1.msra.mxu0 0.0
  %4579 = vmatprep.subr.mxu0 0.0
  %4580 = vmatpush1.msra.mxu0 0.0
  %4581 = vmatprep.subr.mxu0 0.0
  %4582 = vmatpush1.msra.mxu0 0.0
  %4583 = vmatprep.subr.mxu0 0.0
  %4584 = vmatpush1.msra.mxu0 0.0
  %4585 = vmatprep.subr.mxu0 0.0
  %4586 = vmatpush1.msra.mxu0 0.0
  %4587 = vmatprep.subr.mxu0 0.0
  %4588 = vmatpush1.msra.mxu0 0.0
  %4589 = vmatprep.subr.mxu0 0.0
  %4590 = vmatpush1.msra.mxu0 0.0
  %4591 = vmatprep.subr.mxu0 0.0
  %4592 = vmatpush1.msra.mxu0 0.0
  %4593 = vmatprep.subr.mxu0 0.0
  %4594 = vmatpush1.msra.mxu0 0.0
  %4595 = vmatprep.subr.mxu0 0.0
  %4596 = vmatpush1.msra.mxu0 0.0
  %4597 = vmatprep.subr.mxu0 0.0
  %4598 = vmatpush1.msra.mxu0 0.0
  %4599 = vmatprep.subr.mxu0 0.0
  %4600 = vmatpush1.msra.mxu0 0.0
  %4601 = vmatprep.subr.mxu0 0.0
  %4602 = vmatpush1.msra.mxu0 0.0
  %4603 = vmatprep.subr.mxu0 0.0
  %4604 = vmatpush1.msra.mxu0 0.0
  %4605 = vmatprep.subr.mxu0 0.0
  %4606 = vmatpush1.msra.mxu0 0.0
  %4607 = vmatprep.mubr.f32.mxu0 0.0
  %4608 = vmatmul.mubr.f32.gmra.mrb[0].mxu0 %v4537
  %v4609 = vpop.f32.mrb[0].mxu0
  %v4610 = vadd.f32 0.0, %v4609
  %v4611 = vpop.f32.mrb[0].mxu0
  %v4612 = vadd.f32 0.0, %v4611
  %4613 = vdwg.mxu0
  %v4614 = vadd.f32 %v4443, %v4610
  %v4615 = vadd.f32 %v4444, %v4612
  %v4616 = vld [vmem:[%s1420] sm:$0xf]
  %v4618 = vsel %vm102, %v4616, 0
  %4620 = vmatprep.subr.mxu0 %v4541
  %4621 = vmatpush1.msra.mxu0 %v4539
  %4622 = vmatprep.subr.mxu0 0.0
  %4623 = vmatpush1.msra.mxu0 0.0
  %4624 = vmatprep.subr.mxu0 0.0
  %4625 = vmatpush1.msra.mxu0 0.0
  %4626 = vmatprep.subr.mxu0 0.0
  %4627 = vmatpush1.msra.mxu0 0.0
  %4628 = vmatprep.subr.mxu0 0.0
  %4629 = vmatpush1.msra.mxu0 0.0
  %4630 = vmatprep.subr.mxu0 0.0
  %4631 = vmatpush1.msra.mxu0 0.0
  %4632 = vmatprep.subr.mxu0 0.0
  %4633 = vmatpush1.msra.mxu0 0.0
  %4634 = vmatprep.subr.mxu0 0.0
  %4635 = vmatpush1.msra.mxu0 0.0
  %4636 = vmatprep.subr.mxu0 0.0
  %4637 = vmatpush1.msra.mxu0 0.0
  %4638 = vmatprep.subr.mxu0 0.0
  %4639 = vmatpush1.msra.mxu0 0.0
  %4640 = vmatprep.subr.mxu0 0.0
  %4641 = vmatpush1.msra.mxu0 0.0
  %4642 = vmatprep.subr.mxu0 0.0
  %4643 = vmatpush1.msra.mxu0 0.0
  %4644 = vmatprep.subr.mxu0 0.0
  %4645 = vmatpush1.msra.mxu0 0.0
  %4646 = vmatprep.subr.mxu0 0.0
  %4647 = vmatpush1.msra.mxu0 0.0
  %4648 = vmatprep.subr.mxu0 0.0
  %4649 = vmatpush1.msra.mxu0 0.0
  %4650 = vmatprep.subr.mxu0 0.0
  %4651 = vmatpush1.msra.mxu0 0.0
  %4652 = vmatprep.subr.mxu0 0.0
  %4653 = vmatpush1.msra.mxu0 0.0
  %4654 = vmatprep.subr.mxu0 0.0
  %4655 = vmatpush1.msra.mxu0 0.0
  %4656 = vmatprep.subr.mxu0 0.0
  %4657 = vmatpush1.msra.mxu0 0.0
  %4658 = vmatprep.subr.mxu0 0.0
  %4659 = vmatpush1.msra.mxu0 0.0
  %4660 = vmatprep.subr.mxu0 0.0
  %4661 = vmatpush1.msra.mxu0 0.0
  %4662 = vmatprep.subr.mxu0 0.0
  %4663 = vmatpush1.msra.mxu0 0.0
  %4664 = vmatprep.subr.mxu0 0.0
  %4665 = vmatpush1.msra.mxu0 0.0
  %4666 = vmatprep.subr.mxu0 0.0
  %4667 = vmatpush1.msra.mxu0 0.0
  %4668 = vmatprep.subr.mxu0 0.0
  %4669 = vmatpush1.msra.mxu0 0.0
  %4670 = vmatprep.subr.mxu0 0.0
  %4671 = vmatpush1.msra.mxu0 0.0
  %4672 = vmatprep.subr.mxu0 0.0
  %4673 = vmatpush1.msra.mxu0 0.0
  %4674 = vmatprep.subr.mxu0 0.0
  %4675 = vmatpush1.msra.mxu0 0.0
  %4676 = vmatprep.subr.mxu0 0.0
  %4677 = vmatpush1.msra.mxu0 0.0
  %4678 = vmatprep.subr.mxu0 0.0
  %4679 = vmatpush1.msra.mxu0 0.0
  %4680 = vmatprep.subr.mxu0 0.0
  %4681 = vmatpush1.msra.mxu0 0.0
  %4682 = vmatprep.subr.mxu0 0.0
  %4683 = vmatpush1.msra.mxu0 0.0
  %4684 = vmatprep.mubr.f32.mxu0 0.0
  %4685 = vmatmul.mubr.f32.gmra.mrb[0].mxu0 %v4618
  %v4686 = vpop.f32.mrb[0].mxu0
  %v4687 = vadd.f32 0.0, %v4686
  %v4688 = vpop.f32.mrb[0].mxu0
  %v4689 = vadd.f32 0.0, %v4688
  %4690 = vdwg.mxu0
  %v4691 = vadd.f32 %v4520, %v4687
  %v4692 = vadd.f32 %v4521, %v4689
  %v4693 = vld [vmem:[#allocation2 + $0x4] sm:$0xff]
  %v4694 = vld [vmem:[#allocation2 + $0xc] sm:$0xf]
  %v4697 = vcombine.high %v4693, %v4693
  %4698 = vrot.lane.b32.xlu0 %v4693, 111
  %v4699 = vpop.permute.xlu0 %4698
  %4700 = vrot.lane.b32.xlu0 %v4697, 111
  %v4701 = vpop.permute.xlu0 %4700
  %4702 = vrot.lane.b32.xlu0 %v4694, 111
  %v4703 = vpop.permute.xlu0 %4702
  %v4704 = vsel %vm1509, %v4699, %v4701
  %v4705 = vsel %vm1509, %v4701, %v4703
  %v4708 = vsel %vm441, %v4704, 0.0
  %v4709 = vsel %vm442, %v4705, 0.0
  %v4710 = vld [vmem:[%s1516] sm:$0xf]
  %v4712 = vsel %vm102, %v4710, 0
  %v4715 = vsel %vm106, %v4708, 0
  %v4718 = vsel %vm106, %v4709, 0
  %4720 = vmatprep.subr.mxu0 %v4718
  %4721 = vmatpush1.msra.mxu0 %v4715
  %4722 = vmatprep.subr.mxu0 0.0
  %4723 = vmatpush1.msra.mxu0 0.0
  %4724 = vmatprep.subr.mxu0 0.0
  %4725 = vmatpush1.msra.mxu0 0.0
  %4726 = vmatprep.subr.mxu0 0.0
  %4727 = vmatpush1.msra.mxu0 0.0
  %4728 = vmatprep.subr.mxu0 0.0
  %4729 = vmatpush1.msra.mxu0 0.0
  %4730 = vmatprep.subr.mxu0 0.0
  %4731 = vmatpush1.msra.mxu0 0.0
  %4732 = vmatprep.subr.mxu0 0.0
  %4733 = vmatpush1.msra.mxu0 0.0
  %4734 = vmatprep.subr.mxu0 0.0
  %4735 = vmatpush1.msra.mxu0 0.0
  %4736 = vmatprep.subr.mxu0 0.0
  %4737 = vmatpush1.msra.mxu0 0.0
  %4738 = vmatprep.subr.mxu0 0.0
  %4739 = vmatpush1.msra.mxu0 0.0
  %4740 = vmatprep.subr.mxu0 0.0
  %4741 = vmatpush1.msra.mxu0 0.0
  %4742 = vmatprep.subr.mxu0 0.0
  %4743 = vmatpush1.msra.mxu0 0.0
  %4744 = vmatprep.subr.mxu0 0.0
  %4745 = vmatpush1.msra.mxu0 0.0
  %4746 = vmatprep.subr.mxu0 0.0
  %4747 = vmatpush1.msra.mxu0 0.0
  %4748 = vmatprep.subr.mxu0 0.0
  %4749 = vmatpush1.msra.mxu0 0.0
  %4750 = vmatprep.subr.mxu0 0.0
  %4751 = vmatpush1.msra.mxu0 0.0
  %4752 = vmatprep.subr.mxu0 0.0
  %4753 = vmatpush1.msra.mxu0 0.0
  %4754 = vmatprep.subr.mxu0 0.0
  %4755 = vmatpush1.msra.mxu0 0.0
  %4756 = vmatprep.subr.mxu0 0.0
  %4757 = vmatpush1.msra.mxu0 0.0
  %4758 = vmatprep.subr.mxu0 0.0
  %4759 = vmatpush1.msra.mxu0 0.0
  %4760 = vmatprep.subr.mxu0 0.0
  %4761 = vmatpush1.msra.mxu0 0.0
  %4762 = vmatprep.subr.mxu0 0.0
  %4763 = vmatpush1.msra.mxu0 0.0
  %4764 = vmatprep.subr.mxu0 0.0
  %4765 = vmatpush1.msra.mxu0 0.0
  %4766 = vmatprep.subr.mxu0 0.0
  %4767 = vmatpush1.msra.mxu0 0.0
  %4768 = vmatprep.subr.mxu0 0.0
  %4769 = vmatpush1.msra.mxu0 0.0
  %4770 = vmatprep.subr.mxu0 0.0
  %4771 = vmatpush1.msra.mxu0 0.0
  %4772 = vmatprep.subr.mxu0 0.0
  %4773 = vmatpush1.msra.mxu0 0.0
  %4774 = vmatprep.subr.mxu0 0.0
  %4775 = vmatpush1.msra.mxu0 0.0
  %4776 = vmatprep.subr.mxu0 0.0
  %4777 = vmatpush1.msra.mxu0 0.0
  %4778 = vmatprep.subr.mxu0 0.0
  %4779 = vmatpush1.msra.mxu0 0.0
  %4780 = vmatprep.subr.mxu0 0.0
  %4781 = vmatpush1.msra.mxu0 0.0
  %4782 = vmatprep.subr.mxu0 0.0
  %4783 = vmatpush1.msra.mxu0 0.0
  %4784 = vmatprep.mubr.f32.mxu0 0.0
  %4785 = vmatmul.mubr.f32.gmra.mrb[0].mxu0 %v4712
  %v4786 = vpop.f32.mrb[0].mxu0
  %v4787 = vadd.f32 0.0, %v4786
  %v4788 = vpop.f32.mrb[0].mxu0
  %v4789 = vadd.f32 0.0, %v4788
  %4790 = vdwg.mxu0
  %v4791 = vadd.f32 %v4614, %v4787
  %v4792 = vadd.f32 %v4615, %v4789
  %v4793 = vld [vmem:[%s1600] sm:$0xf]
  %v4795 = vsel %vm102, %v4793, 0
  %4797 = vmatprep.subr.mxu0 %v4718
  %4798 = vmatpush1.msra.mxu0 %v4715
  %4799 = vmatprep.subr.mxu0 0.0
  %4800 = vmatpush1.msra.mxu0 0.0
  %4801 = vmatprep.subr.mxu0 0.0
  %4802 = vmatpush1.msra.mxu0 0.0
  %4803 = vmatprep.subr.mxu0 0.0
  %4804 = vmatpush1.msra.mxu0 0.0
  %4805 = vmatprep.subr.mxu0 0.0
  %4806 = vmatpush1.msra.mxu0 0.0
  %4807 = vmatprep.subr.mxu0 0.0
  %4808 = vmatpush1.msra.mxu0 0.0
  %4809 = vmatprep.subr.mxu0 0.0
  %4810 = vmatpush1.msra.mxu0 0.0
  %4811 = vmatprep.subr.mxu0 0.0
  %4812 = vmatpush1.msra.mxu0 0.0
  %4813 = vmatprep.subr.mxu0 0.0
  %4814 = vmatpush1.msra.mxu0 0.0
  %4815 = vmatprep.subr.mxu0 0.0
  %4816 = vmatpush1.msra.mxu0 0.0
  %4817 = vmatprep.subr.mxu0 0.0
  %4818 = vmatpush1.msra.mxu0 0.0
  %4819 = vmatprep.subr.mxu0 0.0
  %4820 = vmatpush1.msra.mxu0 0.0
  %4821 = vmatprep.subr.mxu0 0.0
  %4822 = vmatpush1.msra.mxu0 0.0
  %4823 = vmatprep.subr.mxu0 0.0
  %4824 = vmatpush1.msra.mxu0 0.0
  %4825 = vmatprep.subr.mxu0 0.0
  %4826 = vmatpush1.msra.mxu0 0.0
  %4827 = vmatprep.subr.mxu0 0.0
  %4828 = vmatpush1.msra.mxu0 0.0
  %4829 = vmatprep.subr.mxu0 0.0
  %4830 = vmatpush1.msra.mxu0 0.0
  %4831 = vmatprep.subr.mxu0 0.0
  %4832 = vmatpush1.msra.mxu0 0.0
  %4833 = vmatprep.subr.mxu0 0.0
  %4834 = vmatpush1.msra.mxu0 0.0
  %4835 = vmatprep.subr.mxu0 0.0
  %4836 = vmatpush1.msra.mxu0 0.0
  %4837 = vmatprep.subr.mxu0 0.0
  %4838 = vmatpush1.msra.mxu0 0.0
  %4839 = vmatprep.subr.mxu0 0.0
  %4840 = vmatpush1.msra.mxu0 0.0
  %4841 = vmatprep.subr.mxu0 0.0
  %4842 = vmatpush1.msra.mxu0 0.0
  %4843 = vmatprep.subr.mxu0 0.0
  %4844 = vmatpush1.msra.mxu0 0.0
  %4845 = vmatprep.subr.mxu0 0.0
  %4846 = vmatpush1.msra.mxu0 0.0
  %4847 = vmatprep.subr.mxu0 0.0
  %4848 = vmatpush1.msra.mxu0 0.0
  %4849 = vmatprep.subr.mxu0 0.0
  %4850 = vmatpush1.msra.mxu0 0.0
  %4851 = vmatprep.subr.mxu0 0.0
  %4852 = vmatpush1.msra.mxu0 0.0
  %4853 = vmatprep.subr.mxu0 0.0
  %4854 = vmatpush1.msra.mxu0 0.0
  %4855 = vmatprep.subr.mxu0 0.0
  %4856 = vmatpush1.msra.mxu0 0.0
  %4857 = vmatprep.subr.mxu0 0.0
  %4858 = vmatpush1.msra.mxu0 0.0
  %4859 = vmatprep.subr.mxu0 0.0
  %4860 = vmatpush1.msra.mxu0 0.0
  %4861 = vmatprep.mubr.f32.mxu0 0.0
  %4862 = vmatmul.mubr.f32.gmra.mrb[0].mxu0 %v4795
  %v4863 = vpop.f32.mrb[0].mxu0
  %v4864 = vadd.f32 0.0, %v4863
  %v4865 = vpop.f32.mrb[0].mxu0
  %v4866 = vadd.f32 0.0, %v4865
  %4867 = vdwg.mxu0
  %v4868 = vadd.f32 %v4691, %v4864
  %v4869 = vadd.f32 %v4692, %v4866
  %v4870 = vmax.f32 %v4791, %v4868
  %v4871 = vmax.f32 %v4792, %v4869
  %v4874 = vcombine.low %v4870, %v4871
  %4876 = vst [vmem:[#allocation2 + $0x4] sm:$0xff] %v4874
  %v4877 = vld [vmem:[%s7] sm:$0xf]
  %4879 = vset.pattern.permute.xlu0 0
  %4880 = vperm.xlu0 %4879, %v4877
  %v4881 = vpop.permute.xlu0 %4880
  %v4883 = vld [vmem:[%s8] sm:$0xf]
  %4885 = vset.pattern.permute.xlu0 0
  %4886 = vperm.xlu0 %4885, %v4883
  %v4887 = vpop.permute.xlu0 %4886
  %v4889 = vld [vmem:[#allocation2] sm:$0xff]
  %v4890 = vld [vmem:[#allocation2 + $0x8] sm:$0xf]
  %v4893 = vcombine.high %v4889, %v4889
  %4894 = vrot.lane.b32.xlu0 %v4889, 17
  %v4895 = vpop.permute.xlu0 %4894
  %4896 = vrot.lane.b32.xlu0 %v4893, 17
  %v4897 = vpop.permute.xlu0 %4896
  %4898 = vrot.lane.b32.xlu0 %v4890, 17
  %v4899 = vpop.permute.xlu0 %4898
  %v4900 = vsel %vm94, %v4895, %v4897
  %v4901 = vsel %vm94, %v4897, %v4899
  %v4904 = vsel %vm83, %v4900, 0.0
  %v4905 = vsel %vm84, %v4901, 0.0
  %v4906 = vld [vmem:[%s3] sm:$0xf]
  %v4908 = vsel %vm102, %v4906, 0
  %v4911 = vsel %vm106, %v4904, 0
  %v4914 = vsel %vm106, %v4905, 0
  %4916 = vmatprep.subr.mxu0 %v4914
  %4917 = vmatpush1.msra.mxu0 %v4911
  %4918 = vmatprep.subr.mxu0 0.0
  %4919 = vmatpush1.msra.mxu0 0.0
  %4920 = vmatprep.subr.mxu0 0.0
  %4921 = vmatpush1.msra.mxu0 0.0
  %4922 = vmatprep.subr.mxu0 0.0
  %4923 = vmatpush1.msra.mxu0 0.0
  %4924 = vmatprep.subr.mxu0 0.0
  %4925 = vmatpush1.msra.mxu0 0.0
  %4926 = vmatprep.subr.mxu0 0.0
  %4927 = vmatpush1.msra.mxu0 0.0
  %4928 = vmatprep.subr.mxu0 0.0
  %4929 = vmatpush1.msra.mxu0 0.0
  %4930 = vmatprep.subr.mxu0 0.0
  %4931 = vmatpush1.msra.mxu0 0.0
  %4932 = vmatprep.subr.mxu0 0.0
  %4933 = vmatpush1.msra.mxu0 0.0
  %4934 = vmatprep.subr.mxu0 0.0
  %4935 = vmatpush1.msra.mxu0 0.0
  %4936 = vmatprep.subr.mxu0 0.0
  %4937 = vmatpush1.msra.mxu0 0.0
  %4938 = vmatprep.subr.mxu0 0.0
  %4939 = vmatpush1.msra.mxu0 0.0
  %4940 = vmatprep.subr.mxu0 0.0
  %4941 = vmatpush1.msra.mxu0 0.0
  %4942 = vmatprep.subr.mxu0 0.0
  %4943 = vmatpush1.msra.mxu0 0.0
  %4944 = vmatprep.subr.mxu0 0.0
  %4945 = vmatpush1.msra.mxu0 0.0
  %4946 = vmatprep.subr.mxu0 0.0
  %4947 = vmatpush1.msra.mxu0 0.0
  %4948 = vmatprep.subr.mxu0 0.0
  %4949 = vmatpush1.msra.mxu0 0.0
  %4950 = vmatprep.subr.mxu0 0.0
  %4951 = vmatpush1.msra.mxu0 0.0
  %4952 = vmatprep.subr.mxu0 0.0
  %4953 = vmatpush1.msra.mxu0 0.0
  %4954 = vmatprep.subr.mxu0 0.0
  %4955 = vmatpush1.msra.mxu0 0.0
  %4956 = vmatprep.subr.mxu0 0.0
  %4957 = vmatpush1.msra.mxu0 0.0
  %4958 = vmatprep.subr.mxu0 0.0
  %4959 = vmatpush1.msra.mxu0 0.0
  %4960 = vmatprep.subr.mxu0 0.0
  %4961 = vmatpush1.msra.mxu0 0.0
  %4962 = vmatprep.subr.mxu0 0.0
  %4963 = vmatpush1.msra.mxu0 0.0
  %4964 = vmatprep.subr.mxu0 0.0
  %4965 = vmatpush1.msra.mxu0 0.0
  %4966 = vmatprep.subr.mxu0 0.0
  %4967 = vmatpush1.msra.mxu0 0.0
  %4968 = vmatprep.subr.mxu0 0.0
  %4969 = vmatpush1.msra.mxu0 0.0
  %4970 = vmatprep.subr.mxu0 0.0
  %4971 = vmatpush1.msra.mxu0 0.0
  %4972 = vmatprep.subr.mxu0 0.0
  %4973 = vmatpush1.msra.mxu0 0.0
  %4974 = vmatprep.subr.mxu0 0.0
  %4975 = vmatpush1.msra.mxu0 0.0
  %4976 = vmatprep.subr.mxu0 0.0
  %4977 = vmatpush1.msra.mxu0 0.0
  %4978 = vmatprep.subr.mxu0 0.0
  %4979 = vmatpush1.msra.mxu0 0.0
  %4980 = vmatprep.mubr.f32.mxu0 0.0
  %4981 = vmatmul.mubr.f32.gmra.mrb[0].mxu0 %v4908
  %v4982 = vpop.f32.mrb[0].mxu0
  %v4983 = vadd.f32 0.0, %v4982
  %v4984 = vpop.f32.mrb[0].mxu0
  %v4985 = vadd.f32 0.0, %v4984
  %4986 = vdwg.mxu0
  %v4987 = vadd.f32 %v4881, %v4983
  %v4988 = vadd.f32 %v4881, %v4985
  %v4989 = vld [vmem:[%s4] sm:$0xf]
  %v4991 = vsel %vm102, %v4989, 0
  %4993 = vmatprep.subr.mxu0 %v4914
  %4994 = vmatpush1.msra.mxu0 %v4911
  %4995 = vmatprep.subr.mxu0 0.0
  %4996 = vmatpush1.msra.mxu0 0.0
  %4997 = vmatprep.subr.mxu0 0.0
  %4998 = vmatpush1.msra.mxu0 0.0
  %4999 = vmatprep.subr.mxu0 0.0
  %5000 = vmatpush1.msra.mxu0 0.0
  %5001 = vmatprep.subr.mxu0 0.0
  %5002 = vmatpush1.msra.mxu0 0.0
  %5003 = vmatprep.subr.mxu0 0.0
  %5004 = vmatpush1.msra.mxu0 0.0
  %5005 = vmatprep.subr.mxu0 0.0
  %5006 = vmatpush1.msra.mxu0 0.0
  %5007 = vmatprep.subr.mxu0 0.0
  %5008 = vmatpush1.msra.mxu0 0.0
  %5009 = vmatprep.subr.mxu0 0.0
  %5010 = vmatpush1.msra.mxu0 0.0
  %5011 = vmatprep.subr.mxu0 0.0
  %5012 = vmatpush1.msra.mxu0 0.0
  %5013 = vmatprep.subr.mxu0 0.0
  %5014 = vmatpush1.msra.mxu0 0.0
  %5015 = vmatprep.subr.mxu0 0.0
  %5016 = vmatpush1.msra.mxu0 0.0
  %5017 = vmatprep.subr.mxu0 0.0
  %5018 = vmatpush1.msra.mxu0 0.0
  %5019 = vmatprep.subr.mxu0 0.0
  %5020 = vmatpush1.msra.mxu0 0.0
  %5021 = vmatprep.subr.mxu0 0.0
  %5022 = vmatpush1.msra.mxu0 0.0
  %5023 = vmatprep.subr.mxu0 0.0
  %5024 = vmatpush1.msra.mxu0 0.0
  %5025 = vmatprep.subr.mxu0 0.0
  %5026 = vmatpush1.msra.mxu0 0.0
  %5027 = vmatprep.subr.mxu0 0.0
  %5028 = vmatpush1.msra.mxu0 0.0
  %5029 = vmatprep.subr.mxu0 0.0
  %5030 = vmatpush1.msra.mxu0 0.0
  %5031 = vmatprep.subr.mxu0 0.0
  %5032 = vmatpush1.msra.mxu0 0.0
  %5033 = vmatprep.subr.mxu0 0.0
  %5034 = vmatpush1.msra.mxu0 0.0
  %5035 = vmatprep.subr.mxu0 0.0
  %5036 = vmatpush1.msra.mxu0 0.0
  %5037 = vmatprep.subr.mxu0 0.0
  %5038 = vmatpush1.msra.mxu0 0.0
  %5039 = vmatprep.subr.mxu0 0.0
  %5040 = vmatpush1.msra.mxu0 0.0
  %5041 = vmatprep.subr.mxu0 0.0
  %5042 = vmatpush1.msra.mxu0 0.0
  %5043 = vmatprep.subr.mxu0 0.0
  %5044 = vmatpush1.msra.mxu0 0.0
  %5045 = vmatprep.subr.mxu0 0.0
  %5046 = vmatpush1.msra.mxu0 0.0
  %5047 = vmatprep.subr.mxu0 0.0
  %5048 = vmatpush1.msra.mxu0 0.0
  %5049 = vmatprep.subr.mxu0 0.0
  %5050 = vmatpush1.msra.mxu0 0.0
  %5051 = vmatprep.subr.mxu0 0.0
  %5052 = vmatpush1.msra.mxu0 0.0
  %5053 = vmatprep.subr.mxu0 0.0
  %5054 = vmatpush1.msra.mxu0 0.0
  %5055 = vmatprep.subr.mxu0 0.0
  %5056 = vmatpush1.msra.mxu0 0.0
  %5057 = vmatprep.mubr.f32.mxu0 0.0
  %5058 = vmatmul.mubr.f32.gmra.mrb[0].mxu0 %v4991
  %v5059 = vpop.f32.mrb[0].mxu0
  %v5060 = vadd.f32 0.0, %v5059
  %v5061 = vpop.f32.mrb[0].mxu0
  %v5062 = vadd.f32 0.0, %v5061
  %5063 = vdwg.mxu0
  %v5064 = vadd.f32 %v4887, %v5060
  %v5065 = vadd.f32 %v4887, %v5062
  %v5066 = vld [vmem:[#allocation2] sm:$0xff]
  %v5067 = vld [vmem:[#allocation2 + $0x8] sm:$0xf]
  %v5068 = vld [vmem:[%s1876] sm:$0xf]
  %v5071 = vcombine.high %v5066, %v5066
  %5072 = vrot.lane.b32.xlu0 %v5066, 16
  %v5073 = vpop.permute.xlu0 %5072
  %5074 = vrot.lane.b32.xlu0 %v5071, 16
  %v5075 = vpop.permute.xlu0 %5074
  %5076 = vrot.lane.b32.xlu0 %v5067, 16
  %v5077 = vpop.permute.xlu0 %5076
  %v5078 = vsel %vm276, %v5073, %v5075
  %v5079 = vsel %vm276, %v5075, %v5077
  %v5081 = vsel %vm102, %v5068, 0
  %v5083 = vsel %vm106, %v5078, 0
  %v5085 = vsel %vm106, %v5079, 0
  %5087 = vmatprep.subr.mxu0 %v5085
  %5088 = vmatpush1.msra.mxu0 %v5083
  %5089 = vmatprep.subr.mxu0 0.0
  %5090 = vmatpush1.msra.mxu0 0.0
  %5091 = vmatprep.subr.mxu0 0.0
  %5092 = vmatpush1.msra.mxu0 0.0
  %5093 = vmatprep.subr.mxu0 0.0
  %5094 = vmatpush1.msra.mxu0 0.0
  %5095 = vmatprep.subr.mxu0 0.0
  %5096 = vmatpush1.msra.mxu0 0.0
  %5097 = vmatprep.subr.mxu0 0.0
  %5098 = vmatpush1.msra.mxu0 0.0
  %5099 = vmatprep.subr.mxu0 0.0
  %5100 = vmatpush1.msra.mxu0 0.0
  %5101 = vmatprep.subr.mxu0 0.0
  %5102 = vmatpush1.msra.mxu0 0.0
  %5103 = vmatprep.subr.mxu0 0.0
  %5104 = vmatpush1.msra.mxu0 0.0
  %5105 = vmatprep.subr.mxu0 0.0
  %5106 = vmatpush1.msra.mxu0 0.0
  %5107 = vmatprep.subr.mxu0 0.0
  %5108 = vmatpush1.msra.mxu0 0.0
  %5109 = vmatprep.subr.mxu0 0.0
  %5110 = vmatpush1.msra.mxu0 0.0
  %5111 = vmatprep.subr.mxu0 0.0
  %5112 = vmatpush1.msra.mxu0 0.0
  %5113 = vmatprep.subr.mxu0 0.0
  %5114 = vmatpush1.msra.mxu0 0.0
  %5115 = vmatprep.subr.mxu0 0.0
  %5116 = vmatpush1.msra.mxu0 0.0
  %5117 = vmatprep.subr.mxu0 0.0
  %5118 = vmatpush1.msra.mxu0 0.0
  %5119 = vmatprep.subr.mxu0 0.0
  %5120 = vmatpush1.msra.mxu0 0.0
  %5121 = vmatprep.subr.mxu0 0.0
  %5122 = vmatpush1.msra.mxu0 0.0
  %5123 = vmatprep.subr.mxu0 0.0
  %5124 = vmatpush1.msra.mxu0 0.0
  %5125 = vmatprep.subr.mxu0 0.0
  %5126 = vmatpush1.msra.mxu0 0.0
  %5127 = vmatprep.subr.mxu0 0.0
  %5128 = vmatpush1.msra.mxu0 0.0
  %5129 = vmatprep.subr.mxu0 0.0
  %5130 = vmatpush1.msra.mxu0 0.0
  %5131 = vmatprep.subr.mxu0 0.0
  %5132 = vmatpush1.msra.mxu0 0.0
  %5133 = vmatprep.subr.mxu0 0.0
  %5134 = vmatpush1.msra.mxu0 0.0
  %5135 = vmatprep.subr.mxu0 0.0
  %5136 = vmatpush1.msra.mxu0 0.0
  %5137 = vmatprep.subr.mxu0 0.0
  %5138 = vmatpush1.msra.mxu0 0.0
  %5139 = vmatprep.subr.mxu0 0.0
  %5140 = vmatpush1.msra.mxu0 0.0
  %5141 = vmatprep.subr.mxu0 0.0
  %5142 = vmatpush1.msra.mxu0 0.0
  %5143 = vmatprep.subr.mxu0 0.0
  %5144 = vmatpush1.msra.mxu0 0.0
  %5145 = vmatprep.subr.mxu0 0.0
  %5146 = vmatpush1.msra.mxu0 0.0
  %5147 = vmatprep.subr.mxu0 0.0
  %5148 = vmatpush1.msra.mxu0 0.0
  %5149 = vmatprep.subr.mxu0 0.0
  %5150 = vmatpush1.msra.mxu0 0.0
  %5151 = vmatprep.mubr.f32.mxu0 0.0
  %5152 = vmatmul.mubr.f32.gmra.mrb[0].mxu0 %v5081
  %v5153 = vpop.f32.mrb[0].mxu0
  %v5154 = vadd.f32 0.0, %v5153
  %v5155 = vpop.f32.mrb[0].mxu0
  %v5156 = vadd.f32 0.0, %v5155
  %5157 = vdwg.mxu0
  %v5158 = vadd.f32 %v4987, %v5154
  %v5159 = vadd.f32 %v4988, %v5156
  %v5160 = vld [vmem:[%s1969] sm:$0xf]
  %v5162 = vsel %vm102, %v5160, 0
  %5164 = vmatprep.subr.mxu0 %v5085
  %5165 = vmatpush1.msra.mxu0 %v5083
  %5166 = vmatprep.subr.mxu0 0.0
  %5167 = vmatpush1.msra.mxu0 0.0
  %5168 = vmatprep.subr.mxu0 0.0
  %5169 = vmatpush1.msra.mxu0 0.0
  %5170 = vmatprep.subr.mxu0 0.0
  %5171 = vmatpush1.msra.mxu0 0.0
  %5172 = vmatprep.subr.mxu0 0.0
  %5173 = vmatpush1.msra.mxu0 0.0
  %5174 = vmatprep.subr.mxu0 0.0
  %5175 = vmatpush1.msra.mxu0 0.0
  %5176 = vmatprep.subr.mxu0 0.0
  %5177 = vmatpush1.msra.mxu0 0.0
  %5178 = vmatprep.subr.mxu0 0.0
  %5179 = vmatpush1.msra.mxu0 0.0
  %5180 = vmatprep.subr.mxu0 0.0
  %5181 = vmatpush1.msra.mxu0 0.0
  %5182 = vmatprep.subr.mxu0 0.0
  %5183 = vmatpush1.msra.mxu0 0.0
  %5184 = vmatprep.subr.mxu0 0.0
  %5185 = vmatpush1.msra.mxu0 0.0
  %5186 = vmatprep.subr.mxu0 0.0
  %5187 = vmatpush1.msra.mxu0 0.0
  %5188 = vmatprep.subr.mxu0 0.0
  %5189 = vmatpush1.msra.mxu0 0.0
  %5190 = vmatprep.subr.mxu0 0.0
  %5191 = vmatpush1.msra.mxu0 0.0
  %5192 = vmatprep.subr.mxu0 0.0
  %5193 = vmatpush1.msra.mxu0 0.0
  %5194 = vmatprep.subr.mxu0 0.0
  %5195 = vmatpush1.msra.mxu0 0.0
  %5196 = vmatprep.subr.mxu0 0.0
  %5197 = vmatpush1.msra.mxu0 0.0
  %5198 = vmatprep.subr.mxu0 0.0
  %5199 = vmatpush1.msra.mxu0 0.0
  %5200 = vmatprep.subr.mxu0 0.0
  %5201 = vmatpush1.msra.mxu0 0.0
  %5202 = vmatprep.subr.mxu0 0.0
  %5203 = vmatpush1.msra.mxu0 0.0
  %5204 = vmatprep.subr.mxu0 0.0
  %5205 = vmatpush1.msra.mxu0 0.0
  %5206 = vmatprep.subr.mxu0 0.0
  %5207 = vmatpush1.msra.mxu0 0.0
  %5208 = vmatprep.subr.mxu0 0.0
  %5209 = vmatpush1.msra.mxu0 0.0
  %5210 = vmatprep.subr.mxu0 0.0
  %5211 = vmatpush1.msra.mxu0 0.0
  %5212 = vmatprep.subr.mxu0 0.0
  %5213 = vmatpush1.msra.mxu0 0.0
  %5214 = vmatprep.subr.mxu0 0.0
  %5215 = vmatpush1.msra.mxu0 0.0
  %5216 = vmatprep.subr.mxu0 0.0
  %5217 = vmatpush1.msra.mxu0 0.0
  %5218 = vmatprep.subr.mxu0 0.0
  %5219 = vmatpush1.msra.mxu0 0.0
  %5220 = vmatprep.subr.mxu0 0.0
  %5221 = vmatpush1.msra.mxu0 0.0
  %5222 = vmatprep.subr.mxu0 0.0
  %5223 = vmatpush1.msra.mxu0 0.0
  %5224 = vmatprep.subr.mxu0 0.0
  %5225 = vmatpush1.msra.mxu0 0.0
  %5226 = vmatprep.subr.mxu0 0.0
  %5227 = vmatpush1.msra.mxu0 0.0
  %5228 = vmatprep.mubr.f32.mxu0 0.0
  %5229 = vmatmul.mubr.f32.gmra.mrb[0].mxu0 %v5162
  %v5230 = vpop.f32.mrb[0].mxu0
  %v5231 = vadd.f32 0.0, %v5230
  %v5232 = vpop.f32.mrb[0].mxu0
  %v5233 = vadd.f32 0.0, %v5232
  %5234 = vdwg.mxu0
  %v5235 = vadd.f32 %v5064, %v5231
  %v5236 = vadd.f32 %v5065, %v5233
  %v5237 = vld [vmem:[#allocation2] sm:$0xff]
  %v5238 = vld [vmem:[#allocation2 + $0x8] sm:$0xf]
  %v5241 = vcombine.high %v5237, %v5237
  %5242 = vrot.lane.b32.xlu0 %v5237, 15
  %v5243 = vpop.permute.xlu0 %5242
  %5244 = vrot.lane.b32.xlu0 %v5241, 15
  %v5245 = vpop.permute.xlu0 %5244
  %5246 = vrot.lane.b32.xlu0 %v5238, 15
  %v5247 = vpop.permute.xlu0 %5246
  %v5248 = vsel %vm452, %v5243, %v5245
  %v5249 = vsel %vm452, %v5245, %v5247
  %v5252 = vsel %vm441, %v5248, 0.0
  %v5253 = vsel %vm442, %v5249, 0.0
  %v5254 = vld [vmem:[%s2064] sm:$0xf]
  %v5256 = vsel %vm102, %v5254, 0
  %v5259 = vsel %vm106, %v5252, 0
  %v5262 = vsel %vm106, %v5253, 0
  %5264 = vmatprep.subr.mxu0 %v5262
  %5265 = vmatpush1.msra.mxu0 %v5259
  %5266 = vmatprep.subr.mxu0 0.0
  %5267 = vmatpush1.msra.mxu0 0.0
  %5268 = vmatprep.subr.mxu0 0.0
  %5269 = vmatpush1.msra.mxu0 0.0
  %5270 = vmatprep.subr.mxu0 0.0
  %5271 = vmatpush1.msra.mxu0 0.0
  %5272 = vmatprep.subr.mxu0 0.0
  %5273 = vmatpush1.msra.mxu0 0.0
  %5274 = vmatprep.subr.mxu0 0.0
  %5275 = vmatpush1.msra.mxu0 0.0
  %5276 = vmatprep.subr.mxu0 0.0
  %5277 = vmatpush1.msra.mxu0 0.0
  %5278 = vmatprep.subr.mxu0 0.0
  %5279 = vmatpush1.msra.mxu0 0.0
  %5280 = vmatprep.subr.mxu0 0.0
  %5281 = vmatpush1.msra.mxu0 0.0
  %5282 = vmatprep.subr.mxu0 0.0
  %5283 = vmatpush1.msra.mxu0 0.0
  %5284 = vmatprep.subr.mxu0 0.0
  %5285 = vmatpush1.msra.mxu0 0.0
  %5286 = vmatprep.subr.mxu0 0.0
  %5287 = vmatpush1.msra.mxu0 0.0
  %5288 = vmatprep.subr.mxu0 0.0
  %5289 = vmatpush1.msra.mxu0 0.0
  %5290 = vmatprep.subr.mxu0 0.0
  %5291 = vmatpush1.msra.mxu0 0.0
  %5292 = vmatprep.subr.mxu0 0.0
  %5293 = vmatpush1.msra.mxu0 0.0
  %5294 = vmatprep.subr.mxu0 0.0
  %5295 = vmatpush1.msra.mxu0 0.0
  %5296 = vmatprep.subr.mxu0 0.0
  %5297 = vmatpush1.msra.mxu0 0.0
  %5298 = vmatprep.subr.mxu0 0.0
  %5299 = vmatpush1.msra.mxu0 0.0
  %5300 = vmatprep.subr.mxu0 0.0
  %5301 = vmatpush1.msra.mxu0 0.0
  %5302 = vmatprep.subr.mxu0 0.0
  %5303 = vmatpush1.msra.mxu0 0.0
  %5304 = vmatprep.subr.mxu0 0.0
  %5305 = vmatpush1.msra.mxu0 0.0
  %5306 = vmatprep.subr.mxu0 0.0
  %5307 = vmatpush1.msra.mxu0 0.0
  %5308 = vmatprep.subr.mxu0 0.0
  %5309 = vmatpush1.msra.mxu0 0.0
  %5310 = vmatprep.subr.mxu0 0.0
  %5311 = vmatpush1.msra.mxu0 0.0
  %5312 = vmatprep.subr.mxu0 0.0
  %5313 = vmatpush1.msra.mxu0 0.0
  %5314 = vmatprep.subr.mxu0 0.0
  %5315 = vmatpush1.msra.mxu0 0.0
  %5316 = vmatprep.subr.mxu0 0.0
  %5317 = vmatpush1.msra.mxu0 0.0
  %5318 = vmatprep.subr.mxu0 0.0
  %5319 = vmatpush1.msra.mxu0 0.0
  %5320 = vmatprep.subr.mxu0 0.0
  %5321 = vmatpush1.msra.mxu0 0.0
  %5322 = vmatprep.subr.mxu0 0.0
  %5323 = vmatpush1.msra.mxu0 0.0
  %5324 = vmatprep.subr.mxu0 0.0
  %5325 = vmatpush1.msra.mxu0 0.0
  %5326 = vmatprep.subr.mxu0 0.0
  %5327 = vmatpush1.msra.mxu0 0.0
  %5328 = vmatprep.mubr.f32.mxu0 0.0
  %5329 = vmatmul.mubr.f32.gmra.mrb[0].mxu0 %v5256
  %v5330 = vpop.f32.mrb[0].mxu0
  %v5331 = vadd.f32 0.0, %v5330
  %v5332 = vpop.f32.mrb[0].mxu0
  %v5333 = vadd.f32 0.0, %v5332
  %5334 = vdwg.mxu0
  %v5335 = vadd.f32 %v5158, %v5331
  %v5336 = vadd.f32 %v5159, %v5333
  %v5337 = vld [vmem:[%s2148] sm:$0xf]
  %v5339 = vsel %vm102, %v5337, 0
  %5341 = vmatprep.subr.mxu0 %v5262
  %5342 = vmatpush1.msra.mxu0 %v5259
  %5343 = vmatprep.subr.mxu0 0.0
  %5344 = vmatpush1.msra.mxu0 0.0
  %5345 = vmatprep.subr.mxu0 0.0
  %5346 = vmatpush1.msra.mxu0 0.0
  %5347 = vmatprep.subr.mxu0 0.0
  %5348 = vmatpush1.msra.mxu0 0.0
  %5349 = vmatprep.subr.mxu0 0.0
  %5350 = vmatpush1.msra.mxu0 0.0
  %5351 = vmatprep.subr.mxu0 0.0
  %5352 = vmatpush1.msra.mxu0 0.0
  %5353 = vmatprep.subr.mxu0 0.0
  %5354 = vmatpush1.msra.mxu0 0.0
  %5355 = vmatprep.subr.mxu0 0.0
  %5356 = vmatpush1.msra.mxu0 0.0
  %5357 = vmatprep.subr.mxu0 0.0
  %5358 = vmatpush1.msra.mxu0 0.0
  %5359 = vmatprep.subr.mxu0 0.0
  %5360 = vmatpush1.msra.mxu0 0.0
  %5361 = vmatprep.subr.mxu0 0.0
  %5362 = vmatpush1.msra.mxu0 0.0
  %5363 = vmatprep.subr.mxu0 0.0
  %5364 = vmatpush1.msra.mxu0 0.0
  %5365 = vmatprep.subr.mxu0 0.0
  %5366 = vmatpush1.msra.mxu0 0.0
  %5367 = vmatprep.subr.mxu0 0.0
  %5368 = vmatpush1.msra.mxu0 0.0
  %5369 = vmatprep.subr.mxu0 0.0
  %5370 = vmatpush1.msra.mxu0 0.0
  %5371 = vmatprep.subr.mxu0 0.0
  %5372 = vmatpush1.msra.mxu0 0.0
  %5373 = vmatprep.subr.mxu0 0.0
  %5374 = vmatpush1.msra.mxu0 0.0
  %5375 = vmatprep.subr.mxu0 0.0
  %5376 = vmatpush1.msra.mxu0 0.0
  %5377 = vmatprep.subr.mxu0 0.0
  %5378 = vmatpush1.msra.mxu0 0.0
  %5379 = vmatprep.subr.mxu0 0.0
  %5380 = vmatpush1.msra.mxu0 0.0
  %5381 = vmatprep.subr.mxu0 0.0
  %5382 = vmatpush1.msra.mxu0 0.0
  %5383 = vmatprep.subr.mxu0 0.0
  %5384 = vmatpush1.msra.mxu0 0.0
  %5385 = vmatprep.subr.mxu0 0.0
  %5386 = vmatpush1.msra.mxu0 0.0
  %5387 = vmatprep.subr.mxu0 0.0
  %5388 = vmatpush1.msra.mxu0 0.0
  %5389 = vmatprep.subr.mxu0 0.0
  %5390 = vmatpush1.msra.mxu0 0.0
  %5391 = vmatprep.subr.mxu0 0.0
  %5392 = vmatpush1.msra.mxu0 0.0
  %5393 = vmatprep.subr.mxu0 0.0
  %5394 = vmatpush1.msra.mxu0 0.0
  %5395 = vmatprep.subr.mxu0 0.0
  %5396 = vmatpush1.msra.mxu0 0.0
  %5397 = vmatprep.subr.mxu0 0.0
  %5398 = vmatpush1.msra.mxu0 0.0
  %5399 = vmatprep.subr.mxu0 0.0
  %5400 = vmatpush1.msra.mxu0 0.0
  %5401 = vmatprep.subr.mxu0 0.0
  %5402 = vmatpush1.msra.mxu0 0.0
  %5403 = vmatprep.subr.mxu0 0.0
  %5404 = vmatpush1.msra.mxu0 0.0
  %5405 = vmatprep.mubr.f32.mxu0 0.0
  %5406 = vmatmul.mubr.f32.gmra.mrb[0].mxu0 %v5339
  %v5407 = vpop.f32.mrb[0].mxu0
  %v5408 = vadd.f32 0.0, %v5407
  %v5409 = vpop.f32.mrb[0].mxu0
  %v5410 = vadd.f32 0.0, %v5409
  %5411 = vdwg.mxu0
  %v5412 = vadd.f32 %v5235, %v5408
  %v5413 = vadd.f32 %v5236, %v5410
  %v5414 = vld [vmem:[#allocation2] sm:$0xff]
  %v5415 = vld [vmem:[#allocation2 + $0x8] sm:$0xf]
  %v5418 = vcombine.high %v5414, %v5414
  %5419 = vrot.lane.b32.xlu0 %v5414, 1
  %v5420 = vpop.permute.xlu0 %5419
  %5421 = vrot.lane.b32.xlu0 %v5418, 1
  %v5422 = vpop.permute.xlu0 %5421
  %5423 = vrot.lane.b32.xlu0 %v5415, 1
  %v5424 = vpop.permute.xlu0 %5423
  %v5425 = vsel %vm632, %v5420, %v5422
  %v5426 = vsel %vm632, %v5422, %v5424
  %v5429 = vsel %vm83, %v5425, 0.0
  %v5430 = vsel %vm84, %v5426, 0.0
  %v5431 = vld [vmem:[%s2243] sm:$0xf]
  %v5433 = vsel %vm102, %v5431, 0
  %v5436 = vsel %vm106, %v5429, 0
  %v5439 = vsel %vm106, %v5430, 0
  %5441 = vmatprep.subr.mxu0 %v5439
  %5442 = vmatpush1.msra.mxu0 %v5436
  %5443 = vmatprep.subr.mxu0 0.0
  %5444 = vmatpush1.msra.mxu0 0.0
  %5445 = vmatprep.subr.mxu0 0.0
  %5446 = vmatpush1.msra.mxu0 0.0
  %5447 = vmatprep.subr.mxu0 0.0
  %5448 = vmatpush1.msra.mxu0 0.0
  %5449 = vmatprep.subr.mxu0 0.0
  %5450 = vmatpush1.msra.mxu0 0.0
  %5451 = vmatprep.subr.mxu0 0.0
  %5452 = vmatpush1.msra.mxu0 0.0
  %5453 = vmatprep.subr.mxu0 0.0
  %5454 = vmatpush1.msra.mxu0 0.0
  %5455 = vmatprep.subr.mxu0 0.0
  %5456 = vmatpush1.msra.mxu0 0.0
  %5457 = vmatprep.subr.mxu0 0.0
  %5458 = vmatpush1.msra.mxu0 0.0
  %5459 = vmatprep.subr.mxu0 0.0
  %5460 = vmatpush1.msra.mxu0 0.0
  %5461 = vmatprep.subr.mxu0 0.0
  %5462 = vmatpush1.msra.mxu0 0.0
  %5463 = vmatprep.subr.mxu0 0.0
  %5464 = vmatpush1.msra.mxu0 0.0
  %5465 = vmatprep.subr.mxu0 0.0
  %5466 = vmatpush1.msra.mxu0 0.0
  %5467 = vmatprep.subr.mxu0 0.0
  %5468 = vmatpush1.msra.mxu0 0.0
  %5469 = vmatprep.subr.mxu0 0.0
  %5470 = vmatpush1.msra.mxu0 0.0
  %5471 = vmatprep.subr.mxu0 0.0
  %5472 = vmatpush1.msra.mxu0 0.0
  %5473 = vmatprep.subr.mxu0 0.0
  %5474 = vmatpush1.msra.mxu0 0.0
  %5475 = vmatprep.subr.mxu0 0.0
  %5476 = vmatpush1.msra.mxu0 0.0
  %5477 = vmatprep.subr.mxu0 0.0
  %5478 = vmatpush1.msra.mxu0 0.0
  %5479 = vmatprep.subr.mxu0 0.0
  %5480 = vmatpush1.msra.mxu0 0.0
  %5481 = vmatprep.subr.mxu0 0.0
  %5482 = vmatpush1.msra.mxu0 0.0
  %5483 = vmatprep.subr.mxu0 0.0
  %5484 = vmatpush1.msra.mxu0 0.0
  %5485 = vmatprep.subr.mxu0 0.0
  %5486 = vmatpush1.msra.mxu0 0.0
  %5487 = vmatprep.subr.mxu0 0.0
  %5488 = vmatpush1.msra.mxu0 0.0
  %5489 = vmatprep.subr.mxu0 0.0
  %5490 = vmatpush1.msra.mxu0 0.0
  %5491 = vmatprep.subr.mxu0 0.0
  %5492 = vmatpush1.msra.mxu0 0.0
  %5493 = vmatprep.subr.mxu0 0.0
  %5494 = vmatpush1.msra.mxu0 0.0
  %5495 = vmatprep.subr.mxu0 0.0
  %5496 = vmatpush1.msra.mxu0 0.0
  %5497 = vmatprep.subr.mxu0 0.0
  %5498 = vmatpush1.msra.mxu0 0.0
  %5499 = vmatprep.subr.mxu0 0.0
  %5500 = vmatpush1.msra.mxu0 0.0
  %5501 = vmatprep.subr.mxu0 0.0
  %5502 = vmatpush1.msra.mxu0 0.0
  %5503 = vmatprep.subr.mxu0 0.0
  %5504 = vmatpush1.msra.mxu0 0.0
  %5505 = vmatprep.mubr.f32.mxu0 0.0
  %5506 = vmatmul.mubr.f32.gmra.mrb[0].mxu0 %v5433
  %v5507 = vpop.f32.mrb[0].mxu0
  %v5508 = vadd.f32 0.0, %v5507
  %v5509 = vpop.f32.mrb[0].mxu0
  %v5510 = vadd.f32 0.0, %v5509
  %5511 = vdwg.mxu0
  %v5512 = vadd.f32 %v5335, %v5508
  %v5513 = vadd.f32 %v5336, %v5510
  %v5514 = vld [vmem:[%s2327] sm:$0xf]
  %v5516 = vsel %vm102, %v5514, 0
  %5518 = vmatprep.subr.mxu0 %v5439
  %5519 = vmatpush1.msra.mxu0 %v5436
  %5520 = vmatprep.subr.mxu0 0.0
  %5521 = vmatpush1.msra.mxu0 0.0
  %5522 = vmatprep.subr.mxu0 0.0
  %5523 = vmatpush1.msra.mxu0 0.0
  %5524 = vmatprep.subr.mxu0 0.0
  %5525 = vmatpush1.msra.mxu0 0.0
  %5526 = vmatprep.subr.mxu0 0.0
  %5527 = vmatpush1.msra.mxu0 0.0
  %5528 = vmatprep.subr.mxu0 0.0
  %5529 = vmatpush1.msra.mxu0 0.0
  %5530 = vmatprep.subr.mxu0 0.0
  %5531 = vmatpush1.msra.mxu0 0.0
  %5532 = vmatprep.subr.mxu0 0.0
  %5533 = vmatpush1.msra.mxu0 0.0
  %5534 = vmatprep.subr.mxu0 0.0
  %5535 = vmatpush1.msra.mxu0 0.0
  %5536 = vmatprep.subr.mxu0 0.0
  %5537 = vmatpush1.msra.mxu0 0.0
  %5538 = vmatprep.subr.mxu0 0.0
  %5539 = vmatpush1.msra.mxu0 0.0
  %5540 = vmatprep.subr.mxu0 0.0
  %5541 = vmatpush1.msra.mxu0 0.0
  %5542 = vmatprep.subr.mxu0 0.0
  %5543 = vmatpush1.msra.mxu0 0.0
  %5544 = vmatprep.subr.mxu0 0.0
  %5545 = vmatpush1.msra.mxu0 0.0
  %5546 = vmatprep.subr.mxu0 0.0
  %5547 = vmatpush1.msra.mxu0 0.0
  %5548 = vmatprep.subr.mxu0 0.0
  %5549 = vmatpush1.msra.mxu0 0.0
  %5550 = vmatprep.subr.mxu0 0.0
  %5551 = vmatpush1.msra.mxu0 0.0
  %5552 = vmatprep.subr.mxu0 0.0
  %5553 = vmatpush1.msra.mxu0 0.0
  %5554 = vmatprep.subr.mxu0 0.0
  %5555 = vmatpush1.msra.mxu0 0.0
  %5556 = vmatprep.subr.mxu0 0.0
  %5557 = vmatpush1.msra.mxu0 0.0
  %5558 = vmatprep.subr.mxu0 0.0
  %5559 = vmatpush1.msra.mxu0 0.0
  %5560 = vmatprep.subr.mxu0 0.0
  %5561 = vmatpush1.msra.mxu0 0.0
  %5562 = vmatprep.subr.mxu0 0.0
  %5563 = vmatpush1.msra.mxu0 0.0
  %5564 = vmatprep.subr.mxu0 0.0
  %5565 = vmatpush1.msra.mxu0 0.0
  %5566 = vmatprep.subr.mxu0 0.0
  %5567 = vmatpush1.msra.mxu0 0.0
  %5568 = vmatprep.subr.mxu0 0.0
  %5569 = vmatpush1.msra.mxu0 0.0
  %5570 = vmatprep.subr.mxu0 0.0
  %5571 = vmatpush1.msra.mxu0 0.0
  %5572 = vmatprep.subr.mxu0 0.0
  %5573 = vmatpush1.msra.mxu0 0.0
  %5574 = vmatprep.subr.mxu0 0.0
  %5575 = vmatpush1.msra.mxu0 0.0
  %5576 = vmatprep.subr.mxu0 0.0
  %5577 = vmatpush1.msra.mxu0 0.0
  %5578 = vmatprep.subr.mxu0 0.0
  %5579 = vmatpush1.msra.mxu0 0.0
  %5580 = vmatprep.subr.mxu0 0.0
  %5581 = vmatpush1.msra.mxu0 0.0
  %5582 = vmatprep.mubr.f32.mxu0 0.0
  %5583 = vmatmul.mubr.f32.gmra.mrb[0].mxu0 %v5516
  %v5584 = vpop.f32.mrb[0].mxu0
  %v5585 = vadd.f32 0.0, %v5584
  %v5586 = vpop.f32.mrb[0].mxu0
  %v5587 = vadd.f32 0.0, %v5586
  %5588 = vdwg.mxu0
  %v5589 = vadd.f32 %v5412, %v5585
  %v5590 = vadd.f32 %v5413, %v5587
  %v5591 = vld [vmem:[#allocation2 + $0x4] sm:$0xff]
  %v5592 = vld [vmem:[%s2406] sm:$0xf]
  %v5594 = vcombine.high %v5591, %v5591
  %v5596 = vsel %vm102, %v5592, 0
  %v5598 = vsel %vm106, %v5591, 0
  %v5600 = vsel %vm106, %v5594, 0
  %5602 = vmatprep.subr.mxu0 %v5600
  %5603 = vmatpush1.msra.mxu0 %v5598
  %5604 = vmatprep.subr.mxu0 0.0
  %5605 = vmatpush1.msra.mxu0 0.0
  %5606 = vmatprep.subr.mxu0 0.0
  %5607 = vmatpush1.msra.mxu0 0.0
  %5608 = vmatprep.subr.mxu0 0.0
  %5609 = vmatpush1.msra.mxu0 0.0
  %5610 = vmatprep.subr.mxu0 0.0
  %5611 = vmatpush1.msra.mxu0 0.0
  %5612 = vmatprep.subr.mxu0 0.0
  %5613 = vmatpush1.msra.mxu0 0.0
  %5614 = vmatprep.subr.mxu0 0.0
  %5615 = vmatpush1.msra.mxu0 0.0
  %5616 = vmatprep.subr.mxu0 0.0
  %5617 = vmatpush1.msra.mxu0 0.0
  %5618 = vmatprep.subr.mxu0 0.0
  %5619 = vmatpush1.msra.mxu0 0.0
  %5620 = vmatprep.subr.mxu0 0.0
  %5621 = vmatpush1.msra.mxu0 0.0
  %5622 = vmatprep.subr.mxu0 0.0
  %5623 = vmatpush1.msra.mxu0 0.0
  %5624 = vmatprep.subr.mxu0 0.0
  %5625 = vmatpush1.msra.mxu0 0.0
  %5626 = vmatprep.subr.mxu0 0.0
  %5627 = vmatpush1.msra.mxu0 0.0
  %5628 = vmatprep.subr.mxu0 0.0
  %5629 = vmatpush1.msra.mxu0 0.0
  %5630 = vmatprep.subr.mxu0 0.0
  %5631 = vmatpush1.msra.mxu0 0.0
  %5632 = vmatprep.subr.mxu0 0.0
  %5633 = vmatpush1.msra.mxu0 0.0
  %5634 = vmatprep.subr.mxu0 0.0
  %5635 = vmatpush1.msra.mxu0 0.0
  %5636 = vmatprep.subr.mxu0 0.0
  %5637 = vmatpush1.msra.mxu0 0.0
  %5638 = vmatprep.subr.mxu0 0.0
  %5639 = vmatpush1.msra.mxu0 0.0
  %5640 = vmatprep.subr.mxu0 0.0
  %5641 = vmatpush1.msra.mxu0 0.0
  %5642 = vmatprep.subr.mxu0 0.0
  %5643 = vmatpush1.msra.mxu0 0.0
  %5644 = vmatprep.subr.mxu0 0.0
  %5645 = vmatpush1.msra.mxu0 0.0
  %5646 = vmatprep.subr.mxu0 0.0
  %5647 = vmatpush1.msra.mxu0 0.0
  %5648 = vmatprep.subr.mxu0 0.0
  %5649 = vmatpush1.msra.mxu0 0.0
  %5650 = vmatprep.subr.mxu0 0.0
  %5651 = vmatpush1.msra.mxu0 0.0
  %5652 = vmatprep.subr.mxu0 0.0
  %5653 = vmatpush1.msra.mxu0 0.0
  %5654 = vmatprep.subr.mxu0 0.0
  %5655 = vmatpush1.msra.mxu0 0.0
  %5656 = vmatprep.subr.mxu0 0.0
  %5657 = vmatpush1.msra.mxu0 0.0
  %5658 = vmatprep.subr.mxu0 0.0
  %5659 = vmatpush1.msra.mxu0 0.0
  %5660 = vmatprep.subr.mxu0 0.0
  %5661 = vmatpush1.msra.mxu0 0.0
  %5662 = vmatprep.subr.mxu0 0.0
  %5663 = vmatpush1.msra.mxu0 0.0
  %5664 = vmatprep.subr.mxu0 0.0
  %5665 = vmatpush1.msra.mxu0 0.0
  %5666 = vmatprep.mubr.f32.mxu0 0.0
  %5667 = vmatmul.mubr.f32.gmra.mrb[0].mxu0 %v5596
  %v5668 = vpop.f32.mrb[0].mxu0
  %v5669 = vadd.f32 0.0, %v5668
  %v5670 = vpop.f32.mrb[0].mxu0
  %v5671 = vadd.f32 0.0, %v5670
  %5672 = vdwg.mxu0
  %v5673 = vadd.f32 %v5512, %v5669
  %v5674 = vadd.f32 %v5513, %v5671
  %v5675 = vld [vmem:[%s2490] sm:$0xf]
  %v5677 = vsel %vm102, %v5675, 0
  %5679 = vmatprep.subr.mxu0 %v5600
  %5680 = vmatpush1.msra.mxu0 %v5598
  %5681 = vmatprep.subr.mxu0 0.0
  %5682 = vmatpush1.msra.mxu0 0.0
  %5683 = vmatprep.subr.mxu0 0.0
  %5684 = vmatpush1.msra.mxu0 0.0
  %5685 = vmatprep.subr.mxu0 0.0
  %5686 = vmatpush1.msra.mxu0 0.0
  %5687 = vmatprep.subr.mxu0 0.0
  %5688 = vmatpush1.msra.mxu0 0.0
  %5689 = vmatprep.subr.mxu0 0.0
  %5690 = vmatpush1.msra.mxu0 0.0
  %5691 = vmatprep.subr.mxu0 0.0
  %5692 = vmatpush1.msra.mxu0 0.0
  %5693 = vmatprep.subr.mxu0 0.0
  %5694 = vmatpush1.msra.mxu0 0.0
  %5695 = vmatprep.subr.mxu0 0.0
  %5696 = vmatpush1.msra.mxu0 0.0
  %5697 = vmatprep.subr.mxu0 0.0
  %5698 = vmatpush1.msra.mxu0 0.0
  %5699 = vmatprep.subr.mxu0 0.0
  %5700 = vmatpush1.msra.mxu0 0.0
  %5701 = vmatprep.subr.mxu0 0.0
  %5702 = vmatpush1.msra.mxu0 0.0
  %5703 = vmatprep.subr.mxu0 0.0
  %5704 = vmatpush1.msra.mxu0 0.0
  %5705 = vmatprep.subr.mxu0 0.0
  %5706 = vmatpush1.msra.mxu0 0.0
  %5707 = vmatprep.subr.mxu0 0.0
  %5708 = vmatpush1.msra.mxu0 0.0
  %5709 = vmatprep.subr.mxu0 0.0
  %5710 = vmatpush1.msra.mxu0 0.0
  %5711 = vmatprep.subr.mxu0 0.0
  %5712 = vmatpush1.msra.mxu0 0.0
  %5713 = vmatprep.subr.mxu0 0.0
  %5714 = vmatpush1.msra.mxu0 0.0
  %5715 = vmatprep.subr.mxu0 0.0
  %5716 = vmatpush1.msra.mxu0 0.0
  %5717 = vmatprep.subr.mxu0 0.0
  %5718 = vmatpush1.msra.mxu0 0.0
  %5719 = vmatprep.subr.mxu0 0.0
  %5720 = vmatpush1.msra.mxu0 0.0
  %5721 = vmatprep.subr.mxu0 0.0
  %5722 = vmatpush1.msra.mxu0 0.0
  %5723 = vmatprep.subr.mxu0 0.0
  %5724 = vmatpush1.msra.mxu0 0.0
  %5725 = vmatprep.subr.mxu0 0.0
  %5726 = vmatpush1.msra.mxu0 0.0
  %5727 = vmatprep.subr.mxu0 0.0
  %5728 = vmatpush1.msra.mxu0 0.0
  %5729 = vmatprep.subr.mxu0 0.0
  %5730 = vmatpush1.msra.mxu0 0.0
  %5731 = vmatprep.subr.mxu0 0.0
  %5732 = vmatpush1.msra.mxu0 0.0
  %5733 = vmatprep.subr.mxu0 0.0
  %5734 = vmatpush1.msra.mxu0 0.0
  %5735 = vmatprep.subr.mxu0 0.0
  %5736 = vmatpush1.msra.mxu0 0.0
  %5737 = vmatprep.subr.mxu0 0.0
  %5738 = vmatpush1.msra.mxu0 0.0
  %5739 = vmatprep.subr.mxu0 0.0
  %5740 = vmatpush1.msra.mxu0 0.0
  %5741 = vmatprep.subr.mxu0 0.0
  %5742 = vmatpush1.msra.mxu0 0.0
  %5743 = vmatprep.mubr.f32.mxu0 0.0
  %5744 = vmatmul.mubr.f32.gmra.mrb[0].mxu0 %v5677
  %v5745 = vpop.f32.mrb[0].mxu0
  %v5746 = vadd.f32 0.0, %v5745
  %v5747 = vpop.f32.mrb[0].mxu0
  %v5748 = vadd.f32 0.0, %v5747
  %5749 = vdwg.mxu0
  %v5750 = vadd.f32 %v5589, %v5746
  %v5751 = vadd.f32 %v5590, %v5748
  %v5752 = vld [vmem:[#allocation2 + $0x4] sm:$0xff]
  %v5753 = vld [vmem:[#allocation2 + $0xc] sm:$0xf]
  %v5756 = vcombine.high %v5752, %v5752
  %5757 = vrot.lane.b32.xlu0 %v5752, 127
  %v5758 = vpop.permute.xlu0 %5757
  %5759 = vrot.lane.b32.xlu0 %v5756, 127
  %v5760 = vpop.permute.xlu0 %5759
  %5761 = vrot.lane.b32.xlu0 %v5753, 127
  %v5762 = vpop.permute.xlu0 %5761
  %v5763 = vsel %vm975, %v5758, %v5760
  %v5764 = vsel %vm975, %v5760, %v5762
  %v5767 = vsel %vm441, %v5763, 0.0
  %v5768 = vsel %vm442, %v5764, 0.0
  %v5769 = vld [vmem:[%s2585] sm:$0xf]
  %v5771 = vsel %vm102, %v5769, 0
  %v5774 = vsel %vm106, %v5767, 0
  %v5777 = vsel %vm106, %v5768, 0
  %5779 = vmatprep.subr.mxu0 %v5777
  %5780 = vmatpush1.msra.mxu0 %v5774
  %5781 = vmatprep.subr.mxu0 0.0
  %5782 = vmatpush1.msra.mxu0 0.0
  %5783 = vmatprep.subr.mxu0 0.0
  %5784 = vmatpush1.msra.mxu0 0.0
  %5785 = vmatprep.subr.mxu0 0.0
  %5786 = vmatpush1.msra.mxu0 0.0
  %5787 = vmatprep.subr.mxu0 0.0
  %5788 = vmatpush1.msra.mxu0 0.0
  %5789 = vmatprep.subr.mxu0 0.0
  %5790 = vmatpush1.msra.mxu0 0.0
  %5791 = vmatprep.subr.mxu0 0.0
  %5792 = vmatpush1.msra.mxu0 0.0
  %5793 = vmatprep.subr.mxu0 0.0
  %5794 = vmatpush1.msra.mxu0 0.0
  %5795 = vmatprep.subr.mxu0 0.0
  %5796 = vmatpush1.msra.mxu0 0.0
  %5797 = vmatprep.subr.mxu0 0.0
  %5798 = vmatpush1.msra.mxu0 0.0
  %5799 = vmatprep.subr.mxu0 0.0
  %5800 = vmatpush1.msra.mxu0 0.0
  %5801 = vmatprep.subr.mxu0 0.0
  %5802 = vmatpush1.msra.mxu0 0.0
  %5803 = vmatprep.subr.mxu0 0.0
  %5804 = vmatpush1.msra.mxu0 0.0
  %5805 = vmatprep.subr.mxu0 0.0
  %5806 = vmatpush1.msra.mxu0 0.0
  %5807 = vmatprep.subr.mxu0 0.0
  %5808 = vmatpush1.msra.mxu0 0.0
  %5809 = vmatprep.subr.mxu0 0.0
  %5810 = vmatpush1.msra.mxu0 0.0
  %5811 = vmatprep.subr.mxu0 0.0
  %5812 = vmatpush1.msra.mxu0 0.0
  %5813 = vmatprep.subr.mxu0 0.0
  %5814 = vmatpush1.msra.mxu0 0.0
  %5815 = vmatprep.subr.mxu0 0.0
  %5816 = vmatpush1.msra.mxu0 0.0
  %5817 = vmatprep.subr.mxu0 0.0
  %5818 = vmatpush1.msra.mxu0 0.0
  %5819 = vmatprep.subr.mxu0 0.0
  %5820 = vmatpush1.msra.mxu0 0.0
  %5821 = vmatprep.subr.mxu0 0.0
  %5822 = vmatpush1.msra.mxu0 0.0
  %5823 = vmatprep.subr.mxu0 0.0
  %5824 = vmatpush1.msra.mxu0 0.0
  %5825 = vmatprep.subr.mxu0 0.0
  %5826 = vmatpush1.msra.mxu0 0.0
  %5827 = vmatprep.subr.mxu0 0.0
  %5828 = vmatpush1.msra.mxu0 0.0
  %5829 = vmatprep.subr.mxu0 0.0
  %5830 = vmatpush1.msra.mxu0 0.0
  %5831 = vmatprep.subr.mxu0 0.0
  %5832 = vmatpush1.msra.mxu0 0.0
  %5833 = vmatprep.subr.mxu0 0.0
  %5834 = vmatpush1.msra.mxu0 0.0
  %5835 = vmatprep.subr.mxu0 0.0
  %5836 = vmatpush1.msra.mxu0 0.0
  %5837 = vmatprep.subr.mxu0 0.0
  %5838 = vmatpush1.msra.mxu0 0.0
  %5839 = vmatprep.subr.mxu0 0.0
  %5840 = vmatpush1.msra.mxu0 0.0
  %5841 = vmatprep.subr.mxu0 0.0
  %5842 = vmatpush1.msra.mxu0 0.0
  %5843 = vmatprep.mubr.f32.mxu0 0.0
  %5844 = vmatmul.mubr.f32.gmra.mrb[0].mxu0 %v5771
  %v5845 = vpop.f32.mrb[0].mxu0
  %v5846 = vadd.f32 0.0, %v5845
  %v5847 = vpop.f32.mrb[0].mxu0
  %v5848 = vadd.f32 0.0, %v5847
  %5849 = vdwg.mxu0
  %v5850 = vadd.f32 %v5673, %v5846
  %v5851 = vadd.f32 %v5674, %v5848
  %v5852 = vld [vmem:[%s2669] sm:$0xf]
  %v5854 = vsel %vm102, %v5852, 0
  %5856 = vmatprep.subr.mxu0 %v5777
  %5857 = vmatpush1.msra.mxu0 %v5774
  %5858 = vmatprep.subr.mxu0 0.0
  %5859 = vmatpush1.msra.mxu0 0.0
  %5860 = vmatprep.subr.mxu0 0.0
  %5861 = vmatpush1.msra.mxu0 0.0
  %5862 = vmatprep.subr.mxu0 0.0
  %5863 = vmatpush1.msra.mxu0 0.0
  %5864 = vmatprep.subr.mxu0 0.0
  %5865 = vmatpush1.msra.mxu0 0.0
  %5866 = vmatprep.subr.mxu0 0.0
  %5867 = vmatpush1.msra.mxu0 0.0
  %5868 = vmatprep.subr.mxu0 0.0
  %5869 = vmatpush1.msra.mxu0 0.0
  %5870 = vmatprep.subr.mxu0 0.0
  %5871 = vmatpush1.msra.mxu0 0.0
  %5872 = vmatprep.subr.mxu0 0.0
  %5873 = vmatpush1.msra.mxu0 0.0
  %5874 = vmatprep.subr.mxu0 0.0
  %5875 = vmatpush1.msra.mxu0 0.0
  %5876 = vmatprep.subr.mxu0 0.0
  %5877 = vmatpush1.msra.mxu0 0.0
  %5878 = vmatprep.subr.mxu0 0.0
  %5879 = vmatpush1.msra.mxu0 0.0
  %5880 = vmatprep.subr.mxu0 0.0
  %5881 = vmatpush1.msra.mxu0 0.0
  %5882 = vmatprep.subr.mxu0 0.0
  %5883 = vmatpush1.msra.mxu0 0.0
  %5884 = vmatprep.subr.mxu0 0.0
  %5885 = vmatpush1.msra.mxu0 0.0
  %5886 = vmatprep.subr.mxu0 0.0
  %5887 = vmatpush1.msra.mxu0 0.0
  %5888 = vmatprep.subr.mxu0 0.0
  %5889 = vmatpush1.msra.mxu0 0.0
  %5890 = vmatprep.subr.mxu0 0.0
  %5891 = vmatpush1.msra.mxu0 0.0
  %5892 = vmatprep.subr.mxu0 0.0
  %5893 = vmatpush1.msra.mxu0 0.0
  %5894 = vmatprep.subr.mxu0 0.0
  %5895 = vmatpush1.msra.mxu0 0.0
  %5896 = vmatprep.subr.mxu0 0.0
  %5897 = vmatpush1.msra.mxu0 0.0
  %5898 = vmatprep.subr.mxu0 0.0
  %5899 = vmatpush1.msra.mxu0 0.0
  %5900 = vmatprep.subr.mxu0 0.0
  %5901 = vmatpush1.msra.mxu0 0.0
  %5902 = vmatprep.subr.mxu0 0.0
  %5903 = vmatpush1.msra.mxu0 0.0
  %5904 = vmatprep.subr.mxu0 0.0
  %5905 = vmatpush1.msra.mxu0 0.0
  %5906 = vmatprep.subr.mxu0 0.0
  %5907 = vmatpush1.msra.mxu0 0.0
  %5908 = vmatprep.subr.mxu0 0.0
  %5909 = vmatpush1.msra.mxu0 0.0
  %5910 = vmatprep.subr.mxu0 0.0
  %5911 = vmatpush1.msra.mxu0 0.0
  %5912 = vmatprep.subr.mxu0 0.0
  %5913 = vmatpush1.msra.mxu0 0.0
  %5914 = vmatprep.subr.mxu0 0.0
  %5915 = vmatpush1.msra.mxu0 0.0
  %5916 = vmatprep.subr.mxu0 0.0
  %5917 = vmatpush1.msra.mxu0 0.0
  %5918 = vmatprep.subr.mxu0 0.0
  %5919 = vmatpush1.msra.mxu0 0.0
  %5920 = vmatprep.mubr.f32.mxu0 0.0
  %5921 = vmatmul.mubr.f32.gmra.mrb[0].mxu0 %v5854
  %v5922 = vpop.f32.mrb[0].mxu0
  %v5923 = vadd.f32 0.0, %v5922
  %v5924 = vpop.f32.mrb[0].mxu0
  %v5925 = vadd.f32 0.0, %v5924
  %5926 = vdwg.mxu0
  %v5927 = vadd.f32 %v5750, %v5923
  %v5928 = vadd.f32 %v5751, %v5925
  %v5929 = vld [vmem:[#allocation2 + $0x4] sm:$0xff]
  %v5930 = vld [vmem:[#allocation2 + $0xc] sm:$0xf]
  %v5933 = vcombine.high %v5929, %v5929
  %5934 = vrot.lane.b32.xlu0 %v5929, 113
  %v5935 = vpop.permute.xlu0 %5934
  %5936 = vrot.lane.b32.xlu0 %v5933, 113
  %v5937 = vpop.permute.xlu0 %5936
  %5938 = vrot.lane.b32.xlu0 %v5930, 113
  %v5939 = vpop.permute.xlu0 %5938
  %v5940 = vsel %vm1155, %v5935, %v5937
  %v5941 = vsel %vm1155, %v5937, %v5939
  %v5944 = vsel %vm83, %v5940, 0.0
  %v5945 = vsel %vm84, %v5941, 0.0
  %v5946 = vld [vmem:[%s2764] sm:$0xf]
  %v5948 = vsel %vm102, %v5946, 0
  %v5951 = vsel %vm106, %v5944, 0
  %v5954 = vsel %vm106, %v5945, 0
  %5956 = vmatprep.subr.mxu0 %v5954
  %5957 = vmatpush1.msra.mxu0 %v5951
  %5958 = vmatprep.subr.mxu0 0.0
  %5959 = vmatpush1.msra.mxu0 0.0
  %5960 = vmatprep.subr.mxu0 0.0
  %5961 = vmatpush1.msra.mxu0 0.0
  %5962 = vmatprep.subr.mxu0 0.0
  %5963 = vmatpush1.msra.mxu0 0.0
  %5964 = vmatprep.subr.mxu0 0.0
  %5965 = vmatpush1.msra.mxu0 0.0
  %5966 = vmatprep.subr.mxu0 0.0
  %5967 = vmatpush1.msra.mxu0 0.0
  %5968 = vmatprep.subr.mxu0 0.0
  %5969 = vmatpush1.msra.mxu0 0.0
  %5970 = vmatprep.subr.mxu0 0.0
  %5971 = vmatpush1.msra.mxu0 0.0
  %5972 = vmatprep.subr.mxu0 0.0
  %5973 = vmatpush1.msra.mxu0 0.0
  %5974 = vmatprep.subr.mxu0 0.0
  %5975 = vmatpush1.msra.mxu0 0.0
  %5976 = vmatprep.subr.mxu0 0.0
  %5977 = vmatpush1.msra.mxu0 0.0
  %5978 = vmatprep.subr.mxu0 0.0
  %5979 = vmatpush1.msra.mxu0 0.0
  %5980 = vmatprep.subr.mxu0 0.0
  %5981 = vmatpush1.msra.mxu0 0.0
  %5982 = vmatprep.subr.mxu0 0.0
  %5983 = vmatpush1.msra.mxu0 0.0
  %5984 = vmatprep.subr.mxu0 0.0
  %5985 = vmatpush1.msra.mxu0 0.0
  %5986 = vmatprep.subr.mxu0 0.0
  %5987 = vmatpush1.msra.mxu0 0.0
  %5988 = vmatprep.subr.mxu0 0.0
  %5989 = vmatpush1.msra.mxu0 0.0
  %5990 = vmatprep.subr.mxu0 0.0
  %5991 = vmatpush1.msra.mxu0 0.0
  %5992 = vmatprep.subr.mxu0 0.0
  %5993 = vmatpush1.msra.mxu0 0.0
  %5994 = vmatprep.subr.mxu0 0.0
  %5995 = vmatpush1.msra.mxu0 0.0
  %5996 = vmatprep.subr.mxu0 0.0
  %5997 = vmatpush1.msra.mxu0 0.0
  %5998 = vmatprep.subr.mxu0 0.0
  %5999 = vmatpush1.msra.mxu0 0.0
  %6000 = vmatprep.subr.mxu0 0.0
  %6001 = vmatpush1.msra.mxu0 0.0
  %6002 = vmatprep.subr.mxu0 0.0
  %6003 = vmatpush1.msra.mxu0 0.0
  %6004 = vmatprep.subr.mxu0 0.0
  %6005 = vmatpush1.msra.mxu0 0.0
  %6006 = vmatprep.subr.mxu0 0.0
  %6007 = vmatpush1.msra.mxu0 0.0
  %6008 = vmatprep.subr.mxu0 0.0
  %6009 = vmatpush1.msra.mxu0 0.0
  %6010 = vmatprep.subr.mxu0 0.0
  %6011 = vmatpush1.msra.mxu0 0.0
  %6012 = vmatprep.subr.mxu0 0.0
  %6013 = vmatpush1.msra.mxu0 0.0
  %6014 = vmatprep.subr.mxu0 0.0
  %6015 = vmatpush1.msra.mxu0 0.0
  %6016 = vmatprep.subr.mxu0 0.0
  %6017 = vmatpush1.msra.mxu0 0.0
  %6018 = vmatprep.subr.mxu0 0.0
  %6019 = vmatpush1.msra.mxu0 0.0
  %6020 = vmatprep.mubr.f32.mxu0 0.0
  %6021 = vmatmul.mubr.f32.gmra.mrb[0].mxu0 %v5948
  %v6022 = vpop.f32.mrb[0].mxu0
  %v6023 = vadd.f32 0.0, %v6022
  %v6024 = vpop.f32.mrb[0].mxu0
  %v6025 = vadd.f32 0.0, %v6024
  %6026 = vdwg.mxu0
  %v6027 = vadd.f32 %v5850, %v6023
  %v6028 = vadd.f32 %v5851, %v6025
  %v6029 = vld [vmem:[%s2848] sm:$0xf]
  %v6031 = vsel %vm102, %v6029, 0
  %6033 = vmatprep.subr.mxu0 %v5954
  %6034 = vmatpush1.msra.mxu0 %v5951
  %6035 = vmatprep.subr.mxu0 0.0
  %6036 = vmatpush1.msra.mxu0 0.0
  %6037 = vmatprep.subr.mxu0 0.0
  %6038 = vmatpush1.msra.mxu0 0.0
  %6039 = vmatprep.subr.mxu0 0.0
  %6040 = vmatpush1.msra.mxu0 0.0
  %6041 = vmatprep.subr.mxu0 0.0
  %6042 = vmatpush1.msra.mxu0 0.0
  %6043 = vmatprep.subr.mxu0 0.0
  %6044 = vmatpush1.msra.mxu0 0.0
  %6045 = vmatprep.subr.mxu0 0.0
  %6046 = vmatpush1.msra.mxu0 0.0
  %6047 = vmatprep.subr.mxu0 0.0
  %6048 = vmatpush1.msra.mxu0 0.0
  %6049 = vmatprep.subr.mxu0 0.0
  %6050 = vmatpush1.msra.mxu0 0.0
  %6051 = vmatprep.subr.mxu0 0.0
  %6052 = vmatpush1.msra.mxu0 0.0
  %6053 = vmatprep.subr.mxu0 0.0
  %6054 = vmatpush1.msra.mxu0 0.0
  %6055 = vmatprep.subr.mxu0 0.0
  %6056 = vmatpush1.msra.mxu0 0.0
  %6057 = vmatprep.subr.mxu0 0.0
  %6058 = vmatpush1.msra.mxu0 0.0
  %6059 = vmatprep.subr.mxu0 0.0
  %6060 = vmatpush1.msra.mxu0 0.0
  %6061 = vmatprep.subr.mxu0 0.0
  %6062 = vmatpush1.msra.mxu0 0.0
  %6063 = vmatprep.subr.mxu0 0.0
  %6064 = vmatpush1.msra.mxu0 0.0
  %6065 = vmatprep.subr.mxu0 0.0
  %6066 = vmatpush1.msra.mxu0 0.0
  %6067 = vmatprep.subr.mxu0 0.0
  %6068 = vmatpush1.msra.mxu0 0.0
  %6069 = vmatprep.subr.mxu0 0.0
  %6070 = vmatpush1.msra.mxu0 0.0
  %6071 = vmatprep.subr.mxu0 0.0
  %6072 = vmatpush1.msra.mxu0 0.0
  %6073 = vmatprep.subr.mxu0 0.0
  %6074 = vmatpush1.msra.mxu0 0.0
  %6075 = vmatprep.subr.mxu0 0.0
  %6076 = vmatpush1.msra.mxu0 0.0
  %6077 = vmatprep.subr.mxu0 0.0
  %6078 = vmatpush1.msra.mxu0 0.0
  %6079 = vmatprep.subr.mxu0 0.0
  %6080 = vmatpush1.msra.mxu0 0.0
  %6081 = vmatprep.subr.mxu0 0.0
  %6082 = vmatpush1.msra.mxu0 0.0
  %6083 = vmatprep.subr.mxu0 0.0
  %6084 = vmatpush1.msra.mxu0 0.0
  %6085 = vmatprep.subr.mxu0 0.0
  %6086 = vmatpush1.msra.mxu0 0.0
  %6087 = vmatprep.subr.mxu0 0.0
  %6088 = vmatpush1.msra.mxu0 0.0
  %6089 = vmatprep.subr.mxu0 0.0
  %6090 = vmatpush1.msra.mxu0 0.0
  %6091 = vmatprep.subr.mxu0 0.0
  %6092 = vmatpush1.msra.mxu0 0.0
  %6093 = vmatprep.subr.mxu0 0.0
  %6094 = vmatpush1.msra.mxu0 0.0
  %6095 = vmatprep.subr.mxu0 0.0
  %6096 = vmatpush1.msra.mxu0 0.0
  %6097 = vmatprep.mubr.f32.mxu0 0.0
  %6098 = vmatmul.mubr.f32.gmra.mrb[0].mxu0 %v6031
  %v6099 = vpop.f32.mrb[0].mxu0
  %v6100 = vadd.f32 0.0, %v6099
  %v6101 = vpop.f32.mrb[0].mxu0
  %v6102 = vadd.f32 0.0, %v6101
  %6103 = vdwg.mxu0
  %v6104 = vadd.f32 %v5927, %v6100
  %v6105 = vadd.f32 %v5928, %v6102
  %v6106 = vld [vmem:[#allocation2 + $0x4] sm:$0xff]
  %v6107 = vld [vmem:[#allocation2 + $0xc] sm:$0xf]
  %v6108 = vld [vmem:[%s2928] sm:$0xf]
  %v6111 = vcombine.high %v6106, %v6106
  %6112 = vrot.lane.b32.xlu0 %v6106, 112
  %v6113 = vpop.permute.xlu0 %6112
  %6114 = vrot.lane.b32.xlu0 %v6111, 112
  %v6115 = vpop.permute.xlu0 %6114
  %6116 = vrot.lane.b32.xlu0 %v6107, 112
  %v6117 = vpop.permute.xlu0 %6116
  %v6118 = vsel %vm1337, %v6113, %v6115
  %v6119 = vsel %vm1337, %v6115, %v6117
  %v6121 = vsel %vm102, %v6108, 0
  %v6123 = vsel %vm106, %v6118, 0
  %v6125 = vsel %vm106, %v6119, 0
  %6127 = vmatprep.subr.mxu0 %v6125
  %6128 = vmatpush1.msra.mxu0 %v6123
  %6129 = vmatprep.subr.mxu0 0.0
  %6130 = vmatpush1.msra.mxu0 0.0
  %6131 = vmatprep.subr.mxu0 0.0
  %6132 = vmatpush1.msra.mxu0 0.0
  %6133 = vmatprep.subr.mxu0 0.0
  %6134 = vmatpush1.msra.mxu0 0.0
  %6135 = vmatprep.subr.mxu0 0.0
  %6136 = vmatpush1.msra.mxu0 0.0
  %6137 = vmatprep.subr.mxu0 0.0
  %6138 = vmatpush1.msra.mxu0 0.0
  %6139 = vmatprep.subr.mxu0 0.0
  %6140 = vmatpush1.msra.mxu0 0.0
  %6141 = vmatprep.subr.mxu0 0.0
  %6142 = vmatpush1.msra.mxu0 0.0
  %6143 = vmatprep.subr.mxu0 0.0
  %6144 = vmatpush1.msra.mxu0 0.0
  %6145 = vmatprep.subr.mxu0 0.0
  %6146 = vmatpush1.msra.mxu0 0.0
  %6147 = vmatprep.subr.mxu0 0.0
  %6148 = vmatpush1.msra.mxu0 0.0
  %6149 = vmatprep.subr.mxu0 0.0
  %6150 = vmatpush1.msra.mxu0 0.0
  %6151 = vmatprep.subr.mxu0 0.0
  %6152 = vmatpush1.msra.mxu0 0.0
  %6153 = vmatprep.subr.mxu0 0.0
  %6154 = vmatpush1.msra.mxu0 0.0
  %6155 = vmatprep.subr.mxu0 0.0
  %6156 = vmatpush1.msra.mxu0 0.0
  %6157 = vmatprep.subr.mxu0 0.0
  %6158 = vmatpush1.msra.mxu0 0.0
  %6159 = vmatprep.subr.mxu0 0.0
  %6160 = vmatpush1.msra.mxu0 0.0
  %6161 = vmatprep.subr.mxu0 0.0
  %6162 = vmatpush1.msra.mxu0 0.0
  %6163 = vmatprep.subr.mxu0 0.0
  %6164 = vmatpush1.msra.mxu0 0.0
  %6165 = vmatprep.subr.mxu0 0.0
  %6166 = vmatpush1.msra.mxu0 0.0
  %6167 = vmatprep.subr.mxu0 0.0
  %6168 = vmatpush1.msra.mxu0 0.0
  %6169 = vmatprep.subr.mxu0 0.0
  %6170 = vmatpush1.msra.mxu0 0.0
  %6171 = vmatprep.subr.mxu0 0.0
  %6172 = vmatpush1.msra.mxu0 0.0
  %6173 = vmatprep.subr.mxu0 0.0
  %6174 = vmatpush1.msra.mxu0 0.0
  %6175 = vmatprep.subr.mxu0 0.0
  %6176 = vmatpush1.msra.mxu0 0.0
  %6177 = vmatprep.subr.mxu0 0.0
  %6178 = vmatpush1.msra.mxu0 0.0
  %6179 = vmatprep.subr.mxu0 0.0
  %6180 = vmatpush1.msra.mxu0 0.0
  %6181 = vmatprep.subr.mxu0 0.0
  %6182 = vmatpush1.msra.mxu0 0.0
  %6183 = vmatprep.subr.mxu0 0.0
  %6184 = vmatpush1.msra.mxu0 0.0
  %6185 = vmatprep.subr.mxu0 0.0
  %6186 = vmatpush1.msra.mxu0 0.0
  %6187 = vmatprep.subr.mxu0 0.0
  %6188 = vmatpush1.msra.mxu0 0.0
  %6189 = vmatprep.subr.mxu0 0.0
  %6190 = vmatpush1.msra.mxu0 0.0
  %6191 = vmatprep.mubr.f32.mxu0 0.0
  %6192 = vmatmul.mubr.f32.gmra.mrb[0].mxu0 %v6121
  %v6193 = vpop.f32.mrb[0].mxu0
  %v6194 = vadd.f32 0.0, %v6193
  %v6195 = vpop.f32.mrb[0].mxu0
  %v6196 = vadd.f32 0.0, %v6195
  %6197 = vdwg.mxu0
  %v6198 = vadd.f32 %v6027, %v6194
  %v6199 = vadd.f32 %v6028, %v6196
  %v6200 = vld [vmem:[%s3021] sm:$0xf]
  %v6202 = vsel %vm102, %v6200, 0
  %6204 = vmatprep.subr.mxu0 %v6125
  %6205 = vmatpush1.msra.mxu0 %v6123
  %6206 = vmatprep.subr.mxu0 0.0
  %6207 = vmatpush1.msra.mxu0 0.0
  %6208 = vmatprep.subr.mxu0 0.0
  %6209 = vmatpush1.msra.mxu0 0.0
  %6210 = vmatprep.subr.mxu0 0.0
  %6211 = vmatpush1.msra.mxu0 0.0
  %6212 = vmatprep.subr.mxu0 0.0
  %6213 = vmatpush1.msra.mxu0 0.0
  %6214 = vmatprep.subr.mxu0 0.0
  %6215 = vmatpush1.msra.mxu0 0.0
  %6216 = vmatprep.subr.mxu0 0.0
  %6217 = vmatpush1.msra.mxu0 0.0
  %6218 = vmatprep.subr.mxu0 0.0
  %6219 = vmatpush1.msra.mxu0 0.0
  %6220 = vmatprep.subr.mxu0 0.0
  %6221 = vmatpush1.msra.mxu0 0.0
  %6222 = vmatprep.subr.mxu0 0.0
  %6223 = vmatpush1.msra.mxu0 0.0
  %6224 = vmatprep.subr.mxu0 0.0
  %6225 = vmatpush1.msra.mxu0 0.0
  %6226 = vmatprep.subr.mxu0 0.0
  %6227 = vmatpush1.msra.mxu0 0.0
  %6228 = vmatprep.subr.mxu0 0.0
  %6229 = vmatpush1.msra.mxu0 0.0
  %6230 = vmatprep.subr.mxu0 0.0
  %6231 = vmatpush1.msra.mxu0 0.0
  %6232 = vmatprep.subr.mxu0 0.0
  %6233 = vmatpush1.msra.mxu0 0.0
  %6234 = vmatprep.subr.mxu0 0.0
  %6235 = vmatpush1.msra.mxu0 0.0
  %6236 = vmatprep.subr.mxu0 0.0
  %6237 = vmatpush1.msra.mxu0 0.0
  %6238 = vmatprep.subr.mxu0 0.0
  %6239 = vmatpush1.msra.mxu0 0.0
  %6240 = vmatprep.subr.mxu0 0.0
  %6241 = vmatpush1.msra.mxu0 0.0
  %6242 = vmatprep.subr.mxu0 0.0
  %6243 = vmatpush1.msra.mxu0 0.0
  %6244 = vmatprep.subr.mxu0 0.0
  %6245 = vmatpush1.msra.mxu0 0.0
  %6246 = vmatprep.subr.mxu0 0.0
  %6247 = vmatpush1.msra.mxu0 0.0
  %6248 = vmatprep.subr.mxu0 0.0
  %6249 = vmatpush1.msra.mxu0 0.0
  %6250 = vmatprep.subr.mxu0 0.0
  %6251 = vmatpush1.msra.mxu0 0.0
  %6252 = vmatprep.subr.mxu0 0.0
  %6253 = vmatpush1.msra.mxu0 0.0
  %6254 = vmatprep.subr.mxu0 0.0
  %6255 = vmatpush1.msra.mxu0 0.0
  %6256 = vmatprep.subr.mxu0 0.0
  %6257 = vmatpush1.msra.mxu0 0.0
  %6258 = vmatprep.subr.mxu0 0.0
  %6259 = vmatpush1.msra.mxu0 0.0
  %6260 = vmatprep.subr.mxu0 0.0
  %6261 = vmatpush1.msra.mxu0 0.0
  %6262 = vmatprep.subr.mxu0 0.0
  %6263 = vmatpush1.msra.mxu0 0.0
  %6264 = vmatprep.subr.mxu0 0.0
  %6265 = vmatpush1.msra.mxu0 0.0
  %6266 = vmatprep.subr.mxu0 0.0
  %6267 = vmatpush1.msra.mxu0 0.0
  %6268 = vmatprep.mubr.f32.mxu0 0.0
  %6269 = vmatmul.mubr.f32.gmra.mrb[0].mxu0 %v6202
  %v6270 = vpop.f32.mrb[0].mxu0
  %v6271 = vadd.f32 0.0, %v6270
  %v6272 = vpop.f32.mrb[0].mxu0
  %v6273 = vadd.f32 0.0, %v6272
  %6274 = vdwg.mxu0
  %v6275 = vadd.f32 %v6104, %v6271
  %v6276 = vadd.f32 %v6105, %v6273
  %v6277 = vld [vmem:[#allocation2 + $0x4] sm:$0xff]
  %v6278 = vld [vmem:[#allocation2 + $0xc] sm:$0xf]
  %v6281 = vcombine.high %v6277, %v6277
  %6282 = vrot.lane.b32.xlu0 %v6277, 111
  %v6283 = vpop.permute.xlu0 %6282
  %6284 = vrot.lane.b32.xlu0 %v6281, 111
  %v6285 = vpop.permute.xlu0 %6284
  %6286 = vrot.lane.b32.xlu0 %v6278, 111
  %v6287 = vpop.permute.xlu0 %6286
  %v6288 = vsel %vm1509, %v6283, %v6285
  %v6289 = vsel %vm1509, %v6285, %v6287
  %v6292 = vsel %vm441, %v6288, 0.0
  %v6293 = vsel %vm442, %v6289, 0.0
  %v6294 = vld [vmem:[%s3116] sm:$0xf]
  %v6296 = vsel %vm102, %v6294, 0
  %v6299 = vsel %vm106, %v6292, 0
  %v6302 = vsel %vm106, %v6293, 0
  %6304 = vmatprep.subr.mxu0 %v6302
  %6305 = vmatpush1.msra.mxu0 %v6299
  %6306 = vmatprep.subr.mxu0 0.0
  %6307 = vmatpush1.msra.mxu0 0.0
  %6308 = vmatprep.subr.mxu0 0.0
  %6309 = vmatpush1.msra.mxu0 0.0
  %6310 = vmatprep.subr.mxu0 0.0
  %6311 = vmatpush1.msra.mxu0 0.0
  %6312 = vmatprep.subr.mxu0 0.0
  %6313 = vmatpush1.msra.mxu0 0.0
  %6314 = vmatprep.subr.mxu0 0.0
  %6315 = vmatpush1.msra.mxu0 0.0
  %6316 = vmatprep.subr.mxu0 0.0
  %6317 = vmatpush1.msra.mxu0 0.0
  %6318 = vmatprep.subr.mxu0 0.0
  %6319 = vmatpush1.msra.mxu0 0.0
  %6320 = vmatprep.subr.mxu0 0.0
  %6321 = vmatpush1.msra.mxu0 0.0
  %6322 = vmatprep.subr.mxu0 0.0
  %6323 = vmatpush1.msra.mxu0 0.0
  %6324 = vmatprep.subr.mxu0 0.0
  %6325 = vmatpush1.msra.mxu0 0.0
  %6326 = vmatprep.subr.mxu0 0.0
  %6327 = vmatpush1.msra.mxu0 0.0
  %6328 = vmatprep.subr.mxu0 0.0
  %6329 = vmatpush1.msra.mxu0 0.0
  %6330 = vmatprep.subr.mxu0 0.0
  %6331 = vmatpush1.msra.mxu0 0.0
  %6332 = vmatprep.subr.mxu0 0.0
  %6333 = vmatpush1.msra.mxu0 0.0
  %6334 = vmatprep.subr.mxu0 0.0
  %6335 = vmatpush1.msra.mxu0 0.0
  %6336 = vmatprep.subr.mxu0 0.0
  %6337 = vmatpush1.msra.mxu0 0.0
  %6338 = vmatprep.subr.mxu0 0.0
  %6339 = vmatpush1.msra.mxu0 0.0
  %6340 = vmatprep.subr.mxu0 0.0
  %6341 = vmatpush1.msra.mxu0 0.0
  %6342 = vmatprep.subr.mxu0 0.0
  %6343 = vmatpush1.msra.mxu0 0.0
  %6344 = vmatprep.subr.mxu0 0.0
  %6345 = vmatpush1.msra.mxu0 0.0
  %6346 = vmatprep.subr.mxu0 0.0
  %6347 = vmatpush1.msra.mxu0 0.0
  %6348 = vmatprep.subr.mxu0 0.0
  %6349 = vmatpush1.msra.mxu0 0.0
  %6350 = vmatprep.subr.mxu0 0.0
  %6351 = vmatpush1.msra.mxu0 0.0
  %6352 = vmatprep.subr.mxu0 0.0
  %6353 = vmatpush1.msra.mxu0 0.0
  %6354 = vmatprep.subr.mxu0 0.0
  %6355 = vmatpush1.msra.mxu0 0.0
  %6356 = vmatprep.subr.mxu0 0.0
  %6357 = vmatpush1.msra.mxu0 0.0
  %6358 = vmatprep.subr.mxu0 0.0
  %6359 = vmatpush1.msra.mxu0 0.0
  %6360 = vmatprep.subr.mxu0 0.0
  %6361 = vmatpush1.msra.mxu0 0.0
  %6362 = vmatprep.subr.mxu0 0.0
  %6363 = vmatpush1.msra.mxu0 0.0
  %6364 = vmatprep.subr.mxu0 0.0
  %6365 = vmatpush1.msra.mxu0 0.0
  %6366 = vmatprep.subr.mxu0 0.0
  %6367 = vmatpush1.msra.mxu0 0.0
  %6368 = vmatprep.mubr.f32.mxu0 0.0
  %6369 = vmatmul.mubr.f32.gmra.mrb[0].mxu0 %v6296
  %v6370 = vpop.f32.mrb[0].mxu0
  %v6371 = vadd.f32 0.0, %v6370
  %v6372 = vpop.f32.mrb[0].mxu0
  %v6373 = vadd.f32 0.0, %v6372
  %6374 = vdwg.mxu0
  %v6375 = vadd.f32 %v6198, %v6371
  %v6376 = vadd.f32 %v6199, %v6373
  %v6377 = vld [vmem:[%s3200] sm:$0xf]
  %v6379 = vsel %vm102, %v6377, 0
  %6381 = vmatprep.subr.mxu0 %v6302
  %6382 = vmatpush1.msra.mxu0 %v6299
  %6383 = vmatprep.subr.mxu0 0.0
  %6384 = vmatpush1.msra.mxu0 0.0
  %6385 = vmatprep.subr.mxu0 0.0
  %6386 = vmatpush1.msra.mxu0 0.0
  %6387 = vmatprep.subr.mxu0 0.0
  %6388 = vmatpush1.msra.mxu0 0.0
  %6389 = vmatprep.subr.mxu0 0.0
  %6390 = vmatpush1.msra.mxu0 0.0
  %6391 = vmatprep.subr.mxu0 0.0
  %6392 = vmatpush1.msra.mxu0 0.0
  %6393 = vmatprep.subr.mxu0 0.0
  %6394 = vmatpush1.msra.mxu0 0.0
  %6395 = vmatprep.subr.mxu0 0.0
  %6396 = vmatpush1.msra.mxu0 0.0
  %6397 = vmatprep.subr.mxu0 0.0
  %6398 = vmatpush1.msra.mxu0 0.0
  %6399 = vmatprep.subr.mxu0 0.0
  %6400 = vmatpush1.msra.mxu0 0.0
  %6401 = vmatprep.subr.mxu0 0.0
  %6402 = vmatpush1.msra.mxu0 0.0
  %6403 = vmatprep.subr.mxu0 0.0
  %6404 = vmatpush1.msra.mxu0 0.0
  %6405 = vmatprep.subr.mxu0 0.0
  %6406 = vmatpush1.msra.mxu0 0.0
  %6407 = vmatprep.subr.mxu0 0.0
  %6408 = vmatpush1.msra.mxu0 0.0
  %6409 = vmatprep.subr.mxu0 0.0
  %6410 = vmatpush1.msra.mxu0 0.0
  %6411 = vmatprep.subr.mxu0 0.0
  %6412 = vmatpush1.msra.mxu0 0.0
  %6413 = vmatprep.subr.mxu0 0.0
  %6414 = vmatpush1.msra.mxu0 0.0
  %6415 = vmatprep.subr.mxu0 0.0
  %6416 = vmatpush1.msra.mxu0 0.0
  %6417 = vmatprep.subr.mxu0 0.0
  %6418 = vmatpush1.msra.mxu0 0.0
  %6419 = vmatprep.subr.mxu0 0.0
  %6420 = vmatpush1.msra.mxu0 0.0
  %6421 = vmatprep.subr.mxu0 0.0
  %6422 = vmatpush1.msra.mxu0 0.0
  %6423 = vmatprep.subr.mxu0 0.0
  %6424 = vmatpush1.msra.mxu0 0.0
  %6425 = vmatprep.subr.mxu0 0.0
  %6426 = vmatpush1.msra.mxu0 0.0
  %6427 = vmatprep.subr.mxu0 0.0
  %6428 = vmatpush1.msra.mxu0 0.0
  %6429 = vmatprep.subr.mxu0 0.0
  %6430 = vmatpush1.msra.mxu0 0.0
  %6431 = vmatprep.subr.mxu0 0.0
  %6432 = vmatpush1.msra.mxu0 0.0
  %6433 = vmatprep.subr.mxu0 0.0
  %6434 = vmatpush1.msra.mxu0 0.0
  %6435 = vmatprep.subr.mxu0 0.0
  %6436 = vmatpush1.msra.mxu0 0.0
  %6437 = vmatprep.subr.mxu0 0.0
  %6438 = vmatpush1.msra.mxu0 0.0
  %6439 = vmatprep.subr.mxu0 0.0
  %6440 = vmatpush1.msra.mxu0 0.0
  %6441 = vmatprep.subr.mxu0 0.0
  %6442 = vmatpush1.msra.mxu0 0.0
  %6443 = vmatprep.subr.mxu0 0.0
  %6444 = vmatpush1.msra.mxu0 0.0
  %6445 = vmatprep.mubr.f32.mxu0 0.0
  %6446 = vmatmul.mubr.f32.gmra.mrb[0].mxu0 %v6379
  %v6447 = vpop.f32.mrb[0].mxu0
  %v6448 = vadd.f32 0.0, %v6447
  %v6449 = vpop.f32.mrb[0].mxu0
  %v6450 = vadd.f32 0.0, %v6449
  %6451 = vdwg.mxu0
  %v6452 = vadd.f32 %v6275, %v6448
  %v6453 = vadd.f32 %v6276, %v6450
  %v6454 = vmax.f32 %v6375, %v6452
  %v6455 = vmax.f32 %v6376, %v6453
  %v6457 = vcombine.high %v3291, %v3291
  %v6459 = vadd.f32 %v6454, %v3291
  %v6460 = vadd.f32 %v6455, %v6457
  %v6463 = vcombine.low %v6459, %v6460
  %s6465 = scalar_lea.vmem %s9, 8
  %6466 = vst [vmem:[%s6465] sm:$0xff] %v6463
  // Predicated region
  $region38: #{resblock_forward.1} parent=0 // pred_check
    _
  $region39: #{resblock_forward.1} parent=0 // pred_check_branch
    %6468 = sbr.rel (0) target = $region41
  $region40: #{resblock_forward.1} parent=0 // pred_region
    _
  $region41: #{resblock_forward.1} parent=0 // pred_fallthru
    _
  // Predicated region
  $region42: #{resblock_forward.1} parent=0 // pred_check
    _
  $region43: #{resblock_forward.1} parent=0 // pred_check_branch
    %6470 = sbr.rel (0) target = $region45
  $region44: #{resblock_forward.1} parent=0 // pred_region
    _
  $region45: #{resblock_forward.1} parent=0 // pred_fallthru
    _

</llo_original>
